<compile_context>
chip_gen: v5e
topology: v5e:2x2
jax: 0.10.0
libtpu: 0.0.40
codegen_flags: <defaults>
</compile_context>

<pallas_src>
import functools

import jax
import jax.numpy as jnp
from jax.experimental import pallas as pl
from jax.experimental.pallas import tpu as pltpu

EPS = 1e-5


def _fc_block_kernel(inv_n,
                     x_ref, w1_ref, b1_ref, g1_ref, bt1_ref,
                     w2_ref, b2_ref, g2_ref, bt2_ref,
                     o_ref,
                     s1, q1, s2, q2, sc1, sh1, sc2, sh2):
    p = pl.program_id(0)   # phase: 0 = BN1 stats, 1 = BN2 stats, 2 = write out
    i = pl.program_id(1)   # batch tile
    first_tile = i == 0

    # ---- phase bookkeeping (runs once per phase, on the first batch tile) ---
    @pl.when(jnp.logical_and(p == 0, first_tile))
    def _init_stats1():
        s1[...] = jnp.zeros_like(s1)
        q1[...] = jnp.zeros_like(q1)

    @pl.when(jnp.logical_and(p == 1, first_tile))
    def _finalize_bn1():
        mean = s1[...] * inv_n
        var = jnp.maximum(q1[...] * inv_n - mean * mean, 0.0)  # biased var
        scale = g1_ref[...] * jax.lax.rsqrt(var + EPS)
        sc1[...] = scale
        sh1[...] = bt1_ref[...] - mean * scale
        s2[...] = jnp.zeros_like(s2)
        q2[...] = jnp.zeros_like(q2)

    @pl.when(jnp.logical_and(p == 2, first_tile))
    def _finalize_bn2():
        mean = s2[...] * inv_n
        var = jnp.maximum(q2[...] * inv_n - mean * mean, 0.0)
        scale = g2_ref[...] * jax.lax.rsqrt(var + EPS)
        sc2[...] = scale
        sh2[...] = bt2_ref[...] - mean * scale

    # ---- layer 1: bf16 MXU matmul, f32 accumulation, bias + ReLU in f32 -----
    h1 = jnp.dot(x_ref[...], w1_ref[...], preferred_element_type=jnp.float32)
    h1 = jnp.maximum(h1 + b1_ref[...], 0.0)

    @pl.when(p == 0)
    def _accumulate_stats1():
        s1[...] += jnp.sum(h1, axis=0, keepdims=True)
        q1[...] += jnp.sum(h1 * h1, axis=0, keepdims=True)

    @pl.when(p >= 1)
    def _layer2():
        # BN1 folded into per-feature scale/shift (2 VPU ops / element).
        y1 = (h1 * sc1[...] + sh1[...]).astype(jnp.bfloat16)
        h2 = jnp.dot(y1, w2_ref[...], preferred_element_type=jnp.float32)
        h2 = jnp.maximum(h2 + b2_ref[...], 0.0)

        @pl.when(p == 1)
        def _accumulate_stats2():
            s2[...] += jnp.sum(h2, axis=0, keepdims=True)
            q2[...] += jnp.sum(h2 * h2, axis=0, keepdims=True)

        @pl.when(p == 2)
        def _write_out():
            o_ref[...] = (h2 * sc2[...] + sh2[...]).astype(o_ref.dtype)


def _vmem_capacity_bytes():
    try:
        return int(pltpu.get_tpu_info().vmem_capacity_bytes)
    except Exception:
        return 128 * 1024 * 1024   # conservative default (v5e/v6e)


def _choose_tile_n(n, fin, fout, budget_bytes, resident_bytes):
    """Largest batch tile (divisor of n) whose working set fits the budget."""
    def per_tile(t):
        return (2 * t * fin * 2            # double-buffered bf16 x tile
                + 2 * t * fout * 4         # double-buffered f32 out tile
                + t * fout * (4 + 2 + 4))  # live h1(f32) + y1(bf16) + h2(f32)

    cands = [n] + [t for t in (4096, 2048, 1024, 512, 256, 128, 64, 32, 16, 8)
                   if t < n and n % t == 0]
    for t in cands:
        if resident_bytes + per_tile(t) <= budget_bytes:
            return t
    return cands[-1]


def _build_call(n, fin, fout, tile_n, inv_n, vmem_limit, single_buffer_weights):
    nb = n // tile_n
    kernel = functools.partial(_fc_block_kernel, inv_n)

    # Constant-index blocks are never re-fetched; single-buffer them to save
    # VMEM (one copy instead of two) when the jax version supports it.
    resident_kwargs = (dict(pipeline_mode=pl.Buffered(1))
                       if single_buffer_weights else {})

    def vec_spec():
        return pl.BlockSpec((1, fout), lambda p, i: (0, 0), **resident_kwargs)

    grid_spec = pltpu.PrefetchScalarGridSpec(
        num_scalar_prefetch=0,
        grid=(3, nb),                                     # (phase, batch tile)
        in_specs=[
            pl.BlockSpec((tile_n, fin), lambda p, i: (i, 0)),     # x tile
            pl.BlockSpec((fin, fout), lambda p, i: (0, 0),
                         **resident_kwargs),                      # W1 resident
            vec_spec(), vec_spec(), vec_spec(),                   # b1, g1, beta1
            pl.BlockSpec((fout, fout), lambda p, i: (0, 0),
                         **resident_kwargs),                      # W2 resident
            vec_spec(), vec_spec(), vec_spec(),                   # b2, g2, beta2
        ],
        # Output block index only advances in phase 2, so phases 0/1 never
        # DMA-write the output (block 0 stays resident and is written only
        # after phase 2 fills it).  Phase axis is outermost + sequential, so
        # the phase-2 write is always the last write of each block.
        out_specs=pl.BlockSpec((tile_n, fout),
                               lambda p, i: (jnp.where(p == 2, i, 0), 0)),
        scratch_shapes=[pltpu.VMEM((1, fout), jnp.float32)] * 8,
    )

    flops = 3 * 2 * n * fin * fout + 2 * 2 * n * fout * fout
    bytes_accessed = (3 * n * fin * 2            # x read once per phase (bf16)
                      + (fin + fout) * fout * 2  # weights (bf16, fetched once)
                      + n * fout * 4             # output written once (f32)
                      + 6 * fout * 4)            # bias / gamma / beta vectors
    cost = pl.CostEstimate(flops=flops, transcendentals=2 * fout,
                           bytes_accessed=bytes_accessed)

    return pl.pallas_call(
        kernel,
        out_shape=jax.ShapeDtypeStruct((n, fout), jnp.float32),
        grid_spec=grid_spec,
        compiler_params=pltpu.CompilerParams(
            # Phase axis is sequential; batch axis carries the stat
            # accumulators and the resident output block -> both arbitrary.
            dimension_semantics=("arbitrary", "arbitrary"),
            vmem_limit_bytes=int(vmem_limit),
        ),
        cost_estimate=cost,
    )


def fc_block(x, params, *, tile_n=None):
    """x: (N, in_features) float32/bf16.  params: dict (see init_params)."""
    n, fin = x.shape
    fout = params["w1"].shape[1]

    # bf16 operands for the MXU; weight casts are hoisted to init_params, so
    # these are no-ops per call when params are already bf16.
    x_bf = x if x.dtype == jnp.bfloat16 else x.astype(jnp.bfloat16)
    w1_bf = (params["w1"] if params["w1"].dtype == jnp.bfloat16
             else params["w1"].astype(jnp.bfloat16))
    w2_bf = (params["w2"] if params["w2"].dtype == jnp.bfloat16
             else params["w2"].astype(jnp.bfloat16))

    # Generation-aware VMEM budgeting (128 MiB on v5e/v6e, 64 MiB on v7x).
    vmem_cap = _vmem_capacity_bytes()
    budget = int(0.70 * vmem_cap)
    # Budget residency conservatively assuming double-buffered weights.
    resident = (2 * ((fin * fout + fout * fout) * 2 + 6 * fout * 4)
                + 8 * fout * 4)
    if tile_n is None:
        tile_n = _choose_tile_n(n, fin, fout, budget, resident)
    assert n % tile_n == 0, "batch must be divisible by tile_n"

    vmem_limit = max(32 * 1024 * 1024, min(budget, 96 * 1024 * 1024))
    inv_n = 1.0 / n

    args = (x_bf, w1_bf, params["b1"], params["g1"], params["beta1"],
            w2_bf, params["b2"], params["g2"], params["beta2"])

    try:
        return _build_call(n, fin, fout, tile_n, inv_n, vmem_limit,
                           single_buffer_weights=True)(*args)
    except Exception:
        # pipeline_mode=pl.Buffered(1) unsupported on this jax/libtpu combo:
        # fall back to default double-buffering (identical semantics).
        return _build_call(n, fin, fout, tile_n, inv_n, vmem_limit,
                           single_buffer_weights=False)(*args)


def init_params(key, in_features, out_features):
    """Deterministic synthetic init (PyTorch-Linear-style uniform bounds).

    Weights are cast to bf16 once here (hoisted out of the per-call path).
    """
    k1, k2, k3, k4 = jax.random.split(key, 4)
    bound1 = 1.0 / jnp.sqrt(in_features)
    bound2 = 1.0 / jnp.sqrt(out_features)
    w1 = jax.random.uniform(k1, (in_features, out_features),
                            jnp.float32, -bound1, bound1)
    w2 = jax.random.uniform(k3, (out_features, out_features),
                            jnp.float32, -bound2, bound2)
    return {
        # Linear 1: PyTorch weight is (out, in); stored transposed (in, out).
        "w1": w1.astype(jnp.bfloat16),
        "b1": jax.random.uniform(k2, (1, out_features),
                                 jnp.float32, -bound1, bound1),
        "g1": jnp.ones((1, out_features), jnp.float32),
        "beta1": jnp.zeros((1, out_features), jnp.float32),
        "w2": w2.astype(jnp.bfloat16),
        "b2": jax.random.uniform(k4, (1, out_features),
                                 jnp.float32, -bound2, bound2),
        "g2": jnp.ones((1, out_features), jnp.float32),
        "beta2": jnp.zeros((1, out_features), jnp.float32),
    }


def fc_block_ref(x, p):
    """Pure-JAX reference with the same bf16-matmul / f32-accumulate recipe."""
    xb = x.astype(jnp.bfloat16)
    w1 = p["w1"].astype(jnp.bfloat16)
    w2 = p["w2"].astype(jnp.bfloat16)

    h1 = jnp.dot(xb, w1, preferred_element_type=jnp.float32) + p["b1"]
    h1 = jnp.maximum(h1, 0.0)
    m1 = h1.mean(0, keepdims=True)
    v1 = ((h1 - m1) ** 2).mean(0, keepdims=True)     # biased (training) var
    sc1 = p["g1"] * jax.lax.rsqrt(v1 + EPS)
    y1 = (h1 * sc1 + (p["beta1"] - m1 * sc1)).astype(jnp.bfloat16)

    h2 = jnp.dot(y1, w2, preferred_element_type=jnp.float32) + p["b2"]
    h2 = jnp.maximum(h2, 0.0)
    m2 = h2.mean(0, keepdims=True)
    v2 = ((h2 - m2) ** 2).mean(0, keepdims=True)
    sc2 = p["g2"] * jax.lax.rsqrt(v2 + EPS)
    return h2 * sc2 + (p["beta2"] - m2 * sc2)


if __name__ == "__main__":
    key = jax.random.PRNGKey(0)
    kx, kp = jax.random.split(key)

    # Lane-dense feature dims (multiples of 128).
    batch, in_features, out_features = 512, 256, 256
    x = jax.random.normal(kx, (batch, in_features), jnp.float32)
    params = init_params(kp, in_features, out_features)

    ref = fc_block_ref(x, params)

    # Auto tile selection (whole batch fits in one tile here -> grid (3, 1)).
    out_auto = jax.block_until_ready(fc_block(x, params))
    # Forced small tile to exercise cross-tile BN statistic accumulation.
    out_tiled = jax.block_until_ready(fc_block(x, params, tile_n=128))

    assert out_auto.shape == (batch, out_features)
    assert bool(jnp.allclose(out_auto, ref, atol=1e-2, rtol=1e-2)), (
        "auto-tiled kernel output does not match reference")
    assert bool(jnp.allclose(out_tiled, ref, atol=1e-2, rtol=1e-2)), (
        "batch-tiled kernel output does not match reference")

    print("KERNEL_OK")
</pallas_src>

<mosaic_0001>
module attributes {stable_mosaic.version = 11 : i64} {
  func.func @_fc_block_kernel(%arg0: i32, %arg1: i32, %arg2: memref<512x256xbf16, #tpu.memory_space<vmem>>, %arg3: memref<256x256xbf16, #tpu.memory_space<vmem>>, %arg4: memref<1x256xf32, #tpu.memory_space<vmem>>, %arg5: memref<1x256xf32, #tpu.memory_space<vmem>>, %arg6: memref<1x256xf32, #tpu.memory_space<vmem>>, %arg7: memref<256x256xbf16, #tpu.memory_space<vmem>>, %arg8: memref<1x256xf32, #tpu.memory_space<vmem>>, %arg9: memref<1x256xf32, #tpu.memory_space<vmem>>, %arg10: memref<1x256xf32, #tpu.memory_space<vmem>>, %arg11: memref<512x256xf32, #tpu.memory_space<vmem>>, %arg12: memref<1x256xf32, #tpu.memory_space<vmem>>, %arg13: memref<1x256xf32, #tpu.memory_space<vmem>>, %arg14: memref<1x256xf32, #tpu.memory_space<vmem>>, %arg15: memref<1x256xf32, #tpu.memory_space<vmem>>, %arg16: memref<1x256xf32, #tpu.memory_space<vmem>>, %arg17: memref<1x256xf32, #tpu.memory_space<vmem>>, %arg18: memref<1x256xf32, #tpu.memory_space<vmem>>, %arg19: memref<1x256xf32, #tpu.memory_space<vmem>>) attributes {dimension_semantics = [#tpu.dimension_semantics<arbitrary>, #tpu.dimension_semantics<arbitrary>], iteration_bounds = array<i64: 3, 1>, scalar_prefetch = 0 : i64, scratch_operands = 8 : i64, tpu.core_type = #tpu.core_type<tc>, window_params = [{transform_indices = @transform_0, window_bounds = array<i64: 512, 256>}, {pipeline_mode = #tpu.pipeline_mode<synchronous>, transform_indices = @transform_1, window_bounds = array<i64: 256, 256>}, {pipeline_mode = #tpu.pipeline_mode<synchronous>, transform_indices = @transform_2, window_bounds = array<i64: 1, 256>}, {pipeline_mode = #tpu.pipeline_mode<synchronous>, transform_indices = @transform_3, window_bounds = array<i64: 1, 256>}, {pipeline_mode = #tpu.pipeline_mode<synchronous>, transform_indices = @transform_4, window_bounds = array<i64: 1, 256>}, {pipeline_mode = #tpu.pipeline_mode<synchronous>, transform_indices = @transform_5, window_bounds = array<i64: 256, 256>}, {pipeline_mode = #tpu.pipeline_mode<synchronous>, transform_indices = @transform_6, window_bounds = array<i64: 1, 256>}, {pipeline_mode = #tpu.pipeline_mode<synchronous>, transform_indices = @transform_7, window_bounds = array<i64: 1, 256>}, {pipeline_mode = #tpu.pipeline_mode<synchronous>, transform_indices = @transform_8, window_bounds = array<i64: 1, 256>}, {transform_indices = @transform_9, window_bounds = array<i64: 512, 256>}]} {
    %c0_i32 = arith.constant 0 : i32
    %0 = arith.cmpi eq, %arg1, %c0_i32 : i32
    %c0_i32_0 = arith.constant 0 : i32
    %1 = arith.cmpi eq, %arg0, %c0_i32_0 : i32
    %2 = arith.andi %1, %0 : i1
    %3 = arith.extui %2 : i1 to i32
    %c0_i32_1 = arith.constant 0 : i32
    %4 = arith.cmpi ne, %3, %c0_i32_1 : i32
    scf.if %4 {
      %cst_14 = arith.constant 0.000000e+00 : f32
      %27 = vector.broadcast %cst_14 : f32 to vector<1x256xf32>
      %c0_15 = arith.constant 0 : index
      %c0_16 = arith.constant 0 : index
      %28 = vector.load %arg12[%c0_15, %c0_16] : memref<1x256xf32, #tpu.memory_space<vmem>>, vector<1x256xf32>
      tpu.vector_store %arg12[%c0_15, %c0_16], %27 {strides = array<i32>} : memref<1x256xf32, #tpu.memory_space<vmem>>, vector<1x256xf32>,
      %cst_17 = arith.constant 0.000000e+00 : f32
      %29 = vector.broadcast %cst_17 : f32 to vector<1x256xf32>
      %c0_18 = arith.constant 0 : index
      %c0_19 = arith.constant 0 : index
      %30 = vector.load %arg13[%c0_18, %c0_19] : memref<1x256xf32, #tpu.memory_space<vmem>>, vector<1x256xf32>
      tpu.vector_store %arg13[%c0_18, %c0_19], %29 {strides = array<i32>} : memref<1x256xf32, #tpu.memory_space<vmem>>, vector<1x256xf32>,
    } else {
    }
    %c1_i32 = arith.constant 1 : i32
    %5 = arith.cmpi eq, %arg0, %c1_i32 : i32
    %6 = arith.andi %5, %0 : i1
    %7 = arith.extui %6 : i1 to i32
    %c0_i32_2 = arith.constant 0 : i32
    %8 = arith.cmpi ne, %7, %c0_i32_2 : i32
    scf.if %8 {
      %c0_14 = arith.constant 0 : index
      %c0_15 = arith.constant 0 : index
      %27 = vector.load %arg12[%c0_14, %c0_15] : memref<1x256xf32, #tpu.memory_space<vmem>>, vector<1x256xf32>
      %cst_16 = arith.constant 0.001953125 : f32
      %28 = vector.broadcast %cst_16 : f32 to vector<1x256xf32>
      %29 = arith.mulf %27, %28 : vector<1x256xf32>
      %c0_17 = arith.constant 0 : index
      %c0_18 = arith.constant 0 : index
      %30 = vector.load %arg13[%c0_17, %c0_18] : memref<1x256xf32, #tpu.memory_space<vmem>>, vector<1x256xf32>
      %cst_19 = arith.constant 0.001953125 : f32
      %31 = vector.broadcast %cst_19 : f32 to vector<1x256xf32>
      %32 = arith.mulf %30, %31 : vector<1x256xf32>
      %33 = arith.mulf %29, %29 : vector<1x256xf32>
      %34 = arith.subf %32, %33 : vector<1x256xf32>
      %cst_20 = arith.constant 0.000000e+00 : f32
      %35 = vector.broadcast %cst_20 : f32 to vector<1x256xf32>
      %36 = arith.maximumf %34, %35 : vector<1x256xf32>
      %c0_21 = arith.constant 0 : index
      %c0_22 = arith.constant 0 : index
      %37 = vector.load %arg5[%c0_21, %c0_22] : memref<1x256xf32, #tpu.memory_space<vmem>>, vector<1x256xf32>
      %cst_23 = arith.constant 9.99999974E-6 : f32
      %38 = vector.broadcast %cst_23 : f32 to vector<1x256xf32>
      %39 = arith.addf %36, %38 : vector<1x256xf32>
      %40 = math.rsqrt %39 : vector<1x256xf32>
      %41 = arith.mulf %37, %40 : vector<1x256xf32>
      %c0_24 = arith.constant 0 : index
      %c0_25 = arith.constant 0 : index
      %42 = vector.load %arg16[%c0_24, %c0_25] : memref<1x256xf32, #tpu.memory_space<vmem>>, vector<1x256xf32>
      tpu.vector_store %arg16[%c0_24, %c0_25], %41 {strides = array<i32>} : memref<1x256xf32, #tpu.memory_space<vmem>>, vector<1x256xf32>,
      %c0_26 = arith.constant 0 : index
      %c0_27 = arith.constant 0 : index
      %43 = vector.load %arg6[%c0_26, %c0_27] : memref<1x256xf32, #tpu.memory_space<vmem>>, vector<1x256xf32>
      %44 = arith.mulf %29, %41 : vector<1x256xf32>
      %45 = arith.subf %43, %44 : vector<1x256xf32>
      %c0_28 = arith.constant 0 : index
      %c0_29 = arith.constant 0 : index
      %46 = vector.load %arg17[%c0_28, %c0_29] : memref<1x256xf32, #tpu.memory_space<vmem>>, vector<1x256xf32>
      tpu.vector_store %arg17[%c0_28, %c0_29], %45 {strides = array<i32>} : memref<1x256xf32, #tpu.memory_space<vmem>>, vector<1x256xf32>,
      %cst_30 = arith.constant 0.000000e+00 : f32
      %47 = vector.broadcast %cst_30 : f32 to vector<1x256xf32>
      %c0_31 = arith.constant 0 : index
      %c0_32 = arith.constant 0 : index
      %48 = vector.load %arg14[%c0_31, %c0_32] : memref<1x256xf32, #tpu.memory_space<vmem>>, vector<1x256xf32>
      tpu.vector_store %arg14[%c0_31, %c0_32], %47 {strides = array<i32>} : memref<1x256xf32, #tpu.memory_space<vmem>>, vector<1x256xf32>,
      %cst_33 = arith.constant 0.000000e+00 : f32
      %49 = vector.broadcast %cst_33 : f32 to vector<1x256xf32>
      %c0_34 = arith.constant 0 : index
      %c0_35 = arith.constant 0 : index
      %50 = vector.load %arg15[%c0_34, %c0_35] : memref<1x256xf32, #tpu.memory_space<vmem>>, vector<1x256xf32>
      tpu.vector_store %arg15[%c0_34, %c0_35], %49 {strides = array<i32>} : memref<1x256xf32, #tpu.memory_space<vmem>>, vector<1x256xf32>,
    } else {
    }
    %c2_i32 = arith.constant 2 : i32
    %9 = arith.cmpi eq, %arg0, %c2_i32 : i32
    %10 = arith.andi %9, %0 : i1
    %11 = arith.extui %10 : i1 to i32
    %c0_i32_3 = arith.constant 0 : i32
    %12 = arith.cmpi ne, %11, %c0_i32_3 : i32
    scf.if %12 {
      %c0_14 = arith.constant 0 : index
      %c0_15 = arith.constant 0 : index
      %27 = vector.load %arg14[%c0_14, %c0_15] : memref<1x256xf32, #tpu.memory_space<vmem>>, vector<1x256xf32>
      %cst_16 = arith.constant 0.001953125 : f32
      %28 = vector.broadcast %cst_16 : f32 to vector<1x256xf32>
      %29 = arith.mulf %27, %28 : vector<1x256xf32>
      %c0_17 = arith.constant 0 : index
      %c0_18 = arith.constant 0 : index
      %30 = vector.load %arg15[%c0_17, %c0_18] : memref<1x256xf32, #tpu.memory_space<vmem>>, vector<1x256xf32>
      %cst_19 = arith.constant 0.001953125 : f32
      %31 = vector.broadcast %cst_19 : f32 to vector<1x256xf32>
      %32 = arith.mulf %30, %31 : vector<1x256xf32>
      %33 = arith.mulf %29, %29 : vector<1x256xf32>
      %34 = arith.subf %32, %33 : vector<1x256xf32>
      %cst_20 = arith.constant 0.000000e+00 : f32
      %35 = vector.broadcast %cst_20 : f32 to vector<1x256xf32>
      %36 = arith.maximumf %34, %35 : vector<1x256xf32>
      %c0_21 = arith.constant 0 : index
      %c0_22 = arith.constant 0 : index
      %37 = vector.load %arg9[%c0_21, %c0_22] : memref<1x256xf32, #tpu.memory_space<vmem>>, vector<1x256xf32>
      %cst_23 = arith.constant 9.99999974E-6 : f32
      %38 = vector.broadcast %cst_23 : f32 to vector<1x256xf32>
      %39 = arith.addf %36, %38 : vector<1x256xf32>
      %40 = math.rsqrt %39 : vector<1x256xf32>
      %41 = arith.mulf %37, %40 : vector<1x256xf32>
      %c0_24 = arith.constant 0 : index
      %c0_25 = arith.constant 0 : index
      %42 = vector.load %arg18[%c0_24, %c0_25] : memref<1x256xf32, #tpu.memory_space<vmem>>, vector<1x256xf32>
      tpu.vector_store %arg18[%c0_24, %c0_25], %41 {strides = array<i32>} : memref<1x256xf32, #tpu.memory_space<vmem>>, vector<1x256xf32>,
      %c0_26 = arith.constant 0 : index
      %c0_27 = arith.constant 0 : index
      %43 = vector.load %arg10[%c0_26, %c0_27] : memref<1x256xf32, #tpu.memory_space<vmem>>, vector<1x256xf32>
      %44 = arith.mulf %29, %41 : vector<1x256xf32>
      %45 = arith.subf %43, %44 : vector<1x256xf32>
      %c0_28 = arith.constant 0 : index
      %c0_29 = arith.constant 0 : index
      %46 = vector.load %arg19[%c0_28, %c0_29] : memref<1x256xf32, #tpu.memory_space<vmem>>, vector<1x256xf32>
      tpu.vector_store %arg19[%c0_28, %c0_29], %45 {strides = array<i32>} : memref<1x256xf32, #tpu.memory_space<vmem>>, vector<1x256xf32>,
    } else {
    }
    %c0 = arith.constant 0 : index
    %c0_4 = arith.constant 0 : index
    %13 = vector.load %arg2[%c0, %c0_4] : memref<512x256xbf16, #tpu.memory_space<vmem>>, vector<512x256xbf16>
    %c0_5 = arith.constant 0 : index
    %c0_6 = arith.constant 0 : index
    %14 = vector.load %arg3[%c0_5, %c0_6] : memref<256x256xbf16, #tpu.memory_space<vmem>>, vector<256x256xbf16>
    %cst = arith.constant dense<0.000000e+00> : vector<512x256xf32>
    %15 = tpu.matmul %13, %14, %cst {dimension_numbers = #tpu.dot_dimension_numbers<[1], [0], [0], [1], [0, 0, 1, 1], [], []>} : vector<512x256xbf16>, vector<256x256xbf16>, vector<512x256xf32> -> vector<512x256xf32>
    %c0_7 = arith.constant 0 : index
    %c0_8 = arith.constant 0 : index
    %16 = vector.load %arg4[%c0_7, %c0_8] : memref<1x256xf32, #tpu.memory_space<vmem>>, vector<1x256xf32>
    %17 = vector.broadcast %16 : vector<1x256xf32> to vector<512x256xf32>
    %18 = arith.addf %15, %17 : vector<512x256xf32>
    %cst_9 = arith.constant 0.000000e+00 : f32
    %19 = vector.broadcast %cst_9 : f32 to vector<512x256xf32>
    %20 = arith.maximumf %18, %19 : vector<512x256xf32>
    %c0_i32_10 = arith.constant 0 : i32
    %21 = arith.cmpi eq, %arg0, %c0_i32_10 : i32
    %22 = arith.extui %21 : i1 to i32
    %c0_i32_11 = arith.constant 0 : i32
    %23 = arith.cmpi ne, %22, %c0_i32_11 : i32
    scf.if %23 {
      %c0_14 = arith.constant 0 : index
      %c0_15 = arith.constant 0 : index
      %27 = vector.load %arg12[%c0_14, %c0_15] : memref<1x256xf32, #tpu.memory_space<vmem>>, vector<1x256xf32>
      %cst_16 = arith.constant dense<0.000000e+00> : vector<256xf32>
      %28 = vector.multi_reduction <add>, %20, %cst_16 [0] : vector<512x256xf32> to vector<256xf32>
      %29 = vector.shape_cast %28 : vector<256xf32> to vector<1x256xf32>
      %30 = arith.addf %27, %29 : vector<1x256xf32>
      %c0_17 = arith.constant 0 : index
      %c0_18 = arith.constant 0 : index
      %31 = vector.load %arg12[%c0_17, %c0_18] : memref<1x256xf32, #tpu.memory_space<vmem>>, vector<1x256xf32>
      tpu.vector_store %arg12[%c0_17, %c0_18], %30 {strides = array<i32>} : memref<1x256xf32, #tpu.memory_space<vmem>>, vector<1x256xf32>,
      %c0_19 = arith.constant 0 : index
      %c0_20 = arith.constant 0 : index
      %32 = vector.load %arg13[%c0_19, %c0_20] : memref<1x256xf32, #tpu.memory_space<vmem>>, vector<1x256xf32>
      %33 = arith.mulf %20, %20 : vector<512x256xf32>
      %cst_21 = arith.constant dense<0.000000e+00> : vector<256xf32>
      %34 = vector.multi_reduction <add>, %33, %cst_21 [0] : vector<512x256xf32> to vector<256xf32>
      %35 = vector.shape_cast %34 : vector<256xf32> to vector<1x256xf32>
      %36 = arith.addf %32, %35 : vector<1x256xf32>
      %c0_22 = arith.constant 0 : index
      %c0_23 = arith.constant 0 : index
      %37 = vector.load %arg13[%c0_22, %c0_23] : memref<1x256xf32, #tpu.memory_space<vmem>>, vector<1x256xf32>
      tpu.vector_store %arg13[%c0_22, %c0_23], %36 {strides = array<i32>} : memref<1x256xf32, #tpu.memory_space<vmem>>, vector<1x256xf32>,
    } else {
    }
    %c1_i32_12 = arith.constant 1 : i32
    %24 = arith.cmpi sge, %arg0, %c1_i32_12 : i32
    %25 = arith.extui %24 : i1 to i32
    %c0_i32_13 = arith.constant 0 : i32
    %26 = arith.cmpi ne, %25, %c0_i32_13 : i32
    scf.if %26 {
      %c0_14 = arith.constant 0 : index
      %c0_15 = arith.constant 0 : index
      %27 = vector.load %arg16[%c0_14, %c0_15] : memref<1x256xf32, #tpu.memory_space<vmem>>, vector<1x256xf32>
      %28 = vector.broadcast %27 : vector<1x256xf32> to vector<512x256xf32>
      %29 = arith.mulf %20, %28 : vector<512x256xf32>
      %c0_16 = arith.constant 0 : index
      %c0_17 = arith.constant 0 : index
      %30 = vector.load %arg17[%c0_16, %c0_17] : memref<1x256xf32, #tpu.memory_space<vmem>>, vector<1x256xf32>
      %31 = vector.broadcast %30 : vector<1x256xf32> to vector<512x256xf32>
      %32 = arith.addf %29, %31 : vector<512x256xf32>
      %33 = arith.truncf %32 : vector<512x256xf32> to vector<512x256xbf16>
      %c0_18 = arith.constant 0 : index
      %c0_19 = arith.constant 0 : index
      %34 = vector.load %arg7[%c0_18, %c0_19] : memref<256x256xbf16, #tpu.memory_space<vmem>>, vector<256x256xbf16>
      %cst_20 = arith.constant dense<0.000000e+00> : vector<512x256xf32>
      %35 = tpu.matmul %33, %34, %cst_20 {dimension_numbers = #tpu.dot_dimension_numbers<[1], [0], [0], [1], [0, 0, 1, 1], [], []>} : vector<512x256xbf16>, vector<256x256xbf16>, vector<512x256xf32> -> vector<512x256xf32>
      %c0_21 = arith.constant 0 : index
      %c0_22 = arith.constant 0 : index
      %36 = vector.load %arg8[%c0_21, %c0_22] : memref<1x256xf32, #tpu.memory_space<vmem>>, vector<1x256xf32>
      %37 = vector.broadcast %36 : vector<1x256xf32> to vector<512x256xf32>
      %38 = arith.addf %35, %37 : vector<512x256xf32>
      %cst_23 = arith.constant 0.000000e+00 : f32
      %39 = vector.broadcast %cst_23 : f32 to vector<512x256xf32>
      %40 = arith.maximumf %38, %39 : vector<512x256xf32>
      %c1_i32_24 = arith.constant 1 : i32
      %41 = arith.cmpi eq, %arg0, %c1_i32_24 : i32
      %42 = arith.extui %41 : i1 to i32
      %c0_i32_25 = arith.constant 0 : i32
      %43 = arith.cmpi ne, %42, %c0_i32_25 : i32
      scf.if %43 {
        %c0_28 = arith.constant 0 : index
        %c0_29 = arith.constant 0 : index
        %47 = vector.load %arg14[%c0_28, %c0_29] : memref<1x256xf32, #tpu.memory_space<vmem>>, vector<1x256xf32>
        %cst_30 = arith.constant dense<0.000000e+00> : vector<256xf32>
        %48 = vector.multi_reduction <add>, %40, %cst_30 [0] : vector<512x256xf32> to vector<256xf32>
        %49 = vector.shape_cast %48 : vector<256xf32> to vector<1x256xf32>
        %50 = arith.addf %47, %49 : vector<1x256xf32>
        %c0_31 = arith.constant 0 : index
        %c0_32 = arith.constant 0 : index
        %51 = vector.load %arg14[%c0_31, %c0_32] : memref<1x256xf32, #tpu.memory_space<vmem>>, vector<1x256xf32>
        tpu.vector_store %arg14[%c0_31, %c0_32], %50 {strides = array<i32>} : memref<1x256xf32, #tpu.memory_space<vmem>>, vector<1x256xf32>,
        %c0_33 = arith.constant 0 : index
        %c0_34 = arith.constant 0 : index
        %52 = vector.load %arg15[%c0_33, %c0_34] : memref<1x256xf32, #tpu.memory_space<vmem>>, vector<1x256xf32>
        %53 = arith.mulf %40, %40 : vector<512x256xf32>
        %cst_35 = arith.constant dense<0.000000e+00> : vector<256xf32>
        %54 = vector.multi_reduction <add>, %53, %cst_35 [0] : vector<512x256xf32> to vector<256xf32>
        %55 = vector.shape_cast %54 : vector<256xf32> to vector<1x256xf32>
        %56 = arith.addf %52, %55 : vector<1x256xf32>
        %c0_36 = arith.constant 0 : index
        %c0_37 = arith.constant 0 : index
        %57 = vector.load %arg15[%c0_36, %c0_37] : memref<1x256xf32, #tpu.memory_space<vmem>>, vector<1x256xf32>
        tpu.vector_store %arg15[%c0_36, %c0_37], %56 {strides = array<i32>} : memref<1x256xf32, #tpu.memory_space<vmem>>, vector<1x256xf32>,
      } else {
      }
      %c2_i32_26 = arith.constant 2 : i32
      %44 = arith.cmpi eq, %arg0, %c2_i32_26 : i32
      %45 = arith.extui %44 : i1 to i32
      %c0_i32_27 = arith.constant 0 : i32
      %46 = arith.cmpi ne, %45, %c0_i32_27 : i32
      scf.if %46 {
        %c0_28 = arith.constant 0 : index
        %c0_29 = arith.constant 0 : index
        %47 = vector.load %arg18[%c0_28, %c0_29] : memref<1x256xf32, #tpu.memory_space<vmem>>, vector<1x256xf32>
        %48 = vector.broadcast %47 : vector<1x256xf32> to vector<512x256xf32>
        %49 = arith.mulf %40, %48 : vector<512x256xf32>
        %c0_30 = arith.constant 0 : index
        %c0_31 = arith.constant 0 : index
        %50 = vector.load %arg19[%c0_30, %c0_31] : memref<1x256xf32, #tpu.memory_space<vmem>>, vector<1x256xf32>
        %51 = vector.broadcast %50 : vector<1x256xf32> to vector<512x256xf32>
        %52 = arith.addf %49, %51 : vector<512x256xf32>
        %c0_32 = arith.constant 0 : index
        %c0_33 = arith.constant 0 : index
        %53 = vector.load %arg11[%c0_32, %c0_33] : memref<512x256xf32, #tpu.memory_space<vmem>>, vector<512x256xf32>
        tpu.vector_store %arg11[%c0_32, %c0_33], %52 {strides = array<i32>} : memref<512x256xf32, #tpu.memory_space<vmem>>, vector<512x256xf32>,
      } else {
      }
    } else {
    }
    return
  }
  func.func @transform_0(%arg0: i32, %arg1: i32) -> (i32, i32) {
    %c0_i32 = arith.constant 0 : i32
    %c0_i32_0 = arith.constant 0 : i32
    return %arg1, %c0_i32 : i32, i32
  }
  func.func @transform_1(%arg0: i32, %arg1: i32) -> (i32, i32) {
    %c0_i32 = arith.constant 0 : i32
    %c0_i32_0 = arith.constant 0 : i32
    %c0_i32_1 = arith.constant 0 : i32
    return %c0_i32, %c0_i32_0 : i32, i32
  }
  func.func @transform_2(%arg0: i32, %arg1: i32) -> (i32, i32) {
    %c0_i32 = arith.constant 0 : i32
    %c0_i32_0 = arith.constant 0 : i32
    %c0_i32_1 = arith.constant 0 : i32
    return %c0_i32, %c0_i32_0 : i32, i32
  }
  func.func @transform_3(%arg0: i32, %arg1: i32) -> (i32, i32) {
    %c0_i32 = arith.constant 0 : i32
    %c0_i32_0 = arith.constant 0 : i32
    %c0_i32_1 = arith.constant 0 : i32
    return %c0_i32, %c0_i32_0 : i32, i32
  }
  func.func @transform_4(%arg0: i32, %arg1: i32) -> (i32, i32) {
    %c0_i32 = arith.constant 0 : i32
    %c0_i32_0 = arith.constant 0 : i32
    %c0_i32_1 = arith.constant 0 : i32
    return %c0_i32, %c0_i32_0 : i32, i32
  }
  func.func @transform_5(%arg0: i32, %arg1: i32) -> (i32, i32) {
    %c0_i32 = arith.constant 0 : i32
    %c0_i32_0 = arith.constant 0 : i32
    %c0_i32_1 = arith.constant 0 : i32
    return %c0_i32, %c0_i32_0 : i32, i32
  }
  func.func @transform_6(%arg0: i32, %arg1: i32) -> (i32, i32) {
    %c0_i32 = arith.constant 0 : i32
    %c0_i32_0 = arith.constant 0 : i32
    %c0_i32_1 = arith.constant 0 : i32
    return %c0_i32, %c0_i32_0 : i32, i32
  }
  func.func @transform_7(%arg0: i32, %arg1: i32) -> (i32, i32) {
    %c0_i32 = arith.constant 0 : i32
    %c0_i32_0 = arith.constant 0 : i32
    %c0_i32_1 = arith.constant 0 : i32
    return %c0_i32, %c0_i32_0 : i32, i32
  }
  func.func @transform_8(%arg0: i32, %arg1: i32) -> (i32, i32) {
    %c0_i32 = arith.constant 0 : i32
    %c0_i32_0 = arith.constant 0 : i32
    %c0_i32_1 = arith.constant 0 : i32
    return %c0_i32, %c0_i32_0 : i32, i32
  }
  func.func @transform_9(%arg0: i32, %arg1: i32) -> (i32, i32) {
    %c2_i32 = arith.constant 2 : i32
    %0 = arith.cmpi eq, %arg0, %c2_i32 : i32
    %c0_i32 = arith.constant 0 : i32
    %1 = arith.select %0, %arg1, %c0_i32 : i32
    %c0_i32_0 = arith.constant 0 : i32
    %c0_i32_1 = arith.constant 0 : i32
    return %1, %c0_i32_0 : i32, i32
  }
}

module attributes {stable_mosaic.version = 11 : i64} {
  func.func @_fc_block_kernel(%arg0: i32, %arg1: i32, %arg2: memref<512x256xbf16, #tpu.memory_space<vmem>>, %arg3: memref<256x256xbf16, #tpu.memory_space<vmem>>, %arg4: memref<1x256xf32, #tpu.memory_space<vmem>>, %arg5: memref<1x256xf32, #tpu.memory_space<vmem>>, %arg6: memref<1x256xf32, #tpu.memory_space<vmem>>, %arg7: memref<256x256xbf16, #tpu.memory_space<vmem>>, %arg8: memref<1x256xf32, #tpu.memory_space<vmem>>, %arg9: memref<1x256xf32, #tpu.memory_space<vmem>>, %arg10: memref<1x256xf32, #tpu.memory_space<vmem>>, %arg11: memref<512x256xf32, #tpu.memory_space<vmem>>, %arg12: memref<1x256xf32, #tpu.memory_space<vmem>>, %arg13: memref<1x256xf32, #tpu.memory_space<vmem>>, %arg14: memref<1x256xf32, #tpu.memory_space<vmem>>, %arg15: memref<1x256xf32, #tpu.memory_space<vmem>>, %arg16: memref<1x256xf32, #tpu.memory_space<vmem>>, %arg17: memref<1x256xf32, #tpu.memory_space<vmem>>, %arg18: memref<1x256xf32, #tpu.memory_space<vmem>>, %arg19: memref<1x256xf32, #tpu.memory_space<vmem>>) attributes {dimension_semantics = [#tpu.dimension_semantics<arbitrary>, #tpu.dimension_semantics<arbitrary>], iteration_bounds = array<i64: 3, 1>, scalar_prefetch = 0 : i64, scratch_operands = 8 : i64, tpu.core_type = #tpu.core_type<tc>, window_params = [{transform_indices = @transform_0, window_bounds = array<i64: 512, 256>}, {pipeline_mode = #tpu.pipeline_mode<synchronous>, transform_indices = @transform_1, window_bounds = array<i64: 256, 256>}, {pipeline_mode = #tpu.pipeline_mode<synchronous>, transform_indices = @transform_2, window_bounds = array<i64: 1, 256>}, {pipeline_mode = #tpu.pipeline_mode<synchronous>, transform_indices = @transform_3, window_bounds = array<i64: 1, 256>}, {pipeline_mode = #tpu.pipeline_mode<synchronous>, transform_indices = @transform_4, window_bounds = array<i64: 1, 256>}, {pipeline_mode = #tpu.pipeline_mode<synchronous>, transform_indices = @transform_5, window_bounds = array<i64: 256, 256>}, {pipeline_mode = #tpu.pipeline_mode<synchronous>, transform_indices = @transform_6, window_bounds = array<i64: 1, 256>}, {pipeline_mode = #tpu.pipeline_mode<synchronous>, transform_indices = @transform_7, window_bounds = array<i64: 1, 256>}, {pipeline_mode = #tpu.pipeline_mode<synchronous>, transform_indices = @transform_8, window_bounds = array<i64: 1, 256>}, {transform_indices = @transform_9, window_bounds = array<i64: 512, 256>}]} {
    %c0_i32 = arith.constant 0 : i32
    %0 = arith.cmpi eq, %arg1, %c0_i32 : i32
    %c0_i32_0 = arith.constant 0 : i32
    %1 = arith.cmpi eq, %arg0, %c0_i32_0 : i32
    %2 = arith.andi %1, %0 : i1
    %3 = arith.extui %2 : i1 to i32
    %c0_i32_1 = arith.constant 0 : i32
    %4 = arith.cmpi ne, %3, %c0_i32_1 : i32
    scf.if %4 {
      %cst_14 = arith.constant 0.000000e+00 : f32
      %27 = vector.broadcast %cst_14 : f32 to vector<1x256xf32>
      %c0_15 = arith.constant 0 : index
      %c0_16 = arith.constant 0 : index
      %28 = vector.load %arg12[%c0_15, %c0_16] : memref<1x256xf32, #tpu.memory_space<vmem>>, vector<1x256xf32>
      tpu.vector_store %arg12[%c0_15, %c0_16], %27 {strides = array<i32>} : memref<1x256xf32, #tpu.memory_space<vmem>>, vector<1x256xf32>,
      %cst_17 = arith.constant 0.000000e+00 : f32
      %29 = vector.broadcast %cst_17 : f32 to vector<1x256xf32>
      %c0_18 = arith.constant 0 : index
      %c0_19 = arith.constant 0 : index
      %30 = vector.load %arg13[%c0_18, %c0_19] : memref<1x256xf32, #tpu.memory_space<vmem>>, vector<1x256xf32>
      tpu.vector_store %arg13[%c0_18, %c0_19], %29 {strides = array<i32>} : memref<1x256xf32, #tpu.memory_space<vmem>>, vector<1x256xf32>,
    } else {
    }
    %c1_i32 = arith.constant 1 : i32
    %5 = arith.cmpi eq, %arg0, %c1_i32 : i32
    %6 = arith.andi %5, %0 : i1
    %7 = arith.extui %6 : i1 to i32
    %c0_i32_2 = arith.constant 0 : i32
    %8 = arith.cmpi ne, %7, %c0_i32_2 : i32
    scf.if %8 {
      %c0_14 = arith.constant 0 : index
      %c0_15 = arith.constant 0 : index
      %27 = vector.load %arg12[%c0_14, %c0_15] : memref<1x256xf32, #tpu.memory_space<vmem>>, vector<1x256xf32>
      %cst_16 = arith.constant 0.001953125 : f32
      %28 = vector.broadcast %cst_16 : f32 to vector<1x256xf32>
      %29 = arith.mulf %27, %28 : vector<1x256xf32>
      %c0_17 = arith.constant 0 : index
      %c0_18 = arith.constant 0 : index
      %30 = vector.load %arg13[%c0_17, %c0_18] : memref<1x256xf32, #tpu.memory_space<vmem>>, vector<1x256xf32>
      %cst_19 = arith.constant 0.001953125 : f32
      %31 = vector.broadcast %cst_19 : f32 to vector<1x256xf32>
      %32 = arith.mulf %30, %31 : vector<1x256xf32>
      %33 = arith.mulf %29, %29 : vector<1x256xf32>
      %34 = arith.subf %32, %33 : vector<1x256xf32>
      %cst_20 = arith.constant 0.000000e+00 : f32
      %35 = vector.broadcast %cst_20 : f32 to vector<1x256xf32>
      %36 = arith.maximumf %34, %35 : vector<1x256xf32>
      %c0_21 = arith.constant 0 : index
      %c0_22 = arith.constant 0 : index
      %37 = vector.load %arg5[%c0_21, %c0_22] : memref<1x256xf32, #tpu.memory_space<vmem>>, vector<1x256xf32>
      %cst_23 = arith.constant 9.99999974E-6 : f32
      %38 = vector.broadcast %cst_23 : f32 to vector<1x256xf32>
      %39 = arith.addf %36, %38 : vector<1x256xf32>
      %40 = math.rsqrt %39 : vector<1x256xf32>
      %41 = arith.mulf %37, %40 : vector<1x256xf32>
      %c0_24 = arith.constant 0 : index
      %c0_25 = arith.constant 0 : index
      %42 = vector.load %arg16[%c0_24, %c0_25] : memref<1x256xf32, #tpu.memory_space<vmem>>, vector<1x256xf32>
      tpu.vector_store %arg16[%c0_24, %c0_25], %41 {strides = array<i32>} : memref<1x256xf32, #tpu.memory_space<vmem>>, vector<1x256xf32>,
      %c0_26 = arith.constant 0 : index
      %c0_27 = arith.constant 0 : index
      %43 = vector.load %arg6[%c0_26, %c0_27] : memref<1x256xf32, #tpu.memory_space<vmem>>, vector<1x256xf32>
      %44 = arith.mulf %29, %41 : vector<1x256xf32>
      %45 = arith.subf %43, %44 : vector<1x256xf32>
      %c0_28 = arith.constant 0 : index
      %c0_29 = arith.constant 0 : index
      %46 = vector.load %arg17[%c0_28, %c0_29] : memref<1x256xf32, #tpu.memory_space<vmem>>, vector<1x256xf32>
      tpu.vector_store %arg17[%c0_28, %c0_29], %45 {strides = array<i32>} : memref<1x256xf32, #tpu.memory_space<vmem>>, vector<1x256xf32>,
      %cst_30 = arith.constant 0.000000e+00 : f32
      %47 = vector.broadcast %cst_30 : f32 to vector<1x256xf32>
      %c0_31 = arith.constant 0 : index
      %c0_32 = arith.constant 0 : index
      %48 = vector.load %arg14[%c0_31, %c0_32] : memref<1x256xf32, #tpu.memory_space<vmem>>, vector<1x256xf32>
      tpu.vector_store %arg14[%c0_31, %c0_32], %47 {strides = array<i32>} : memref<1x256xf32, #tpu.memory_space<vmem>>, vector<1x256xf32>,
      %cst_33 = arith.constant 0.000000e+00 : f32
      %49 = vector.broadcast %cst_33 : f32 to vector<1x256xf32>
      %c0_34 = arith.constant 0 : index
      %c0_35 = arith.constant 0 : index
      %50 = vector.load %arg15[%c0_34, %c0_35] : memref<1x256xf32, #tpu.memory_space<vmem>>, vector<1x256xf32>
      tpu.vector_store %arg15[%c0_34, %c0_35], %49 {strides = array<i32>} : memref<1x256xf32, #tpu.memory_space<vmem>>, vector<1x256xf32>,
    } else {
    }
    %c2_i32 = arith.constant 2 : i32
    %9 = arith.cmpi eq, %arg0, %c2_i32 : i32
    %10 = arith.andi %9, %0 : i1
    %11 = arith.extui %10 : i1 to i32
    %c0_i32_3 = arith.constant 0 : i32
    %12 = arith.cmpi ne, %11, %c0_i32_3 : i32
    scf.if %12 {
      %c0_14 = arith.constant 0 : index
      %c0_15 = arith.constant 0 : index
      %27 = vector.load %arg14[%c0_14, %c0_15] : memref<1x256xf32, #tpu.memory_space<vmem>>, vector<1x256xf32>
      %cst_16 = arith.constant 0.001953125 : f32
      %28 = vector.broadcast %cst_16 : f32 to vector<1x256xf32>
      %29 = arith.mulf %27, %28 : vector<1x256xf32>
      %c0_17 = arith.constant 0 : index
      %c0_18 = arith.constant 0 : index
      %30 = vector.load %arg15[%c0_17, %c0_18] : memref<1x256xf32, #tpu.memory_space<vmem>>, vector<1x256xf32>
      %cst_19 = arith.constant 0.001953125 : f32
      %31 = vector.broadcast %cst_19 : f32 to vector<1x256xf32>
      %32 = arith.mulf %30, %31 : vector<1x256xf32>
      %33 = arith.mulf %29, %29 : vector<1x256xf32>
      %34 = arith.subf %32, %33 : vector<1x256xf32>
      %cst_20 = arith.constant 0.000000e+00 : f32
      %35 = vector.broadcast %cst_20 : f32 to vector<1x256xf32>
      %36 = arith.maximumf %34, %35 : vector<1x256xf32>
      %c0_21 = arith.constant 0 : index
      %c0_22 = arith.constant 0 : index
      %37 = vector.load %arg9[%c0_21, %c0_22] : memref<1x256xf32, #tpu.memory_space<vmem>>, vector<1x256xf32>
      %cst_23 = arith.constant 9.99999974E-6 : f32
      %38 = vector.broadcast %cst_23 : f32 to vector<1x256xf32>
      %39 = arith.addf %36, %38 : vector<1x256xf32>
      %40 = math.rsqrt %39 : vector<1x256xf32>
      %41 = arith.mulf %37, %40 : vector<1x256xf32>
      %c0_24 = arith.constant 0 : index
      %c0_25 = arith.constant 0 : index
      %42 = vector.load %arg18[%c0_24, %c0_25] : memref<1x256xf32, #tpu.memory_space<vmem>>, vector<1x256xf32>
      tpu.vector_store %arg18[%c0_24, %c0_25], %41 {strides = array<i32>} : memref<1x256xf32, #tpu.memory_space<vmem>>, vector<1x256xf32>,
      %c0_26 = arith.constant 0 : index
      %c0_27 = arith.constant 0 : index
      %43 = vector.load %arg10[%c0_26, %c0_27] : memref<1x256xf32, #tpu.memory_space<vmem>>, vector<1x256xf32>
      %44 = arith.mulf %29, %41 : vector<1x256xf32>
      %45 = arith.subf %43, %44 : vector<1x256xf32>
      %c0_28 = arith.constant 0 : index
      %c0_29 = arith.constant 0 : index
      %46 = vector.load %arg19[%c0_28, %c0_29] : memref<1x256xf32, #tpu.memory_space<vmem>>, vector<1x256xf32>
      tpu.vector_store %arg19[%c0_28, %c0_29], %45 {strides = array<i32>} : memref<1x256xf32, #tpu.memory_space<vmem>>, vector<1x256xf32>,
    } else {
    }
    %c0 = arith.constant 0 : index
    %c0_4 = arith.constant 0 : index
    %13 = vector.load %arg2[%c0, %c0_4] : memref<512x256xbf16, #tpu.memory_space<vmem>>, vector<512x256xbf16>
    %c0_5 = arith.constant 0 : index
    %c0_6 = arith.constant 0 : index
    %14 = vector.load %arg3[%c0_5, %c0_6] : memref<256x256xbf16, #tpu.memory_space<vmem>>, vector<256x256xbf16>
    %cst = arith.constant dense<0.000000e+00> : vector<512x256xf32>
    %15 = tpu.matmul %13, %14, %cst {dimension_numbers = #tpu.dot_dimension_numbers<[1], [0], [0], [1], [0, 0, 1, 1], [], []>} : vector<512x256xbf16>, vector<256x256xbf16>, vector<512x256xf32> -> vector<512x256xf32>
    %c0_7 = arith.constant 0 : index
    %c0_8 = arith.constant 0 : index
    %16 = vector.load %arg4[%c0_7, %c0_8] : memref<1x256xf32, #tpu.memory_space<vmem>>, vector<1x256xf32>
    %17 = vector.broadcast %16 : vector<1x256xf32> to vector<512x256xf32>
    %18 = arith.addf %15, %17 : vector<512x256xf32>
    %cst_9 = arith.constant 0.000000e+00 : f32
    %19 = vector.broadcast %cst_9 : f32 to vector<512x256xf32>
    %20 = arith.maximumf %18, %19 : vector<512x256xf32>
    %c0_i32_10 = arith.constant 0 : i32
    %21 = arith.cmpi eq, %arg0, %c0_i32_10 : i32
    %22 = arith.extui %21 : i1 to i32
    %c0_i32_11 = arith.constant 0 : i32
    %23 = arith.cmpi ne, %22, %c0_i32_11 : i32
    scf.if %23 {
      %c0_14 = arith.constant 0 : index
      %c0_15 = arith.constant 0 : index
      %27 = vector.load %arg12[%c0_14, %c0_15] : memref<1x256xf32, #tpu.memory_space<vmem>>, vector<1x256xf32>
      %cst_16 = arith.constant dense<0.000000e+00> : vector<256xf32>
      %28 = vector.multi_reduction <add>, %20, %cst_16 [0] : vector<512x256xf32> to vector<256xf32>
      %29 = vector.shape_cast %28 : vector<256xf32> to vector<1x256xf32>
      %30 = arith.addf %27, %29 : vector<1x256xf32>
      %c0_17 = arith.constant 0 : index
      %c0_18 = arith.constant 0 : index
      %31 = vector.load %arg12[%c0_17, %c0_18] : memref<1x256xf32, #tpu.memory_space<vmem>>, vector<1x256xf32>
      tpu.vector_store %arg12[%c0_17, %c0_18], %30 {strides = array<i32>} : memref<1x256xf32, #tpu.memory_space<vmem>>, vector<1x256xf32>,
      %c0_19 = arith.constant 0 : index
      %c0_20 = arith.constant 0 : index
      %32 = vector.load %arg13[%c0_19, %c0_20] : memref<1x256xf32, #tpu.memory_space<vmem>>, vector<1x256xf32>
      %33 = arith.mulf %20, %20 : vector<512x256xf32>
      %cst_21 = arith.constant dense<0.000000e+00> : vector<256xf32>
      %34 = vector.multi_reduction <add>, %33, %cst_21 [0] : vector<512x256xf32> to vector<256xf32>
      %35 = vector.shape_cast %34 : vector<256xf32> to vector<1x256xf32>
      %36 = arith.addf %32, %35 : vector<1x256xf32>
      %c0_22 = arith.constant 0 : index
      %c0_23 = arith.constant 0 : index
      %37 = vector.load %arg13[%c0_22, %c0_23] : memref<1x256xf32, #tpu.memory_space<vmem>>, vector<1x256xf32>
      tpu.vector_store %arg13[%c0_22, %c0_23], %36 {strides = array<i32>} : memref<1x256xf32, #tpu.memory_space<vmem>>, vector<1x256xf32>,
    } else {
    }
    %c1_i32_12 = arith.constant 1 : i32
    %24 = arith.cmpi sge, %arg0, %c1_i32_12 : i32
    %25 = arith.extui %24 : i1 to i32
    %c0_i32_13 = arith.constant 0 : i32
    %26 = arith.cmpi ne, %25, %c0_i32_13 : i32
    scf.if %26 {
      %c0_14 = arith.constant 0 : index
      %c0_15 = arith.constant 0 : index
      %27 = vector.load %arg16[%c0_14, %c0_15] : memref<1x256xf32, #tpu.memory_space<vmem>>, vector<1x256xf32>
      %28 = vector.broadcast %27 : vector<1x256xf32> to vector<512x256xf32>
      %29 = arith.mulf %20, %28 : vector<512x256xf32>
      %c0_16 = arith.constant 0 : index
      %c0_17 = arith.constant 0 : index
      %30 = vector.load %arg17[%c0_16, %c0_17] : memref<1x256xf32, #tpu.memory_space<vmem>>, vector<1x256xf32>
      %31 = vector.broadcast %30 : vector<1x256xf32> to vector<512x256xf32>
      %32 = arith.addf %29, %31 : vector<512x256xf32>
      %33 = arith.truncf %32 : vector<512x256xf32> to vector<512x256xbf16>
      %c0_18 = arith.constant 0 : index
      %c0_19 = arith.constant 0 : index
      %34 = vector.load %arg7[%c0_18, %c0_19] : memref<256x256xbf16, #tpu.memory_space<vmem>>, vector<256x256xbf16>
      %cst_20 = arith.constant dense<0.000000e+00> : vector<512x256xf32>
      %35 = tpu.matmul %33, %34, %cst_20 {dimension_numbers = #tpu.dot_dimension_numbers<[1], [0], [0], [1], [0, 0, 1, 1], [], []>} : vector<512x256xbf16>, vector<256x256xbf16>, vector<512x256xf32> -> vector<512x256xf32>
      %c0_21 = arith.constant 0 : index
      %c0_22 = arith.constant 0 : index
      %36 = vector.load %arg8[%c0_21, %c0_22] : memref<1x256xf32, #tpu.memory_space<vmem>>, vector<1x256xf32>
      %37 = vector.broadcast %36 : vector<1x256xf32> to vector<512x256xf32>
      %38 = arith.addf %35, %37 : vector<512x256xf32>
      %cst_23 = arith.constant 0.000000e+00 : f32
      %39 = vector.broadcast %cst_23 : f32 to vector<512x256xf32>
      %40 = arith.maximumf %38, %39 : vector<512x256xf32>
      %c1_i32_24 = arith.constant 1 : i32
      %41 = arith.cmpi eq, %arg0, %c1_i32_24 : i32
      %42 = arith.extui %41 : i1 to i32
      %c0_i32_25 = arith.constant 0 : i32
      %43 = arith.cmpi ne, %42, %c0_i32_25 : i32
      scf.if %43 {
        %c0_28 = arith.constant 0 : index
        %c0_29 = arith.constant 0 : index
        %47 = vector.load %arg14[%c0_28, %c0_29] : memref<1x256xf32, #tpu.memory_space<vmem>>, vector<1x256xf32>
        %cst_30 = arith.constant dense<0.000000e+00> : vector<256xf32>
        %48 = vector.multi_reduction <add>, %40, %cst_30 [0] : vector<512x256xf32> to vector<256xf32>
        %49 = vector.shape_cast %48 : vector<256xf32> to vector<1x256xf32>
        %50 = arith.addf %47, %49 : vector<1x256xf32>
        %c0_31 = arith.constant 0 : index
        %c0_32 = arith.constant 0 : index
        %51 = vector.load %arg14[%c0_31, %c0_32] : memref<1x256xf32, #tpu.memory_space<vmem>>, vector<1x256xf32>
        tpu.vector_store %arg14[%c0_31, %c0_32], %50 {strides = array<i32>} : memref<1x256xf32, #tpu.memory_space<vmem>>, vector<1x256xf32>,
        %c0_33 = arith.constant 0 : index
        %c0_34 = arith.constant 0 : index
        %52 = vector.load %arg15[%c0_33, %c0_34] : memref<1x256xf32, #tpu.memory_space<vmem>>, vector<1x256xf32>
        %53 = arith.mulf %40, %40 : vector<512x256xf32>
        %cst_35 = arith.constant dense<0.000000e+00> : vector<256xf32>
        %54 = vector.multi_reduction <add>, %53, %cst_35 [0] : vector<512x256xf32> to vector<256xf32>
        %55 = vector.shape_cast %54 : vector<256xf32> to vector<1x256xf32>
        %56 = arith.addf %52, %55 : vector<1x256xf32>
        %c0_36 = arith.constant 0 : index
        %c0_37 = arith.constant 0 : index
        %57 = vector.load %arg15[%c0_36, %c0_37] : memref<1x256xf32, #tpu.memory_space<vmem>>, vector<1x256xf32>
        tpu.vector_store %arg15[%c0_36, %c0_37], %56 {strides = array<i32>} : memref<1x256xf32, #tpu.memory_space<vmem>>, vector<1x256xf32>,
      } else {
      }
      %c2_i32_26 = arith.constant 2 : i32
      %44 = arith.cmpi eq, %arg0, %c2_i32_26 : i32
      %45 = arith.extui %44 : i1 to i32
      %c0_i32_27 = arith.constant 0 : i32
      %46 = arith.cmpi ne, %45, %c0_i32_27 : i32
      scf.if %46 {
        %c0_28 = arith.constant 0 : index
        %c0_29 = arith.constant 0 : index
        %47 = vector.load %arg18[%c0_28, %c0_29] : memref<1x256xf32, #tpu.memory_space<vmem>>, vector<1x256xf32>
        %48 = vector.broadcast %47 : vector<1x256xf32> to vector<512x256xf32>
        %49 = arith.mulf %40, %48 : vector<512x256xf32>
        %c0_30 = arith.constant 0 : index
        %c0_31 = arith.constant 0 : index
        %50 = vector.load %arg19[%c0_30, %c0_31] : memref<1x256xf32, #tpu.memory_space<vmem>>, vector<1x256xf32>
        %51 = vector.broadcast %50 : vector<1x256xf32> to vector<512x256xf32>
        %52 = arith.addf %49, %51 : vector<512x256xf32>
        %c0_32 = arith.constant 0 : index
        %c0_33 = arith.constant 0 : index
        %53 = vector.load %arg11[%c0_32, %c0_33] : memref<512x256xf32, #tpu.memory_space<vmem>>, vector<512x256xf32>
        tpu.vector_store %arg11[%c0_32, %c0_33], %52 {strides = array<i32>} : memref<512x256xf32, #tpu.memory_space<vmem>>, vector<512x256xf32>,
      } else {
      }
    } else {
    }
    return
  }
  func.func @transform_0(%arg0: i32, %arg1: i32) -> (i32, i32) {
    %c0_i32 = arith.constant 0 : i32
    %c0_i32_0 = arith.constant 0 : i32
    return %arg1, %c0_i32 : i32, i32
  }
  func.func @transform_1(%arg0: i32, %arg1: i32) -> (i32, i32) {
    %c0_i32 = arith.constant 0 : i32
    %c0_i32_0 = arith.constant 0 : i32
    %c0_i32_1 = arith.constant 0 : i32
    return %c0_i32, %c0_i32_0 : i32, i32
  }
  func.func @transform_2(%arg0: i32, %arg1: i32) -> (i32, i32) {
    %c0_i32 = arith.constant 0 : i32
    %c0_i32_0 = arith.constant 0 : i32
    %c0_i32_1 = arith.constant 0 : i32
    return %c0_i32, %c0_i32_0 : i32, i32
  }
  func.func @transform_3(%arg0: i32, %arg1: i32) -> (i32, i32) {
    %c0_i32 = arith.constant 0 : i32
    %c0_i32_0 = arith.constant 0 : i32
    %c0_i32_1 = arith.constant 0 : i32
    return %c0_i32, %c0_i32_0 : i32, i32
  }
  func.func @transform_4(%arg0: i32, %arg1: i32) -> (i32, i32) {
    %c0_i32 = arith.constant 0 : i32
    %c0_i32_0 = arith.constant 0 : i32
    %c0_i32_1 = arith.constant 0 : i32
    return %c0_i32, %c0_i32_0 : i32, i32
  }
  func.func @transform_5(%arg0: i32, %arg1: i32) -> (i32, i32) {
    %c0_i32 = arith.constant 0 : i32
    %c0_i32_0 = arith.constant 0 : i32
    %c0_i32_1 = arith.constant 0 : i32
    return %c0_i32, %c0_i32_0 : i32, i32
  }
  func.func @transform_6(%arg0: i32, %arg1: i32) -> (i32, i32) {
    %c0_i32 = arith.constant 0 : i32
    %c0_i32_0 = arith.constant 0 : i32
    %c0_i32_1 = arith.constant 0 : i32
    return %c0_i32, %c0_i32_0 : i32, i32
  }
  func.func @transform_7(%arg0: i32, %arg1: i32) -> (i32, i32) {
    %c0_i32 = arith.constant 0 : i32
    %c0_i32_0 = arith.constant 0 : i32
    %c0_i32_1 = arith.constant 0 : i32
    return %c0_i32, %c0_i32_0 : i32, i32
  }
  func.func @transform_8(%arg0: i32, %arg1: i32) -> (i32, i32) {
    %c0_i32 = arith.constant 0 : i32
    %c0_i32_0 = arith.constant 0 : i32
    %c0_i32_1 = arith.constant 0 : i32
    return %c0_i32, %c0_i32_0 : i32, i32
  }
  func.func @transform_9(%arg0: i32, %arg1: i32) -> (i32, i32) {
    %c2_i32 = arith.constant 2 : i32
    %0 = arith.cmpi eq, %arg0, %c2_i32 : i32
    %c0_i32 = arith.constant 0 : i32
    %1 = arith.select %0, %arg1, %c0_i32 : i32
    %c0_i32_0 = arith.constant 0 : i32
    %c0_i32_1 = arith.constant 0 : i32
    return %1, %c0_i32_0 : i32, i32
  }
}

</mosaic_0001>

<llo_original>
// kernel: tpu_custom_call.1
$region0: #{tpu_custom_call.1}
  #allocation0 [shape = 'u32[]', space=smem, size = 0x4, offset = 0x4, fixed_abs, tag = 'smem constant byte address 0x4 - core index']
  #allocation1 [shape = 'u32[72,128]{1,0:T(1,128)}', space=vmem, size = 0x9000, scoped, tag = 'internal scratch']
  #allocation2 [shape = 'f32[1,256]{1,0:T(1,128)}', space=vmem, size = 0x400, scoped, tag = 'scratch operand']
  #allocation3 [shape = 'f32[1,256]{1,0:T(1,128)}', space=vmem, size = 0x400, scoped, tag = 'scratch operand']
  #allocation4 [shape = 'f32[1,256]{1,0:T(1,128)}', space=vmem, size = 0x400, scoped, tag = 'scratch operand']
  #allocation5 [shape = 'f32[1,256]{1,0:T(1,128)}', space=vmem, size = 0x400, scoped, tag = 'scratch operand']
  #allocation6 [shape = 'f32[1,256]{1,0:T(1,128)}', space=vmem, size = 0x400, scoped, tag = 'scratch operand']
  #allocation7 [shape = 'f32[1,256]{1,0:T(1,128)}', space=vmem, size = 0x400, scoped, tag = 'scratch operand']
  #allocation8 [shape = 'f32[1,256]{1,0:T(1,128)}', space=vmem, size = 0x400, scoped, tag = 'scratch operand']
  #allocation9 [shape = 'f32[1,256]{1,0:T(1,128)}', space=vmem, size = 0x400, scoped, tag = 'scratch operand']
  %s0 = inlined_call_operand.hbm [shape: bf16[512,256], index: 0, kind: input, shape index: {}]
  %s1 = inlined_call_operand.hbm [shape: bf16[256,256], index: 1, kind: input, shape index: {}]
  %s2 = inlined_call_operand.hbm [shape: f32[1,256], index: 2, kind: input, shape index: {}]
  %s3 = inlined_call_operand.vmem [shape: f32[1,256], index: 3, kind: input, shape index: {}]
  %s4 = inlined_call_operand.hbm [shape: f32[1,256], index: 4, kind: input, shape index: {}]
  %s5 = inlined_call_operand.hbm [shape: bf16[256,256], index: 5, kind: input, shape index: {}]
  %s6 = inlined_call_operand.vmem [shape: f32[1,256], index: 6, kind: input, shape index: {}]
  %s7 = inlined_call_operand.vmem [shape: f32[1,256], index: 7, kind: input, shape index: {}]
  %s8 = inlined_call_operand.hbm [shape: f32[1,256], index: 8, kind: input, shape index: {}]
  %s9 = inlined_call_operand.hbm [shape: f32[512,256], index: 9, kind: output, shape index: {}]
  %s10 = sld [smem:[#allocation0]]
  $region121: #{tpu_custom_call.1} parent=0
    _
  %s12 = ssub.s32 1, %s10
  %s13 = scalar_select 0, %s12, %s10
  $region1: #{tpu_custom_call.1} parent=0
    #allocation10 [shape = 'u8[262144]{0}', space=vmem, size = 0x40000, scoped, tag = 'input window, operand 0, single buffered']
    #allocation11 [shape = 's32[2]{0}', space=sflag, size = 0x8, scoped, tag = 'scoped memory for tpu_custom_call.1']
    #allocation12 [shape = 's32[2]{0}', space=sflag, size = 0x8, scoped, tag = 'scoped memory for tpu_custom_call.1']
    #allocation13 [shape = 'u8[131072]{0}', space=vmem, size = 0x20000, scoped, tag = 'input window, operand 1, single buffered']
    #allocation14 [shape = 's32[1]{0}', space=sflag, size = 0x4, scoped, tag = 'scoped memory for tpu_custom_call.1']
    #allocation15 [shape = 'u8[1024]{0}', space=vmem, size = 0x400, scoped, tag = 'input window, operand 2, single buffered']
    #allocation16 [shape = 'u8[1024]{0}', space=vmem, size = 0x400, scoped, tag = 'input window, operand 4, single buffered']
    #allocation17 [shape = 's32[1]{0}', space=sflag, size = 0x4, scoped, tag = 'scoped memory for tpu_custom_call.1']
    #allocation18 [shape = 'u8[131072]{0}', space=vmem, size = 0x20000, scoped, tag = 'input window, operand 5, single buffered']
    #allocation19 [shape = 'u8[1024]{0}', space=vmem, size = 0x400, scoped, tag = 'input window, operand 8, single buffered']
    #allocation20 [shape = 's32[1]{0}', space=sflag, size = 0x4, scoped, tag = 'scoped memory for tpu_custom_call.1']
    #allocation21 [shape = 'u8[1048576]{0}', space=vmem, size = 0x100000, scoped, tag = 'output window, operand 0']
    %14 = vsyncpa [#allocation11], 0
    %15 = vsyncpa [#allocation14], 0
    %16 = vsyncpa [#allocation17], 0
    %17 = vsyncpa [#allocation20], 0
    %18 = vsyncpa [#allocation12], 0
    %s19 = scalar_lea.sflag [#allocation12], 1
    %20 = vsyncpa %s19, 0
    loop: start=0, step=1, limit=5
    $region2: #{tpu_custom_call.1} parent=1 // loop_pre_header
      _
    $region3: #{tpu_custom_call.1} parent=1 // loop_header
      %s22 = sphi 0, %s26
      %p23 = scmp.ge.s32.totalorder %s22, 5
      %s29 = sphi 0, %s41
      %s30 = sphi 0, %s37
      %s31 = sphi 0, %s29
      %s32 = sphi 0, %s30
      %s33 = sphi 0, %s31
      %s34 = sphi 0, %s32
      %s44 = sphi 0, %s46
      %s47 = sphi 0, %s44
      %s48 = sphi 0, %s47
      %s64 = sphi 0, %s48
      %s68 = sphi 0, %s68
      %s70 = sphi 0, %s68
      %s71 = sphi 0, %s70
      %s85 = sphi 0, %s71
      %s89 = sphi 0, %s89
      %s91 = sphi 0, %s89
      %s92 = sphi 0, %s91
      %s106 = sphi 0, %s92
      %s110 = sphi 0, %s110
      %s112 = sphi 0, %s110
      %s113 = sphi 0, %s112
      %s127 = sphi 0, %s113
      %s131 = sphi 0, %s131
      %s133 = sphi 0, %s131
      %s134 = sphi 0, %s133
      %s148 = sphi 0, %s134
      %s152 = sphi 0, %s152
      %s154 = sphi 0, %s152
      %s155 = sphi 0, %s154
      %s169 = sphi 0, %s155
      %s173 = sphi 0, %s173
      %s175 = sphi 0, %s173
      %s176 = sphi 0, %s175
      %s190 = sphi 0, %s176
      %s194 = sphi 0, %s194
      %s196 = sphi 0, %s194
      %s197 = sphi 0, %s196
      %s211 = sphi 0, %s197
      %s215 = sphi 0, %s215
      %s217 = sphi 0, %s215
      %s218 = sphi 0, %s217
      %s232 = sphi 0, %s218
      %s242 = sphi 0, %s244
      %s245 = sphi 0, %s242
      %s246 = sphi 0, %s245
      %s262 = sphi 0, %s246
    $region4: #{tpu_custom_call.1} parent=1 // loop_header_branch
      %25 = sbr.rel (%p23) target = $region8
    $region5: #{tpu_custom_call.1} parent=1 // loop_body
      %s27 = ssub.s32 %s22, 1
      %s28 = ssub.s32 %s22, 2
      %s35 = sadd.s32 1, %s30
      %p36 = scmp.ge.s32.totalorder %s35, 1
      %s37 = scalar_select %p36, 0, %s35
      %s38 = sadd.s32 1, %s29
      %s39 = scalar_select %p36, %s38, %s29
      %p40 = scmp.ge.s32.totalorder %s39, 3
      %s41 = scalar_select %p40, 0, %s39
      %s42 = ssub.s32 %s30, %s37
      %p43 = scmp.eq.s32.totalorder %s42, 0
      %s45 = sadd.s32 %s44, 1
      %s46 = scalar_select %p43, %s44, %s45
      %p49 = pneg %p43
      %p50 = scmp.eq.s32.totalorder %s22, 2
      %p51 = por %p49, %p50
      %p52 = scmp.ne.s32.totalorder %s44, %s47
      %p53 = scmp.eq.s32.totalorder %s22, 0
      %p54 = por %p52, %p53
      %p55 = scmp.ne.s32.totalorder %s44, %s47
      %p56 = scmp.eq.s32.totalorder %s27, 2
      %p57 = por %p55, %p56
      %p58 = scmp.ne.s32.totalorder %s47, %s48
      %p59 = scmp.eq.s32.totalorder %s27, 0
      %p60 = por %p58, %p59
      %p61 = scmp.ne.s32.totalorder %s47, %s48
      %p62 = scmp.eq.s32.totalorder %s28, 2
      %p63 = por %p61, %p62
      %p65 = scmp.ne.s32.totalorder %s48, %s64
      %p66 = scmp.eq.s32.totalorder %s28, 0
      %p67 = por %p65, %p66
      %s69 = sadd.s32 %s68, 1
      %p72 = scmp.eq.s32.totalorder %s22, 2
      %p73 = scmp.ne.s32.totalorder %s68, %s70
      %p74 = scmp.eq.s32.totalorder %s22, 0
      %p75 = por %p73, %p74
      %p76 = scmp.ne.s32.totalorder %s68, %s70
      %p77 = scmp.eq.s32.totalorder %s27, 2
      %p78 = por %p76, %p77
      %p79 = scmp.ne.s32.totalorder %s70, %s71
      %p80 = scmp.eq.s32.totalorder %s27, 0
      %p81 = por %p79, %p80
      %p82 = scmp.ne.s32.totalorder %s70, %s71
      %p83 = scmp.eq.s32.totalorder %s28, 2
      %p84 = por %p82, %p83
      %p86 = scmp.ne.s32.totalorder %s71, %s85
      %p87 = scmp.eq.s32.totalorder %s28, 0
      %p88 = por %p86, %p87
      %s90 = sadd.s32 %s89, 1
      %p93 = scmp.eq.s32.totalorder %s22, 2
      %p94 = scmp.ne.s32.totalorder %s89, %s91
      %p95 = scmp.eq.s32.totalorder %s22, 0
      %p96 = por %p94, %p95
      %p97 = scmp.ne.s32.totalorder %s89, %s91
      %p98 = scmp.eq.s32.totalorder %s27, 2
      %p99 = por %p97, %p98
      %p100 = scmp.ne.s32.totalorder %s91, %s92
      %p101 = scmp.eq.s32.totalorder %s27, 0
      %p102 = por %p100, %p101
      %p103 = scmp.ne.s32.totalorder %s91, %s92
      %p104 = scmp.eq.s32.totalorder %s28, 2
      %p105 = por %p103, %p104
      %p107 = scmp.ne.s32.totalorder %s92, %s106
      %p108 = scmp.eq.s32.totalorder %s28, 0
      %p109 = por %p107, %p108
      %s111 = sadd.s32 %s110, 1
      %p114 = scmp.eq.s32.totalorder %s22, 2
      %p115 = scmp.ne.s32.totalorder %s110, %s112
      %p116 = scmp.eq.s32.totalorder %s22, 0
      %p117 = por %p115, %p116
      %p118 = scmp.ne.s32.totalorder %s110, %s112
      %p119 = scmp.eq.s32.totalorder %s27, 2
      %p120 = por %p118, %p119
      %p121 = scmp.ne.s32.totalorder %s112, %s113
      %p122 = scmp.eq.s32.totalorder %s27, 0
      %p123 = por %p121, %p122
      %p124 = scmp.ne.s32.totalorder %s112, %s113
      %p125 = scmp.eq.s32.totalorder %s28, 2
      %p126 = por %p124, %p125
      %p128 = scmp.ne.s32.totalorder %s113, %s127
      %p129 = scmp.eq.s32.totalorder %s28, 0
      %p130 = por %p128, %p129
      %s132 = sadd.s32 %s131, 1
      %p135 = scmp.eq.s32.totalorder %s22, 2
      %p136 = scmp.ne.s32.totalorder %s131, %s133
      %p137 = scmp.eq.s32.totalorder %s22, 0
      %p138 = por %p136, %p137
      %p139 = scmp.ne.s32.totalorder %s131, %s133
      %p140 = scmp.eq.s32.totalorder %s27, 2
      %p141 = por %p139, %p140
      %p142 = scmp.ne.s32.totalorder %s133, %s134
      %p143 = scmp.eq.s32.totalorder %s27, 0
      %p144 = por %p142, %p143
      %p145 = scmp.ne.s32.totalorder %s133, %s134
      %p146 = scmp.eq.s32.totalorder %s28, 2
      %p147 = por %p145, %p146
      %p149 = scmp.ne.s32.totalorder %s134, %s148
      %p150 = scmp.eq.s32.totalorder %s28, 0
      %p151 = por %p149, %p150
      %s153 = sadd.s32 %s152, 1
      %p156 = scmp.eq.s32.totalorder %s22, 2
      %p157 = scmp.ne.s32.totalorder %s152, %s154
      %p158 = scmp.eq.s32.totalorder %s22, 0
      %p159 = por %p157, %p158
      %p160 = scmp.ne.s32.totalorder %s152, %s154
      %p161 = scmp.eq.s32.totalorder %s27, 2
      %p162 = por %p160, %p161
      %p163 = scmp.ne.s32.totalorder %s154, %s155
      %p164 = scmp.eq.s32.totalorder %s27, 0
      %p165 = por %p163, %p164
      %p166 = scmp.ne.s32.totalorder %s154, %s155
      %p167 = scmp.eq.s32.totalorder %s28, 2
      %p168 = por %p166, %p167
      %p170 = scmp.ne.s32.totalorder %s155, %s169
      %p171 = scmp.eq.s32.totalorder %s28, 0
      %p172 = por %p170, %p171
      %s174 = sadd.s32 %s173, 1
      %p177 = scmp.eq.s32.totalorder %s22, 2
      %p178 = scmp.ne.s32.totalorder %s173, %s175
      %p179 = scmp.eq.s32.totalorder %s22, 0
      %p180 = por %p178, %p179
      %p181 = scmp.ne.s32.totalorder %s173, %s175
      %p182 = scmp.eq.s32.totalorder %s27, 2
      %p183 = por %p181, %p182
      %p184 = scmp.ne.s32.totalorder %s175, %s176
      %p185 = scmp.eq.s32.totalorder %s27, 0
      %p186 = por %p184, %p185
      %p187 = scmp.ne.s32.totalorder %s175, %s176
      %p188 = scmp.eq.s32.totalorder %s28, 2
      %p189 = por %p187, %p188
      %p191 = scmp.ne.s32.totalorder %s176, %s190
      %p192 = scmp.eq.s32.totalorder %s28, 0
      %p193 = por %p191, %p192
      %s195 = sadd.s32 %s194, 1
      %p198 = scmp.eq.s32.totalorder %s22, 2
      %p199 = scmp.ne.s32.totalorder %s194, %s196
      %p200 = scmp.eq.s32.totalorder %s22, 0
      %p201 = por %p199, %p200
      %p202 = scmp.ne.s32.totalorder %s194, %s196
      %p203 = scmp.eq.s32.totalorder %s27, 2
      %p204 = por %p202, %p203
      %p205 = scmp.ne.s32.totalorder %s196, %s197
      %p206 = scmp.eq.s32.totalorder %s27, 0
      %p207 = por %p205, %p206
      %p208 = scmp.ne.s32.totalorder %s196, %s197
      %p209 = scmp.eq.s32.totalorder %s28, 2
      %p210 = por %p208, %p209
      %p212 = scmp.ne.s32.totalorder %s197, %s211
      %p213 = scmp.eq.s32.totalorder %s28, 0
      %p214 = por %p212, %p213
      %s216 = sadd.s32 %s215, 1
      %p219 = scmp.eq.s32.totalorder %s22, 2
      %p220 = scmp.ne.s32.totalorder %s215, %s217
      %p221 = scmp.eq.s32.totalorder %s22, 0
      %p222 = por %p220, %p221
      %p223 = scmp.ne.s32.totalorder %s215, %s217
      %p224 = scmp.eq.s32.totalorder %s27, 2
      %p225 = por %p223, %p224
      %p226 = scmp.ne.s32.totalorder %s217, %s218
      %p227 = scmp.eq.s32.totalorder %s27, 0
      %p228 = por %p226, %p227
      %p229 = scmp.ne.s32.totalorder %s217, %s218
      %p230 = scmp.eq.s32.totalorder %s28, 2
      %p231 = por %p229, %p230
      %p233 = scmp.ne.s32.totalorder %s218, %s232
      %p234 = scmp.eq.s32.totalorder %s28, 0
      %p235 = por %p233, %p234
      %p236 = scmp.eq.s32.totalorder %s29, 2
      %s237 = scalar_select %p236, %s30, 0
      %p238 = scmp.eq.s32.totalorder %s41, 2
      %s239 = scalar_select %p238, %s37, 0
      %s240 = ssub.s32 %s237, %s239
      %p241 = scmp.eq.s32.totalorder %s240, 0
      %s243 = sadd.s32 %s242, 1
      %s244 = scalar_select %p241, %s242, %s243
      %p247 = pneg %p241
      %p248 = scmp.eq.s32.totalorder %s22, 2
      %p249 = por %p247, %p248
      %p250 = scmp.ne.s32.totalorder %s242, %s245
      %p251 = scmp.eq.s32.totalorder %s22, 0
      %p252 = por %p250, %p251
      %p253 = scmp.ne.s32.totalorder %s242, %s245
      %p254 = scmp.eq.s32.totalorder %s27, 2
      %p255 = por %p253, %p254
      %p256 = scmp.ne.s32.totalorder %s245, %s246
      %p257 = scmp.eq.s32.totalorder %s27, 0
      %p258 = por %p256, %p257
      %p259 = scmp.ne.s32.totalorder %s245, %s246
      %p260 = scmp.eq.s32.totalorder %s28, 2
      %p261 = por %p259, %p260
      %p263 = scmp.ne.s32.totalorder %s246, %s262
      %p264 = scmp.eq.s32.totalorder %s28, 0
      %p265 = por %p263, %p264
      %p266 = scmp.le.s32.totalorder 1, %s22
      %p267 = scmp.lt.s32.totalorder %s22, 4
      %p268 = pnand %p266, %p267
      %p269 = pneg %p268
      // Predicated region
      $region9: #{tpu_custom_call.1} parent=5 // pred_check
        _
      $region10: #{tpu_custom_call.1} parent=5 // pred_check_branch
        %271 = sbr.rel (%p268) target = $region12
      $region11: #{tpu_custom_call.1} parent=5 // pred_region
        %s272 = ssub.s32 %s22, 1
        // Predicated region
        $region13: #{tpu_custom_call.1} parent=11 // pred_check
          %p273 = pneg %p60
        $region14: #{tpu_custom_call.1} parent=11 // pred_check_branch
          %275 = sbr.rel (%p273) target = $region16
        $region15: #{tpu_custom_call.1} parent=11 // pred_region
          %s276 = smul.u32 64, %s32
          %278 = vsyncadd [#allocation11], 0
          %s279 = smul.addr %s276, 2
          %s280 = smul.addr %s279, 4
          %s281 = scalar_lea.hbm %s0, %s280
          %s282 = sshll.u32 %s281, 4
          %s283 = int_to_ptr.hbm [resolvable:$true] %s282
          %s284 = sshll.u32 [#allocation10], 4
          %s285 = int_to_ptr.vmem [resolvable:$true] %s284
          %290 = dma.hbm_to_vmem [thread:$0]  %s283, 8192, %s285, [#allocation11], 128, 128, 8
        $region16: #{tpu_custom_call.1} parent=11 // pred_fallthru
          _
        // Predicated region
        $region17: #{tpu_custom_call.1} parent=11 // pred_check
          %p291 = pneg %p81
        $region18: #{tpu_custom_call.1} parent=11 // pred_check_branch
          %293 = sbr.rel (%p291) target = $region20
        $region19: #{tpu_custom_call.1} parent=11 // pred_region
          %295 = vsyncadd [#allocation14], 0
          %s296 = sshll.u32 %s1, 4
          %s297 = int_to_ptr.hbm [resolvable:$true] %s296
          %s298 = sshll.u32 [#allocation13], 4
          %s299 = int_to_ptr.vmem [resolvable:$true] %s298
          %304 = dma.hbm_to_vmem [thread:$0]  %s297, 4096, %s299, [#allocation14], 128, 128, 8
        $region20: #{tpu_custom_call.1} parent=11 // pred_fallthru
          _
        // Predicated region
        $region21: #{tpu_custom_call.1} parent=11 // pred_check
          %p305 = pneg %p102
        $region22: #{tpu_custom_call.1} parent=11 // pred_check_branch
          %307 = sbr.rel (%p305) target = $region24
        $region23: #{tpu_custom_call.1} parent=11 // pred_region
          %309 = vsyncadd [#allocation14], 0
          %s311 = sshll.u32 %s2, 4
          %s312 = int_to_ptr.hbm [resolvable:$true] %s311
          %s313 = sshll.u32 [#allocation15], 4
          %s314 = int_to_ptr.vmem [resolvable:$true] %s313
          %316 = dma.hbm_to_vmem [thread:$0]  %s312, 32, %s314, [#allocation14]
        $region24: #{tpu_custom_call.1} parent=11 // pred_fallthru
          _
        // Predicated region
        $region25: #{tpu_custom_call.1} parent=11 // pred_check
          %p317 = pneg %p123
        $region26: #{tpu_custom_call.1} parent=11 // pred_check_branch
          %319 = sbr.rel (%p317) target = $region28
        $region27: #{tpu_custom_call.1} parent=11 // pred_region
          _
        $region28: #{tpu_custom_call.1} parent=11 // pred_fallthru
          _
        // Predicated region
        $region29: #{tpu_custom_call.1} parent=11 // pred_check
          %p320 = pneg %p144
        $region30: #{tpu_custom_call.1} parent=11 // pred_check_branch
          %322 = sbr.rel (%p320) target = $region32
        $region31: #{tpu_custom_call.1} parent=11 // pred_region
          %324 = vsyncadd [#allocation17], 0
          %s326 = sshll.u32 %s4, 4
          %s327 = int_to_ptr.hbm [resolvable:$true] %s326
          %s328 = sshll.u32 [#allocation16], 4
          %s329 = int_to_ptr.vmem [resolvable:$true] %s328
          %331 = dma.hbm_to_vmem [thread:$0]  %s327, 32, %s329, [#allocation17]
        $region32: #{tpu_custom_call.1} parent=11 // pred_fallthru
          _
        // Predicated region
        $region33: #{tpu_custom_call.1} parent=11 // pred_check
          %p332 = pneg %p165
        $region34: #{tpu_custom_call.1} parent=11 // pred_check_branch
          %334 = sbr.rel (%p332) target = $region36
        $region35: #{tpu_custom_call.1} parent=11 // pred_region
          %336 = vsyncadd [#allocation17], 0
          %s337 = sshll.u32 %s5, 4
          %s338 = int_to_ptr.hbm [resolvable:$true] %s337
          %s339 = sshll.u32 [#allocation18], 4
          %s340 = int_to_ptr.vmem [resolvable:$true] %s339
          %345 = dma.hbm_to_vmem [thread:$0]  %s338, 4096, %s340, [#allocation17], 128, 128, 8
        $region36: #{tpu_custom_call.1} parent=11 // pred_fallthru
          _
        // Predicated region
        $region37: #{tpu_custom_call.1} parent=11 // pred_check
          %p346 = pneg %p186
        $region38: #{tpu_custom_call.1} parent=11 // pred_check_branch
          %348 = sbr.rel (%p346) target = $region40
        $region39: #{tpu_custom_call.1} parent=11 // pred_region
          _
        $region40: #{tpu_custom_call.1} parent=11 // pred_fallthru
          _
        // Predicated region
        $region41: #{tpu_custom_call.1} parent=11 // pred_check
          %p349 = pneg %p207
        $region42: #{tpu_custom_call.1} parent=11 // pred_check_branch
          %351 = sbr.rel (%p349) target = $region44
        $region43: #{tpu_custom_call.1} parent=11 // pred_region
          _
        $region44: #{tpu_custom_call.1} parent=11 // pred_fallthru
          _
        // Predicated region
        $region45: #{tpu_custom_call.1} parent=11 // pred_check
          %p352 = pneg %p228
        $region46: #{tpu_custom_call.1} parent=11 // pred_check_branch
          %354 = sbr.rel (%p352) target = $region48
        $region47: #{tpu_custom_call.1} parent=11 // pred_region
          %356 = vsyncadd [#allocation20], 0
          %s358 = sshll.u32 %s8, 4
          %s359 = int_to_ptr.hbm [resolvable:$true] %s358
          %s360 = sshll.u32 [#allocation19], 4
          %s361 = int_to_ptr.vmem [resolvable:$true] %s360
          %363 = dma.hbm_to_vmem [thread:$0]  %s359, 32, %s361, [#allocation20]
        $region48: #{tpu_custom_call.1} parent=11 // pred_fallthru
          _
      $region12: #{tpu_custom_call.1} parent=5 // pred_fallthru
        _
      %p364 = scmp.lt.s32.totalorder %s22, 3
      // Predicated region
      $region49: #{tpu_custom_call.1} parent=5 // pred_check
        %p365 = pneg %p364
      $region50: #{tpu_custom_call.1} parent=5 // pred_check_branch
        %367 = sbr.rel (%p365) target = $region52
      $region51: #{tpu_custom_call.1} parent=5 // pred_region
        _
      $region52: #{tpu_custom_call.1} parent=5 // pred_fallthru
        _
      %p368 = scmp.le.s32.totalorder 1, %s22
      %p369 = scmp.lt.s32.totalorder %s22, 4
      %p370 = pnand %p368, %p369
      %p371 = pneg %p370
      // Predicated region
      $region53: #{tpu_custom_call.1} parent=5 // pred_check
        _
      $region54: #{tpu_custom_call.1} parent=5 // pred_check_branch
        %373 = sbr.rel (%p370) target = $region56
      $region55: #{tpu_custom_call.1} parent=5 // pred_region
        %s374 = ssub.s32 %s22, 1
        // Predicated region
        $region57: #{tpu_custom_call.1} parent=55 // pred_check
          %p375 = pneg %p60
        $region58: #{tpu_custom_call.1} parent=55 // pred_check_branch
          %377 = sbr.rel (%p375) target = $region60
        $region59: #{tpu_custom_call.1} parent=55 // pred_region
          %379 = dma.done [#allocation11], 8192
        $region60: #{tpu_custom_call.1} parent=55 // pred_fallthru
          _
        // Predicated region
        $region61: #{tpu_custom_call.1} parent=55 // pred_check
          %p380 = pneg %p81
        $region62: #{tpu_custom_call.1} parent=55 // pred_check_branch
          %382 = sbr.rel (%p380) target = $region64
        $region63: #{tpu_custom_call.1} parent=55 // pred_region
          %384 = dma.done [#allocation14], 4096
        $region64: #{tpu_custom_call.1} parent=55 // pred_fallthru
          _
        // Predicated region
        $region65: #{tpu_custom_call.1} parent=55 // pred_check
          %p385 = pneg %p102
        $region66: #{tpu_custom_call.1} parent=55 // pred_check_branch
          %387 = sbr.rel (%p385) target = $region68
        $region67: #{tpu_custom_call.1} parent=55 // pred_region
          %389 = dma.done [#allocation14], 32
        $region68: #{tpu_custom_call.1} parent=55 // pred_fallthru
          _
        // Predicated region
        $region69: #{tpu_custom_call.1} parent=55 // pred_check
          %p390 = pneg %p144
        $region70: #{tpu_custom_call.1} parent=55 // pred_check_branch
          %392 = sbr.rel (%p390) target = $region72
        $region71: #{tpu_custom_call.1} parent=55 // pred_region
          %394 = dma.done [#allocation17], 32
        $region72: #{tpu_custom_call.1} parent=55 // pred_fallthru
          _
        // Predicated region
        $region73: #{tpu_custom_call.1} parent=55 // pred_check
          %p395 = pneg %p165
        $region74: #{tpu_custom_call.1} parent=55 // pred_check_branch
          %397 = sbr.rel (%p395) target = $region76
        $region75: #{tpu_custom_call.1} parent=55 // pred_region
          %399 = dma.done [#allocation17], 4096
        $region76: #{tpu_custom_call.1} parent=55 // pred_fallthru
          _
        // Predicated region
        $region77: #{tpu_custom_call.1} parent=55 // pred_check
          %p400 = pneg %p228
        $region78: #{tpu_custom_call.1} parent=55 // pred_check_branch
          %402 = sbr.rel (%p400) target = $region80
        $region79: #{tpu_custom_call.1} parent=55 // pred_region
          %404 = dma.done [#allocation20], 32
        $region80: #{tpu_custom_call.1} parent=55 // pred_fallthru
          _
        %p405 = pneg %p60
        %p406 = pneg %p57
        %p407 = pneg %p81
        %p408 = pneg %p78
        %p409 = pneg %p102
        %p410 = pneg %p99
        %p411 = pneg %p123
        %p412 = pneg %p120
        %p413 = pneg %p144
        %p414 = pneg %p141
        %p415 = pneg %p165
        %p416 = pneg %p162
        %p417 = pneg %p186
        %p418 = pneg %p183
        %p419 = pneg %p207
        %p420 = pneg %p204
        %p421 = pneg %p228
        %p422 = pneg %p225
        %p423 = pneg %p258
        %p424 = pneg %p255
        %s425 = sand.u32 %s245, 1
        %s426 = scalar_lea.sflag [#allocation12], %s425
        %s427 = sand.u32 %s245, 1
        %s428 = smul.addr %s427, 1024
        %s429 = scalar_lea.vmem [#allocation21], %s428
        %s430 = smul.u32 64, %s32
        %p431 = scmp.eq.s32.totalorder %s31, 2
        %s432 = scalar_select %p431, %s32, 0
        %s433 = smul.u32 64, %s432
        %p434 = scmp.eq.s32.totalorder %s32, 0
        %p435 = scmp.eq.s32.totalorder %s31, 0
        %p436 = pnand %p435, %p434
        %p437 = pneg %p436
        // Predicated region
        $region81: #{tpu_custom_call.1} parent=55 // pred_check
          _
        $region82: #{tpu_custom_call.1} parent=55 // pred_check_branch
          %439 = sbr.rel (%p436) target = $region84
        $region83: #{tpu_custom_call.1} parent=55 // pred_region
          %v440 = vlaneseq
          %vm441 = vcmp.ge.s32.totalorder %v440, 0
          %vm442 = vcmp.lt.s32.totalorder %v440, 256
          %vm443 = vmand %vm441, %vm442
          %444 = vst.msk [vmem:[#allocation2] sm:$0x3] %vm443, 0.0
          %445 = vst.msk [vmem:[#allocation3] sm:$0x3] %vm443, 0.0
        $region84: #{tpu_custom_call.1} parent=55 // pred_fallthru
          _
        %p446 = scmp.eq.s32.totalorder %s31, 1
        %p447 = pnand %p446, %p434
        %p448 = pneg %p447
        // Predicated region
        $region85: #{tpu_custom_call.1} parent=55 // pred_check
          _
        $region86: #{tpu_custom_call.1} parent=55 // pred_check_branch
          %450 = sbr.rel (%p447) target = $region88
        $region87: #{tpu_custom_call.1} parent=55 // pred_region
          %v451 = vld [vmem:[#allocation2] sm:$0x3]
          %v452 = vmul.f32 %v451, 0.001953125
          %v453 = vld [vmem:[#allocation3] sm:$0x3]
          %v454 = vmul.f32 %v453, 0.001953125
          %v455 = vmul.f32 %v452, %v452
          %v456 = vsub.f32 %v454, %v455
          %v457 = vmax.f32 %v456, 0.0
          %v458 = vld [vmem:[%s3] sm:$0x3]
          %v459 = vadd.f32 %v457, 1e-05
          %v460 = vrsqrt.pop %v459
          %v461 = vmul.f32 %v460, %v459
          %v462 = vmul.f32 %v461, %v460
          %v463 = vmul.f32 0.5, %v462
          %v464 = vsub.f32 1.5, %v463
          %v465 = vmul.f32 %v460, %v464
          %vm466 = vweird.f32 %v459
          %vm467 = vweird.f32 %v460
          %vm468 = vmor %vm466, %vm467
          %v469 = vsel %vm468, %v460, %v465
          %v470 = vmul.f32 %v458, %v469
          %v471 = vlaneseq
          %vm472 = vcmp.ge.s32.totalorder %v471, 0
          %vm473 = vcmp.lt.s32.totalorder %v471, 256
          %vm474 = vmand %vm472, %vm473
          %475 = vst.msk [vmem:[#allocation6] sm:$0x3] %vm474, %v470
          %v476 = vld [vmem:[#allocation16] sm:$0x3]
          %v477 = vmul.f32 %v452, %v470
          %v478 = vsub.f32 %v476, %v477
          %479 = vst.msk [vmem:[#allocation7] sm:$0x3] %vm474, %v478
          %480 = vst.msk [vmem:[#allocation4] sm:$0x3] %vm474, 0.0
          %481 = vst.msk [vmem:[#allocation5] sm:$0x3] %vm474, 0.0
        $region88: #{tpu_custom_call.1} parent=55 // pred_fallthru
          _
        %p482 = scmp.eq.s32.totalorder %s31, 2
        %p483 = pnand %p482, %p434
        %p484 = pneg %p483
        // Predicated region
        $region89: #{tpu_custom_call.1} parent=55 // pred_check
          _
        $region90: #{tpu_custom_call.1} parent=55 // pred_check_branch
          %486 = sbr.rel (%p483) target = $region92
        $region91: #{tpu_custom_call.1} parent=55 // pred_region
          %v487 = vld [vmem:[#allocation4] sm:$0x3]
          %v488 = vmul.f32 %v487, 0.001953125
          %v489 = vld [vmem:[#allocation5] sm:$0x3]
          %v490 = vmul.f32 %v489, 0.001953125
          %v491 = vmul.f32 %v488, %v488
          %v492 = vsub.f32 %v490, %v491
          %v493 = vmax.f32 %v492, 0.0
          %v494 = vld [vmem:[%s7] sm:$0x3]
          %v495 = vadd.f32 %v493, 1e-05
          %v496 = vrsqrt.pop %v495
          %v497 = vmul.f32 %v496, %v495
          %v498 = vmul.f32 %v497, %v496
          %v499 = vmul.f32 0.5, %v498
          %v500 = vsub.f32 1.5, %v499
          %v501 = vmul.f32 %v496, %v500
          %vm502 = vweird.f32 %v495
          %vm503 = vweird.f32 %v496
          %vm504 = vmor %vm502, %vm503
          %v505 = vsel %vm504, %v496, %v501
          %v506 = vmul.f32 %v494, %v505
          %v507 = vlaneseq
          %vm508 = vcmp.ge.s32.totalorder %v507, 0
          %vm509 = vcmp.lt.s32.totalorder %v507, 256
          %vm510 = vmand %vm508, %vm509
          %511 = vst.msk [vmem:[#allocation8] sm:$0x3] %vm510, %v506
          %v512 = vld [vmem:[#allocation19] sm:$0x3]
          %v513 = vmul.f32 %v488, %v506
          %v514 = vsub.f32 %v512, %v513
          %515 = vst.msk [vmem:[#allocation9] sm:$0x3] %vm510, %v514
        $region92: #{tpu_custom_call.1} parent=55 // pred_fallthru
          _
        %v516 = vld [vmem:[#allocation10] sm:$0xff]
        %v517 = vld [vmem:[#allocation10 + $0x8] sm:$0xff]
        %v518 = vld [vmem:[#allocation10 + $0x10] sm:$0xff]
        %v519 = vld [vmem:[#allocation10 + $0x18] sm:$0xff]
        %v520 = vld [vmem:[#allocation10 + $0x20] sm:$0xff]
        %v521 = vld [vmem:[#allocation10 + $0x28] sm:$0xff]
        %v522 = vld [vmem:[#allocation10 + $0x30] sm:$0xff]
        %v523 = vld [vmem:[#allocation10 + $0x38] sm:$0xff]
        %v524 = vld [vmem:[#allocation10 + $0x40] sm:$0xff]
        %v525 = vld [vmem:[#allocation10 + $0x48] sm:$0xff]
        %v526 = vld [vmem:[#allocation10 + $0x50] sm:$0xff]
        %v527 = vld [vmem:[#allocation10 + $0x58] sm:$0xff]
        %v528 = vld [vmem:[#allocation10 + $0x60] sm:$0xff]
        %v529 = vld [vmem:[#allocation10 + $0x68] sm:$0xff]
        %v530 = vld [vmem:[#allocation10 + $0x70] sm:$0xff]
        %v531 = vld [vmem:[#allocation10 + $0x78] sm:$0xff]
        %v532 = vld [vmem:[#allocation10 + $0x80] sm:$0xff]
        %v533 = vld [vmem:[#allocation10 + $0x88] sm:$0xff]
        %v534 = vld [vmem:[#allocation10 + $0x90] sm:$0xff]
        %v535 = vld [vmem:[#allocation10 + $0x98] sm:$0xff]
        %v536 = vld [vmem:[#allocation10 + $0xa0] sm:$0xff]
        %v537 = vld [vmem:[#allocation10 + $0xa8] sm:$0xff]
        %v538 = vld [vmem:[#allocation10 + $0xb0] sm:$0xff]
        %v539 = vld [vmem:[#allocation10 + $0xb8] sm:$0xff]
        %v540 = vld [vmem:[#allocation10 + $0xc0] sm:$0xff]
        %v541 = vld [vmem:[#allocation10 + $0xc8] sm:$0xff]
        %v542 = vld [vmem:[#allocation10 + $0xd0] sm:$0xff]
        %v543 = vld [vmem:[#allocation10 + $0xd8] sm:$0xff]
        %v544 = vld [vmem:[#allocation10 + $0xe0] sm:$0xff]
        %v545 = vld [vmem:[#allocation10 + $0xe8] sm:$0xff]
        %v546 = vld [vmem:[#allocation10 + $0xf0] sm:$0xff]
        %v547 = vld [vmem:[#allocation10 + $0xf8] sm:$0xff]
        %v548 = vld [vmem:[#allocation10 + $0x100] sm:$0xff]
        %v549 = vld [vmem:[#allocation10 + $0x108] sm:$0xff]
        %v550 = vld [vmem:[#allocation10 + $0x110] sm:$0xff]
        %v551 = vld [vmem:[#allocation10 + $0x118] sm:$0xff]
        %v552 = vld [vmem:[#allocation10 + $0x120] sm:$0xff]
        %v553 = vld [vmem:[#allocation10 + $0x128] sm:$0xff]
        %v554 = vld [vmem:[#allocation10 + $0x130] sm:$0xff]
        %v555 = vld [vmem:[#allocation10 + $0x138] sm:$0xff]
        %v556 = vld [vmem:[#allocation10 + $0x140] sm:$0xff]
        %v557 = vld [vmem:[#allocation10 + $0x148] sm:$0xff]
        %v558 = vld [vmem:[#allocation10 + $0x150] sm:$0xff]
        %v559 = vld [vmem:[#allocation10 + $0x158] sm:$0xff]
        %v560 = vld [vmem:[#allocation10 + $0x160] sm:$0xff]
        %v561 = vld [vmem:[#allocation10 + $0x168] sm:$0xff]
        %v562 = vld [vmem:[#allocation10 + $0x170] sm:$0xff]
        %v563 = vld [vmem:[#allocation10 + $0x178] sm:$0xff]
        %v564 = vld [vmem:[#allocation10 + $0x180] sm:$0xff]
        %v565 = vld [vmem:[#allocation10 + $0x188] sm:$0xff]
        %v566 = vld [vmem:[#allocation10 + $0x190] sm:$0xff]
        %v567 = vld [vmem:[#allocation10 + $0x198] sm:$0xff]
        %v568 = vld [vmem:[#allocation10 + $0x1a0] sm:$0xff]
        %v569 = vld [vmem:[#allocation10 + $0x1a8] sm:$0xff]
        %v570 = vld [vmem:[#allocation10 + $0x1b0] sm:$0xff]
        %v571 = vld [vmem:[#allocation10 + $0x1b8] sm:$0xff]
        %v572 = vld [vmem:[#allocation10 + $0x1c0] sm:$0xff]
        %v573 = vld [vmem:[#allocation10 + $0x1c8] sm:$0xff]
        %v574 = vld [vmem:[#allocation10 + $0x1d0] sm:$0xff]
        %v575 = vld [vmem:[#allocation10 + $0x1d8] sm:$0xff]
        %v576 = vld [vmem:[#allocation10 + $0x1e0] sm:$0xff]
        %v577 = vld [vmem:[#allocation10 + $0x1e8] sm:$0xff]
        %v578 = vld [vmem:[#allocation10 + $0x1f0] sm:$0xff]
        %v579 = vld [vmem:[#allocation10 + $0x1f8] sm:$0xff]
        %v580 = vld [vmem:[#allocation13] sm:$0xff]
        %v581 = vld [vmem:[#allocation13 + $0x8] sm:$0xff]
        %v582 = vld [vmem:[#allocation13 + $0x10] sm:$0xff]
        %v583 = vld [vmem:[#allocation13 + $0x18] sm:$0xff]
        %v584 = vld [vmem:[#allocation13 + $0x20] sm:$0xff]
        %v585 = vld [vmem:[#allocation13 + $0x28] sm:$0xff]
        %v586 = vld [vmem:[#allocation13 + $0x30] sm:$0xff]
        %v587 = vld [vmem:[#allocation13 + $0x38] sm:$0xff]
        %v588 = vld [vmem:[#allocation13 + $0x40] sm:$0xff]
        %v589 = vld [vmem:[#allocation13 + $0x48] sm:$0xff]
        %v590 = vld [vmem:[#allocation13 + $0x50] sm:$0xff]
        %v591 = vld [vmem:[#allocation13 + $0x58] sm:$0xff]
        %v592 = vld [vmem:[#allocation13 + $0x60] sm:$0xff]
        %v593 = vld [vmem:[#allocation13 + $0x68] sm:$0xff]
        %v594 = vld [vmem:[#allocation13 + $0x70] sm:$0xff]
        %v595 = vld [vmem:[#allocation13 + $0x78] sm:$0xff]
        %v596 = vld [vmem:[#allocation13 + $0x80] sm:$0xff]
        %v597 = vld [vmem:[#allocation13 + $0x88] sm:$0xff]
        %v598 = vld [vmem:[#allocation13 + $0x90] sm:$0xff]
        %v599 = vld [vmem:[#allocation13 + $0x98] sm:$0xff]
        %v600 = vld [vmem:[#allocation13 + $0xa0] sm:$0xff]
        %v601 = vld [vmem:[#allocation13 + $0xa8] sm:$0xff]
        %v602 = vld [vmem:[#allocation13 + $0xb0] sm:$0xff]
        %v603 = vld [vmem:[#allocation13 + $0xb8] sm:$0xff]
        %v604 = vld [vmem:[#allocation13 + $0xc0] sm:$0xff]
        %v605 = vld [vmem:[#allocation13 + $0xc8] sm:$0xff]
        %v606 = vld [vmem:[#allocation13 + $0xd0] sm:$0xff]
        %v607 = vld [vmem:[#allocation13 + $0xd8] sm:$0xff]
        %v608 = vld [vmem:[#allocation13 + $0xe0] sm:$0xff]
        %v609 = vld [vmem:[#allocation13 + $0xe8] sm:$0xff]
        %v610 = vld [vmem:[#allocation13 + $0xf0] sm:$0xff]
        %v611 = vld [vmem:[#allocation13 + $0xf8] sm:$0xff]
        %v612 = vld [vmem:[#allocation15] sm:$0x3]
        %v614 = vperm.slane %v612, 0
        %v615 = vperm.slane %v612, 1
        %v682 = vunpack.c.l.b16 %v516
        %v683 = vunpack.c.h.b16 %v516
        %v684 = vunpack.c.l.b16 %v517
        %v685 = vunpack.c.h.b16 %v517
        %v686 = vunpack.c.l.b16 %v518
        %v687 = vunpack.c.h.b16 %v518
        %v688 = vunpack.c.l.b16 %v519
        %v689 = vunpack.c.h.b16 %v519
        %v690 = vunpack.c.l.b16 %v520
        %v691 = vunpack.c.h.b16 %v520
        %v692 = vunpack.c.l.b16 %v521
        %v693 = vunpack.c.h.b16 %v521
        %v694 = vunpack.c.l.b16 %v522
        %v695 = vunpack.c.h.b16 %v522
        %v696 = vunpack.c.l.b16 %v523
        %v697 = vunpack.c.h.b16 %v523
        %v698 = vunpack.c.l.b16 %v524
        %v699 = vunpack.c.h.b16 %v524
        %v700 = vunpack.c.l.b16 %v525
        %v701 = vunpack.c.h.b16 %v525
        %v702 = vunpack.c.l.b16 %v526
        %v703 = vunpack.c.h.b16 %v526
        %v704 = vunpack.c.l.b16 %v527
        %v705 = vunpack.c.h.b16 %v527
        %v706 = vunpack.c.l.b16 %v528
        %v707 = vunpack.c.h.b16 %v528
        %v708 = vunpack.c.l.b16 %v529
        %v709 = vunpack.c.h.b16 %v529
        %v710 = vunpack.c.l.b16 %v530
        %v711 = vunpack.c.h.b16 %v530
        %v712 = vunpack.c.l.b16 %v531
        %v713 = vunpack.c.h.b16 %v531
        %v714 = vunpack.c.l.b16 %v532
        %v715 = vunpack.c.h.b16 %v532
        %v716 = vunpack.c.l.b16 %v533
        %v717 = vunpack.c.h.b16 %v533
        %v718 = vunpack.c.l.b16 %v534
        %v719 = vunpack.c.h.b16 %v534
        %v720 = vunpack.c.l.b16 %v535
        %v721 = vunpack.c.h.b16 %v535
        %v722 = vunpack.c.l.b16 %v536
        %v723 = vunpack.c.h.b16 %v536
        %v724 = vunpack.c.l.b16 %v537
        %v725 = vunpack.c.h.b16 %v537
        %v726 = vunpack.c.l.b16 %v538
        %v727 = vunpack.c.h.b16 %v538
        %v728 = vunpack.c.l.b16 %v539
        %v729 = vunpack.c.h.b16 %v539
        %v730 = vunpack.c.l.b16 %v540
        %v731 = vunpack.c.h.b16 %v540
        %v732 = vunpack.c.l.b16 %v541
        %v733 = vunpack.c.h.b16 %v541
        %v734 = vunpack.c.l.b16 %v542
        %v735 = vunpack.c.h.b16 %v542
        %v736 = vunpack.c.l.b16 %v543
        %v737 = vunpack.c.h.b16 %v543
        %v738 = vunpack.c.l.b16 %v544
        %v739 = vunpack.c.h.b16 %v544
        %v740 = vunpack.c.l.b16 %v545
        %v741 = vunpack.c.h.b16 %v545
        %v742 = vunpack.c.l.b16 %v546
        %v743 = vunpack.c.h.b16 %v546
        %v744 = vunpack.c.l.b16 %v547
        %v745 = vunpack.c.h.b16 %v547
        %v746 = vunpack.c.l.b16 %v548
        %v747 = vunpack.c.h.b16 %v548
        %v748 = vunpack.c.l.b16 %v549
        %v749 = vunpack.c.h.b16 %v549
        %v750 = vunpack.c.l.b16 %v550
        %v751 = vunpack.c.h.b16 %v550
        %v752 = vunpack.c.l.b16 %v551
        %v753 = vunpack.c.h.b16 %v551
        %v754 = vunpack.c.l.b16 %v552
        %v755 = vunpack.c.h.b16 %v552
        %v756 = vunpack.c.l.b16 %v553
        %v757 = vunpack.c.h.b16 %v553
        %v758 = vunpack.c.l.b16 %v554
        %v759 = vunpack.c.h.b16 %v554
        %v760 = vunpack.c.l.b16 %v555
        %v761 = vunpack.c.h.b16 %v555
        %v762 = vunpack.c.l.b16 %v556
        %v763 = vunpack.c.h.b16 %v556
        %v764 = vunpack.c.l.b16 %v557
        %v765 = vunpack.c.h.b16 %v557
        %v766 = vunpack.c.l.b16 %v558
        %v767 = vunpack.c.h.b16 %v558
        %v768 = vunpack.c.l.b16 %v559
        %v769 = vunpack.c.h.b16 %v559
        %v770 = vunpack.c.l.b16 %v560
        %v771 = vunpack.c.h.b16 %v560
        %v772 = vunpack.c.l.b16 %v561
        %v773 = vunpack.c.h.b16 %v561
        %v774 = vunpack.c.l.b16 %v562
        %v775 = vunpack.c.h.b16 %v562
        %v776 = vunpack.c.l.b16 %v563
        %v777 = vunpack.c.h.b16 %v563
        %v778 = vunpack.c.l.b16 %v564
        %v779 = vunpack.c.h.b16 %v564
        %v780 = vunpack.c.l.b16 %v565
        %v781 = vunpack.c.h.b16 %v565
        %v782 = vunpack.c.l.b16 %v566
        %v783 = vunpack.c.h.b16 %v566
        %v784 = vunpack.c.l.b16 %v567
        %v785 = vunpack.c.h.b16 %v567
        %v786 = vunpack.c.l.b16 %v568
        %v787 = vunpack.c.h.b16 %v568
        %v788 = vunpack.c.l.b16 %v569
        %v789 = vunpack.c.h.b16 %v569
        %v790 = vunpack.c.l.b16 %v570
        %v791 = vunpack.c.h.b16 %v570
        %v792 = vunpack.c.l.b16 %v571
        %v793 = vunpack.c.h.b16 %v571
        %v794 = vunpack.c.l.b16 %v572
        %v795 = vunpack.c.h.b16 %v572
        %v796 = vunpack.c.l.b16 %v573
        %v797 = vunpack.c.h.b16 %v573
        %v798 = vunpack.c.l.b16 %v574
        %v799 = vunpack.c.h.b16 %v574
        %v800 = vunpack.c.l.b16 %v575
        %v801 = vunpack.c.h.b16 %v575
        %v802 = vunpack.c.l.b16 %v576
        %v803 = vunpack.c.h.b16 %v576
        %v804 = vunpack.c.l.b16 %v577
        %v805 = vunpack.c.h.b16 %v577
        %v806 = vunpack.c.l.b16 %v578
        %v807 = vunpack.c.h.b16 %v578
        %v808 = vunpack.c.l.b16 %v579
        %v809 = vunpack.c.h.b16 %v579
        %v810 = vpack.c.b16 %v684, %v682
        %v811 = vpack.c.b16 %v685, %v683
        %v812 = vpack.c.b16 %v688, %v686
        %v813 = vpack.c.b16 %v689, %v687
        %v814 = vpack.c.b16 %v692, %v690
        %v815 = vpack.c.b16 %v693, %v691
        %v816 = vpack.c.b16 %v696, %v694
        %v817 = vpack.c.b16 %v697, %v695
        %v818 = vpack.c.b16 %v700, %v698
        %v819 = vpack.c.b16 %v701, %v699
        %v820 = vpack.c.b16 %v704, %v702
        %v821 = vpack.c.b16 %v705, %v703
        %v822 = vpack.c.b16 %v708, %v706
        %v823 = vpack.c.b16 %v709, %v707
        %v824 = vpack.c.b16 %v712, %v710
        %v825 = vpack.c.b16 %v713, %v711
        %v826 = vpack.c.b16 %v716, %v714
        %v827 = vpack.c.b16 %v717, %v715
        %v828 = vpack.c.b16 %v720, %v718
        %v829 = vpack.c.b16 %v721, %v719
        %v830 = vpack.c.b16 %v724, %v722
        %v831 = vpack.c.b16 %v725, %v723
        %v832 = vpack.c.b16 %v728, %v726
        %v833 = vpack.c.b16 %v729, %v727
        %v834 = vpack.c.b16 %v732, %v730
        %v835 = vpack.c.b16 %v733, %v731
        %v836 = vpack.c.b16 %v736, %v734
        %v837 = vpack.c.b16 %v737, %v735
        %v838 = vpack.c.b16 %v740, %v738
        %v839 = vpack.c.b16 %v741, %v739
        %v840 = vpack.c.b16 %v744, %v742
        %v841 = vpack.c.b16 %v745, %v743
        %v842 = vpack.c.b16 %v748, %v746
        %v843 = vpack.c.b16 %v749, %v747
        %v844 = vpack.c.b16 %v752, %v750
        %v845 = vpack.c.b16 %v753, %v751
        %v846 = vpack.c.b16 %v756, %v754
        %v847 = vpack.c.b16 %v757, %v755
        %v848 = vpack.c.b16 %v760, %v758
        %v849 = vpack.c.b16 %v761, %v759
        %v850 = vpack.c.b16 %v764, %v762
        %v851 = vpack.c.b16 %v765, %v763
        %v852 = vpack.c.b16 %v768, %v766
        %v853 = vpack.c.b16 %v769, %v767
        %v854 = vpack.c.b16 %v772, %v770
        %v855 = vpack.c.b16 %v773, %v771
        %v856 = vpack.c.b16 %v776, %v774
        %v857 = vpack.c.b16 %v777, %v775
        %v858 = vpack.c.b16 %v780, %v778
        %v859 = vpack.c.b16 %v781, %v779
        %v860 = vpack.c.b16 %v784, %v782
        %v861 = vpack.c.b16 %v785, %v783
        %v862 = vpack.c.b16 %v788, %v786
        %v863 = vpack.c.b16 %v789, %v787
        %v864 = vpack.c.b16 %v792, %v790
        %v865 = vpack.c.b16 %v793, %v791
        %v866 = vpack.c.b16 %v796, %v794
        %v867 = vpack.c.b16 %v797, %v795
        %v868 = vpack.c.b16 %v800, %v798
        %v869 = vpack.c.b16 %v801, %v799
        %v870 = vpack.c.b16 %v804, %v802
        %v871 = vpack.c.b16 %v805, %v803
        %v872 = vpack.c.b16 %v808, %v806
        %v873 = vpack.c.b16 %v809, %v807
        %v970 = vunpack.c.l.b16 %v580
        %v971 = vunpack.c.h.b16 %v580
        %v972 = vunpack.c.l.b16 %v581
        %v973 = vunpack.c.h.b16 %v581
        %v974 = vunpack.c.l.b16 %v582
        %v975 = vunpack.c.h.b16 %v582
        %v976 = vunpack.c.l.b16 %v583
        %v977 = vunpack.c.h.b16 %v583
        %v978 = vunpack.c.l.b16 %v584
        %v979 = vunpack.c.h.b16 %v584
        %v980 = vunpack.c.l.b16 %v585
        %v981 = vunpack.c.h.b16 %v585
        %v982 = vunpack.c.l.b16 %v586
        %v983 = vunpack.c.h.b16 %v586
        %v984 = vunpack.c.l.b16 %v587
        %v985 = vunpack.c.h.b16 %v587
        %v986 = vunpack.c.l.b16 %v588
        %v987 = vunpack.c.h.b16 %v588
        %v988 = vunpack.c.l.b16 %v589
        %v989 = vunpack.c.h.b16 %v589
        %v990 = vunpack.c.l.b16 %v590
        %v991 = vunpack.c.h.b16 %v590
        %v992 = vunpack.c.l.b16 %v591
        %v993 = vunpack.c.h.b16 %v591
        %v994 = vunpack.c.l.b16 %v592
        %v995 = vunpack.c.h.b16 %v592
        %v996 = vunpack.c.l.b16 %v593
        %v997 = vunpack.c.h.b16 %v593
        %v998 = vunpack.c.l.b16 %v594
        %v999 = vunpack.c.h.b16 %v594
        %v1000 = vunpack.c.l.b16 %v595
        %v1001 = vunpack.c.h.b16 %v595
        %v1002 = vunpack.c.l.b16 %v596
        %v1003 = vunpack.c.h.b16 %v596
        %v1004 = vunpack.c.l.b16 %v597
        %v1005 = vunpack.c.h.b16 %v597
        %v1006 = vunpack.c.l.b16 %v598
        %v1007 = vunpack.c.h.b16 %v598
        %v1008 = vunpack.c.l.b16 %v599
        %v1009 = vunpack.c.h.b16 %v599
        %v1010 = vunpack.c.l.b16 %v600
        %v1011 = vunpack.c.h.b16 %v600
        %v1012 = vunpack.c.l.b16 %v601
        %v1013 = vunpack.c.h.b16 %v601
        %v1014 = vunpack.c.l.b16 %v602
        %v1015 = vunpack.c.h.b16 %v602
        %v1016 = vunpack.c.l.b16 %v603
        %v1017 = vunpack.c.h.b16 %v603
        %v1018 = vunpack.c.l.b16 %v604
        %v1019 = vunpack.c.h.b16 %v604
        %v1020 = vunpack.c.l.b16 %v605
        %v1021 = vunpack.c.h.b16 %v605
        %v1022 = vunpack.c.l.b16 %v606
        %v1023 = vunpack.c.h.b16 %v606
        %v1024 = vunpack.c.l.b16 %v607
        %v1025 = vunpack.c.h.b16 %v607
        %v1026 = vunpack.c.l.b16 %v608
        %v1027 = vunpack.c.h.b16 %v608
        %v1028 = vunpack.c.l.b16 %v609
        %v1029 = vunpack.c.h.b16 %v609
        %v1030 = vunpack.c.l.b16 %v610
        %v1031 = vunpack.c.h.b16 %v610
        %v1032 = vunpack.c.l.b16 %v611
        %v1033 = vunpack.c.h.b16 %v611
        %v1034 = vpack.c.b16 %v972, %v970
        %v1035 = vpack.c.b16 %v973, %v971
        %v1036 = vpack.c.b16 %v976, %v974
        %v1037 = vpack.c.b16 %v977, %v975
        %v1038 = vpack.c.b16 %v980, %v978
        %v1039 = vpack.c.b16 %v981, %v979
        %v1040 = vpack.c.b16 %v984, %v982
        %v1041 = vpack.c.b16 %v985, %v983
        %v1042 = vpack.c.b16 %v988, %v986
        %v1043 = vpack.c.b16 %v989, %v987
        %v1044 = vpack.c.b16 %v992, %v990
        %v1045 = vpack.c.b16 %v993, %v991
        %v1046 = vpack.c.b16 %v996, %v994
        %v1047 = vpack.c.b16 %v997, %v995
        %v1048 = vpack.c.b16 %v1000, %v998
        %v1049 = vpack.c.b16 %v1001, %v999
        %v1050 = vpack.c.b16 %v1004, %v1002
        %v1051 = vpack.c.b16 %v1005, %v1003
        %v1052 = vpack.c.b16 %v1008, %v1006
        %v1053 = vpack.c.b16 %v1009, %v1007
        %v1054 = vpack.c.b16 %v1012, %v1010
        %v1055 = vpack.c.b16 %v1013, %v1011
        %v1056 = vpack.c.b16 %v1016, %v1014
        %v1057 = vpack.c.b16 %v1017, %v1015
        %v1058 = vpack.c.b16 %v1020, %v1018
        %v1059 = vpack.c.b16 %v1021, %v1019
        %v1060 = vpack.c.b16 %v1024, %v1022
        %v1061 = vpack.c.b16 %v1025, %v1023
        %v1062 = vpack.c.b16 %v1028, %v1026
        %v1063 = vpack.c.b16 %v1029, %v1027
        %v1064 = vpack.c.b16 %v1032, %v1030
        %v1065 = vpack.c.b16 %v1033, %v1031
        %1098 = vmatpush.bf16.msra.mxu0 %v1048
        %1099 = vmatpush.bf16.msra.mxu0 %v1046
        %1100 = vmatpush.bf16.msra.mxu0 %v1044
        %1101 = vmatpush.bf16.msra.mxu0 %v1042
        %1102 = vmatpush.bf16.msra.mxu0 %v1040
        %1103 = vmatpush.bf16.msra.mxu0 %v1038
        %1104 = vmatpush.bf16.msra.mxu0 %v1036
        %1105 = vmatpush.bf16.msra.mxu0 %v1034
        %1106 = vmatmul.bf16.gmra.mxu0 %v810
        %v1107 = vpop.f32.mrf.mxu0
        %v1108 = vadd.f32 %v614, %v1107
        %v1109 = vpop.f32.mrf.mxu0
        %v1110 = vadd.f32 %v614, %v1109
        %1111 = vmatmul.bf16.gmra.mxu0 %v812
        %v1112 = vpop.f32.mrf.mxu0
        %v1113 = vadd.f32 %v614, %v1112
        %v1114 = vpop.f32.mrf.mxu0
        %v1115 = vadd.f32 %v614, %v1114
        %1116 = vmatmul.bf16.gmra.mxu0 %v814
        %v1117 = vpop.f32.mrf.mxu0
        %v1118 = vadd.f32 %v614, %v1117
        %v1119 = vpop.f32.mrf.mxu0
        %v1120 = vadd.f32 %v614, %v1119
        %1121 = vmatmul.bf16.gmra.mxu0 %v816
        %v1122 = vpop.f32.mrf.mxu0
        %v1123 = vadd.f32 %v614, %v1122
        %v1124 = vpop.f32.mrf.mxu0
        %v1125 = vadd.f32 %v614, %v1124
        %1126 = vmatmul.bf16.gmra.mxu0 %v818
        %v1127 = vpop.f32.mrf.mxu0
        %v1128 = vadd.f32 %v614, %v1127
        %v1129 = vpop.f32.mrf.mxu0
        %v1130 = vadd.f32 %v614, %v1129
        %1131 = vmatmul.bf16.gmra.mxu0 %v820
        %v1132 = vpop.f32.mrf.mxu0
        %v1133 = vadd.f32 %v614, %v1132
        %v1134 = vpop.f32.mrf.mxu0
        %v1135 = vadd.f32 %v614, %v1134
        %1136 = vmatmul.bf16.gmra.mxu0 %v822
        %v1137 = vpop.f32.mrf.mxu0
        %v1138 = vadd.f32 %v614, %v1137
        %v1139 = vpop.f32.mrf.mxu0
        %v1140 = vadd.f32 %v614, %v1139
        %1141 = vmatmul.bf16.gmra.mxu0 %v824
        %v1142 = vpop.f32.mrf.mxu0
        %v1143 = vadd.f32 %v614, %v1142
        %v1144 = vpop.f32.mrf.mxu0
        %v1145 = vadd.f32 %v614, %v1144
        %1146 = vmatmul.bf16.gmra.mxu0 %v826
        %v1147 = vpop.f32.mrf.mxu0
        %v1148 = vadd.f32 %v614, %v1147
        %v1149 = vpop.f32.mrf.mxu0
        %v1150 = vadd.f32 %v614, %v1149
        %1151 = vmatmul.bf16.gmra.mxu0 %v828
        %v1152 = vpop.f32.mrf.mxu0
        %v1153 = vadd.f32 %v614, %v1152
        %v1154 = vpop.f32.mrf.mxu0
        %v1155 = vadd.f32 %v614, %v1154
        %1156 = vmatmul.bf16.gmra.mxu0 %v830
        %v1157 = vpop.f32.mrf.mxu0
        %v1158 = vadd.f32 %v614, %v1157
        %v1159 = vpop.f32.mrf.mxu0
        %v1160 = vadd.f32 %v614, %v1159
        %1161 = vmatmul.bf16.gmra.mxu0 %v832
        %v1162 = vpop.f32.mrf.mxu0
        %v1163 = vadd.f32 %v614, %v1162
        %v1164 = vpop.f32.mrf.mxu0
        %v1165 = vadd.f32 %v614, %v1164
        %1166 = vmatmul.bf16.gmra.mxu0 %v834
        %v1167 = vpop.f32.mrf.mxu0
        %v1168 = vadd.f32 %v614, %v1167
        %v1169 = vpop.f32.mrf.mxu0
        %v1170 = vadd.f32 %v614, %v1169
        %1171 = vmatmul.bf16.gmra.mxu0 %v836
        %v1172 = vpop.f32.mrf.mxu0
        %v1173 = vadd.f32 %v614, %v1172
        %v1174 = vpop.f32.mrf.mxu0
        %v1175 = vadd.f32 %v614, %v1174
        %1176 = vmatmul.bf16.gmra.mxu0 %v838
        %v1177 = vpop.f32.mrf.mxu0
        %v1178 = vadd.f32 %v614, %v1177
        %v1179 = vpop.f32.mrf.mxu0
        %v1180 = vadd.f32 %v614, %v1179
        %1181 = vmatmul.bf16.gmra.mxu0 %v840
        %v1182 = vpop.f32.mrf.mxu0
        %v1183 = vadd.f32 %v614, %v1182
        %v1184 = vpop.f32.mrf.mxu0
        %v1185 = vadd.f32 %v614, %v1184
        %1186 = vmatmul.bf16.gmra.mxu0 %v842
        %v1187 = vpop.f32.mrf.mxu0
        %v1188 = vadd.f32 %v614, %v1187
        %v1189 = vpop.f32.mrf.mxu0
        %v1190 = vadd.f32 %v614, %v1189
        %1191 = vmatmul.bf16.gmra.mxu0 %v844
        %v1192 = vpop.f32.mrf.mxu0
        %v1193 = vadd.f32 %v614, %v1192
        %v1194 = vpop.f32.mrf.mxu0
        %v1195 = vadd.f32 %v614, %v1194
        %1196 = vmatmul.bf16.gmra.mxu0 %v846
        %v1197 = vpop.f32.mrf.mxu0
        %v1198 = vadd.f32 %v614, %v1197
        %v1199 = vpop.f32.mrf.mxu0
        %v1200 = vadd.f32 %v614, %v1199
        %1201 = vmatmul.bf16.gmra.mxu0 %v848
        %v1202 = vpop.f32.mrf.mxu0
        %v1203 = vadd.f32 %v614, %v1202
        %v1204 = vpop.f32.mrf.mxu0
        %v1205 = vadd.f32 %v614, %v1204
        %1206 = vmatmul.bf16.gmra.mxu0 %v850
        %v1207 = vpop.f32.mrf.mxu0
        %v1208 = vadd.f32 %v614, %v1207
        %v1209 = vpop.f32.mrf.mxu0
        %v1210 = vadd.f32 %v614, %v1209
        %1211 = vmatmul.bf16.gmra.mxu0 %v852
        %v1212 = vpop.f32.mrf.mxu0
        %v1213 = vadd.f32 %v614, %v1212
        %v1214 = vpop.f32.mrf.mxu0
        %v1215 = vadd.f32 %v614, %v1214
        %1216 = vmatmul.bf16.gmra.mxu0 %v854
        %v1217 = vpop.f32.mrf.mxu0
        %v1218 = vadd.f32 %v614, %v1217
        %v1219 = vpop.f32.mrf.mxu0
        %v1220 = vadd.f32 %v614, %v1219
        %1221 = vmatmul.bf16.gmra.mxu0 %v856
        %v1222 = vpop.f32.mrf.mxu0
        %v1223 = vadd.f32 %v614, %v1222
        %v1224 = vpop.f32.mrf.mxu0
        %v1225 = vadd.f32 %v614, %v1224
        %1226 = vmatmul.bf16.gmra.mxu0 %v858
        %v1227 = vpop.f32.mrf.mxu0
        %v1228 = vadd.f32 %v614, %v1227
        %v1229 = vpop.f32.mrf.mxu0
        %v1230 = vadd.f32 %v614, %v1229
        %1231 = vmatmul.bf16.gmra.mxu0 %v860
        %v1232 = vpop.f32.mrf.mxu0
        %v1233 = vadd.f32 %v614, %v1232
        %v1234 = vpop.f32.mrf.mxu0
        %v1235 = vadd.f32 %v614, %v1234
        %1236 = vmatmul.bf16.gmra.mxu0 %v862
        %v1237 = vpop.f32.mrf.mxu0
        %v1238 = vadd.f32 %v614, %v1237
        %v1239 = vpop.f32.mrf.mxu0
        %v1240 = vadd.f32 %v614, %v1239
        %1241 = vmatmul.bf16.gmra.mxu0 %v864
        %v1242 = vpop.f32.mrf.mxu0
        %v1243 = vadd.f32 %v614, %v1242
        %v1244 = vpop.f32.mrf.mxu0
        %v1245 = vadd.f32 %v614, %v1244
        %1246 = vmatmul.bf16.gmra.mxu0 %v866
        %v1247 = vpop.f32.mrf.mxu0
        %v1248 = vadd.f32 %v614, %v1247
        %v1249 = vpop.f32.mrf.mxu0
        %v1250 = vadd.f32 %v614, %v1249
        %1251 = vmatmul.bf16.gmra.mxu0 %v868
        %v1252 = vpop.f32.mrf.mxu0
        %v1253 = vadd.f32 %v614, %v1252
        %v1254 = vpop.f32.mrf.mxu0
        %v1255 = vadd.f32 %v614, %v1254
        %1256 = vmatmul.bf16.gmra.mxu0 %v870
        %v1257 = vpop.f32.mrf.mxu0
        %v1258 = vadd.f32 %v614, %v1257
        %v1259 = vpop.f32.mrf.mxu0
        %v1260 = vadd.f32 %v614, %v1259
        %1261 = vmatmul.bf16.gmra.mxu0 %v872
        %v1262 = vpop.f32.mrf.mxu0
        %v1263 = vadd.f32 %v614, %v1262
        %v1264 = vpop.f32.mrf.mxu0
        %v1265 = vadd.f32 %v614, %v1264
        %1266 = vdwg.mxu0
        %1267 = vmatpush.bf16.msra.mxu0 %v1064
        %1268 = vmatpush.bf16.msra.mxu0 %v1062
        %1269 = vmatpush.bf16.msra.mxu0 %v1060
        %1270 = vmatpush.bf16.msra.mxu0 %v1058
        %1271 = vmatpush.bf16.msra.mxu0 %v1056
        %1272 = vmatpush.bf16.msra.mxu0 %v1054
        %1273 = vmatpush.bf16.msra.mxu0 %v1052
        %1274 = vmatpush.bf16.msra.mxu0 %v1050
        %1275 = vmatmul.bf16.gmra.mxu0 %v811
        %v1276 = vpop.f32.mrf.mxu0
        %v1277 = vadd.f32 %v1108, %v1276
        %v1278 = vpop.f32.mrf.mxu0
        %v1279 = vadd.f32 %v1110, %v1278
        %1280 = vmatmul.bf16.gmra.mxu0 %v813
        %v1281 = vpop.f32.mrf.mxu0
        %v1282 = vadd.f32 %v1113, %v1281
        %v1283 = vpop.f32.mrf.mxu0
        %v1284 = vadd.f32 %v1115, %v1283
        %1285 = vmatmul.bf16.gmra.mxu0 %v815
        %v1286 = vpop.f32.mrf.mxu0
        %v1287 = vadd.f32 %v1118, %v1286
        %v1288 = vpop.f32.mrf.mxu0
        %v1289 = vadd.f32 %v1120, %v1288
        %1290 = vmatmul.bf16.gmra.mxu0 %v817
        %v1291 = vpop.f32.mrf.mxu0
        %v1292 = vadd.f32 %v1123, %v1291
        %v1293 = vpop.f32.mrf.mxu0
        %v1294 = vadd.f32 %v1125, %v1293
        %1295 = vmatmul.bf16.gmra.mxu0 %v819
        %v1296 = vpop.f32.mrf.mxu0
        %v1297 = vadd.f32 %v1128, %v1296
        %v1298 = vpop.f32.mrf.mxu0
        %v1299 = vadd.f32 %v1130, %v1298
        %1300 = vmatmul.bf16.gmra.mxu0 %v821
        %v1301 = vpop.f32.mrf.mxu0
        %v1302 = vadd.f32 %v1133, %v1301
        %v1303 = vpop.f32.mrf.mxu0
        %v1304 = vadd.f32 %v1135, %v1303
        %1305 = vmatmul.bf16.gmra.mxu0 %v823
        %v1306 = vpop.f32.mrf.mxu0
        %v1307 = vadd.f32 %v1138, %v1306
        %v1308 = vpop.f32.mrf.mxu0
        %v1309 = vadd.f32 %v1140, %v1308
        %1310 = vmatmul.bf16.gmra.mxu0 %v825
        %v1311 = vpop.f32.mrf.mxu0
        %v1312 = vadd.f32 %v1143, %v1311
        %v1313 = vpop.f32.mrf.mxu0
        %v1314 = vadd.f32 %v1145, %v1313
        %1315 = vmatmul.bf16.gmra.mxu0 %v827
        %v1316 = vpop.f32.mrf.mxu0
        %v1317 = vadd.f32 %v1148, %v1316
        %v1318 = vpop.f32.mrf.mxu0
        %v1319 = vadd.f32 %v1150, %v1318
        %1320 = vmatmul.bf16.gmra.mxu0 %v829
        %v1321 = vpop.f32.mrf.mxu0
        %v1322 = vadd.f32 %v1153, %v1321
        %v1323 = vpop.f32.mrf.mxu0
        %v1324 = vadd.f32 %v1155, %v1323
        %1325 = vmatmul.bf16.gmra.mxu0 %v831
        %v1326 = vpop.f32.mrf.mxu0
        %v1327 = vadd.f32 %v1158, %v1326
        %v1328 = vpop.f32.mrf.mxu0
        %v1329 = vadd.f32 %v1160, %v1328
        %1330 = vmatmul.bf16.gmra.mxu0 %v833
        %v1331 = vpop.f32.mrf.mxu0
        %v1332 = vadd.f32 %v1163, %v1331
        %v1333 = vpop.f32.mrf.mxu0
        %v1334 = vadd.f32 %v1165, %v1333
        %1335 = vmatmul.bf16.gmra.mxu0 %v835
        %v1336 = vpop.f32.mrf.mxu0
        %v1337 = vadd.f32 %v1168, %v1336
        %v1338 = vpop.f32.mrf.mxu0
        %v1339 = vadd.f32 %v1170, %v1338
        %1340 = vmatmul.bf16.gmra.mxu0 %v837
        %v1341 = vpop.f32.mrf.mxu0
        %v1342 = vadd.f32 %v1173, %v1341
        %v1343 = vpop.f32.mrf.mxu0
        %v1344 = vadd.f32 %v1175, %v1343
        %1345 = vmatmul.bf16.gmra.mxu0 %v839
        %v1346 = vpop.f32.mrf.mxu0
        %v1347 = vadd.f32 %v1178, %v1346
        %v1348 = vpop.f32.mrf.mxu0
        %v1349 = vadd.f32 %v1180, %v1348
        %1350 = vmatmul.bf16.gmra.mxu0 %v841
        %v1351 = vpop.f32.mrf.mxu0
        %v1352 = vadd.f32 %v1183, %v1351
        %v1353 = vpop.f32.mrf.mxu0
        %v1354 = vadd.f32 %v1185, %v1353
        %1355 = vmatmul.bf16.gmra.mxu0 %v843
        %v1356 = vpop.f32.mrf.mxu0
        %v1357 = vadd.f32 %v1188, %v1356
        %v1358 = vpop.f32.mrf.mxu0
        %v1359 = vadd.f32 %v1190, %v1358
        %1360 = vmatmul.bf16.gmra.mxu0 %v845
        %v1361 = vpop.f32.mrf.mxu0
        %v1362 = vadd.f32 %v1193, %v1361
        %v1363 = vpop.f32.mrf.mxu0
        %v1364 = vadd.f32 %v1195, %v1363
        %1365 = vmatmul.bf16.gmra.mxu0 %v847
        %v1366 = vpop.f32.mrf.mxu0
        %v1367 = vadd.f32 %v1198, %v1366
        %v1368 = vpop.f32.mrf.mxu0
        %v1369 = vadd.f32 %v1200, %v1368
        %1370 = vmatmul.bf16.gmra.mxu0 %v849
        %v1371 = vpop.f32.mrf.mxu0
        %v1372 = vadd.f32 %v1203, %v1371
        %v1373 = vpop.f32.mrf.mxu0
        %v1374 = vadd.f32 %v1205, %v1373
        %1375 = vmatmul.bf16.gmra.mxu0 %v851
        %v1376 = vpop.f32.mrf.mxu0
        %v1377 = vadd.f32 %v1208, %v1376
        %v1378 = vpop.f32.mrf.mxu0
        %v1379 = vadd.f32 %v1210, %v1378
        %1380 = vmatmul.bf16.gmra.mxu0 %v853
        %v1381 = vpop.f32.mrf.mxu0
        %v1382 = vadd.f32 %v1213, %v1381
        %v1383 = vpop.f32.mrf.mxu0
        %v1384 = vadd.f32 %v1215, %v1383
        %1385 = vmatmul.bf16.gmra.mxu0 %v855
        %v1386 = vpop.f32.mrf.mxu0
        %v1387 = vadd.f32 %v1218, %v1386
        %v1388 = vpop.f32.mrf.mxu0
        %v1389 = vadd.f32 %v1220, %v1388
        %1390 = vmatmul.bf16.gmra.mxu0 %v857
        %v1391 = vpop.f32.mrf.mxu0
        %v1392 = vadd.f32 %v1223, %v1391
        %v1393 = vpop.f32.mrf.mxu0
        %v1394 = vadd.f32 %v1225, %v1393
        %1395 = vmatmul.bf16.gmra.mxu0 %v859
        %v1396 = vpop.f32.mrf.mxu0
        %v1397 = vadd.f32 %v1228, %v1396
        %v1398 = vpop.f32.mrf.mxu0
        %v1399 = vadd.f32 %v1230, %v1398
        %1400 = vmatmul.bf16.gmra.mxu0 %v861
        %v1401 = vpop.f32.mrf.mxu0
        %v1402 = vadd.f32 %v1233, %v1401
        %v1403 = vpop.f32.mrf.mxu0
        %v1404 = vadd.f32 %v1235, %v1403
        %1405 = vmatmul.bf16.gmra.mxu0 %v863
        %v1406 = vpop.f32.mrf.mxu0
        %v1407 = vadd.f32 %v1238, %v1406
        %v1408 = vpop.f32.mrf.mxu0
        %v1409 = vadd.f32 %v1240, %v1408
        %1410 = vmatmul.bf16.gmra.mxu0 %v865
        %v1411 = vpop.f32.mrf.mxu0
        %v1412 = vadd.f32 %v1243, %v1411
        %v1413 = vpop.f32.mrf.mxu0
        %v1414 = vadd.f32 %v1245, %v1413
        %1415 = vmatmul.bf16.gmra.mxu0 %v867
        %v1416 = vpop.f32.mrf.mxu0
        %v1417 = vadd.f32 %v1248, %v1416
        %v1418 = vpop.f32.mrf.mxu0
        %v1419 = vadd.f32 %v1250, %v1418
        %1420 = vmatmul.bf16.gmra.mxu0 %v869
        %v1421 = vpop.f32.mrf.mxu0
        %v1422 = vadd.f32 %v1253, %v1421
        %v1423 = vpop.f32.mrf.mxu0
        %v1424 = vadd.f32 %v1255, %v1423
        %1425 = vmatmul.bf16.gmra.mxu0 %v871
        %v1426 = vpop.f32.mrf.mxu0
        %v1427 = vadd.f32 %v1258, %v1426
        %v1428 = vpop.f32.mrf.mxu0
        %v1429 = vadd.f32 %v1260, %v1428
        %1430 = vmatmul.bf16.gmra.mxu0 %v873
        %v1431 = vpop.f32.mrf.mxu0
        %v1432 = vadd.f32 %v1263, %v1431
        %v1433 = vpop.f32.mrf.mxu0
        %v1434 = vadd.f32 %v1265, %v1433
        %1435 = vdwg.mxu0
        %1436 = vmatpush.bf16.msra.mxu0 %v1049
        %1437 = vmatpush.bf16.msra.mxu0 %v1047
        %1438 = vmatpush.bf16.msra.mxu0 %v1045
        %1439 = vmatpush.bf16.msra.mxu0 %v1043
        %1440 = vmatpush.bf16.msra.mxu0 %v1041
        %1441 = vmatpush.bf16.msra.mxu0 %v1039
        %1442 = vmatpush.bf16.msra.mxu0 %v1037
        %1443 = vmatpush.bf16.msra.mxu0 %v1035
        %1444 = vmatmul.bf16.gmra.mxu0 %v810
        %v1445 = vpop.f32.mrf.mxu0
        %v1446 = vadd.f32 %v615, %v1445
        %v1447 = vpop.f32.mrf.mxu0
        %v1448 = vadd.f32 %v615, %v1447
        %1449 = vmatmul.bf16.gmra.mxu0 %v812
        %v1450 = vpop.f32.mrf.mxu0
        %v1451 = vadd.f32 %v615, %v1450
        %v1452 = vpop.f32.mrf.mxu0
        %v1453 = vadd.f32 %v615, %v1452
        %1454 = vmatmul.bf16.gmra.mxu0 %v814
        %v1455 = vpop.f32.mrf.mxu0
        %v1456 = vadd.f32 %v615, %v1455
        %v1457 = vpop.f32.mrf.mxu0
        %v1458 = vadd.f32 %v615, %v1457
        %1459 = vmatmul.bf16.gmra.mxu0 %v816
        %v1460 = vpop.f32.mrf.mxu0
        %v1461 = vadd.f32 %v615, %v1460
        %v1462 = vpop.f32.mrf.mxu0
        %v1463 = vadd.f32 %v615, %v1462
        %1464 = vmatmul.bf16.gmra.mxu0 %v818
        %v1465 = vpop.f32.mrf.mxu0
        %v1466 = vadd.f32 %v615, %v1465
        %v1467 = vpop.f32.mrf.mxu0
        %v1468 = vadd.f32 %v615, %v1467
        %1469 = vmatmul.bf16.gmra.mxu0 %v820
        %v1470 = vpop.f32.mrf.mxu0
        %v1471 = vadd.f32 %v615, %v1470
        %v1472 = vpop.f32.mrf.mxu0
        %v1473 = vadd.f32 %v615, %v1472
        %1474 = vmatmul.bf16.gmra.mxu0 %v822
        %v1475 = vpop.f32.mrf.mxu0
        %v1476 = vadd.f32 %v615, %v1475
        %v1477 = vpop.f32.mrf.mxu0
        %v1478 = vadd.f32 %v615, %v1477
        %1479 = vmatmul.bf16.gmra.mxu0 %v824
        %v1480 = vpop.f32.mrf.mxu0
        %v1481 = vadd.f32 %v615, %v1480
        %v1482 = vpop.f32.mrf.mxu0
        %v1483 = vadd.f32 %v615, %v1482
        %1484 = vmatmul.bf16.gmra.mxu0 %v826
        %v1485 = vpop.f32.mrf.mxu0
        %v1486 = vadd.f32 %v615, %v1485
        %v1487 = vpop.f32.mrf.mxu0
        %v1488 = vadd.f32 %v615, %v1487
        %1489 = vmatmul.bf16.gmra.mxu0 %v828
        %v1490 = vpop.f32.mrf.mxu0
        %v1491 = vadd.f32 %v615, %v1490
        %v1492 = vpop.f32.mrf.mxu0
        %v1493 = vadd.f32 %v615, %v1492
        %1494 = vmatmul.bf16.gmra.mxu0 %v830
        %v1495 = vpop.f32.mrf.mxu0
        %v1496 = vadd.f32 %v615, %v1495
        %v1497 = vpop.f32.mrf.mxu0
        %v1498 = vadd.f32 %v615, %v1497
        %1499 = vmatmul.bf16.gmra.mxu0 %v832
        %v1500 = vpop.f32.mrf.mxu0
        %v1501 = vadd.f32 %v615, %v1500
        %v1502 = vpop.f32.mrf.mxu0
        %v1503 = vadd.f32 %v615, %v1502
        %1504 = vmatmul.bf16.gmra.mxu0 %v834
        %v1505 = vpop.f32.mrf.mxu0
        %v1506 = vadd.f32 %v615, %v1505
        %v1507 = vpop.f32.mrf.mxu0
        %v1508 = vadd.f32 %v615, %v1507
        %1509 = vmatmul.bf16.gmra.mxu0 %v836
        %v1510 = vpop.f32.mrf.mxu0
        %v1511 = vadd.f32 %v615, %v1510
        %v1512 = vpop.f32.mrf.mxu0
        %v1513 = vadd.f32 %v615, %v1512
        %1514 = vmatmul.bf16.gmra.mxu0 %v838
        %v1515 = vpop.f32.mrf.mxu0
        %v1516 = vadd.f32 %v615, %v1515
        %v1517 = vpop.f32.mrf.mxu0
        %v1518 = vadd.f32 %v615, %v1517
        %1519 = vmatmul.bf16.gmra.mxu0 %v840
        %v1520 = vpop.f32.mrf.mxu0
        %v1521 = vadd.f32 %v615, %v1520
        %v1522 = vpop.f32.mrf.mxu0
        %v1523 = vadd.f32 %v615, %v1522
        %1524 = vmatmul.bf16.gmra.mxu0 %v842
        %v1525 = vpop.f32.mrf.mxu0
        %v1526 = vadd.f32 %v615, %v1525
        %v1527 = vpop.f32.mrf.mxu0
        %v1528 = vadd.f32 %v615, %v1527
        %1529 = vmatmul.bf16.gmra.mxu0 %v844
        %v1530 = vpop.f32.mrf.mxu0
        %v1531 = vadd.f32 %v615, %v1530
        %v1532 = vpop.f32.mrf.mxu0
        %v1533 = vadd.f32 %v615, %v1532
        %1534 = vmatmul.bf16.gmra.mxu0 %v846
        %v1535 = vpop.f32.mrf.mxu0
        %v1536 = vadd.f32 %v615, %v1535
        %v1537 = vpop.f32.mrf.mxu0
        %v1538 = vadd.f32 %v615, %v1537
        %1539 = vmatmul.bf16.gmra.mxu0 %v848
        %v1540 = vpop.f32.mrf.mxu0
        %v1541 = vadd.f32 %v615, %v1540
        %v1542 = vpop.f32.mrf.mxu0
        %v1543 = vadd.f32 %v615, %v1542
        %1544 = vmatmul.bf16.gmra.mxu0 %v850
        %v1545 = vpop.f32.mrf.mxu0
        %v1546 = vadd.f32 %v615, %v1545
        %v1547 = vpop.f32.mrf.mxu0
        %v1548 = vadd.f32 %v615, %v1547
        %1549 = vmatmul.bf16.gmra.mxu0 %v852
        %v1550 = vpop.f32.mrf.mxu0
        %v1551 = vadd.f32 %v615, %v1550
        %v1552 = vpop.f32.mrf.mxu0
        %v1553 = vadd.f32 %v615, %v1552
        %1554 = vmatmul.bf16.gmra.mxu0 %v854
        %v1555 = vpop.f32.mrf.mxu0
        %v1556 = vadd.f32 %v615, %v1555
        %v1557 = vpop.f32.mrf.mxu0
        %v1558 = vadd.f32 %v615, %v1557
        %1559 = vmatmul.bf16.gmra.mxu0 %v856
        %v1560 = vpop.f32.mrf.mxu0
        %v1561 = vadd.f32 %v615, %v1560
        %v1562 = vpop.f32.mrf.mxu0
        %v1563 = vadd.f32 %v615, %v1562
        %1564 = vmatmul.bf16.gmra.mxu0 %v858
        %v1565 = vpop.f32.mrf.mxu0
        %v1566 = vadd.f32 %v615, %v1565
        %v1567 = vpop.f32.mrf.mxu0
        %v1568 = vadd.f32 %v615, %v1567
        %1569 = vmatmul.bf16.gmra.mxu0 %v860
        %v1570 = vpop.f32.mrf.mxu0
        %v1571 = vadd.f32 %v615, %v1570
        %v1572 = vpop.f32.mrf.mxu0
        %v1573 = vadd.f32 %v615, %v1572
        %1574 = vmatmul.bf16.gmra.mxu0 %v862
        %v1575 = vpop.f32.mrf.mxu0
        %v1576 = vadd.f32 %v615, %v1575
        %v1577 = vpop.f32.mrf.mxu0
        %v1578 = vadd.f32 %v615, %v1577
        %1579 = vmatmul.bf16.gmra.mxu0 %v864
        %v1580 = vpop.f32.mrf.mxu0
        %v1581 = vadd.f32 %v615, %v1580
        %v1582 = vpop.f32.mrf.mxu0
        %v1583 = vadd.f32 %v615, %v1582
        %1584 = vmatmul.bf16.gmra.mxu0 %v866
        %v1585 = vpop.f32.mrf.mxu0
        %v1586 = vadd.f32 %v615, %v1585
        %v1587 = vpop.f32.mrf.mxu0
        %v1588 = vadd.f32 %v615, %v1587
        %1589 = vmatmul.bf16.gmra.mxu0 %v868
        %v1590 = vpop.f32.mrf.mxu0
        %v1591 = vadd.f32 %v615, %v1590
        %v1592 = vpop.f32.mrf.mxu0
        %v1593 = vadd.f32 %v615, %v1592
        %1594 = vmatmul.bf16.gmra.mxu0 %v870
        %v1595 = vpop.f32.mrf.mxu0
        %v1596 = vadd.f32 %v615, %v1595
        %v1597 = vpop.f32.mrf.mxu0
        %v1598 = vadd.f32 %v615, %v1597
        %1599 = vmatmul.bf16.gmra.mxu0 %v872
        %v1600 = vpop.f32.mrf.mxu0
        %v1601 = vadd.f32 %v615, %v1600
        %v1602 = vpop.f32.mrf.mxu0
        %v1603 = vadd.f32 %v615, %v1602
        %1604 = vdwg.mxu0
        %1605 = vmatpush.bf16.msra.mxu0 %v1065
        %1606 = vmatpush.bf16.msra.mxu0 %v1063
        %1607 = vmatpush.bf16.msra.mxu0 %v1061
        %1608 = vmatpush.bf16.msra.mxu0 %v1059
        %1609 = vmatpush.bf16.msra.mxu0 %v1057
        %1610 = vmatpush.bf16.msra.mxu0 %v1055
        %1611 = vmatpush.bf16.msra.mxu0 %v1053
        %1612 = vmatpush.bf16.msra.mxu0 %v1051
        %1613 = vmatmul.bf16.gmra.mxu0 %v811
        %v1614 = vpop.f32.mrf.mxu0
        %v1615 = vadd.f32 %v1446, %v1614
        %v1616 = vpop.f32.mrf.mxu0
        %v1617 = vadd.f32 %v1448, %v1616
        %1618 = vmatmul.bf16.gmra.mxu0 %v813
        %v1619 = vpop.f32.mrf.mxu0
        %v1620 = vadd.f32 %v1451, %v1619
        %v1621 = vpop.f32.mrf.mxu0
        %v1622 = vadd.f32 %v1453, %v1621
        %1623 = vmatmul.bf16.gmra.mxu0 %v815
        %v1624 = vpop.f32.mrf.mxu0
        %v1625 = vadd.f32 %v1456, %v1624
        %v1626 = vpop.f32.mrf.mxu0
        %v1627 = vadd.f32 %v1458, %v1626
        %1628 = vmatmul.bf16.gmra.mxu0 %v817
        %v1629 = vpop.f32.mrf.mxu0
        %v1630 = vadd.f32 %v1461, %v1629
        %v1631 = vpop.f32.mrf.mxu0
        %v1632 = vadd.f32 %v1463, %v1631
        %1633 = vmatmul.bf16.gmra.mxu0 %v819
        %v1634 = vpop.f32.mrf.mxu0
        %v1635 = vadd.f32 %v1466, %v1634
        %v1636 = vpop.f32.mrf.mxu0
        %v1637 = vadd.f32 %v1468, %v1636
        %1638 = vmatmul.bf16.gmra.mxu0 %v821
        %v1639 = vpop.f32.mrf.mxu0
        %v1640 = vadd.f32 %v1471, %v1639
        %v1641 = vpop.f32.mrf.mxu0
        %v1642 = vadd.f32 %v1473, %v1641
        %1643 = vmatmul.bf16.gmra.mxu0 %v823
        %v1644 = vpop.f32.mrf.mxu0
        %v1645 = vadd.f32 %v1476, %v1644
        %v1646 = vpop.f32.mrf.mxu0
        %v1647 = vadd.f32 %v1478, %v1646
        %1648 = vmatmul.bf16.gmra.mxu0 %v825
        %v1649 = vpop.f32.mrf.mxu0
        %v1650 = vadd.f32 %v1481, %v1649
        %v1651 = vpop.f32.mrf.mxu0
        %v1652 = vadd.f32 %v1483, %v1651
        %1653 = vmatmul.bf16.gmra.mxu0 %v827
        %v1654 = vpop.f32.mrf.mxu0
        %v1655 = vadd.f32 %v1486, %v1654
        %v1656 = vpop.f32.mrf.mxu0
        %v1657 = vadd.f32 %v1488, %v1656
        %1658 = vmatmul.bf16.gmra.mxu0 %v829
        %v1659 = vpop.f32.mrf.mxu0
        %v1660 = vadd.f32 %v1491, %v1659
        %v1661 = vpop.f32.mrf.mxu0
        %v1662 = vadd.f32 %v1493, %v1661
        %1663 = vmatmul.bf16.gmra.mxu0 %v831
        %v1664 = vpop.f32.mrf.mxu0
        %v1665 = vadd.f32 %v1496, %v1664
        %v1666 = vpop.f32.mrf.mxu0
        %v1667 = vadd.f32 %v1498, %v1666
        %1668 = vmatmul.bf16.gmra.mxu0 %v833
        %v1669 = vpop.f32.mrf.mxu0
        %v1670 = vadd.f32 %v1501, %v1669
        %v1671 = vpop.f32.mrf.mxu0
        %v1672 = vadd.f32 %v1503, %v1671
        %1673 = vmatmul.bf16.gmra.mxu0 %v835
        %v1674 = vpop.f32.mrf.mxu0
        %v1675 = vadd.f32 %v1506, %v1674
        %v1676 = vpop.f32.mrf.mxu0
        %v1677 = vadd.f32 %v1508, %v1676
        %1678 = vmatmul.bf16.gmra.mxu0 %v837
        %v1679 = vpop.f32.mrf.mxu0
        %v1680 = vadd.f32 %v1511, %v1679
        %v1681 = vpop.f32.mrf.mxu0
        %v1682 = vadd.f32 %v1513, %v1681
        %1683 = vmatmul.bf16.gmra.mxu0 %v839
        %v1684 = vpop.f32.mrf.mxu0
        %v1685 = vadd.f32 %v1516, %v1684
        %v1686 = vpop.f32.mrf.mxu0
        %v1687 = vadd.f32 %v1518, %v1686
        %1688 = vmatmul.bf16.gmra.mxu0 %v841
        %v1689 = vpop.f32.mrf.mxu0
        %v1690 = vadd.f32 %v1521, %v1689
        %v1691 = vpop.f32.mrf.mxu0
        %v1692 = vadd.f32 %v1523, %v1691
        %1693 = vmatmul.bf16.gmra.mxu0 %v843
        %v1694 = vpop.f32.mrf.mxu0
        %v1695 = vadd.f32 %v1526, %v1694
        %v1696 = vpop.f32.mrf.mxu0
        %v1697 = vadd.f32 %v1528, %v1696
        %1698 = vmatmul.bf16.gmra.mxu0 %v845
        %v1699 = vpop.f32.mrf.mxu0
        %v1700 = vadd.f32 %v1531, %v1699
        %v1701 = vpop.f32.mrf.mxu0
        %v1702 = vadd.f32 %v1533, %v1701
        %1703 = vmatmul.bf16.gmra.mxu0 %v847
        %v1704 = vpop.f32.mrf.mxu0
        %v1705 = vadd.f32 %v1536, %v1704
        %v1706 = vpop.f32.mrf.mxu0
        %v1707 = vadd.f32 %v1538, %v1706
        %1708 = vmatmul.bf16.gmra.mxu0 %v849
        %v1709 = vpop.f32.mrf.mxu0
        %v1710 = vadd.f32 %v1541, %v1709
        %v1711 = vpop.f32.mrf.mxu0
        %v1712 = vadd.f32 %v1543, %v1711
        %1713 = vmatmul.bf16.gmra.mxu0 %v851
        %v1714 = vpop.f32.mrf.mxu0
        %v1715 = vadd.f32 %v1546, %v1714
        %v1716 = vpop.f32.mrf.mxu0
        %v1717 = vadd.f32 %v1548, %v1716
        %1718 = vmatmul.bf16.gmra.mxu0 %v853
        %v1719 = vpop.f32.mrf.mxu0
        %v1720 = vadd.f32 %v1551, %v1719
        %v1721 = vpop.f32.mrf.mxu0
        %v1722 = vadd.f32 %v1553, %v1721
        %1723 = vmatmul.bf16.gmra.mxu0 %v855
        %v1724 = vpop.f32.mrf.mxu0
        %v1725 = vadd.f32 %v1556, %v1724
        %v1726 = vpop.f32.mrf.mxu0
        %v1727 = vadd.f32 %v1558, %v1726
        %1728 = vmatmul.bf16.gmra.mxu0 %v857
        %v1729 = vpop.f32.mrf.mxu0
        %v1730 = vadd.f32 %v1561, %v1729
        %v1731 = vpop.f32.mrf.mxu0
        %v1732 = vadd.f32 %v1563, %v1731
        %1733 = vmatmul.bf16.gmra.mxu0 %v859
        %v1734 = vpop.f32.mrf.mxu0
        %v1735 = vadd.f32 %v1566, %v1734
        %v1736 = vpop.f32.mrf.mxu0
        %v1737 = vadd.f32 %v1568, %v1736
        %1738 = vmatmul.bf16.gmra.mxu0 %v861
        %v1739 = vpop.f32.mrf.mxu0
        %v1740 = vadd.f32 %v1571, %v1739
        %v1741 = vpop.f32.mrf.mxu0
        %v1742 = vadd.f32 %v1573, %v1741
        %1743 = vmatmul.bf16.gmra.mxu0 %v863
        %v1744 = vpop.f32.mrf.mxu0
        %v1745 = vadd.f32 %v1576, %v1744
        %v1746 = vpop.f32.mrf.mxu0
        %v1747 = vadd.f32 %v1578, %v1746
        %1748 = vmatmul.bf16.gmra.mxu0 %v865
        %v1749 = vpop.f32.mrf.mxu0
        %v1750 = vadd.f32 %v1581, %v1749
        %v1751 = vpop.f32.mrf.mxu0
        %v1752 = vadd.f32 %v1583, %v1751
        %1753 = vmatmul.bf16.gmra.mxu0 %v867
        %v1754 = vpop.f32.mrf.mxu0
        %v1755 = vadd.f32 %v1586, %v1754
        %v1756 = vpop.f32.mrf.mxu0
        %v1757 = vadd.f32 %v1588, %v1756
        %1758 = vmatmul.bf16.gmra.mxu0 %v869
        %v1759 = vpop.f32.mrf.mxu0
        %v1760 = vadd.f32 %v1591, %v1759
        %v1761 = vpop.f32.mrf.mxu0
        %v1762 = vadd.f32 %v1593, %v1761
        %1763 = vmatmul.bf16.gmra.mxu0 %v871
        %v1764 = vpop.f32.mrf.mxu0
        %v1765 = vadd.f32 %v1596, %v1764
        %v1766 = vpop.f32.mrf.mxu0
        %v1767 = vadd.f32 %v1598, %v1766
        %1768 = vmatmul.bf16.gmra.mxu0 %v873
        %v1769 = vpop.f32.mrf.mxu0
        %v1770 = vadd.f32 %v1601, %v1769
        %v1771 = vpop.f32.mrf.mxu0
        %v1772 = vadd.f32 %v1603, %v1771
        %1773 = vdwg.mxu0
        %v1774 = vmax.f32 %v1277, 0.0
        %v1775 = vmax.f32 %v1615, 0.0
        %v1776 = vmax.f32 %v1279, 0.0
        %v1777 = vmax.f32 %v1617, 0.0
        %v1778 = vmax.f32 %v1282, 0.0
        %v1779 = vmax.f32 %v1620, 0.0
        %v1780 = vmax.f32 %v1284, 0.0
        %v1781 = vmax.f32 %v1622, 0.0
        %v1782 = vmax.f32 %v1287, 0.0
        %v1783 = vmax.f32 %v1625, 0.0
        %v1784 = vmax.f32 %v1289, 0.0
        %v1785 = vmax.f32 %v1627, 0.0
        %v1786 = vmax.f32 %v1292, 0.0
        %v1787 = vmax.f32 %v1630, 0.0
        %v1788 = vmax.f32 %v1294, 0.0
        %v1789 = vmax.f32 %v1632, 0.0
        %v1790 = vmax.f32 %v1297, 0.0
        %v1791 = vmax.f32 %v1635, 0.0
        %v1792 = vmax.f32 %v1299, 0.0
        %v1793 = vmax.f32 %v1637, 0.0
        %v1794 = vmax.f32 %v1302, 0.0
        %v1795 = vmax.f32 %v1640, 0.0
        %v1796 = vmax.f32 %v1304, 0.0
        %v1797 = vmax.f32 %v1642, 0.0
        %v1798 = vmax.f32 %v1307, 0.0
        %v1799 = vmax.f32 %v1645, 0.0
        %v1800 = vmax.f32 %v1309, 0.0
        %v1801 = vmax.f32 %v1647, 0.0
        %v1802 = vmax.f32 %v1312, 0.0
        %v1803 = vmax.f32 %v1650, 0.0
        %v1804 = vmax.f32 %v1314, 0.0
        %v1805 = vmax.f32 %v1652, 0.0
        %v1806 = vmax.f32 %v1317, 0.0
        %v1807 = vmax.f32 %v1655, 0.0
        %v1808 = vmax.f32 %v1319, 0.0
        %v1809 = vmax.f32 %v1657, 0.0
        %v1810 = vmax.f32 %v1322, 0.0
        %v1811 = vmax.f32 %v1660, 0.0
        %v1812 = vmax.f32 %v1324, 0.0
        %v1813 = vmax.f32 %v1662, 0.0
        %v1814 = vmax.f32 %v1327, 0.0
        %v1815 = vmax.f32 %v1665, 0.0
        %v1816 = vmax.f32 %v1329, 0.0
        %v1817 = vmax.f32 %v1667, 0.0
        %v1818 = vmax.f32 %v1332, 0.0
        %v1819 = vmax.f32 %v1670, 0.0
        %v1820 = vmax.f32 %v1334, 0.0
        %v1821 = vmax.f32 %v1672, 0.0
        %v1822 = vmax.f32 %v1337, 0.0
        %v1823 = vmax.f32 %v1675, 0.0
        %v1824 = vmax.f32 %v1339, 0.0
        %v1825 = vmax.f32 %v1677, 0.0
        %v1826 = vmax.f32 %v1342, 0.0
        %v1827 = vmax.f32 %v1680, 0.0
        %v1828 = vmax.f32 %v1344, 0.0
        %v1829 = vmax.f32 %v1682, 0.0
        %v1830 = vmax.f32 %v1347, 0.0
        %v1831 = vmax.f32 %v1685, 0.0
        %v1832 = vmax.f32 %v1349, 0.0
        %v1833 = vmax.f32 %v1687, 0.0
        %v1834 = vmax.f32 %v1352, 0.0
        %v1835 = vmax.f32 %v1690, 0.0
        %v1836 = vmax.f32 %v1354, 0.0
        %v1837 = vmax.f32 %v1692, 0.0
        %v1838 = vmax.f32 %v1357, 0.0
        %v1839 = vmax.f32 %v1695, 0.0
        %v1840 = vmax.f32 %v1359, 0.0
        %v1841 = vmax.f32 %v1697, 0.0
        %v1842 = vmax.f32 %v1362, 0.0
        %v1843 = vmax.f32 %v1700, 0.0
        %v1844 = vmax.f32 %v1364, 0.0
        %v1845 = vmax.f32 %v1702, 0.0
        %v1846 = vmax.f32 %v1367, 0.0
        %v1847 = vmax.f32 %v1705, 0.0
        %v1848 = vmax.f32 %v1369, 0.0
        %v1849 = vmax.f32 %v1707, 0.0
        %v1850 = vmax.f32 %v1372, 0.0
        %v1851 = vmax.f32 %v1710, 0.0
        %v1852 = vmax.f32 %v1374, 0.0
        %v1853 = vmax.f32 %v1712, 0.0
        %v1854 = vmax.f32 %v1377, 0.0
        %v1855 = vmax.f32 %v1715, 0.0
        %v1856 = vmax.f32 %v1379, 0.0
        %v1857 = vmax.f32 %v1717, 0.0
        %v1858 = vmax.f32 %v1382, 0.0
        %v1859 = vmax.f32 %v1720, 0.0
        %v1860 = vmax.f32 %v1384, 0.0
        %v1861 = vmax.f32 %v1722, 0.0
        %v1862 = vmax.f32 %v1387, 0.0
        %v1863 = vmax.f32 %v1725, 0.0
        %v1864 = vmax.f32 %v1389, 0.0
        %v1865 = vmax.f32 %v1727, 0.0
        %v1866 = vmax.f32 %v1392, 0.0
        %v1867 = vmax.f32 %v1730, 0.0
        %v1868 = vmax.f32 %v1394, 0.0
        %v1869 = vmax.f32 %v1732, 0.0
        %v1870 = vmax.f32 %v1397, 0.0
        %v1871 = vmax.f32 %v1735, 0.0
        %v1872 = vmax.f32 %v1399, 0.0
        %v1873 = vmax.f32 %v1737, 0.0
        %v1874 = vmax.f32 %v1402, 0.0
        %v1875 = vmax.f32 %v1740, 0.0
        %v1876 = vmax.f32 %v1404, 0.0
        %v1877 = vmax.f32 %v1742, 0.0
        %v1878 = vmax.f32 %v1407, 0.0
        %v1879 = vmax.f32 %v1745, 0.0
        %v1880 = vmax.f32 %v1409, 0.0
        %v1881 = vmax.f32 %v1747, 0.0
        %v1882 = vmax.f32 %v1412, 0.0
        %v1883 = vmax.f32 %v1750, 0.0
        %v1884 = vmax.f32 %v1414, 0.0
        %v1885 = vmax.f32 %v1752, 0.0
        %v1886 = vmax.f32 %v1417, 0.0
        %v1887 = vmax.f32 %v1755, 0.0
        %v1888 = vmax.f32 %v1419, 0.0
        %v1889 = vmax.f32 %v1757, 0.0
        %v1890 = vmax.f32 %v1422, 0.0
        %v1891 = vmax.f32 %v1760, 0.0
        %v1892 = vmax.f32 %v1424, 0.0
        %v1893 = vmax.f32 %v1762, 0.0
        %v1894 = vmax.f32 %v1427, 0.0
        %v1895 = vmax.f32 %v1765, 0.0
        %v1896 = vmax.f32 %v1429, 0.0
        %v1897 = vmax.f32 %v1767, 0.0
        %v1898 = vmax.f32 %v1432, 0.0
        %v1899 = vmax.f32 %v1770, 0.0
        %v1900 = vmax.f32 %v1434, 0.0
        %v1901 = vmax.f32 %v1772, 0.0
        // Predicated region
        $region93: #{tpu_custom_call.1} parent=55 // pred_check
          %p1902 = pneg %p435
        $region94: #{tpu_custom_call.1} parent=55 // pred_check_branch
          %1904 = sbr.rel (%p1902) target = $region96
        $region95: #{tpu_custom_call.1} parent=55 // pred_region
          %v1905 = vld [vmem:[#allocation2] sm:$0x3]
          %v1906 = vadd.f32 %v1774, %v1776
          %v1907 = vadd.f32 %v1906, %v1778
          %v1908 = vadd.f32 %v1907, %v1780
          %v1909 = vadd.f32 %v1908, %v1782
          %v1910 = vadd.f32 %v1909, %v1784
          %v1911 = vadd.f32 %v1910, %v1786
          %v1912 = vadd.f32 %v1911, %v1788
          %v1913 = vadd.f32 %v1912, %v1790
          %v1914 = vadd.f32 %v1913, %v1792
          %v1915 = vadd.f32 %v1914, %v1794
          %v1916 = vadd.f32 %v1915, %v1796
          %v1917 = vadd.f32 %v1916, %v1798
          %v1918 = vadd.f32 %v1917, %v1800
          %v1919 = vadd.f32 %v1918, %v1802
          %v1920 = vadd.f32 %v1919, %v1804
          %v1921 = vadd.f32 %v1920, %v1806
          %v1922 = vadd.f32 %v1921, %v1808
          %v1923 = vadd.f32 %v1922, %v1810
          %v1924 = vadd.f32 %v1923, %v1812
          %v1925 = vadd.f32 %v1924, %v1814
          %v1926 = vadd.f32 %v1925, %v1816
          %v1927 = vadd.f32 %v1926, %v1818
          %v1928 = vadd.f32 %v1927, %v1820
          %v1929 = vadd.f32 %v1928, %v1822
          %v1930 = vadd.f32 %v1929, %v1824
          %v1931 = vadd.f32 %v1930, %v1826
          %v1932 = vadd.f32 %v1931, %v1828
          %v1933 = vadd.f32 %v1932, %v1830
          %v1934 = vadd.f32 %v1933, %v1832
          %v1935 = vadd.f32 %v1934, %v1834
          %v1936 = vadd.f32 %v1935, %v1836
          %v1937 = vadd.f32 %v1936, %v1838
          %v1938 = vadd.f32 %v1937, %v1840
          %v1939 = vadd.f32 %v1938, %v1842
          %v1940 = vadd.f32 %v1939, %v1844
          %v1941 = vadd.f32 %v1940, %v1846
          %v1942 = vadd.f32 %v1941, %v1848
          %v1943 = vadd.f32 %v1942, %v1850
          %v1944 = vadd.f32 %v1943, %v1852
          %v1945 = vadd.f32 %v1944, %v1854
          %v1946 = vadd.f32 %v1945, %v1856
          %v1947 = vadd.f32 %v1946, %v1858
          %v1948 = vadd.f32 %v1947, %v1860
          %v1949 = vadd.f32 %v1948, %v1862
          %v1950 = vadd.f32 %v1949, %v1864
          %v1951 = vadd.f32 %v1950, %v1866
          %v1952 = vadd.f32 %v1951, %v1868
          %v1953 = vadd.f32 %v1952, %v1870
          %v1954 = vadd.f32 %v1953, %v1872
          %v1955 = vadd.f32 %v1954, %v1874
          %v1956 = vadd.f32 %v1955, %v1876
          %v1957 = vadd.f32 %v1956, %v1878
          %v1958 = vadd.f32 %v1957, %v1880
          %v1959 = vadd.f32 %v1958, %v1882
          %v1960 = vadd.f32 %v1959, %v1884
          %v1961 = vadd.f32 %v1960, %v1886
          %v1962 = vadd.f32 %v1961, %v1888
          %v1963 = vadd.f32 %v1962, %v1890
          %v1964 = vadd.f32 %v1963, %v1892
          %v1965 = vadd.f32 %v1964, %v1894
          %v1966 = vadd.f32 %v1965, %v1896
          %v1967 = vadd.f32 %v1966, %v1898
          %v1968 = vadd.f32 %v1967, %v1900
          %v1969 = vrot.slane %v1968, 4
          %v1970 = vadd.f32 %v1968, %v1969
          %v1971 = vrot.slane %v1970, 2
          %v1972 = vadd.f32 %v1970, %v1971
          %v1973 = vrot.slane %v1972, 1
          %v1974 = vadd.f32 %v1972, %v1973
          %v1975 = vadd.f32 %v1775, %v1777
          %v1976 = vadd.f32 %v1975, %v1779
          %v1977 = vadd.f32 %v1976, %v1781
          %v1978 = vadd.f32 %v1977, %v1783
          %v1979 = vadd.f32 %v1978, %v1785
          %v1980 = vadd.f32 %v1979, %v1787
          %v1981 = vadd.f32 %v1980, %v1789
          %v1982 = vadd.f32 %v1981, %v1791
          %v1983 = vadd.f32 %v1982, %v1793
          %v1984 = vadd.f32 %v1983, %v1795
          %v1985 = vadd.f32 %v1984, %v1797
          %v1986 = vadd.f32 %v1985, %v1799
          %v1987 = vadd.f32 %v1986, %v1801
          %v1988 = vadd.f32 %v1987, %v1803
          %v1989 = vadd.f32 %v1988, %v1805
          %v1990 = vadd.f32 %v1989, %v1807
          %v1991 = vadd.f32 %v1990, %v1809
          %v1992 = vadd.f32 %v1991, %v1811
          %v1993 = vadd.f32 %v1992, %v1813
          %v1994 = vadd.f32 %v1993, %v1815
          %v1995 = vadd.f32 %v1994, %v1817
          %v1996 = vadd.f32 %v1995, %v1819
          %v1997 = vadd.f32 %v1996, %v1821
          %v1998 = vadd.f32 %v1997, %v1823
          %v1999 = vadd.f32 %v1998, %v1825
          %v2000 = vadd.f32 %v1999, %v1827
          %v2001 = vadd.f32 %v2000, %v1829
          %v2002 = vadd.f32 %v2001, %v1831
          %v2003 = vadd.f32 %v2002, %v1833
          %v2004 = vadd.f32 %v2003, %v1835
          %v2005 = vadd.f32 %v2004, %v1837
          %v2006 = vadd.f32 %v2005, %v1839
          %v2007 = vadd.f32 %v2006, %v1841
          %v2008 = vadd.f32 %v2007, %v1843
          %v2009 = vadd.f32 %v2008, %v1845
          %v2010 = vadd.f32 %v2009, %v1847
          %v2011 = vadd.f32 %v2010, %v1849
          %v2012 = vadd.f32 %v2011, %v1851
          %v2013 = vadd.f32 %v2012, %v1853
          %v2014 = vadd.f32 %v2013, %v1855
          %v2015 = vadd.f32 %v2014, %v1857
          %v2016 = vadd.f32 %v2015, %v1859
          %v2017 = vadd.f32 %v2016, %v1861
          %v2018 = vadd.f32 %v2017, %v1863
          %v2019 = vadd.f32 %v2018, %v1865
          %v2020 = vadd.f32 %v2019, %v1867
          %v2021 = vadd.f32 %v2020, %v1869
          %v2022 = vadd.f32 %v2021, %v1871
          %v2023 = vadd.f32 %v2022, %v1873
          %v2024 = vadd.f32 %v2023, %v1875
          %v2025 = vadd.f32 %v2024, %v1877
          %v2026 = vadd.f32 %v2025, %v1879
          %v2027 = vadd.f32 %v2026, %v1881
          %v2028 = vadd.f32 %v2027, %v1883
          %v2029 = vadd.f32 %v2028, %v1885
          %v2030 = vadd.f32 %v2029, %v1887
          %v2031 = vadd.f32 %v2030, %v1889
          %v2032 = vadd.f32 %v2031, %v1891
          %v2033 = vadd.f32 %v2032, %v1893
          %v2034 = vadd.f32 %v2033, %v1895
          %v2035 = vadd.f32 %v2034, %v1897
          %v2036 = vadd.f32 %v2035, %v1899
          %v2037 = vadd.f32 %v2036, %v1901
          %v2038 = vrot.slane %v2037, 4
          %v2039 = vadd.f32 %v2037, %v2038
          %v2040 = vrot.slane %v2039, 2
          %v2041 = vadd.f32 %v2039, %v2040
          %v2042 = vrot.slane %v2041, 1
          %v2043 = vadd.f32 %v2041, %v2042
          %v2046 = vrot.slane %v2043, 7
          %vm2047 = vcmask 1040384
          %v2048 = vsel %vm2047, %v1974, %v2046
          %v2050 = vadd.f32 %v1905, %v2048
          %v2051 = vlaneseq
          %vm2052 = vcmp.ge.s32.totalorder %v2051, 0
          %vm2053 = vcmp.lt.s32.totalorder %v2051, 256
          %vm2054 = vmand %vm2052, %vm2053
          %2055 = vst.msk [vmem:[#allocation2] sm:$0x3] %vm2054, %v2050
          %v2056 = vld [vmem:[#allocation3] sm:$0x3]
          %v2057 = vmul.f32 %v1774, %v1774
          %v2058 = vmul.f32 %v1775, %v1775
          %v2059 = vmul.f32 %v1776, %v1776
          %v2060 = vmul.f32 %v1777, %v1777
          %v2061 = vmul.f32 %v1778, %v1778
          %v2062 = vmul.f32 %v1779, %v1779
          %v2063 = vmul.f32 %v1780, %v1780
          %v2064 = vmul.f32 %v1781, %v1781
          %v2065 = vmul.f32 %v1782, %v1782
          %v2066 = vmul.f32 %v1783, %v1783
          %v2067 = vmul.f32 %v1784, %v1784
          %v2068 = vmul.f32 %v1785, %v1785
          %v2069 = vmul.f32 %v1786, %v1786
          %v2070 = vmul.f32 %v1787, %v1787
          %v2071 = vmul.f32 %v1788, %v1788
          %v2072 = vmul.f32 %v1789, %v1789
          %v2073 = vmul.f32 %v1790, %v1790
          %v2074 = vmul.f32 %v1791, %v1791
          %v2075 = vmul.f32 %v1792, %v1792
          %v2076 = vmul.f32 %v1793, %v1793
          %v2077 = vmul.f32 %v1794, %v1794
          %v2078 = vmul.f32 %v1795, %v1795
          %v2079 = vmul.f32 %v1796, %v1796
          %v2080 = vmul.f32 %v1797, %v1797
          %v2081 = vmul.f32 %v1798, %v1798
          %v2082 = vmul.f32 %v1799, %v1799
          %v2083 = vmul.f32 %v1800, %v1800
          %v2084 = vmul.f32 %v1801, %v1801
          %v2085 = vmul.f32 %v1802, %v1802
          %v2086 = vmul.f32 %v1803, %v1803
          %v2087 = vmul.f32 %v1804, %v1804
          %v2088 = vmul.f32 %v1805, %v1805
          %v2089 = vmul.f32 %v1806, %v1806
          %v2090 = vmul.f32 %v1807, %v1807
          %v2091 = vmul.f32 %v1808, %v1808
          %v2092 = vmul.f32 %v1809, %v1809
          %v2093 = vmul.f32 %v1810, %v1810
          %v2094 = vmul.f32 %v1811, %v1811
          %v2095 = vmul.f32 %v1812, %v1812
          %v2096 = vmul.f32 %v1813, %v1813
          %v2097 = vmul.f32 %v1814, %v1814
          %v2098 = vmul.f32 %v1815, %v1815
          %v2099 = vmul.f32 %v1816, %v1816
          %v2100 = vmul.f32 %v1817, %v1817
          %v2101 = vmul.f32 %v1818, %v1818
          %v2102 = vmul.f32 %v1819, %v1819
          %v2103 = vmul.f32 %v1820, %v1820
          %v2104 = vmul.f32 %v1821, %v1821
          %v2105 = vmul.f32 %v1822, %v1822
          %v2106 = vmul.f32 %v1823, %v1823
          %v2107 = vmul.f32 %v1824, %v1824
          %v2108 = vmul.f32 %v1825, %v1825
          %v2109 = vmul.f32 %v1826, %v1826
          %v2110 = vmul.f32 %v1827, %v1827
          %v2111 = vmul.f32 %v1828, %v1828
          %v2112 = vmul.f32 %v1829, %v1829
          %v2113 = vmul.f32 %v1830, %v1830
          %v2114 = vmul.f32 %v1831, %v1831
          %v2115 = vmul.f32 %v1832, %v1832
          %v2116 = vmul.f32 %v1833, %v1833
          %v2117 = vmul.f32 %v1834, %v1834
          %v2118 = vmul.f32 %v1835, %v1835
          %v2119 = vmul.f32 %v1836, %v1836
          %v2120 = vmul.f32 %v1837, %v1837
          %v2121 = vmul.f32 %v1838, %v1838
          %v2122 = vmul.f32 %v1839, %v1839
          %v2123 = vmul.f32 %v1840, %v1840
          %v2124 = vmul.f32 %v1841, %v1841
          %v2125 = vmul.f32 %v1842, %v1842
          %v2126 = vmul.f32 %v1843, %v1843
          %v2127 = vmul.f32 %v1844, %v1844
          %v2128 = vmul.f32 %v1845, %v1845
          %v2129 = vmul.f32 %v1846, %v1846
          %v2130 = vmul.f32 %v1847, %v1847
          %v2131 = vmul.f32 %v1848, %v1848
          %v2132 = vmul.f32 %v1849, %v1849
          %v2133 = vmul.f32 %v1850, %v1850
          %v2134 = vmul.f32 %v1851, %v1851
          %v2135 = vmul.f32 %v1852, %v1852
          %v2136 = vmul.f32 %v1853, %v1853
          %v2137 = vmul.f32 %v1854, %v1854
          %v2138 = vmul.f32 %v1855, %v1855
          %v2139 = vmul.f32 %v1856, %v1856
          %v2140 = vmul.f32 %v1857, %v1857
          %v2141 = vmul.f32 %v1858, %v1858
          %v2142 = vmul.f32 %v1859, %v1859
          %v2143 = vmul.f32 %v1860, %v1860
          %v2144 = vmul.f32 %v1861, %v1861
          %v2145 = vmul.f32 %v1862, %v1862
          %v2146 = vmul.f32 %v1863, %v1863
          %v2147 = vmul.f32 %v1864, %v1864
          %v2148 = vmul.f32 %v1865, %v1865
          %v2149 = vmul.f32 %v1866, %v1866
          %v2150 = vmul.f32 %v1867, %v1867
          %v2151 = vmul.f32 %v1868, %v1868
          %v2152 = vmul.f32 %v1869, %v1869
          %v2153 = vmul.f32 %v1870, %v1870
          %v2154 = vmul.f32 %v1871, %v1871
          %v2155 = vmul.f32 %v1872, %v1872
          %v2156 = vmul.f32 %v1873, %v1873
          %v2157 = vmul.f32 %v1874, %v1874
          %v2158 = vmul.f32 %v1875, %v1875
          %v2159 = vmul.f32 %v1876, %v1876
          %v2160 = vmul.f32 %v1877, %v1877
          %v2161 = vmul.f32 %v1878, %v1878
          %v2162 = vmul.f32 %v1879, %v1879
          %v2163 = vmul.f32 %v1880, %v1880
          %v2164 = vmul.f32 %v1881, %v1881
          %v2165 = vmul.f32 %v1882, %v1882
          %v2166 = vmul.f32 %v1883, %v1883
          %v2167 = vmul.f32 %v1884, %v1884
          %v2168 = vmul.f32 %v1885, %v1885
          %v2169 = vmul.f32 %v1886, %v1886
          %v2170 = vmul.f32 %v1887, %v1887
          %v2171 = vmul.f32 %v1888, %v1888
          %v2172 = vmul.f32 %v1889, %v1889
          %v2173 = vmul.f32 %v1890, %v1890
          %v2174 = vmul.f32 %v1891, %v1891
          %v2175 = vmul.f32 %v1892, %v1892
          %v2176 = vmul.f32 %v1893, %v1893
          %v2177 = vmul.f32 %v1894, %v1894
          %v2178 = vmul.f32 %v1895, %v1895
          %v2179 = vmul.f32 %v1896, %v1896
          %v2180 = vmul.f32 %v1897, %v1897
          %v2181 = vmul.f32 %v1898, %v1898
          %v2182 = vmul.f32 %v1899, %v1899
          %v2183 = vmul.f32 %v1900, %v1900
          %v2184 = vmul.f32 %v1901, %v1901
          %v2185 = vadd.f32 %v2057, %v2059
          %v2186 = vadd.f32 %v2185, %v2061
          %v2187 = vadd.f32 %v2186, %v2063
          %v2188 = vadd.f32 %v2187, %v2065
          %v2189 = vadd.f32 %v2188, %v2067
          %v2190 = vadd.f32 %v2189, %v2069
          %v2191 = vadd.f32 %v2190, %v2071
          %v2192 = vadd.f32 %v2191, %v2073
          %v2193 = vadd.f32 %v2192, %v2075
          %v2194 = vadd.f32 %v2193, %v2077
          %v2195 = vadd.f32 %v2194, %v2079
          %v2196 = vadd.f32 %v2195, %v2081
          %v2197 = vadd.f32 %v2196, %v2083
          %v2198 = vadd.f32 %v2197, %v2085
          %v2199 = vadd.f32 %v2198, %v2087
          %v2200 = vadd.f32 %v2199, %v2089
          %v2201 = vadd.f32 %v2200, %v2091
          %v2202 = vadd.f32 %v2201, %v2093
          %v2203 = vadd.f32 %v2202, %v2095
          %v2204 = vadd.f32 %v2203, %v2097
          %v2205 = vadd.f32 %v2204, %v2099
          %v2206 = vadd.f32 %v2205, %v2101
          %v2207 = vadd.f32 %v2206, %v2103
          %v2208 = vadd.f32 %v2207, %v2105
          %v2209 = vadd.f32 %v2208, %v2107
          %v2210 = vadd.f32 %v2209, %v2109
          %v2211 = vadd.f32 %v2210, %v2111
          %v2212 = vadd.f32 %v2211, %v2113
          %v2213 = vadd.f32 %v2212, %v2115
          %v2214 = vadd.f32 %v2213, %v2117
          %v2215 = vadd.f32 %v2214, %v2119
          %v2216 = vadd.f32 %v2215, %v2121
          %v2217 = vadd.f32 %v2216, %v2123
          %v2218 = vadd.f32 %v2217, %v2125
          %v2219 = vadd.f32 %v2218, %v2127
          %v2220 = vadd.f32 %v2219, %v2129
          %v2221 = vadd.f32 %v2220, %v2131
          %v2222 = vadd.f32 %v2221, %v2133
          %v2223 = vadd.f32 %v2222, %v2135
          %v2224 = vadd.f32 %v2223, %v2137
          %v2225 = vadd.f32 %v2224, %v2139
          %v2226 = vadd.f32 %v2225, %v2141
          %v2227 = vadd.f32 %v2226, %v2143
          %v2228 = vadd.f32 %v2227, %v2145
          %v2229 = vadd.f32 %v2228, %v2147
          %v2230 = vadd.f32 %v2229, %v2149
          %v2231 = vadd.f32 %v2230, %v2151
          %v2232 = vadd.f32 %v2231, %v2153
          %v2233 = vadd.f32 %v2232, %v2155
          %v2234 = vadd.f32 %v2233, %v2157
          %v2235 = vadd.f32 %v2234, %v2159
          %v2236 = vadd.f32 %v2235, %v2161
          %v2237 = vadd.f32 %v2236, %v2163
          %v2238 = vadd.f32 %v2237, %v2165
          %v2239 = vadd.f32 %v2238, %v2167
          %v2240 = vadd.f32 %v2239, %v2169
          %v2241 = vadd.f32 %v2240, %v2171
          %v2242 = vadd.f32 %v2241, %v2173
          %v2243 = vadd.f32 %v2242, %v2175
          %v2244 = vadd.f32 %v2243, %v2177
          %v2245 = vadd.f32 %v2244, %v2179
          %v2246 = vadd.f32 %v2245, %v2181
          %v2247 = vadd.f32 %v2246, %v2183
          %v2248 = vrot.slane %v2247, 4
          %v2249 = vadd.f32 %v2247, %v2248
          %v2250 = vrot.slane %v2249, 2
          %v2251 = vadd.f32 %v2249, %v2250
          %v2252 = vrot.slane %v2251, 1
          %v2253 = vadd.f32 %v2251, %v2252
          %v2254 = vadd.f32 %v2058, %v2060
          %v2255 = vadd.f32 %v2254, %v2062
          %v2256 = vadd.f32 %v2255, %v2064
          %v2257 = vadd.f32 %v2256, %v2066
          %v2258 = vadd.f32 %v2257, %v2068
          %v2259 = vadd.f32 %v2258, %v2070
          %v2260 = vadd.f32 %v2259, %v2072
          %v2261 = vadd.f32 %v2260, %v2074
          %v2262 = vadd.f32 %v2261, %v2076
          %v2263 = vadd.f32 %v2262, %v2078
          %v2264 = vadd.f32 %v2263, %v2080
          %v2265 = vadd.f32 %v2264, %v2082
          %v2266 = vadd.f32 %v2265, %v2084
          %v2267 = vadd.f32 %v2266, %v2086
          %v2268 = vadd.f32 %v2267, %v2088
          %v2269 = vadd.f32 %v2268, %v2090
          %v2270 = vadd.f32 %v2269, %v2092
          %v2271 = vadd.f32 %v2270, %v2094
          %v2272 = vadd.f32 %v2271, %v2096
          %v2273 = vadd.f32 %v2272, %v2098
          %v2274 = vadd.f32 %v2273, %v2100
          %v2275 = vadd.f32 %v2274, %v2102
          %v2276 = vadd.f32 %v2275, %v2104
          %v2277 = vadd.f32 %v2276, %v2106
          %v2278 = vadd.f32 %v2277, %v2108
          %v2279 = vadd.f32 %v2278, %v2110
          %v2280 = vadd.f32 %v2279, %v2112
          %v2281 = vadd.f32 %v2280, %v2114
          %v2282 = vadd.f32 %v2281, %v2116
          %v2283 = vadd.f32 %v2282, %v2118
          %v2284 = vadd.f32 %v2283, %v2120
          %v2285 = vadd.f32 %v2284, %v2122
          %v2286 = vadd.f32 %v2285, %v2124
          %v2287 = vadd.f32 %v2286, %v2126
          %v2288 = vadd.f32 %v2287, %v2128
          %v2289 = vadd.f32 %v2288, %v2130
          %v2290 = vadd.f32 %v2289, %v2132
          %v2291 = vadd.f32 %v2290, %v2134
          %v2292 = vadd.f32 %v2291, %v2136
          %v2293 = vadd.f32 %v2292, %v2138
          %v2294 = vadd.f32 %v2293, %v2140
          %v2295 = vadd.f32 %v2294, %v2142
          %v2296 = vadd.f32 %v2295, %v2144
          %v2297 = vadd.f32 %v2296, %v2146
          %v2298 = vadd.f32 %v2297, %v2148
          %v2299 = vadd.f32 %v2298, %v2150
          %v2300 = vadd.f32 %v2299, %v2152
          %v2301 = vadd.f32 %v2300, %v2154
          %v2302 = vadd.f32 %v2301, %v2156
          %v2303 = vadd.f32 %v2302, %v2158
          %v2304 = vadd.f32 %v2303, %v2160
          %v2305 = vadd.f32 %v2304, %v2162
          %v2306 = vadd.f32 %v2305, %v2164
          %v2307 = vadd.f32 %v2306, %v2166
          %v2308 = vadd.f32 %v2307, %v2168
          %v2309 = vadd.f32 %v2308, %v2170
          %v2310 = vadd.f32 %v2309, %v2172
          %v2311 = vadd.f32 %v2310, %v2174
          %v2312 = vadd.f32 %v2311, %v2176
          %v2313 = vadd.f32 %v2312, %v2178
          %v2314 = vadd.f32 %v2313, %v2180
          %v2315 = vadd.f32 %v2314, %v2182
          %v2316 = vadd.f32 %v2315, %v2184
          %v2317 = vrot.slane %v2316, 4
          %v2318 = vadd.f32 %v2316, %v2317
          %v2319 = vrot.slane %v2318, 2
          %v2320 = vadd.f32 %v2318, %v2319
          %v2321 = vrot.slane %v2320, 1
          %v2322 = vadd.f32 %v2320, %v2321
          %v2325 = vrot.slane %v2322, 7
          %v2326 = vsel %vm2047, %v2253, %v2325
          %v2328 = vadd.f32 %v2056, %v2326
          %2329 = vst.msk [vmem:[#allocation3] sm:$0x3] %vm2054, %v2328
        $region96: #{tpu_custom_call.1} parent=55 // pred_fallthru
          _
        %p2330 = scmp.ge.s32.totalorder %s31, 1
        // Predicated region
        $region97: #{tpu_custom_call.1} parent=55 // pred_check
          %p2331 = pneg %p2330
        $region98: #{tpu_custom_call.1} parent=55 // pred_check_branch
          %2333 = sbr.rel (%p2331) target = $region100
        $region99: #{tpu_custom_call.1} parent=55 // pred_region
          %v2334 = vld [vmem:[#allocation6] sm:$0x3]
          %v2336 = vperm.slane %v2334, 0
          %v2337 = vperm.slane %v2334, 1
          %v2340 = vmul.f32 %v1774, %v2336
          %v2341 = vmul.f32 %v1775, %v2337
          %v2342 = vmul.f32 %v1776, %v2336
          %v2343 = vmul.f32 %v1777, %v2337
          %v2344 = vmul.f32 %v1778, %v2336
          %v2345 = vmul.f32 %v1779, %v2337
          %v2346 = vmul.f32 %v1780, %v2336
          %v2347 = vmul.f32 %v1781, %v2337
          %v2348 = vmul.f32 %v1782, %v2336
          %v2349 = vmul.f32 %v1783, %v2337
          %v2350 = vmul.f32 %v1784, %v2336
          %v2351 = vmul.f32 %v1785, %v2337
          %v2352 = vmul.f32 %v1786, %v2336
          %v2353 = vmul.f32 %v1787, %v2337
          %v2354 = vmul.f32 %v1788, %v2336
          %v2355 = vmul.f32 %v1789, %v2337
          %v2356 = vmul.f32 %v1790, %v2336
          %v2357 = vmul.f32 %v1791, %v2337
          %v2358 = vmul.f32 %v1792, %v2336
          %v2359 = vmul.f32 %v1793, %v2337
          %v2360 = vmul.f32 %v1794, %v2336
          %v2361 = vmul.f32 %v1795, %v2337
          %v2362 = vmul.f32 %v1796, %v2336
          %v2363 = vmul.f32 %v1797, %v2337
          %v2364 = vmul.f32 %v1798, %v2336
          %v2365 = vmul.f32 %v1799, %v2337
          %v2366 = vmul.f32 %v1800, %v2336
          %v2367 = vmul.f32 %v1801, %v2337
          %v2368 = vmul.f32 %v1802, %v2336
          %v2369 = vmul.f32 %v1803, %v2337
          %v2370 = vmul.f32 %v1804, %v2336
          %v2371 = vmul.f32 %v1805, %v2337
          %v2372 = vmul.f32 %v1806, %v2336
          %v2373 = vmul.f32 %v1807, %v2337
          %v2374 = vmul.f32 %v1808, %v2336
          %v2375 = vmul.f32 %v1809, %v2337
          %v2376 = vmul.f32 %v1810, %v2336
          %v2377 = vmul.f32 %v1811, %v2337
          %v2378 = vmul.f32 %v1812, %v2336
          %v2379 = vmul.f32 %v1813, %v2337
          %v2380 = vmul.f32 %v1814, %v2336
          %v2381 = vmul.f32 %v1815, %v2337
          %v2382 = vmul.f32 %v1816, %v2336
          %v2383 = vmul.f32 %v1817, %v2337
          %v2384 = vmul.f32 %v1818, %v2336
          %v2385 = vmul.f32 %v1819, %v2337
          %v2386 = vmul.f32 %v1820, %v2336
          %v2387 = vmul.f32 %v1821, %v2337
          %v2388 = vmul.f32 %v1822, %v2336
          %v2389 = vmul.f32 %v1823, %v2337
          %v2390 = vmul.f32 %v1824, %v2336
          %v2391 = vmul.f32 %v1825, %v2337
          %v2392 = vmul.f32 %v1826, %v2336
          %v2393 = vmul.f32 %v1827, %v2337
          %v2394 = vmul.f32 %v1828, %v2336
          %v2395 = vmul.f32 %v1829, %v2337
          %v2396 = vmul.f32 %v1830, %v2336
          %v2397 = vmul.f32 %v1831, %v2337
          %v2398 = vmul.f32 %v1832, %v2336
          %v2399 = vmul.f32 %v1833, %v2337
          %v2400 = vmul.f32 %v1834, %v2336
          %v2401 = vmul.f32 %v1835, %v2337
          %v2402 = vmul.f32 %v1836, %v2336
          %v2403 = vmul.f32 %v1837, %v2337
          %v2404 = vmul.f32 %v1838, %v2336
          %v2405 = vmul.f32 %v1839, %v2337
          %v2406 = vmul.f32 %v1840, %v2336
          %v2407 = vmul.f32 %v1841, %v2337
          %v2408 = vmul.f32 %v1842, %v2336
          %v2409 = vmul.f32 %v1843, %v2337
          %v2410 = vmul.f32 %v1844, %v2336
          %v2411 = vmul.f32 %v1845, %v2337
          %v2412 = vmul.f32 %v1846, %v2336
          %v2413 = vmul.f32 %v1847, %v2337
          %v2414 = vmul.f32 %v1848, %v2336
          %v2415 = vmul.f32 %v1849, %v2337
          %v2416 = vmul.f32 %v1850, %v2336
          %v2417 = vmul.f32 %v1851, %v2337
          %v2418 = vmul.f32 %v1852, %v2336
          %v2419 = vmul.f32 %v1853, %v2337
          %v2420 = vmul.f32 %v1854, %v2336
          %v2421 = vmul.f32 %v1855, %v2337
          %v2422 = vmul.f32 %v1856, %v2336
          %v2423 = vmul.f32 %v1857, %v2337
          %v2424 = vmul.f32 %v1858, %v2336
          %v2425 = vmul.f32 %v1859, %v2337
          %v2426 = vmul.f32 %v1860, %v2336
          %v2427 = vmul.f32 %v1861, %v2337
          %v2428 = vmul.f32 %v1862, %v2336
          %v2429 = vmul.f32 %v1863, %v2337
          %v2430 = vmul.f32 %v1864, %v2336
          %v2431 = vmul.f32 %v1865, %v2337
          %v2432 = vmul.f32 %v1866, %v2336
          %v2433 = vmul.f32 %v1867, %v2337
          %v2434 = vmul.f32 %v1868, %v2336
          %v2435 = vmul.f32 %v1869, %v2337
          %v2436 = vmul.f32 %v1870, %v2336
          %v2437 = vmul.f32 %v1871, %v2337
          %v2438 = vmul.f32 %v1872, %v2336
          %v2439 = vmul.f32 %v1873, %v2337
          %v2440 = vmul.f32 %v1874, %v2336
          %v2441 = vmul.f32 %v1875, %v2337
          %v2442 = vmul.f32 %v1876, %v2336
          %v2443 = vmul.f32 %v1877, %v2337
          %v2444 = vmul.f32 %v1878, %v2336
          %v2445 = vmul.f32 %v1879, %v2337
          %v2446 = vmul.f32 %v1880, %v2336
          %v2447 = vmul.f32 %v1881, %v2337
          %v2448 = vmul.f32 %v1882, %v2336
          %v2449 = vmul.f32 %v1883, %v2337
          %v2450 = vmul.f32 %v1884, %v2336
          %v2451 = vmul.f32 %v1885, %v2337
          %v2452 = vmul.f32 %v1886, %v2336
          %v2453 = vmul.f32 %v1887, %v2337
          %v2454 = vmul.f32 %v1888, %v2336
          %v2455 = vmul.f32 %v1889, %v2337
          %v2456 = vmul.f32 %v1890, %v2336
          %v2457 = vmul.f32 %v1891, %v2337
          %v2458 = vmul.f32 %v1892, %v2336
          %v2459 = vmul.f32 %v1893, %v2337
          %v2460 = vmul.f32 %v1894, %v2336
          %v2461 = vmul.f32 %v1895, %v2337
          %v2462 = vmul.f32 %v1896, %v2336
          %v2463 = vmul.f32 %v1897, %v2337
          %v2464 = vmul.f32 %v1898, %v2336
          %v2465 = vmul.f32 %v1899, %v2337
          %v2466 = vmul.f32 %v1900, %v2336
          %v2467 = vmul.f32 %v1901, %v2337
          %v2468 = vld [vmem:[#allocation7] sm:$0x3]
          %v2470 = vperm.slane %v2468, 0
          %v2471 = vperm.slane %v2468, 1
          %v2474 = vadd.f32 %v2340, %v2470
          %v2475 = vadd.f32 %v2341, %v2471
          %v2476 = vadd.f32 %v2342, %v2470
          %v2477 = vadd.f32 %v2343, %v2471
          %v2478 = vadd.f32 %v2344, %v2470
          %v2479 = vadd.f32 %v2345, %v2471
          %v2480 = vadd.f32 %v2346, %v2470
          %v2481 = vadd.f32 %v2347, %v2471
          %v2482 = vadd.f32 %v2348, %v2470
          %v2483 = vadd.f32 %v2349, %v2471
          %v2484 = vadd.f32 %v2350, %v2470
          %v2485 = vadd.f32 %v2351, %v2471
          %v2486 = vadd.f32 %v2352, %v2470
          %v2487 = vadd.f32 %v2353, %v2471
          %v2488 = vadd.f32 %v2354, %v2470
          %v2489 = vadd.f32 %v2355, %v2471
          %v2490 = vadd.f32 %v2356, %v2470
          %v2491 = vadd.f32 %v2357, %v2471
          %v2492 = vadd.f32 %v2358, %v2470
          %v2493 = vadd.f32 %v2359, %v2471
          %v2494 = vadd.f32 %v2360, %v2470
          %v2495 = vadd.f32 %v2361, %v2471
          %v2496 = vadd.f32 %v2362, %v2470
          %v2497 = vadd.f32 %v2363, %v2471
          %v2498 = vadd.f32 %v2364, %v2470
          %v2499 = vadd.f32 %v2365, %v2471
          %v2500 = vadd.f32 %v2366, %v2470
          %v2501 = vadd.f32 %v2367, %v2471
          %v2502 = vadd.f32 %v2368, %v2470
          %v2503 = vadd.f32 %v2369, %v2471
          %v2504 = vadd.f32 %v2370, %v2470
          %v2505 = vadd.f32 %v2371, %v2471
          %v2506 = vadd.f32 %v2372, %v2470
          %v2507 = vadd.f32 %v2373, %v2471
          %v2508 = vadd.f32 %v2374, %v2470
          %v2509 = vadd.f32 %v2375, %v2471
          %v2510 = vadd.f32 %v2376, %v2470
          %v2511 = vadd.f32 %v2377, %v2471
          %v2512 = vadd.f32 %v2378, %v2470
          %v2513 = vadd.f32 %v2379, %v2471
          %v2514 = vadd.f32 %v2380, %v2470
          %v2515 = vadd.f32 %v2381, %v2471
          %v2516 = vadd.f32 %v2382, %v2470
          %v2517 = vadd.f32 %v2383, %v2471
          %v2518 = vadd.f32 %v2384, %v2470
          %v2519 = vadd.f32 %v2385, %v2471
          %v2520 = vadd.f32 %v2386, %v2470
          %v2521 = vadd.f32 %v2387, %v2471
          %v2522 = vadd.f32 %v2388, %v2470
          %v2523 = vadd.f32 %v2389, %v2471
          %v2524 = vadd.f32 %v2390, %v2470
          %v2525 = vadd.f32 %v2391, %v2471
          %v2526 = vadd.f32 %v2392, %v2470
          %v2527 = vadd.f32 %v2393, %v2471
          %v2528 = vadd.f32 %v2394, %v2470
          %v2529 = vadd.f32 %v2395, %v2471
          %v2530 = vadd.f32 %v2396, %v2470
          %v2531 = vadd.f32 %v2397, %v2471
          %v2532 = vadd.f32 %v2398, %v2470
          %v2533 = vadd.f32 %v2399, %v2471
          %v2534 = vadd.f32 %v2400, %v2470
          %v2535 = vadd.f32 %v2401, %v2471
          %v2536 = vadd.f32 %v2402, %v2470
          %v2537 = vadd.f32 %v2403, %v2471
          %v2538 = vadd.f32 %v2404, %v2470
          %v2539 = vadd.f32 %v2405, %v2471
          %v2540 = vadd.f32 %v2406, %v2470
          %v2541 = vadd.f32 %v2407, %v2471
          %v2542 = vadd.f32 %v2408, %v2470
          %v2543 = vadd.f32 %v2409, %v2471
          %v2544 = vadd.f32 %v2410, %v2470
          %v2545 = vadd.f32 %v2411, %v2471
          %v2546 = vadd.f32 %v2412, %v2470
          %v2547 = vadd.f32 %v2413, %v2471
          %v2548 = vadd.f32 %v2414, %v2470
          %v2549 = vadd.f32 %v2415, %v2471
          %v2550 = vadd.f32 %v2416, %v2470
          %v2551 = vadd.f32 %v2417, %v2471
          %v2552 = vadd.f32 %v2418, %v2470
          %v2553 = vadd.f32 %v2419, %v2471
          %v2554 = vadd.f32 %v2420, %v2470
          %v2555 = vadd.f32 %v2421, %v2471
          %v2556 = vadd.f32 %v2422, %v2470
          %v2557 = vadd.f32 %v2423, %v2471
          %v2558 = vadd.f32 %v2424, %v2470
          %v2559 = vadd.f32 %v2425, %v2471
          %v2560 = vadd.f32 %v2426, %v2470
          %v2561 = vadd.f32 %v2427, %v2471
          %v2562 = vadd.f32 %v2428, %v2470
          %v2563 = vadd.f32 %v2429, %v2471
          %v2564 = vadd.f32 %v2430, %v2470
          %v2565 = vadd.f32 %v2431, %v2471
          %v2566 = vadd.f32 %v2432, %v2470
          %v2567 = vadd.f32 %v2433, %v2471
          %v2568 = vadd.f32 %v2434, %v2470
          %v2569 = vadd.f32 %v2435, %v2471
          %v2570 = vadd.f32 %v2436, %v2470
          %v2571 = vadd.f32 %v2437, %v2471
          %v2572 = vadd.f32 %v2438, %v2470
          %v2573 = vadd.f32 %v2439, %v2471
          %v2574 = vadd.f32 %v2440, %v2470
          %v2575 = vadd.f32 %v2441, %v2471
          %v2576 = vadd.f32 %v2442, %v2470
          %v2577 = vadd.f32 %v2443, %v2471
          %v2578 = vadd.f32 %v2444, %v2470
          %v2579 = vadd.f32 %v2445, %v2471
          %v2580 = vadd.f32 %v2446, %v2470
          %v2581 = vadd.f32 %v2447, %v2471
          %v2582 = vadd.f32 %v2448, %v2470
          %v2583 = vadd.f32 %v2449, %v2471
          %v2584 = vadd.f32 %v2450, %v2470
          %v2585 = vadd.f32 %v2451, %v2471
          %v2586 = vadd.f32 %v2452, %v2470
          %v2587 = vadd.f32 %v2453, %v2471
          %v2588 = vadd.f32 %v2454, %v2470
          %v2589 = vadd.f32 %v2455, %v2471
          %v2590 = vadd.f32 %v2456, %v2470
          %v2591 = vadd.f32 %v2457, %v2471
          %v2592 = vadd.f32 %v2458, %v2470
          %v2593 = vadd.f32 %v2459, %v2471
          %v2594 = vadd.f32 %v2460, %v2470
          %v2595 = vadd.f32 %v2461, %v2471
          %v2596 = vadd.f32 %v2462, %v2470
          %v2597 = vadd.f32 %v2463, %v2471
          %v2598 = vadd.f32 %v2464, %v2470
          %v2599 = vadd.f32 %v2465, %v2471
          %v2600 = vadd.f32 %v2466, %v2470
          %v2601 = vadd.f32 %v2467, %v2471
          %v2602 = vpack.c.bf16 %v2476, %v2474
          %v2603 = vpack.c.bf16 %v2477, %v2475
          %v2604 = vpack.c.bf16 %v2480, %v2478
          %v2605 = vpack.c.bf16 %v2481, %v2479
          %v2606 = vpack.c.bf16 %v2484, %v2482
          %v2607 = vpack.c.bf16 %v2485, %v2483
          %v2608 = vpack.c.bf16 %v2488, %v2486
          %v2609 = vpack.c.bf16 %v2489, %v2487
          %v2610 = vpack.c.bf16 %v2492, %v2490
          %v2611 = vpack.c.bf16 %v2493, %v2491
          %v2612 = vpack.c.bf16 %v2496, %v2494
          %v2613 = vpack.c.bf16 %v2497, %v2495
          %v2614 = vpack.c.bf16 %v2500, %v2498
          %v2615 = vpack.c.bf16 %v2501, %v2499
          %v2616 = vpack.c.bf16 %v2504, %v2502
          %v2617 = vpack.c.bf16 %v2505, %v2503
          %v2618 = vpack.c.bf16 %v2508, %v2506
          %v2619 = vpack.c.bf16 %v2509, %v2507
          %v2620 = vpack.c.bf16 %v2512, %v2510
          %v2621 = vpack.c.bf16 %v2513, %v2511
          %v2622 = vpack.c.bf16 %v2516, %v2514
          %v2623 = vpack.c.bf16 %v2517, %v2515
          %v2624 = vpack.c.bf16 %v2520, %v2518
          %v2625 = vpack.c.bf16 %v2521, %v2519
          %v2626 = vpack.c.bf16 %v2524, %v2522
          %v2627 = vpack.c.bf16 %v2525, %v2523
          %v2628 = vpack.c.bf16 %v2528, %v2526
          %v2629 = vpack.c.bf16 %v2529, %v2527
          %v2630 = vpack.c.bf16 %v2532, %v2530
          %v2631 = vpack.c.bf16 %v2533, %v2531
          %v2632 = vpack.c.bf16 %v2536, %v2534
          %v2633 = vpack.c.bf16 %v2537, %v2535
          %v2634 = vpack.c.bf16 %v2540, %v2538
          %v2635 = vpack.c.bf16 %v2541, %v2539
          %v2636 = vpack.c.bf16 %v2544, %v2542
          %v2637 = vpack.c.bf16 %v2545, %v2543
          %v2638 = vpack.c.bf16 %v2548, %v2546
          %v2639 = vpack.c.bf16 %v2549, %v2547
          %v2640 = vpack.c.bf16 %v2552, %v2550
          %v2641 = vpack.c.bf16 %v2553, %v2551
          %v2642 = vpack.c.bf16 %v2556, %v2554
          %v2643 = vpack.c.bf16 %v2557, %v2555
          %v2644 = vpack.c.bf16 %v2560, %v2558
          %v2645 = vpack.c.bf16 %v2561, %v2559
          %v2646 = vpack.c.bf16 %v2564, %v2562
          %v2647 = vpack.c.bf16 %v2565, %v2563
          %v2648 = vpack.c.bf16 %v2568, %v2566
          %v2649 = vpack.c.bf16 %v2569, %v2567
          %v2650 = vpack.c.bf16 %v2572, %v2570
          %v2651 = vpack.c.bf16 %v2573, %v2571
          %v2652 = vpack.c.bf16 %v2576, %v2574
          %v2653 = vpack.c.bf16 %v2577, %v2575
          %v2654 = vpack.c.bf16 %v2580, %v2578
          %v2655 = vpack.c.bf16 %v2581, %v2579
          %v2656 = vpack.c.bf16 %v2584, %v2582
          %v2657 = vpack.c.bf16 %v2585, %v2583
          %v2658 = vpack.c.bf16 %v2588, %v2586
          %v2659 = vpack.c.bf16 %v2589, %v2587
          %v2660 = vpack.c.bf16 %v2592, %v2590
          %v2661 = vpack.c.bf16 %v2593, %v2591
          %v2662 = vpack.c.bf16 %v2596, %v2594
          %v2663 = vpack.c.bf16 %v2597, %v2595
          %v2664 = vpack.c.bf16 %v2600, %v2598
          %v2665 = vpack.c.bf16 %v2601, %v2599
          %v2666 = vld [vmem:[#allocation18] sm:$0xff]
          %v2667 = vld [vmem:[#allocation18 + $0x8] sm:$0xff]
          %v2668 = vld [vmem:[#allocation18 + $0x10] sm:$0xff]
          %v2669 = vld [vmem:[#allocation18 + $0x18] sm:$0xff]
          %v2670 = vld [vmem:[#allocation18 + $0x20] sm:$0xff]
          %v2671 = vld [vmem:[#allocation18 + $0x28] sm:$0xff]
          %v2672 = vld [vmem:[#allocation18 + $0x30] sm:$0xff]
          %v2673 = vld [vmem:[#allocation18 + $0x38] sm:$0xff]
          %v2674 = vld [vmem:[#allocation18 + $0x40] sm:$0xff]
          %v2675 = vld [vmem:[#allocation18 + $0x48] sm:$0xff]
          %v2676 = vld [vmem:[#allocation18 + $0x50] sm:$0xff]
          %v2677 = vld [vmem:[#allocation18 + $0x58] sm:$0xff]
          %v2678 = vld [vmem:[#allocation18 + $0x60] sm:$0xff]
          %v2679 = vld [vmem:[#allocation18 + $0x68] sm:$0xff]
          %v2680 = vld [vmem:[#allocation18 + $0x70] sm:$0xff]
          %v2681 = vld [vmem:[#allocation18 + $0x78] sm:$0xff]
          %v2682 = vld [vmem:[#allocation18 + $0x80] sm:$0xff]
          %v2683 = vld [vmem:[#allocation18 + $0x88] sm:$0xff]
          %v2684 = vld [vmem:[#allocation18 + $0x90] sm:$0xff]
          %v2685 = vld [vmem:[#allocation18 + $0x98] sm:$0xff]
          %v2686 = vld [vmem:[#allocation18 + $0xa0] sm:$0xff]
          %v2687 = vld [vmem:[#allocation18 + $0xa8] sm:$0xff]
          %v2688 = vld [vmem:[#allocation18 + $0xb0] sm:$0xff]
          %v2689 = vld [vmem:[#allocation18 + $0xb8] sm:$0xff]
          %v2690 = vld [vmem:[#allocation18 + $0xc0] sm:$0xff]
          %v2691 = vld [vmem:[#allocation18 + $0xc8] sm:$0xff]
          %v2692 = vld [vmem:[#allocation18 + $0xd0] sm:$0xff]
          %v2693 = vld [vmem:[#allocation18 + $0xd8] sm:$0xff]
          %v2694 = vld [vmem:[#allocation18 + $0xe0] sm:$0xff]
          %v2695 = vld [vmem:[#allocation18 + $0xe8] sm:$0xff]
          %v2696 = vld [vmem:[#allocation18 + $0xf0] sm:$0xff]
          %v2697 = vld [vmem:[#allocation18 + $0xf8] sm:$0xff]
          %v2698 = vld [vmem:[%s6] sm:$0x3]
          %v2700 = vperm.slane %v2698, 0
          %v2701 = vperm.slane %v2698, 1
          %v2736 = vunpack.c.l.b16 %v2666
          %v2737 = vunpack.c.h.b16 %v2666
          %v2738 = vunpack.c.l.b16 %v2667
          %v2739 = vunpack.c.h.b16 %v2667
          %v2740 = vunpack.c.l.b16 %v2668
          %v2741 = vunpack.c.h.b16 %v2668
          %v2742 = vunpack.c.l.b16 %v2669
          %v2743 = vunpack.c.h.b16 %v2669
          %v2744 = vunpack.c.l.b16 %v2670
          %v2745 = vunpack.c.h.b16 %v2670
          %v2746 = vunpack.c.l.b16 %v2671
          %v2747 = vunpack.c.h.b16 %v2671
          %v2748 = vunpack.c.l.b16 %v2672
          %v2749 = vunpack.c.h.b16 %v2672
          %v2750 = vunpack.c.l.b16 %v2673
          %v2751 = vunpack.c.h.b16 %v2673
          %v2752 = vunpack.c.l.b16 %v2674
          %v2753 = vunpack.c.h.b16 %v2674
          %v2754 = vunpack.c.l.b16 %v2675
          %v2755 = vunpack.c.h.b16 %v2675
          %v2756 = vunpack.c.l.b16 %v2676
          %v2757 = vunpack.c.h.b16 %v2676
          %v2758 = vunpack.c.l.b16 %v2677
          %v2759 = vunpack.c.h.b16 %v2677
          %v2760 = vunpack.c.l.b16 %v2678
          %v2761 = vunpack.c.h.b16 %v2678
          %v2762 = vunpack.c.l.b16 %v2679
          %v2763 = vunpack.c.h.b16 %v2679
          %v2764 = vunpack.c.l.b16 %v2680
          %v2765 = vunpack.c.h.b16 %v2680
          %v2766 = vunpack.c.l.b16 %v2681
          %v2767 = vunpack.c.h.b16 %v2681
          %v2768 = vunpack.c.l.b16 %v2682
          %v2769 = vunpack.c.h.b16 %v2682
          %v2770 = vunpack.c.l.b16 %v2683
          %v2771 = vunpack.c.h.b16 %v2683
          %v2772 = vunpack.c.l.b16 %v2684
          %v2773 = vunpack.c.h.b16 %v2684
          %v2774 = vunpack.c.l.b16 %v2685
          %v2775 = vunpack.c.h.b16 %v2685
          %v2776 = vunpack.c.l.b16 %v2686
          %v2777 = vunpack.c.h.b16 %v2686
          %v2778 = vunpack.c.l.b16 %v2687
          %v2779 = vunpack.c.h.b16 %v2687
          %v2780 = vunpack.c.l.b16 %v2688
          %v2781 = vunpack.c.h.b16 %v2688
          %v2782 = vunpack.c.l.b16 %v2689
          %v2783 = vunpack.c.h.b16 %v2689
          %v2784 = vunpack.c.l.b16 %v2690
          %v2785 = vunpack.c.h.b16 %v2690
          %v2786 = vunpack.c.l.b16 %v2691
          %v2787 = vunpack.c.h.b16 %v2691
          %v2788 = vunpack.c.l.b16 %v2692
          %v2789 = vunpack.c.h.b16 %v2692
          %v2790 = vunpack.c.l.b16 %v2693
          %v2791 = vunpack.c.h.b16 %v2693
          %v2792 = vunpack.c.l.b16 %v2694
          %v2793 = vunpack.c.h.b16 %v2694
          %v2794 = vunpack.c.l.b16 %v2695
          %v2795 = vunpack.c.h.b16 %v2695
          %v2796 = vunpack.c.l.b16 %v2696
          %v2797 = vunpack.c.h.b16 %v2696
          %v2798 = vunpack.c.l.b16 %v2697
          %v2799 = vunpack.c.h.b16 %v2697
          %v2800 = vpack.c.b16 %v2738, %v2736
          %v2801 = vpack.c.b16 %v2739, %v2737
          %v2802 = vpack.c.b16 %v2742, %v2740
          %v2803 = vpack.c.b16 %v2743, %v2741
          %v2804 = vpack.c.b16 %v2746, %v2744
          %v2805 = vpack.c.b16 %v2747, %v2745
          %v2806 = vpack.c.b16 %v2750, %v2748
          %v2807 = vpack.c.b16 %v2751, %v2749
          %v2808 = vpack.c.b16 %v2754, %v2752
          %v2809 = vpack.c.b16 %v2755, %v2753
          %v2810 = vpack.c.b16 %v2758, %v2756
          %v2811 = vpack.c.b16 %v2759, %v2757
          %v2812 = vpack.c.b16 %v2762, %v2760
          %v2813 = vpack.c.b16 %v2763, %v2761
          %v2814 = vpack.c.b16 %v2766, %v2764
          %v2815 = vpack.c.b16 %v2767, %v2765
          %v2816 = vpack.c.b16 %v2770, %v2768
          %v2817 = vpack.c.b16 %v2771, %v2769
          %v2818 = vpack.c.b16 %v2774, %v2772
          %v2819 = vpack.c.b16 %v2775, %v2773
          %v2820 = vpack.c.b16 %v2778, %v2776
          %v2821 = vpack.c.b16 %v2779, %v2777
          %v2822 = vpack.c.b16 %v2782, %v2780
          %v2823 = vpack.c.b16 %v2783, %v2781
          %v2824 = vpack.c.b16 %v2786, %v2784
          %v2825 = vpack.c.b16 %v2787, %v2785
          %v2826 = vpack.c.b16 %v2790, %v2788
          %v2827 = vpack.c.b16 %v2791, %v2789
          %v2828 = vpack.c.b16 %v2794, %v2792
          %v2829 = vpack.c.b16 %v2795, %v2793
          %v2830 = vpack.c.b16 %v2798, %v2796
          %v2831 = vpack.c.b16 %v2799, %v2797
          %2864 = vmatpush.bf16.msra.mxu0 %v2814
          %2865 = vmatpush.bf16.msra.mxu0 %v2812
          %2866 = vmatpush.bf16.msra.mxu0 %v2810
          %2867 = vmatpush.bf16.msra.mxu0 %v2808
          %2868 = vmatpush.bf16.msra.mxu0 %v2806
          %2869 = vmatpush.bf16.msra.mxu0 %v2804
          %2870 = vmatpush.bf16.msra.mxu0 %v2802
          %2871 = vmatpush.bf16.msra.mxu0 %v2800
          %2872 = vmatmul.bf16.gmra.mxu0 %v2602
          %v2873 = vpop.f32.mrf.mxu0
          %v2874 = vadd.f32 %v2700, %v2873
          %v2875 = vpop.f32.mrf.mxu0
          %v2876 = vadd.f32 %v2700, %v2875
          %2877 = vmatmul.bf16.gmra.mxu0 %v2604
          %v2878 = vpop.f32.mrf.mxu0
          %v2879 = vadd.f32 %v2700, %v2878
          %v2880 = vpop.f32.mrf.mxu0
          %v2881 = vadd.f32 %v2700, %v2880
          %2882 = vmatmul.bf16.gmra.mxu0 %v2606
          %v2883 = vpop.f32.mrf.mxu0
          %v2884 = vadd.f32 %v2700, %v2883
          %v2885 = vpop.f32.mrf.mxu0
          %v2886 = vadd.f32 %v2700, %v2885
          %2887 = vmatmul.bf16.gmra.mxu0 %v2608
          %v2888 = vpop.f32.mrf.mxu0
          %v2889 = vadd.f32 %v2700, %v2888
          %v2890 = vpop.f32.mrf.mxu0
          %v2891 = vadd.f32 %v2700, %v2890
          %2892 = vmatmul.bf16.gmra.mxu0 %v2610
          %v2893 = vpop.f32.mrf.mxu0
          %v2894 = vadd.f32 %v2700, %v2893
          %v2895 = vpop.f32.mrf.mxu0
          %v2896 = vadd.f32 %v2700, %v2895
          %2897 = vmatmul.bf16.gmra.mxu0 %v2612
          %v2898 = vpop.f32.mrf.mxu0
          %v2899 = vadd.f32 %v2700, %v2898
          %v2900 = vpop.f32.mrf.mxu0
          %v2901 = vadd.f32 %v2700, %v2900
          %2902 = vmatmul.bf16.gmra.mxu0 %v2614
          %v2903 = vpop.f32.mrf.mxu0
          %v2904 = vadd.f32 %v2700, %v2903
          %v2905 = vpop.f32.mrf.mxu0
          %v2906 = vadd.f32 %v2700, %v2905
          %2907 = vmatmul.bf16.gmra.mxu0 %v2616
          %v2908 = vpop.f32.mrf.mxu0
          %v2909 = vadd.f32 %v2700, %v2908
          %v2910 = vpop.f32.mrf.mxu0
          %v2911 = vadd.f32 %v2700, %v2910
          %2912 = vmatmul.bf16.gmra.mxu0 %v2618
          %v2913 = vpop.f32.mrf.mxu0
          %v2914 = vadd.f32 %v2700, %v2913
          %v2915 = vpop.f32.mrf.mxu0
          %v2916 = vadd.f32 %v2700, %v2915
          %2917 = vmatmul.bf16.gmra.mxu0 %v2620
          %v2918 = vpop.f32.mrf.mxu0
          %v2919 = vadd.f32 %v2700, %v2918
          %v2920 = vpop.f32.mrf.mxu0
          %v2921 = vadd.f32 %v2700, %v2920
          %2922 = vmatmul.bf16.gmra.mxu0 %v2622
          %v2923 = vpop.f32.mrf.mxu0
          %v2924 = vadd.f32 %v2700, %v2923
          %v2925 = vpop.f32.mrf.mxu0
          %v2926 = vadd.f32 %v2700, %v2925
          %2927 = vmatmul.bf16.gmra.mxu0 %v2624
          %v2928 = vpop.f32.mrf.mxu0
          %v2929 = vadd.f32 %v2700, %v2928
          %v2930 = vpop.f32.mrf.mxu0
          %v2931 = vadd.f32 %v2700, %v2930
          %2932 = vmatmul.bf16.gmra.mxu0 %v2626
          %v2933 = vpop.f32.mrf.mxu0
          %v2934 = vadd.f32 %v2700, %v2933
          %v2935 = vpop.f32.mrf.mxu0
          %v2936 = vadd.f32 %v2700, %v2935
          %2937 = vmatmul.bf16.gmra.mxu0 %v2628
          %v2938 = vpop.f32.mrf.mxu0
          %v2939 = vadd.f32 %v2700, %v2938
          %v2940 = vpop.f32.mrf.mxu0
          %v2941 = vadd.f32 %v2700, %v2940
          %2942 = vmatmul.bf16.gmra.mxu0 %v2630
          %v2943 = vpop.f32.mrf.mxu0
          %v2944 = vadd.f32 %v2700, %v2943
          %v2945 = vpop.f32.mrf.mxu0
          %v2946 = vadd.f32 %v2700, %v2945
          %2947 = vmatmul.bf16.gmra.mxu0 %v2632
          %v2948 = vpop.f32.mrf.mxu0
          %v2949 = vadd.f32 %v2700, %v2948
          %v2950 = vpop.f32.mrf.mxu0
          %v2951 = vadd.f32 %v2700, %v2950
          %2952 = vmatmul.bf16.gmra.mxu0 %v2634
          %v2953 = vpop.f32.mrf.mxu0
          %v2954 = vadd.f32 %v2700, %v2953
          %v2955 = vpop.f32.mrf.mxu0
          %v2956 = vadd.f32 %v2700, %v2955
          %2957 = vmatmul.bf16.gmra.mxu0 %v2636
          %v2958 = vpop.f32.mrf.mxu0
          %v2959 = vadd.f32 %v2700, %v2958
          %v2960 = vpop.f32.mrf.mxu0
          %v2961 = vadd.f32 %v2700, %v2960
          %2962 = vmatmul.bf16.gmra.mxu0 %v2638
          %v2963 = vpop.f32.mrf.mxu0
          %v2964 = vadd.f32 %v2700, %v2963
          %v2965 = vpop.f32.mrf.mxu0
          %v2966 = vadd.f32 %v2700, %v2965
          %2967 = vmatmul.bf16.gmra.mxu0 %v2640
          %v2968 = vpop.f32.mrf.mxu0
          %v2969 = vadd.f32 %v2700, %v2968
          %v2970 = vpop.f32.mrf.mxu0
          %v2971 = vadd.f32 %v2700, %v2970
          %2972 = vmatmul.bf16.gmra.mxu0 %v2642
          %v2973 = vpop.f32.mrf.mxu0
          %v2974 = vadd.f32 %v2700, %v2973
          %v2975 = vpop.f32.mrf.mxu0
          %v2976 = vadd.f32 %v2700, %v2975
          %2977 = vmatmul.bf16.gmra.mxu0 %v2644
          %v2978 = vpop.f32.mrf.mxu0
          %v2979 = vadd.f32 %v2700, %v2978
          %v2980 = vpop.f32.mrf.mxu0
          %v2981 = vadd.f32 %v2700, %v2980
          %2982 = vmatmul.bf16.gmra.mxu0 %v2646
          %v2983 = vpop.f32.mrf.mxu0
          %v2984 = vadd.f32 %v2700, %v2983
          %v2985 = vpop.f32.mrf.mxu0
          %v2986 = vadd.f32 %v2700, %v2985
          %2987 = vmatmul.bf16.gmra.mxu0 %v2648
          %v2988 = vpop.f32.mrf.mxu0
          %v2989 = vadd.f32 %v2700, %v2988
          %v2990 = vpop.f32.mrf.mxu0
          %v2991 = vadd.f32 %v2700, %v2990
          %2992 = vmatmul.bf16.gmra.mxu0 %v2650
          %v2993 = vpop.f32.mrf.mxu0
          %v2994 = vadd.f32 %v2700, %v2993
          %v2995 = vpop.f32.mrf.mxu0
          %v2996 = vadd.f32 %v2700, %v2995
          %2997 = vmatmul.bf16.gmra.mxu0 %v2652
          %v2998 = vpop.f32.mrf.mxu0
          %v2999 = vadd.f32 %v2700, %v2998
          %v3000 = vpop.f32.mrf.mxu0
          %v3001 = vadd.f32 %v2700, %v3000
          %3002 = vmatmul.bf16.gmra.mxu0 %v2654
          %v3003 = vpop.f32.mrf.mxu0
          %v3004 = vadd.f32 %v2700, %v3003
          %v3005 = vpop.f32.mrf.mxu0
          %v3006 = vadd.f32 %v2700, %v3005
          %3007 = vmatmul.bf16.gmra.mxu0 %v2656
          %v3008 = vpop.f32.mrf.mxu0
          %v3009 = vadd.f32 %v2700, %v3008
          %v3010 = vpop.f32.mrf.mxu0
          %v3011 = vadd.f32 %v2700, %v3010
          %3012 = vmatmul.bf16.gmra.mxu0 %v2658
          %v3013 = vpop.f32.mrf.mxu0
          %v3014 = vadd.f32 %v2700, %v3013
          %v3015 = vpop.f32.mrf.mxu0
          %v3016 = vadd.f32 %v2700, %v3015
          %3017 = vmatmul.bf16.gmra.mxu0 %v2660
          %v3018 = vpop.f32.mrf.mxu0
          %v3019 = vadd.f32 %v2700, %v3018
          %v3020 = vpop.f32.mrf.mxu0
          %v3021 = vadd.f32 %v2700, %v3020
          %3022 = vmatmul.bf16.gmra.mxu0 %v2662
          %v3023 = vpop.f32.mrf.mxu0
          %v3024 = vadd.f32 %v2700, %v3023
          %v3025 = vpop.f32.mrf.mxu0
          %v3026 = vadd.f32 %v2700, %v3025
          %3027 = vmatmul.bf16.gmra.mxu0 %v2664
          %v3028 = vpop.f32.mrf.mxu0
          %v3029 = vadd.f32 %v2700, %v3028
          %v3030 = vpop.f32.mrf.mxu0
          %v3031 = vadd.f32 %v2700, %v3030
          %3032 = vdwg.mxu0
          %3033 = vmatpush.bf16.msra.mxu0 %v2830
          %3034 = vmatpush.bf16.msra.mxu0 %v2828
          %3035 = vmatpush.bf16.msra.mxu0 %v2826
          %3036 = vmatpush.bf16.msra.mxu0 %v2824
          %3037 = vmatpush.bf16.msra.mxu0 %v2822
          %3038 = vmatpush.bf16.msra.mxu0 %v2820
          %3039 = vmatpush.bf16.msra.mxu0 %v2818
          %3040 = vmatpush.bf16.msra.mxu0 %v2816
          %3041 = vmatmul.bf16.gmra.mxu0 %v2603
          %v3042 = vpop.f32.mrf.mxu0
          %v3043 = vadd.f32 %v2874, %v3042
          %v3044 = vpop.f32.mrf.mxu0
          %v3045 = vadd.f32 %v2876, %v3044
          %3046 = vmatmul.bf16.gmra.mxu0 %v2605
          %v3047 = vpop.f32.mrf.mxu0
          %v3048 = vadd.f32 %v2879, %v3047
          %v3049 = vpop.f32.mrf.mxu0
          %v3050 = vadd.f32 %v2881, %v3049
          %3051 = vmatmul.bf16.gmra.mxu0 %v2607
          %v3052 = vpop.f32.mrf.mxu0
          %v3053 = vadd.f32 %v2884, %v3052
          %v3054 = vpop.f32.mrf.mxu0
          %v3055 = vadd.f32 %v2886, %v3054
          %3056 = vmatmul.bf16.gmra.mxu0 %v2609
          %v3057 = vpop.f32.mrf.mxu0
          %v3058 = vadd.f32 %v2889, %v3057
          %v3059 = vpop.f32.mrf.mxu0
          %v3060 = vadd.f32 %v2891, %v3059
          %3061 = vmatmul.bf16.gmra.mxu0 %v2611
          %v3062 = vpop.f32.mrf.mxu0
          %v3063 = vadd.f32 %v2894, %v3062
          %v3064 = vpop.f32.mrf.mxu0
          %v3065 = vadd.f32 %v2896, %v3064
          %3066 = vmatmul.bf16.gmra.mxu0 %v2613
          %v3067 = vpop.f32.mrf.mxu0
          %v3068 = vadd.f32 %v2899, %v3067
          %v3069 = vpop.f32.mrf.mxu0
          %v3070 = vadd.f32 %v2901, %v3069
          %3071 = vmatmul.bf16.gmra.mxu0 %v2615
          %v3072 = vpop.f32.mrf.mxu0
          %v3073 = vadd.f32 %v2904, %v3072
          %v3074 = vpop.f32.mrf.mxu0
          %v3075 = vadd.f32 %v2906, %v3074
          %3076 = vmatmul.bf16.gmra.mxu0 %v2617
          %v3077 = vpop.f32.mrf.mxu0
          %v3078 = vadd.f32 %v2909, %v3077
          %v3079 = vpop.f32.mrf.mxu0
          %v3080 = vadd.f32 %v2911, %v3079
          %3081 = vmatmul.bf16.gmra.mxu0 %v2619
          %v3082 = vpop.f32.mrf.mxu0
          %v3083 = vadd.f32 %v2914, %v3082
          %v3084 = vpop.f32.mrf.mxu0
          %v3085 = vadd.f32 %v2916, %v3084
          %3086 = vmatmul.bf16.gmra.mxu0 %v2621
          %v3087 = vpop.f32.mrf.mxu0
          %v3088 = vadd.f32 %v2919, %v3087
          %v3089 = vpop.f32.mrf.mxu0
          %v3090 = vadd.f32 %v2921, %v3089
          %3091 = vmatmul.bf16.gmra.mxu0 %v2623
          %v3092 = vpop.f32.mrf.mxu0
          %v3093 = vadd.f32 %v2924, %v3092
          %v3094 = vpop.f32.mrf.mxu0
          %v3095 = vadd.f32 %v2926, %v3094
          %3096 = vmatmul.bf16.gmra.mxu0 %v2625
          %v3097 = vpop.f32.mrf.mxu0
          %v3098 = vadd.f32 %v2929, %v3097
          %v3099 = vpop.f32.mrf.mxu0
          %v3100 = vadd.f32 %v2931, %v3099
          %3101 = vmatmul.bf16.gmra.mxu0 %v2627
          %v3102 = vpop.f32.mrf.mxu0
          %v3103 = vadd.f32 %v2934, %v3102
          %v3104 = vpop.f32.mrf.mxu0
          %v3105 = vadd.f32 %v2936, %v3104
          %3106 = vmatmul.bf16.gmra.mxu0 %v2629
          %v3107 = vpop.f32.mrf.mxu0
          %v3108 = vadd.f32 %v2939, %v3107
          %v3109 = vpop.f32.mrf.mxu0
          %v3110 = vadd.f32 %v2941, %v3109
          %3111 = vmatmul.bf16.gmra.mxu0 %v2631
          %v3112 = vpop.f32.mrf.mxu0
          %v3113 = vadd.f32 %v2944, %v3112
          %v3114 = vpop.f32.mrf.mxu0
          %v3115 = vadd.f32 %v2946, %v3114
          %3116 = vmatmul.bf16.gmra.mxu0 %v2633
          %v3117 = vpop.f32.mrf.mxu0
          %v3118 = vadd.f32 %v2949, %v3117
          %v3119 = vpop.f32.mrf.mxu0
          %v3120 = vadd.f32 %v2951, %v3119
          %3121 = vmatmul.bf16.gmra.mxu0 %v2635
          %v3122 = vpop.f32.mrf.mxu0
          %v3123 = vadd.f32 %v2954, %v3122
          %v3124 = vpop.f32.mrf.mxu0
          %v3125 = vadd.f32 %v2956, %v3124
          %3126 = vmatmul.bf16.gmra.mxu0 %v2637
          %v3127 = vpop.f32.mrf.mxu0
          %v3128 = vadd.f32 %v2959, %v3127
          %v3129 = vpop.f32.mrf.mxu0
          %v3130 = vadd.f32 %v2961, %v3129
          %3131 = vmatmul.bf16.gmra.mxu0 %v2639
          %v3132 = vpop.f32.mrf.mxu0
          %v3133 = vadd.f32 %v2964, %v3132
          %v3134 = vpop.f32.mrf.mxu0
          %v3135 = vadd.f32 %v2966, %v3134
          %3136 = vmatmul.bf16.gmra.mxu0 %v2641
          %v3137 = vpop.f32.mrf.mxu0
          %v3138 = vadd.f32 %v2969, %v3137
          %v3139 = vpop.f32.mrf.mxu0
          %v3140 = vadd.f32 %v2971, %v3139
          %3141 = vmatmul.bf16.gmra.mxu0 %v2643
          %v3142 = vpop.f32.mrf.mxu0
          %v3143 = vadd.f32 %v2974, %v3142
          %v3144 = vpop.f32.mrf.mxu0
          %v3145 = vadd.f32 %v2976, %v3144
          %3146 = vmatmul.bf16.gmra.mxu0 %v2645
          %v3147 = vpop.f32.mrf.mxu0
          %v3148 = vadd.f32 %v2979, %v3147
          %v3149 = vpop.f32.mrf.mxu0
          %v3150 = vadd.f32 %v2981, %v3149
          %3151 = vmatmul.bf16.gmra.mxu0 %v2647
          %v3152 = vpop.f32.mrf.mxu0
          %v3153 = vadd.f32 %v2984, %v3152
          %v3154 = vpop.f32.mrf.mxu0
          %v3155 = vadd.f32 %v2986, %v3154
          %3156 = vmatmul.bf16.gmra.mxu0 %v2649
          %v3157 = vpop.f32.mrf.mxu0
          %v3158 = vadd.f32 %v2989, %v3157
          %v3159 = vpop.f32.mrf.mxu0
          %v3160 = vadd.f32 %v2991, %v3159
          %3161 = vmatmul.bf16.gmra.mxu0 %v2651
          %v3162 = vpop.f32.mrf.mxu0
          %v3163 = vadd.f32 %v2994, %v3162
          %v3164 = vpop.f32.mrf.mxu0
          %v3165 = vadd.f32 %v2996, %v3164
          %3166 = vmatmul.bf16.gmra.mxu0 %v2653
          %v3167 = vpop.f32.mrf.mxu0
          %v3168 = vadd.f32 %v2999, %v3167
          %v3169 = vpop.f32.mrf.mxu0
          %v3170 = vadd.f32 %v3001, %v3169
          %3171 = vmatmul.bf16.gmra.mxu0 %v2655
          %v3172 = vpop.f32.mrf.mxu0
          %v3173 = vadd.f32 %v3004, %v3172
          %v3174 = vpop.f32.mrf.mxu0
          %v3175 = vadd.f32 %v3006, %v3174
          %3176 = vmatmul.bf16.gmra.mxu0 %v2657
          %v3177 = vpop.f32.mrf.mxu0
          %v3178 = vadd.f32 %v3009, %v3177
          %v3179 = vpop.f32.mrf.mxu0
          %v3180 = vadd.f32 %v3011, %v3179
          %3181 = vmatmul.bf16.gmra.mxu0 %v2659
          %v3182 = vpop.f32.mrf.mxu0
          %v3183 = vadd.f32 %v3014, %v3182
          %v3184 = vpop.f32.mrf.mxu0
          %v3185 = vadd.f32 %v3016, %v3184
          %3186 = vmatmul.bf16.gmra.mxu0 %v2661
          %v3187 = vpop.f32.mrf.mxu0
          %v3188 = vadd.f32 %v3019, %v3187
          %v3189 = vpop.f32.mrf.mxu0
          %v3190 = vadd.f32 %v3021, %v3189
          %3191 = vmatmul.bf16.gmra.mxu0 %v2663
          %v3192 = vpop.f32.mrf.mxu0
          %v3193 = vadd.f32 %v3024, %v3192
          %v3194 = vpop.f32.mrf.mxu0
          %v3195 = vadd.f32 %v3026, %v3194
          %3196 = vmatmul.bf16.gmra.mxu0 %v2665
          %v3197 = vpop.f32.mrf.mxu0
          %v3198 = vadd.f32 %v3029, %v3197
          %v3199 = vpop.f32.mrf.mxu0
          %v3200 = vadd.f32 %v3031, %v3199
          %3201 = vdwg.mxu0
          %3202 = vmatpush.bf16.msra.mxu0 %v2815
          %3203 = vmatpush.bf16.msra.mxu0 %v2813
          %3204 = vmatpush.bf16.msra.mxu0 %v2811
          %3205 = vmatpush.bf16.msra.mxu0 %v2809
          %3206 = vmatpush.bf16.msra.mxu0 %v2807
          %3207 = vmatpush.bf16.msra.mxu0 %v2805
          %3208 = vmatpush.bf16.msra.mxu0 %v2803
          %3209 = vmatpush.bf16.msra.mxu0 %v2801
          %3210 = vmatmul.bf16.gmra.mxu0 %v2602
          %v3211 = vpop.f32.mrf.mxu0
          %v3212 = vadd.f32 %v2701, %v3211
          %v3213 = vpop.f32.mrf.mxu0
          %v3214 = vadd.f32 %v2701, %v3213
          %3215 = vmatmul.bf16.gmra.mxu0 %v2604
          %v3216 = vpop.f32.mrf.mxu0
          %v3217 = vadd.f32 %v2701, %v3216
          %v3218 = vpop.f32.mrf.mxu0
          %v3219 = vadd.f32 %v2701, %v3218
          %3220 = vmatmul.bf16.gmra.mxu0 %v2606
          %v3221 = vpop.f32.mrf.mxu0
          %v3222 = vadd.f32 %v2701, %v3221
          %v3223 = vpop.f32.mrf.mxu0
          %v3224 = vadd.f32 %v2701, %v3223
          %3225 = vmatmul.bf16.gmra.mxu0 %v2608
          %v3226 = vpop.f32.mrf.mxu0
          %v3227 = vadd.f32 %v2701, %v3226
          %v3228 = vpop.f32.mrf.mxu0
          %v3229 = vadd.f32 %v2701, %v3228
          %3230 = vmatmul.bf16.gmra.mxu0 %v2610
          %v3231 = vpop.f32.mrf.mxu0
          %v3232 = vadd.f32 %v2701, %v3231
          %v3233 = vpop.f32.mrf.mxu0
          %v3234 = vadd.f32 %v2701, %v3233
          %3235 = vmatmul.bf16.gmra.mxu0 %v2612
          %v3236 = vpop.f32.mrf.mxu0
          %v3237 = vadd.f32 %v2701, %v3236
          %v3238 = vpop.f32.mrf.mxu0
          %v3239 = vadd.f32 %v2701, %v3238
          %3240 = vmatmul.bf16.gmra.mxu0 %v2614
          %v3241 = vpop.f32.mrf.mxu0
          %v3242 = vadd.f32 %v2701, %v3241
          %v3243 = vpop.f32.mrf.mxu0
          %v3244 = vadd.f32 %v2701, %v3243
          %3245 = vmatmul.bf16.gmra.mxu0 %v2616
          %v3246 = vpop.f32.mrf.mxu0
          %v3247 = vadd.f32 %v2701, %v3246
          %v3248 = vpop.f32.mrf.mxu0
          %v3249 = vadd.f32 %v2701, %v3248
          %3250 = vmatmul.bf16.gmra.mxu0 %v2618
          %v3251 = vpop.f32.mrf.mxu0
          %v3252 = vadd.f32 %v2701, %v3251
          %v3253 = vpop.f32.mrf.mxu0
          %v3254 = vadd.f32 %v2701, %v3253
          %3255 = vmatmul.bf16.gmra.mxu0 %v2620
          %v3256 = vpop.f32.mrf.mxu0
          %v3257 = vadd.f32 %v2701, %v3256
          %v3258 = vpop.f32.mrf.mxu0
          %v3259 = vadd.f32 %v2701, %v3258
          %3260 = vmatmul.bf16.gmra.mxu0 %v2622
          %v3261 = vpop.f32.mrf.mxu0
          %v3262 = vadd.f32 %v2701, %v3261
          %v3263 = vpop.f32.mrf.mxu0
          %v3264 = vadd.f32 %v2701, %v3263
          %3265 = vmatmul.bf16.gmra.mxu0 %v2624
          %v3266 = vpop.f32.mrf.mxu0
          %v3267 = vadd.f32 %v2701, %v3266
          %v3268 = vpop.f32.mrf.mxu0
          %v3269 = vadd.f32 %v2701, %v3268
          %3270 = vmatmul.bf16.gmra.mxu0 %v2626
          %v3271 = vpop.f32.mrf.mxu0
          %v3272 = vadd.f32 %v2701, %v3271
          %v3273 = vpop.f32.mrf.mxu0
          %v3274 = vadd.f32 %v2701, %v3273
          %3275 = vmatmul.bf16.gmra.mxu0 %v2628
          %v3276 = vpop.f32.mrf.mxu0
          %v3277 = vadd.f32 %v2701, %v3276
          %v3278 = vpop.f32.mrf.mxu0
          %v3279 = vadd.f32 %v2701, %v3278
          %3280 = vmatmul.bf16.gmra.mxu0 %v2630
          %v3281 = vpop.f32.mrf.mxu0
          %v3282 = vadd.f32 %v2701, %v3281
          %v3283 = vpop.f32.mrf.mxu0
          %v3284 = vadd.f32 %v2701, %v3283
          %3285 = vmatmul.bf16.gmra.mxu0 %v2632
          %v3286 = vpop.f32.mrf.mxu0
          %v3287 = vadd.f32 %v2701, %v3286
          %v3288 = vpop.f32.mrf.mxu0
          %v3289 = vadd.f32 %v2701, %v3288
          %3290 = vmatmul.bf16.gmra.mxu0 %v2634
          %v3291 = vpop.f32.mrf.mxu0
          %v3292 = vadd.f32 %v2701, %v3291
          %v3293 = vpop.f32.mrf.mxu0
          %v3294 = vadd.f32 %v2701, %v3293
          %3295 = vmatmul.bf16.gmra.mxu0 %v2636
          %v3296 = vpop.f32.mrf.mxu0
          %v3297 = vadd.f32 %v2701, %v3296
          %v3298 = vpop.f32.mrf.mxu0
          %v3299 = vadd.f32 %v2701, %v3298
          %3300 = vmatmul.bf16.gmra.mxu0 %v2638
          %v3301 = vpop.f32.mrf.mxu0
          %v3302 = vadd.f32 %v2701, %v3301
          %v3303 = vpop.f32.mrf.mxu0
          %v3304 = vadd.f32 %v2701, %v3303
          %3305 = vmatmul.bf16.gmra.mxu0 %v2640
          %v3306 = vpop.f32.mrf.mxu0
          %v3307 = vadd.f32 %v2701, %v3306
          %v3308 = vpop.f32.mrf.mxu0
          %v3309 = vadd.f32 %v2701, %v3308
          %3310 = vmatmul.bf16.gmra.mxu0 %v2642
          %v3311 = vpop.f32.mrf.mxu0
          %v3312 = vadd.f32 %v2701, %v3311
          %v3313 = vpop.f32.mrf.mxu0
          %v3314 = vadd.f32 %v2701, %v3313
          %3315 = vmatmul.bf16.gmra.mxu0 %v2644
          %v3316 = vpop.f32.mrf.mxu0
          %v3317 = vadd.f32 %v2701, %v3316
          %v3318 = vpop.f32.mrf.mxu0
          %v3319 = vadd.f32 %v2701, %v3318
          %3320 = vmatmul.bf16.gmra.mxu0 %v2646
          %v3321 = vpop.f32.mrf.mxu0
          %v3322 = vadd.f32 %v2701, %v3321
          %v3323 = vpop.f32.mrf.mxu0
          %v3324 = vadd.f32 %v2701, %v3323
          %3325 = vmatmul.bf16.gmra.mxu0 %v2648
          %v3326 = vpop.f32.mrf.mxu0
          %v3327 = vadd.f32 %v2701, %v3326
          %v3328 = vpop.f32.mrf.mxu0
          %v3329 = vadd.f32 %v2701, %v3328
          %3330 = vmatmul.bf16.gmra.mxu0 %v2650
          %v3331 = vpop.f32.mrf.mxu0
          %v3332 = vadd.f32 %v2701, %v3331
          %v3333 = vpop.f32.mrf.mxu0
          %v3334 = vadd.f32 %v2701, %v3333
          %3335 = vmatmul.bf16.gmra.mxu0 %v2652
          %v3336 = vpop.f32.mrf.mxu0
          %v3337 = vadd.f32 %v2701, %v3336
          %v3338 = vpop.f32.mrf.mxu0
          %v3339 = vadd.f32 %v2701, %v3338
          %3340 = vmatmul.bf16.gmra.mxu0 %v2654
          %v3341 = vpop.f32.mrf.mxu0
          %v3342 = vadd.f32 %v2701, %v3341
          %v3343 = vpop.f32.mrf.mxu0
          %v3344 = vadd.f32 %v2701, %v3343
          %3345 = vmatmul.bf16.gmra.mxu0 %v2656
          %v3346 = vpop.f32.mrf.mxu0
          %v3347 = vadd.f32 %v2701, %v3346
          %v3348 = vpop.f32.mrf.mxu0
          %v3349 = vadd.f32 %v2701, %v3348
          %3350 = vmatmul.bf16.gmra.mxu0 %v2658
          %v3351 = vpop.f32.mrf.mxu0
          %v3352 = vadd.f32 %v2701, %v3351
          %v3353 = vpop.f32.mrf.mxu0
          %v3354 = vadd.f32 %v2701, %v3353
          %3355 = vmatmul.bf16.gmra.mxu0 %v2660
          %v3356 = vpop.f32.mrf.mxu0
          %v3357 = vadd.f32 %v2701, %v3356
          %v3358 = vpop.f32.mrf.mxu0
          %v3359 = vadd.f32 %v2701, %v3358
          %3360 = vmatmul.bf16.gmra.mxu0 %v2662
          %v3361 = vpop.f32.mrf.mxu0
          %v3362 = vadd.f32 %v2701, %v3361
          %v3363 = vpop.f32.mrf.mxu0
          %v3364 = vadd.f32 %v2701, %v3363
          %3365 = vmatmul.bf16.gmra.mxu0 %v2664
          %v3366 = vpop.f32.mrf.mxu0
          %v3367 = vadd.f32 %v2701, %v3366
          %v3368 = vpop.f32.mrf.mxu0
          %v3369 = vadd.f32 %v2701, %v3368
          %3370 = vdwg.mxu0
          %3371 = vmatpush.bf16.msra.mxu0 %v2831
          %3372 = vmatpush.bf16.msra.mxu0 %v2829
          %3373 = vmatpush.bf16.msra.mxu0 %v2827
          %3374 = vmatpush.bf16.msra.mxu0 %v2825
          %3375 = vmatpush.bf16.msra.mxu0 %v2823
          %3376 = vmatpush.bf16.msra.mxu0 %v2821
          %3377 = vmatpush.bf16.msra.mxu0 %v2819
          %3378 = vmatpush.bf16.msra.mxu0 %v2817
          %3379 = vmatmul.bf16.gmra.mxu0 %v2603
          %v3380 = vpop.f32.mrf.mxu0
          %v3381 = vadd.f32 %v3212, %v3380
          %v3382 = vpop.f32.mrf.mxu0
          %v3383 = vadd.f32 %v3214, %v3382
          %3384 = vmatmul.bf16.gmra.mxu0 %v2605
          %v3385 = vpop.f32.mrf.mxu0
          %v3386 = vadd.f32 %v3217, %v3385
          %v3387 = vpop.f32.mrf.mxu0
          %v3388 = vadd.f32 %v3219, %v3387
          %3389 = vmatmul.bf16.gmra.mxu0 %v2607
          %v3390 = vpop.f32.mrf.mxu0
          %v3391 = vadd.f32 %v3222, %v3390
          %v3392 = vpop.f32.mrf.mxu0
          %v3393 = vadd.f32 %v3224, %v3392
          %3394 = vmatmul.bf16.gmra.mxu0 %v2609
          %v3395 = vpop.f32.mrf.mxu0
          %v3396 = vadd.f32 %v3227, %v3395
          %v3397 = vpop.f32.mrf.mxu0
          %v3398 = vadd.f32 %v3229, %v3397
          %3399 = vmatmul.bf16.gmra.mxu0 %v2611
          %v3400 = vpop.f32.mrf.mxu0
          %v3401 = vadd.f32 %v3232, %v3400
          %v3402 = vpop.f32.mrf.mxu0
          %v3403 = vadd.f32 %v3234, %v3402
          %3404 = vmatmul.bf16.gmra.mxu0 %v2613
          %v3405 = vpop.f32.mrf.mxu0
          %v3406 = vadd.f32 %v3237, %v3405
          %v3407 = vpop.f32.mrf.mxu0
          %v3408 = vadd.f32 %v3239, %v3407
          %3409 = vmatmul.bf16.gmra.mxu0 %v2615
          %v3410 = vpop.f32.mrf.mxu0
          %v3411 = vadd.f32 %v3242, %v3410
          %v3412 = vpop.f32.mrf.mxu0
          %v3413 = vadd.f32 %v3244, %v3412
          %3414 = vmatmul.bf16.gmra.mxu0 %v2617
          %v3415 = vpop.f32.mrf.mxu0
          %v3416 = vadd.f32 %v3247, %v3415
          %v3417 = vpop.f32.mrf.mxu0
          %v3418 = vadd.f32 %v3249, %v3417
          %3419 = vmatmul.bf16.gmra.mxu0 %v2619
          %v3420 = vpop.f32.mrf.mxu0
          %v3421 = vadd.f32 %v3252, %v3420
          %v3422 = vpop.f32.mrf.mxu0
          %v3423 = vadd.f32 %v3254, %v3422
          %3424 = vmatmul.bf16.gmra.mxu0 %v2621
          %v3425 = vpop.f32.mrf.mxu0
          %v3426 = vadd.f32 %v3257, %v3425
          %v3427 = vpop.f32.mrf.mxu0
          %v3428 = vadd.f32 %v3259, %v3427
          %3429 = vmatmul.bf16.gmra.mxu0 %v2623
          %v3430 = vpop.f32.mrf.mxu0
          %v3431 = vadd.f32 %v3262, %v3430
          %v3432 = vpop.f32.mrf.mxu0
          %v3433 = vadd.f32 %v3264, %v3432
          %3434 = vmatmul.bf16.gmra.mxu0 %v2625
          %v3435 = vpop.f32.mrf.mxu0
          %v3436 = vadd.f32 %v3267, %v3435
          %v3437 = vpop.f32.mrf.mxu0
          %v3438 = vadd.f32 %v3269, %v3437
          %3439 = vmatmul.bf16.gmra.mxu0 %v2627
          %v3440 = vpop.f32.mrf.mxu0
          %v3441 = vadd.f32 %v3272, %v3440
          %v3442 = vpop.f32.mrf.mxu0
          %v3443 = vadd.f32 %v3274, %v3442
          %3444 = vmatmul.bf16.gmra.mxu0 %v2629
          %v3445 = vpop.f32.mrf.mxu0
          %v3446 = vadd.f32 %v3277, %v3445
          %v3447 = vpop.f32.mrf.mxu0
          %v3448 = vadd.f32 %v3279, %v3447
          %3449 = vmatmul.bf16.gmra.mxu0 %v2631
          %v3450 = vpop.f32.mrf.mxu0
          %v3451 = vadd.f32 %v3282, %v3450
          %v3452 = vpop.f32.mrf.mxu0
          %v3453 = vadd.f32 %v3284, %v3452
          %3454 = vmatmul.bf16.gmra.mxu0 %v2633
          %v3455 = vpop.f32.mrf.mxu0
          %v3456 = vadd.f32 %v3287, %v3455
          %v3457 = vpop.f32.mrf.mxu0
          %v3458 = vadd.f32 %v3289, %v3457
          %3459 = vmatmul.bf16.gmra.mxu0 %v2635
          %v3460 = vpop.f32.mrf.mxu0
          %v3461 = vadd.f32 %v3292, %v3460
          %v3462 = vpop.f32.mrf.mxu0
          %v3463 = vadd.f32 %v3294, %v3462
          %3464 = vmatmul.bf16.gmra.mxu0 %v2637
          %v3465 = vpop.f32.mrf.mxu0
          %v3466 = vadd.f32 %v3297, %v3465
          %v3467 = vpop.f32.mrf.mxu0
          %v3468 = vadd.f32 %v3299, %v3467
          %3469 = vmatmul.bf16.gmra.mxu0 %v2639
          %v3470 = vpop.f32.mrf.mxu0
          %v3471 = vadd.f32 %v3302, %v3470
          %v3472 = vpop.f32.mrf.mxu0
          %v3473 = vadd.f32 %v3304, %v3472
          %3474 = vmatmul.bf16.gmra.mxu0 %v2641
          %v3475 = vpop.f32.mrf.mxu0
          %v3476 = vadd.f32 %v3307, %v3475
          %v3477 = vpop.f32.mrf.mxu0
          %v3478 = vadd.f32 %v3309, %v3477
          %3479 = vmatmul.bf16.gmra.mxu0 %v2643
          %v3480 = vpop.f32.mrf.mxu0
          %v3481 = vadd.f32 %v3312, %v3480
          %v3482 = vpop.f32.mrf.mxu0
          %v3483 = vadd.f32 %v3314, %v3482
          %3484 = vmatmul.bf16.gmra.mxu0 %v2645
          %v3485 = vpop.f32.mrf.mxu0
          %v3486 = vadd.f32 %v3317, %v3485
          %v3487 = vpop.f32.mrf.mxu0
          %v3488 = vadd.f32 %v3319, %v3487
          %3489 = vmatmul.bf16.gmra.mxu0 %v2647
          %v3490 = vpop.f32.mrf.mxu0
          %v3491 = vadd.f32 %v3322, %v3490
          %v3492 = vpop.f32.mrf.mxu0
          %v3493 = vadd.f32 %v3324, %v3492
          %3494 = vmatmul.bf16.gmra.mxu0 %v2649
          %v3495 = vpop.f32.mrf.mxu0
          %v3496 = vadd.f32 %v3327, %v3495
          %v3497 = vpop.f32.mrf.mxu0
          %v3498 = vadd.f32 %v3329, %v3497
          %3499 = vmatmul.bf16.gmra.mxu0 %v2651
          %v3500 = vpop.f32.mrf.mxu0
          %v3501 = vadd.f32 %v3332, %v3500
          %v3502 = vpop.f32.mrf.mxu0
          %v3503 = vadd.f32 %v3334, %v3502
          %3504 = vmatmul.bf16.gmra.mxu0 %v2653
          %v3505 = vpop.f32.mrf.mxu0
          %v3506 = vadd.f32 %v3337, %v3505
          %v3507 = vpop.f32.mrf.mxu0
          %v3508 = vadd.f32 %v3339, %v3507
          %3509 = vmatmul.bf16.gmra.mxu0 %v2655
          %v3510 = vpop.f32.mrf.mxu0
          %v3511 = vadd.f32 %v3342, %v3510
          %v3512 = vpop.f32.mrf.mxu0
          %v3513 = vadd.f32 %v3344, %v3512
          %3514 = vmatmul.bf16.gmra.mxu0 %v2657
          %v3515 = vpop.f32.mrf.mxu0
          %v3516 = vadd.f32 %v3347, %v3515
          %v3517 = vpop.f32.mrf.mxu0
          %v3518 = vadd.f32 %v3349, %v3517
          %3519 = vmatmul.bf16.gmra.mxu0 %v2659
          %v3520 = vpop.f32.mrf.mxu0
          %v3521 = vadd.f32 %v3352, %v3520
          %v3522 = vpop.f32.mrf.mxu0
          %v3523 = vadd.f32 %v3354, %v3522
          %3524 = vmatmul.bf16.gmra.mxu0 %v2661
          %v3525 = vpop.f32.mrf.mxu0
          %v3526 = vadd.f32 %v3357, %v3525
          %v3527 = vpop.f32.mrf.mxu0
          %v3528 = vadd.f32 %v3359, %v3527
          %3529 = vmatmul.bf16.gmra.mxu0 %v2663
          %v3530 = vpop.f32.mrf.mxu0
          %v3531 = vadd.f32 %v3362, %v3530
          %v3532 = vpop.f32.mrf.mxu0
          %v3533 = vadd.f32 %v3364, %v3532
          %3534 = vmatmul.bf16.gmra.mxu0 %v2665
          %v3535 = vpop.f32.mrf.mxu0
          %v3536 = vadd.f32 %v3367, %v3535
          %v3537 = vpop.f32.mrf.mxu0
          %v3538 = vadd.f32 %v3369, %v3537
          %3539 = vdwg.mxu0
          %v3540 = vmax.f32 %v3043, 0.0
          %v3541 = vmax.f32 %v3381, 0.0
          %v3542 = vmax.f32 %v3045, 0.0
          %v3543 = vmax.f32 %v3383, 0.0
          %v3544 = vmax.f32 %v3048, 0.0
          %v3545 = vmax.f32 %v3386, 0.0
          %v3546 = vmax.f32 %v3050, 0.0
          %v3547 = vmax.f32 %v3388, 0.0
          %v3548 = vmax.f32 %v3053, 0.0
          %v3549 = vmax.f32 %v3391, 0.0
          %v3550 = vmax.f32 %v3055, 0.0
          %v3551 = vmax.f32 %v3393, 0.0
          %v3552 = vmax.f32 %v3058, 0.0
          %v3553 = vmax.f32 %v3396, 0.0
          %v3554 = vmax.f32 %v3060, 0.0
          %v3555 = vmax.f32 %v3398, 0.0
          %v3556 = vmax.f32 %v3063, 0.0
          %v3557 = vmax.f32 %v3401, 0.0
          %v3558 = vmax.f32 %v3065, 0.0
          %v3559 = vmax.f32 %v3403, 0.0
          %v3560 = vmax.f32 %v3068, 0.0
          %v3561 = vmax.f32 %v3406, 0.0
          %v3562 = vmax.f32 %v3070, 0.0
          %v3563 = vmax.f32 %v3408, 0.0
          %v3564 = vmax.f32 %v3073, 0.0
          %v3565 = vmax.f32 %v3411, 0.0
          %v3566 = vmax.f32 %v3075, 0.0
          %v3567 = vmax.f32 %v3413, 0.0
          %v3568 = vmax.f32 %v3078, 0.0
          %v3569 = vmax.f32 %v3416, 0.0
          %v3570 = vmax.f32 %v3080, 0.0
          %v3571 = vmax.f32 %v3418, 0.0
          %v3572 = vmax.f32 %v3083, 0.0
          %v3573 = vmax.f32 %v3421, 0.0
          %v3574 = vmax.f32 %v3085, 0.0
          %v3575 = vmax.f32 %v3423, 0.0
          %v3576 = vmax.f32 %v3088, 0.0
          %v3577 = vmax.f32 %v3426, 0.0
          %v3578 = vmax.f32 %v3090, 0.0
          %v3579 = vmax.f32 %v3428, 0.0
          %v3580 = vmax.f32 %v3093, 0.0
          %v3581 = vmax.f32 %v3431, 0.0
          %v3582 = vmax.f32 %v3095, 0.0
          %v3583 = vmax.f32 %v3433, 0.0
          %v3584 = vmax.f32 %v3098, 0.0
          %v3585 = vmax.f32 %v3436, 0.0
          %v3586 = vmax.f32 %v3100, 0.0
          %v3587 = vmax.f32 %v3438, 0.0
          %v3588 = vmax.f32 %v3103, 0.0
          %v3589 = vmax.f32 %v3441, 0.0
          %v3590 = vmax.f32 %v3105, 0.0
          %v3591 = vmax.f32 %v3443, 0.0
          %v3592 = vmax.f32 %v3108, 0.0
          %v3593 = vmax.f32 %v3446, 0.0
          %v3594 = vmax.f32 %v3110, 0.0
          %v3595 = vmax.f32 %v3448, 0.0
          %v3596 = vmax.f32 %v3113, 0.0
          %v3597 = vmax.f32 %v3451, 0.0
          %v3598 = vmax.f32 %v3115, 0.0
          %v3599 = vmax.f32 %v3453, 0.0
          %v3600 = vmax.f32 %v3118, 0.0
          %v3601 = vmax.f32 %v3456, 0.0
          %v3602 = vmax.f32 %v3120, 0.0
          %v3603 = vmax.f32 %v3458, 0.0
          %v3604 = vmax.f32 %v3123, 0.0
          %v3605 = vmax.f32 %v3461, 0.0
          %v3606 = vmax.f32 %v3125, 0.0
          %v3607 = vmax.f32 %v3463, 0.0
          %v3608 = vmax.f32 %v3128, 0.0
          %v3609 = vmax.f32 %v3466, 0.0
          %v3610 = vmax.f32 %v3130, 0.0
          %v3611 = vmax.f32 %v3468, 0.0
          %v3612 = vmax.f32 %v3133, 0.0
          %v3613 = vmax.f32 %v3471, 0.0
          %v3614 = vmax.f32 %v3135, 0.0
          %v3615 = vmax.f32 %v3473, 0.0
          %v3616 = vmax.f32 %v3138, 0.0
          %v3617 = vmax.f32 %v3476, 0.0
          %v3618 = vmax.f32 %v3140, 0.0
          %v3619 = vmax.f32 %v3478, 0.0
          %v3620 = vmax.f32 %v3143, 0.0
          %v3621 = vmax.f32 %v3481, 0.0
          %v3622 = vmax.f32 %v3145, 0.0
          %v3623 = vmax.f32 %v3483, 0.0
          %v3624 = vmax.f32 %v3148, 0.0
          %v3625 = vmax.f32 %v3486, 0.0
          %v3626 = vmax.f32 %v3150, 0.0
          %v3627 = vmax.f32 %v3488, 0.0
          %v3628 = vmax.f32 %v3153, 0.0
          %v3629 = vmax.f32 %v3491, 0.0
          %v3630 = vmax.f32 %v3155, 0.0
          %v3631 = vmax.f32 %v3493, 0.0
          %v3632 = vmax.f32 %v3158, 0.0
          %v3633 = vmax.f32 %v3496, 0.0
          %v3634 = vmax.f32 %v3160, 0.0
          %v3635 = vmax.f32 %v3498, 0.0
          %v3636 = vmax.f32 %v3163, 0.0
          %v3637 = vmax.f32 %v3501, 0.0
          %v3638 = vmax.f32 %v3165, 0.0
          %v3639 = vmax.f32 %v3503, 0.0
          %v3640 = vmax.f32 %v3168, 0.0
          %v3641 = vmax.f32 %v3506, 0.0
          %v3642 = vmax.f32 %v3170, 0.0
          %v3643 = vmax.f32 %v3508, 0.0
          %v3644 = vmax.f32 %v3173, 0.0
          %v3645 = vmax.f32 %v3511, 0.0
          %v3646 = vmax.f32 %v3175, 0.0
          %v3647 = vmax.f32 %v3513, 0.0
          %v3648 = vmax.f32 %v3178, 0.0
          %v3649 = vmax.f32 %v3516, 0.0
          %v3650 = vmax.f32 %v3180, 0.0
          %v3651 = vmax.f32 %v3518, 0.0
          %v3652 = vmax.f32 %v3183, 0.0
          %v3653 = vmax.f32 %v3521, 0.0
          %v3654 = vmax.f32 %v3185, 0.0
          %v3655 = vmax.f32 %v3523, 0.0
          %v3656 = vmax.f32 %v3188, 0.0
          %v3657 = vmax.f32 %v3526, 0.0
          %v3658 = vmax.f32 %v3190, 0.0
          %v3659 = vmax.f32 %v3528, 0.0
          %v3660 = vmax.f32 %v3193, 0.0
          %v3661 = vmax.f32 %v3531, 0.0
          %v3662 = vmax.f32 %v3195, 0.0
          %v3663 = vmax.f32 %v3533, 0.0
          %v3664 = vmax.f32 %v3198, 0.0
          %v3665 = vmax.f32 %v3536, 0.0
          %v3666 = vmax.f32 %v3200, 0.0
          %v3667 = vmax.f32 %v3538, 0.0
          // Predicated region
          $region101: #{tpu_custom_call.1} parent=99 // pred_check
            %p3668 = pneg %p446
          $region102: #{tpu_custom_call.1} parent=99 // pred_check_branch
            %3670 = sbr.rel (%p3668) target = $region104
          $region103: #{tpu_custom_call.1} parent=99 // pred_region
            %v3671 = vld [vmem:[#allocation4] sm:$0x3]
            %v3672 = vadd.f32 %v3540, %v3542
            %v3673 = vadd.f32 %v3672, %v3544
            %v3674 = vadd.f32 %v3673, %v3546
            %v3675 = vadd.f32 %v3674, %v3548
            %v3676 = vadd.f32 %v3675, %v3550
            %v3677 = vadd.f32 %v3676, %v3552
            %v3678 = vadd.f32 %v3677, %v3554
            %v3679 = vadd.f32 %v3678, %v3556
            %v3680 = vadd.f32 %v3679, %v3558
            %v3681 = vadd.f32 %v3680, %v3560
            %v3682 = vadd.f32 %v3681, %v3562
            %v3683 = vadd.f32 %v3682, %v3564
            %v3684 = vadd.f32 %v3683, %v3566
            %v3685 = vadd.f32 %v3684, %v3568
            %v3686 = vadd.f32 %v3685, %v3570
            %v3687 = vadd.f32 %v3686, %v3572
            %v3688 = vadd.f32 %v3687, %v3574
            %v3689 = vadd.f32 %v3688, %v3576
            %v3690 = vadd.f32 %v3689, %v3578
            %v3691 = vadd.f32 %v3690, %v3580
            %v3692 = vadd.f32 %v3691, %v3582
            %v3693 = vadd.f32 %v3692, %v3584
            %v3694 = vadd.f32 %v3693, %v3586
            %v3695 = vadd.f32 %v3694, %v3588
            %v3696 = vadd.f32 %v3695, %v3590
            %v3697 = vadd.f32 %v3696, %v3592
            %v3698 = vadd.f32 %v3697, %v3594
            %v3699 = vadd.f32 %v3698, %v3596
            %v3700 = vadd.f32 %v3699, %v3598
            %v3701 = vadd.f32 %v3700, %v3600
            %v3702 = vadd.f32 %v3701, %v3602
            %v3703 = vadd.f32 %v3702, %v3604
            %v3704 = vadd.f32 %v3703, %v3606
            %v3705 = vadd.f32 %v3704, %v3608
            %v3706 = vadd.f32 %v3705, %v3610
            %v3707 = vadd.f32 %v3706, %v3612
            %v3708 = vadd.f32 %v3707, %v3614
            %v3709 = vadd.f32 %v3708, %v3616
            %v3710 = vadd.f32 %v3709, %v3618
            %v3711 = vadd.f32 %v3710, %v3620
            %v3712 = vadd.f32 %v3711, %v3622
            %v3713 = vadd.f32 %v3712, %v3624
            %v3714 = vadd.f32 %v3713, %v3626
            %v3715 = vadd.f32 %v3714, %v3628
            %v3716 = vadd.f32 %v3715, %v3630
            %v3717 = vadd.f32 %v3716, %v3632
            %v3718 = vadd.f32 %v3717, %v3634
            %v3719 = vadd.f32 %v3718, %v3636
            %v3720 = vadd.f32 %v3719, %v3638
            %v3721 = vadd.f32 %v3720, %v3640
            %v3722 = vadd.f32 %v3721, %v3642
            %v3723 = vadd.f32 %v3722, %v3644
            %v3724 = vadd.f32 %v3723, %v3646
            %v3725 = vadd.f32 %v3724, %v3648
            %v3726 = vadd.f32 %v3725, %v3650
            %v3727 = vadd.f32 %v3726, %v3652
            %v3728 = vadd.f32 %v3727, %v3654
            %v3729 = vadd.f32 %v3728, %v3656
            %v3730 = vadd.f32 %v3729, %v3658
            %v3731 = vadd.f32 %v3730, %v3660
            %v3732 = vadd.f32 %v3731, %v3662
            %v3733 = vadd.f32 %v3732, %v3664
            %v3734 = vadd.f32 %v3733, %v3666
            %v3735 = vrot.slane %v3734, 4
            %v3736 = vadd.f32 %v3734, %v3735
            %v3737 = vrot.slane %v3736, 2
            %v3738 = vadd.f32 %v3736, %v3737
            %v3739 = vrot.slane %v3738, 1
            %v3740 = vadd.f32 %v3738, %v3739
            %v3741 = vadd.f32 %v3541, %v3543
            %v3742 = vadd.f32 %v3741, %v3545
            %v3743 = vadd.f32 %v3742, %v3547
            %v3744 = vadd.f32 %v3743, %v3549
            %v3745 = vadd.f32 %v3744, %v3551
            %v3746 = vadd.f32 %v3745, %v3553
            %v3747 = vadd.f32 %v3746, %v3555
            %v3748 = vadd.f32 %v3747, %v3557
            %v3749 = vadd.f32 %v3748, %v3559
            %v3750 = vadd.f32 %v3749, %v3561
            %v3751 = vadd.f32 %v3750, %v3563
            %v3752 = vadd.f32 %v3751, %v3565
            %v3753 = vadd.f32 %v3752, %v3567
            %v3754 = vadd.f32 %v3753, %v3569
            %v3755 = vadd.f32 %v3754, %v3571
            %v3756 = vadd.f32 %v3755, %v3573
            %v3757 = vadd.f32 %v3756, %v3575
            %v3758 = vadd.f32 %v3757, %v3577
            %v3759 = vadd.f32 %v3758, %v3579
            %v3760 = vadd.f32 %v3759, %v3581
            %v3761 = vadd.f32 %v3760, %v3583
            %v3762 = vadd.f32 %v3761, %v3585
            %v3763 = vadd.f32 %v3762, %v3587
            %v3764 = vadd.f32 %v3763, %v3589
            %v3765 = vadd.f32 %v3764, %v3591
            %v3766 = vadd.f32 %v3765, %v3593
            %v3767 = vadd.f32 %v3766, %v3595
            %v3768 = vadd.f32 %v3767, %v3597
            %v3769 = vadd.f32 %v3768, %v3599
            %v3770 = vadd.f32 %v3769, %v3601
            %v3771 = vadd.f32 %v3770, %v3603
            %v3772 = vadd.f32 %v3771, %v3605
            %v3773 = vadd.f32 %v3772, %v3607
            %v3774 = vadd.f32 %v3773, %v3609
            %v3775 = vadd.f32 %v3774, %v3611
            %v3776 = vadd.f32 %v3775, %v3613
            %v3777 = vadd.f32 %v3776, %v3615
            %v3778 = vadd.f32 %v3777, %v3617
            %v3779 = vadd.f32 %v3778, %v3619
            %v3780 = vadd.f32 %v3779, %v3621
            %v3781 = vadd.f32 %v3780, %v3623
            %v3782 = vadd.f32 %v3781, %v3625
            %v3783 = vadd.f32 %v3782, %v3627
            %v3784 = vadd.f32 %v3783, %v3629
            %v3785 = vadd.f32 %v3784, %v3631
            %v3786 = vadd.f32 %v3785, %v3633
            %v3787 = vadd.f32 %v3786, %v3635
            %v3788 = vadd.f32 %v3787, %v3637
            %v3789 = vadd.f32 %v3788, %v3639
            %v3790 = vadd.f32 %v3789, %v3641
            %v3791 = vadd.f32 %v3790, %v3643
            %v3792 = vadd.f32 %v3791, %v3645
            %v3793 = vadd.f32 %v3792, %v3647
            %v3794 = vadd.f32 %v3793, %v3649
            %v3795 = vadd.f32 %v3794, %v3651
            %v3796 = vadd.f32 %v3795, %v3653
            %v3797 = vadd.f32 %v3796, %v3655
            %v3798 = vadd.f32 %v3797, %v3657
            %v3799 = vadd.f32 %v3798, %v3659
            %v3800 = vadd.f32 %v3799, %v3661
            %v3801 = vadd.f32 %v3800, %v3663
            %v3802 = vadd.f32 %v3801, %v3665
            %v3803 = vadd.f32 %v3802, %v3667
            %v3804 = vrot.slane %v3803, 4
            %v3805 = vadd.f32 %v3803, %v3804
            %v3806 = vrot.slane %v3805, 2
            %v3807 = vadd.f32 %v3805, %v3806
            %v3808 = vrot.slane %v3807, 1
            %v3809 = vadd.f32 %v3807, %v3808
            %v3812 = vrot.slane %v3809, 7
            %vm3813 = vcmask 1040384
            %v3814 = vsel %vm3813, %v3740, %v3812
            %v3816 = vadd.f32 %v3671, %v3814
            %v3817 = vlaneseq
            %vm3818 = vcmp.ge.s32.totalorder %v3817, 0
            %vm3819 = vcmp.lt.s32.totalorder %v3817, 256
            %vm3820 = vmand %vm3818, %vm3819
            %3821 = vst.msk [vmem:[#allocation4] sm:$0x3] %vm3820, %v3816
            %v3822 = vld [vmem:[#allocation5] sm:$0x3]
            %v3823 = vmul.f32 %v3540, %v3540
            %v3824 = vmul.f32 %v3541, %v3541
            %v3825 = vmul.f32 %v3542, %v3542
            %v3826 = vmul.f32 %v3543, %v3543
            %v3827 = vmul.f32 %v3544, %v3544
            %v3828 = vmul.f32 %v3545, %v3545
            %v3829 = vmul.f32 %v3546, %v3546
            %v3830 = vmul.f32 %v3547, %v3547
            %v3831 = vmul.f32 %v3548, %v3548
            %v3832 = vmul.f32 %v3549, %v3549
            %v3833 = vmul.f32 %v3550, %v3550
            %v3834 = vmul.f32 %v3551, %v3551
            %v3835 = vmul.f32 %v3552, %v3552
            %v3836 = vmul.f32 %v3553, %v3553
            %v3837 = vmul.f32 %v3554, %v3554
            %v3838 = vmul.f32 %v3555, %v3555
            %v3839 = vmul.f32 %v3556, %v3556
            %v3840 = vmul.f32 %v3557, %v3557
            %v3841 = vmul.f32 %v3558, %v3558
            %v3842 = vmul.f32 %v3559, %v3559
            %v3843 = vmul.f32 %v3560, %v3560
            %v3844 = vmul.f32 %v3561, %v3561
            %v3845 = vmul.f32 %v3562, %v3562
            %v3846 = vmul.f32 %v3563, %v3563
            %v3847 = vmul.f32 %v3564, %v3564
            %v3848 = vmul.f32 %v3565, %v3565
            %v3849 = vmul.f32 %v3566, %v3566
            %v3850 = vmul.f32 %v3567, %v3567
            %v3851 = vmul.f32 %v3568, %v3568
            %v3852 = vmul.f32 %v3569, %v3569
            %v3853 = vmul.f32 %v3570, %v3570
            %v3854 = vmul.f32 %v3571, %v3571
            %v3855 = vmul.f32 %v3572, %v3572
            %v3856 = vmul.f32 %v3573, %v3573
            %v3857 = vmul.f32 %v3574, %v3574
            %v3858 = vmul.f32 %v3575, %v3575
            %v3859 = vmul.f32 %v3576, %v3576
            %v3860 = vmul.f32 %v3577, %v3577
            %v3861 = vmul.f32 %v3578, %v3578
            %v3862 = vmul.f32 %v3579, %v3579
            %v3863 = vmul.f32 %v3580, %v3580
            %v3864 = vmul.f32 %v3581, %v3581
            %v3865 = vmul.f32 %v3582, %v3582
            %v3866 = vmul.f32 %v3583, %v3583
            %v3867 = vmul.f32 %v3584, %v3584
            %v3868 = vmul.f32 %v3585, %v3585
            %v3869 = vmul.f32 %v3586, %v3586
            %v3870 = vmul.f32 %v3587, %v3587
            %v3871 = vmul.f32 %v3588, %v3588
            %v3872 = vmul.f32 %v3589, %v3589
            %v3873 = vmul.f32 %v3590, %v3590
            %v3874 = vmul.f32 %v3591, %v3591
            %v3875 = vmul.f32 %v3592, %v3592
            %v3876 = vmul.f32 %v3593, %v3593
            %v3877 = vmul.f32 %v3594, %v3594
            %v3878 = vmul.f32 %v3595, %v3595
            %v3879 = vmul.f32 %v3596, %v3596
            %v3880 = vmul.f32 %v3597, %v3597
            %v3881 = vmul.f32 %v3598, %v3598
            %v3882 = vmul.f32 %v3599, %v3599
            %v3883 = vmul.f32 %v3600, %v3600
            %v3884 = vmul.f32 %v3601, %v3601
            %v3885 = vmul.f32 %v3602, %v3602
            %v3886 = vmul.f32 %v3603, %v3603
            %v3887 = vmul.f32 %v3604, %v3604
            %v3888 = vmul.f32 %v3605, %v3605
            %v3889 = vmul.f32 %v3606, %v3606
            %v3890 = vmul.f32 %v3607, %v3607
            %v3891 = vmul.f32 %v3608, %v3608
            %v3892 = vmul.f32 %v3609, %v3609
            %v3893 = vmul.f32 %v3610, %v3610
            %v3894 = vmul.f32 %v3611, %v3611
            %v3895 = vmul.f32 %v3612, %v3612
            %v3896 = vmul.f32 %v3613, %v3613
            %v3897 = vmul.f32 %v3614, %v3614
            %v3898 = vmul.f32 %v3615, %v3615
            %v3899 = vmul.f32 %v3616, %v3616
            %v3900 = vmul.f32 %v3617, %v3617
            %v3901 = vmul.f32 %v3618, %v3618
            %v3902 = vmul.f32 %v3619, %v3619
            %v3903 = vmul.f32 %v3620, %v3620
            %v3904 = vmul.f32 %v3621, %v3621
            %v3905 = vmul.f32 %v3622, %v3622
            %v3906 = vmul.f32 %v3623, %v3623
            %v3907 = vmul.f32 %v3624, %v3624
            %v3908 = vmul.f32 %v3625, %v3625
            %v3909 = vmul.f32 %v3626, %v3626
            %v3910 = vmul.f32 %v3627, %v3627
            %v3911 = vmul.f32 %v3628, %v3628
            %v3912 = vmul.f32 %v3629, %v3629
            %v3913 = vmul.f32 %v3630, %v3630
            %v3914 = vmul.f32 %v3631, %v3631
            %v3915 = vmul.f32 %v3632, %v3632
            %v3916 = vmul.f32 %v3633, %v3633
            %v3917 = vmul.f32 %v3634, %v3634
            %v3918 = vmul.f32 %v3635, %v3635
            %v3919 = vmul.f32 %v3636, %v3636
            %v3920 = vmul.f32 %v3637, %v3637
            %v3921 = vmul.f32 %v3638, %v3638
            %v3922 = vmul.f32 %v3639, %v3639
            %v3923 = vmul.f32 %v3640, %v3640
            %v3924 = vmul.f32 %v3641, %v3641
            %v3925 = vmul.f32 %v3642, %v3642
            %v3926 = vmul.f32 %v3643, %v3643
            %v3927 = vmul.f32 %v3644, %v3644
            %v3928 = vmul.f32 %v3645, %v3645
            %v3929 = vmul.f32 %v3646, %v3646
            %v3930 = vmul.f32 %v3647, %v3647
            %v3931 = vmul.f32 %v3648, %v3648
            %v3932 = vmul.f32 %v3649, %v3649
            %v3933 = vmul.f32 %v3650, %v3650
            %v3934 = vmul.f32 %v3651, %v3651
            %v3935 = vmul.f32 %v3652, %v3652
            %v3936 = vmul.f32 %v3653, %v3653
            %v3937 = vmul.f32 %v3654, %v3654
            %v3938 = vmul.f32 %v3655, %v3655
            %v3939 = vmul.f32 %v3656, %v3656
            %v3940 = vmul.f32 %v3657, %v3657
            %v3941 = vmul.f32 %v3658, %v3658
            %v3942 = vmul.f32 %v3659, %v3659
            %v3943 = vmul.f32 %v3660, %v3660
            %v3944 = vmul.f32 %v3661, %v3661
            %v3945 = vmul.f32 %v3662, %v3662
            %v3946 = vmul.f32 %v3663, %v3663
            %v3947 = vmul.f32 %v3664, %v3664
            %v3948 = vmul.f32 %v3665, %v3665
            %v3949 = vmul.f32 %v3666, %v3666
            %v3950 = vmul.f32 %v3667, %v3667
            %v3951 = vadd.f32 %v3823, %v3825
            %v3952 = vadd.f32 %v3951, %v3827
            %v3953 = vadd.f32 %v3952, %v3829
            %v3954 = vadd.f32 %v3953, %v3831
            %v3955 = vadd.f32 %v3954, %v3833
            %v3956 = vadd.f32 %v3955, %v3835
            %v3957 = vadd.f32 %v3956, %v3837
            %v3958 = vadd.f32 %v3957, %v3839
            %v3959 = vadd.f32 %v3958, %v3841
            %v3960 = vadd.f32 %v3959, %v3843
            %v3961 = vadd.f32 %v3960, %v3845
            %v3962 = vadd.f32 %v3961, %v3847
            %v3963 = vadd.f32 %v3962, %v3849
            %v3964 = vadd.f32 %v3963, %v3851
            %v3965 = vadd.f32 %v3964, %v3853
            %v3966 = vadd.f32 %v3965, %v3855
            %v3967 = vadd.f32 %v3966, %v3857
            %v3968 = vadd.f32 %v3967, %v3859
            %v3969 = vadd.f32 %v3968, %v3861
            %v3970 = vadd.f32 %v3969, %v3863
            %v3971 = vadd.f32 %v3970, %v3865
            %v3972 = vadd.f32 %v3971, %v3867
            %v3973 = vadd.f32 %v3972, %v3869
            %v3974 = vadd.f32 %v3973, %v3871
            %v3975 = vadd.f32 %v3974, %v3873
            %v3976 = vadd.f32 %v3975, %v3875
            %v3977 = vadd.f32 %v3976, %v3877
            %v3978 = vadd.f32 %v3977, %v3879
            %v3979 = vadd.f32 %v3978, %v3881
            %v3980 = vadd.f32 %v3979, %v3883
            %v3981 = vadd.f32 %v3980, %v3885
            %v3982 = vadd.f32 %v3981, %v3887
            %v3983 = vadd.f32 %v3982, %v3889
            %v3984 = vadd.f32 %v3983, %v3891
            %v3985 = vadd.f32 %v3984, %v3893
            %v3986 = vadd.f32 %v3985, %v3895
            %v3987 = vadd.f32 %v3986, %v3897
            %v3988 = vadd.f32 %v3987, %v3899
            %v3989 = vadd.f32 %v3988, %v3901
            %v3990 = vadd.f32 %v3989, %v3903
            %v3991 = vadd.f32 %v3990, %v3905
            %v3992 = vadd.f32 %v3991, %v3907
            %v3993 = vadd.f32 %v3992, %v3909
            %v3994 = vadd.f32 %v3993, %v3911
            %v3995 = vadd.f32 %v3994, %v3913
            %v3996 = vadd.f32 %v3995, %v3915
            %v3997 = vadd.f32 %v3996, %v3917
            %v3998 = vadd.f32 %v3997, %v3919
            %v3999 = vadd.f32 %v3998, %v3921
            %v4000 = vadd.f32 %v3999, %v3923
            %v4001 = vadd.f32 %v4000, %v3925
            %v4002 = vadd.f32 %v4001, %v3927
            %v4003 = vadd.f32 %v4002, %v3929
            %v4004 = vadd.f32 %v4003, %v3931
            %v4005 = vadd.f32 %v4004, %v3933
            %v4006 = vadd.f32 %v4005, %v3935
            %v4007 = vadd.f32 %v4006, %v3937
            %v4008 = vadd.f32 %v4007, %v3939
            %v4009 = vadd.f32 %v4008, %v3941
            %v4010 = vadd.f32 %v4009, %v3943
            %v4011 = vadd.f32 %v4010, %v3945
            %v4012 = vadd.f32 %v4011, %v3947
            %v4013 = vadd.f32 %v4012, %v3949
            %v4014 = vrot.slane %v4013, 4
            %v4015 = vadd.f32 %v4013, %v4014
            %v4016 = vrot.slane %v4015, 2
            %v4017 = vadd.f32 %v4015, %v4016
            %v4018 = vrot.slane %v4017, 1
            %v4019 = vadd.f32 %v4017, %v4018
            %v4020 = vadd.f32 %v3824, %v3826
            %v4021 = vadd.f32 %v4020, %v3828
            %v4022 = vadd.f32 %v4021, %v3830
            %v4023 = vadd.f32 %v4022, %v3832
            %v4024 = vadd.f32 %v4023, %v3834
            %v4025 = vadd.f32 %v4024, %v3836
            %v4026 = vadd.f32 %v4025, %v3838
            %v4027 = vadd.f32 %v4026, %v3840
            %v4028 = vadd.f32 %v4027, %v3842
            %v4029 = vadd.f32 %v4028, %v3844
            %v4030 = vadd.f32 %v4029, %v3846
            %v4031 = vadd.f32 %v4030, %v3848
            %v4032 = vadd.f32 %v4031, %v3850
            %v4033 = vadd.f32 %v4032, %v3852
            %v4034 = vadd.f32 %v4033, %v3854
            %v4035 = vadd.f32 %v4034, %v3856
            %v4036 = vadd.f32 %v4035, %v3858
            %v4037 = vadd.f32 %v4036, %v3860
            %v4038 = vadd.f32 %v4037, %v3862
            %v4039 = vadd.f32 %v4038, %v3864
            %v4040 = vadd.f32 %v4039, %v3866
            %v4041 = vadd.f32 %v4040, %v3868
            %v4042 = vadd.f32 %v4041, %v3870
            %v4043 = vadd.f32 %v4042, %v3872
            %v4044 = vadd.f32 %v4043, %v3874
            %v4045 = vadd.f32 %v4044, %v3876
            %v4046 = vadd.f32 %v4045, %v3878
            %v4047 = vadd.f32 %v4046, %v3880
            %v4048 = vadd.f32 %v4047, %v3882
            %v4049 = vadd.f32 %v4048, %v3884
            %v4050 = vadd.f32 %v4049, %v3886
            %v4051 = vadd.f32 %v4050, %v3888
            %v4052 = vadd.f32 %v4051, %v3890
            %v4053 = vadd.f32 %v4052, %v3892
            %v4054 = vadd.f32 %v4053, %v3894
            %v4055 = vadd.f32 %v4054, %v3896
            %v4056 = vadd.f32 %v4055, %v3898
            %v4057 = vadd.f32 %v4056, %v3900
            %v4058 = vadd.f32 %v4057, %v3902
            %v4059 = vadd.f32 %v4058, %v3904
            %v4060 = vadd.f32 %v4059, %v3906
            %v4061 = vadd.f32 %v4060, %v3908
            %v4062 = vadd.f32 %v4061, %v3910
            %v4063 = vadd.f32 %v4062, %v3912
            %v4064 = vadd.f32 %v4063, %v3914
            %v4065 = vadd.f32 %v4064, %v3916
            %v4066 = vadd.f32 %v4065, %v3918
            %v4067 = vadd.f32 %v4066, %v3920
            %v4068 = vadd.f32 %v4067, %v3922
            %v4069 = vadd.f32 %v4068, %v3924
            %v4070 = vadd.f32 %v4069, %v3926
            %v4071 = vadd.f32 %v4070, %v3928
            %v4072 = vadd.f32 %v4071, %v3930
            %v4073 = vadd.f32 %v4072, %v3932
            %v4074 = vadd.f32 %v4073, %v3934
            %v4075 = vadd.f32 %v4074, %v3936
            %v4076 = vadd.f32 %v4075, %v3938
            %v4077 = vadd.f32 %v4076, %v3940
            %v4078 = vadd.f32 %v4077, %v3942
            %v4079 = vadd.f32 %v4078, %v3944
            %v4080 = vadd.f32 %v4079, %v3946
            %v4081 = vadd.f32 %v4080, %v3948
            %v4082 = vadd.f32 %v4081, %v3950
            %v4083 = vrot.slane %v4082, 4
            %v4084 = vadd.f32 %v4082, %v4083
            %v4085 = vrot.slane %v4084, 2
            %v4086 = vadd.f32 %v4084, %v4085
            %v4087 = vrot.slane %v4086, 1
            %v4088 = vadd.f32 %v4086, %v4087
            %v4091 = vrot.slane %v4088, 7
            %v4092 = vsel %vm3813, %v4019, %v4091
            %v4094 = vadd.f32 %v3822, %v4092
            %4095 = vst.msk [vmem:[#allocation5] sm:$0x3] %vm3820, %v4094
          $region104: #{tpu_custom_call.1} parent=99 // pred_fallthru
            _
          // Predicated region
          $region105: #{tpu_custom_call.1} parent=99 // pred_check
            %p4096 = pneg %p482
          $region106: #{tpu_custom_call.1} parent=99 // pred_check_branch
            %4098 = sbr.rel (%p4096) target = $region108
          $region107: #{tpu_custom_call.1} parent=99 // pred_region
            %v4099 = vld [vmem:[#allocation8] sm:$0x3]
            %v4101 = vperm.slane %v4099, 0
            %v4102 = vperm.slane %v4099, 1
            %v4105 = vmul.f32 %v3540, %v4101
            %v4106 = vmul.f32 %v3541, %v4102
            %v4107 = vmul.f32 %v3542, %v4101
            %v4108 = vmul.f32 %v3543, %v4102
            %v4109 = vmul.f32 %v3544, %v4101
            %v4110 = vmul.f32 %v3545, %v4102
            %v4111 = vmul.f32 %v3546, %v4101
            %v4112 = vmul.f32 %v3547, %v4102
            %v4113 = vmul.f32 %v3548, %v4101
            %v4114 = vmul.f32 %v3549, %v4102
            %v4115 = vmul.f32 %v3550, %v4101
            %v4116 = vmul.f32 %v3551, %v4102
            %v4117 = vmul.f32 %v3552, %v4101
            %v4118 = vmul.f32 %v3553, %v4102
            %v4119 = vmul.f32 %v3554, %v4101
            %v4120 = vmul.f32 %v3555, %v4102
            %v4121 = vmul.f32 %v3556, %v4101
            %v4122 = vmul.f32 %v3557, %v4102
            %v4123 = vmul.f32 %v3558, %v4101
            %v4124 = vmul.f32 %v3559, %v4102
            %v4125 = vmul.f32 %v3560, %v4101
            %v4126 = vmul.f32 %v3561, %v4102
            %v4127 = vmul.f32 %v3562, %v4101
            %v4128 = vmul.f32 %v3563, %v4102
            %v4129 = vmul.f32 %v3564, %v4101
            %v4130 = vmul.f32 %v3565, %v4102
            %v4131 = vmul.f32 %v3566, %v4101
            %v4132 = vmul.f32 %v3567, %v4102
            %v4133 = vmul.f32 %v3568, %v4101
            %v4134 = vmul.f32 %v3569, %v4102
            %v4135 = vmul.f32 %v3570, %v4101
            %v4136 = vmul.f32 %v3571, %v4102
            %v4137 = vmul.f32 %v3572, %v4101
            %v4138 = vmul.f32 %v3573, %v4102
            %v4139 = vmul.f32 %v3574, %v4101
            %v4140 = vmul.f32 %v3575, %v4102
            %v4141 = vmul.f32 %v3576, %v4101
            %v4142 = vmul.f32 %v3577, %v4102
            %v4143 = vmul.f32 %v3578, %v4101
            %v4144 = vmul.f32 %v3579, %v4102
            %v4145 = vmul.f32 %v3580, %v4101
            %v4146 = vmul.f32 %v3581, %v4102
            %v4147 = vmul.f32 %v3582, %v4101
            %v4148 = vmul.f32 %v3583, %v4102
            %v4149 = vmul.f32 %v3584, %v4101
            %v4150 = vmul.f32 %v3585, %v4102
            %v4151 = vmul.f32 %v3586, %v4101
            %v4152 = vmul.f32 %v3587, %v4102
            %v4153 = vmul.f32 %v3588, %v4101
            %v4154 = vmul.f32 %v3589, %v4102
            %v4155 = vmul.f32 %v3590, %v4101
            %v4156 = vmul.f32 %v3591, %v4102
            %v4157 = vmul.f32 %v3592, %v4101
            %v4158 = vmul.f32 %v3593, %v4102
            %v4159 = vmul.f32 %v3594, %v4101
            %v4160 = vmul.f32 %v3595, %v4102
            %v4161 = vmul.f32 %v3596, %v4101
            %v4162 = vmul.f32 %v3597, %v4102
            %v4163 = vmul.f32 %v3598, %v4101
            %v4164 = vmul.f32 %v3599, %v4102
            %v4165 = vmul.f32 %v3600, %v4101
            %v4166 = vmul.f32 %v3601, %v4102
            %v4167 = vmul.f32 %v3602, %v4101
            %v4168 = vmul.f32 %v3603, %v4102
            %v4169 = vmul.f32 %v3604, %v4101
            %v4170 = vmul.f32 %v3605, %v4102
            %v4171 = vmul.f32 %v3606, %v4101
            %v4172 = vmul.f32 %v3607, %v4102
            %v4173 = vmul.f32 %v3608, %v4101
            %v4174 = vmul.f32 %v3609, %v4102
            %v4175 = vmul.f32 %v3610, %v4101
            %v4176 = vmul.f32 %v3611, %v4102
            %v4177 = vmul.f32 %v3612, %v4101
            %v4178 = vmul.f32 %v3613, %v4102
            %v4179 = vmul.f32 %v3614, %v4101
            %v4180 = vmul.f32 %v3615, %v4102
            %v4181 = vmul.f32 %v3616, %v4101
            %v4182 = vmul.f32 %v3617, %v4102
            %v4183 = vmul.f32 %v3618, %v4101
            %v4184 = vmul.f32 %v3619, %v4102
            %v4185 = vmul.f32 %v3620, %v4101
            %v4186 = vmul.f32 %v3621, %v4102
            %v4187 = vmul.f32 %v3622, %v4101
            %v4188 = vmul.f32 %v3623, %v4102
            %v4189 = vmul.f32 %v3624, %v4101
            %v4190 = vmul.f32 %v3625, %v4102
            %v4191 = vmul.f32 %v3626, %v4101
            %v4192 = vmul.f32 %v3627, %v4102
            %v4193 = vmul.f32 %v3628, %v4101
            %v4194 = vmul.f32 %v3629, %v4102
            %v4195 = vmul.f32 %v3630, %v4101
            %v4196 = vmul.f32 %v3631, %v4102
            %v4197 = vmul.f32 %v3632, %v4101
            %v4198 = vmul.f32 %v3633, %v4102
            %v4199 = vmul.f32 %v3634, %v4101
            %v4200 = vmul.f32 %v3635, %v4102
            %v4201 = vmul.f32 %v3636, %v4101
            %v4202 = vmul.f32 %v3637, %v4102
            %v4203 = vmul.f32 %v3638, %v4101
            %v4204 = vmul.f32 %v3639, %v4102
            %v4205 = vmul.f32 %v3640, %v4101
            %v4206 = vmul.f32 %v3641, %v4102
            %v4207 = vmul.f32 %v3642, %v4101
            %v4208 = vmul.f32 %v3643, %v4102
            %v4209 = vmul.f32 %v3644, %v4101
            %v4210 = vmul.f32 %v3645, %v4102
            %v4211 = vmul.f32 %v3646, %v4101
            %v4212 = vmul.f32 %v3647, %v4102
            %v4213 = vmul.f32 %v3648, %v4101
            %v4214 = vmul.f32 %v3649, %v4102
            %v4215 = vmul.f32 %v3650, %v4101
            %v4216 = vmul.f32 %v3651, %v4102
            %v4217 = vmul.f32 %v3652, %v4101
            %v4218 = vmul.f32 %v3653, %v4102
            %v4219 = vmul.f32 %v3654, %v4101
            %v4220 = vmul.f32 %v3655, %v4102
            %v4221 = vmul.f32 %v3656, %v4101
            %v4222 = vmul.f32 %v3657, %v4102
            %v4223 = vmul.f32 %v3658, %v4101
            %v4224 = vmul.f32 %v3659, %v4102
            %v4225 = vmul.f32 %v3660, %v4101
            %v4226 = vmul.f32 %v3661, %v4102
            %v4227 = vmul.f32 %v3662, %v4101
            %v4228 = vmul.f32 %v3663, %v4102
            %v4229 = vmul.f32 %v3664, %v4101
            %v4230 = vmul.f32 %v3665, %v4102
            %v4231 = vmul.f32 %v3666, %v4101
            %v4232 = vmul.f32 %v3667, %v4102
            %v4233 = vld [vmem:[#allocation9] sm:$0x3]
            %v4235 = vperm.slane %v4233, 0
            %v4236 = vperm.slane %v4233, 1
            %v4239 = vadd.f32 %v4105, %v4235
            %v4240 = vadd.f32 %v4106, %v4236
            %v4241 = vadd.f32 %v4107, %v4235
            %v4242 = vadd.f32 %v4108, %v4236
            %v4243 = vadd.f32 %v4109, %v4235
            %v4244 = vadd.f32 %v4110, %v4236
            %v4245 = vadd.f32 %v4111, %v4235
            %v4246 = vadd.f32 %v4112, %v4236
            %v4247 = vadd.f32 %v4113, %v4235
            %v4248 = vadd.f32 %v4114, %v4236
            %v4249 = vadd.f32 %v4115, %v4235
            %v4250 = vadd.f32 %v4116, %v4236
            %v4251 = vadd.f32 %v4117, %v4235
            %v4252 = vadd.f32 %v4118, %v4236
            %v4253 = vadd.f32 %v4119, %v4235
            %v4254 = vadd.f32 %v4120, %v4236
            %v4255 = vadd.f32 %v4121, %v4235
            %v4256 = vadd.f32 %v4122, %v4236
            %v4257 = vadd.f32 %v4123, %v4235
            %v4258 = vadd.f32 %v4124, %v4236
            %v4259 = vadd.f32 %v4125, %v4235
            %v4260 = vadd.f32 %v4126, %v4236
            %v4261 = vadd.f32 %v4127, %v4235
            %v4262 = vadd.f32 %v4128, %v4236
            %v4263 = vadd.f32 %v4129, %v4235
            %v4264 = vadd.f32 %v4130, %v4236
            %v4265 = vadd.f32 %v4131, %v4235
            %v4266 = vadd.f32 %v4132, %v4236
            %v4267 = vadd.f32 %v4133, %v4235
            %v4268 = vadd.f32 %v4134, %v4236
            %v4269 = vadd.f32 %v4135, %v4235
            %v4270 = vadd.f32 %v4136, %v4236
            %v4271 = vadd.f32 %v4137, %v4235
            %v4272 = vadd.f32 %v4138, %v4236
            %v4273 = vadd.f32 %v4139, %v4235
            %v4274 = vadd.f32 %v4140, %v4236
            %v4275 = vadd.f32 %v4141, %v4235
            %v4276 = vadd.f32 %v4142, %v4236
            %v4277 = vadd.f32 %v4143, %v4235
            %v4278 = vadd.f32 %v4144, %v4236
            %v4279 = vadd.f32 %v4145, %v4235
            %v4280 = vadd.f32 %v4146, %v4236
            %v4281 = vadd.f32 %v4147, %v4235
            %v4282 = vadd.f32 %v4148, %v4236
            %v4283 = vadd.f32 %v4149, %v4235
            %v4284 = vadd.f32 %v4150, %v4236
            %v4285 = vadd.f32 %v4151, %v4235
            %v4286 = vadd.f32 %v4152, %v4236
            %v4287 = vadd.f32 %v4153, %v4235
            %v4288 = vadd.f32 %v4154, %v4236
            %v4289 = vadd.f32 %v4155, %v4235
            %v4290 = vadd.f32 %v4156, %v4236
            %v4291 = vadd.f32 %v4157, %v4235
            %v4292 = vadd.f32 %v4158, %v4236
            %v4293 = vadd.f32 %v4159, %v4235
            %v4294 = vadd.f32 %v4160, %v4236
            %v4295 = vadd.f32 %v4161, %v4235
            %v4296 = vadd.f32 %v4162, %v4236
            %v4297 = vadd.f32 %v4163, %v4235
            %v4298 = vadd.f32 %v4164, %v4236
            %v4299 = vadd.f32 %v4165, %v4235
            %v4300 = vadd.f32 %v4166, %v4236
            %v4301 = vadd.f32 %v4167, %v4235
            %v4302 = vadd.f32 %v4168, %v4236
            %v4303 = vadd.f32 %v4169, %v4235
            %v4304 = vadd.f32 %v4170, %v4236
            %v4305 = vadd.f32 %v4171, %v4235
            %v4306 = vadd.f32 %v4172, %v4236
            %v4307 = vadd.f32 %v4173, %v4235
            %v4308 = vadd.f32 %v4174, %v4236
            %v4309 = vadd.f32 %v4175, %v4235
            %v4310 = vadd.f32 %v4176, %v4236
            %v4311 = vadd.f32 %v4177, %v4235
            %v4312 = vadd.f32 %v4178, %v4236
            %v4313 = vadd.f32 %v4179, %v4235
            %v4314 = vadd.f32 %v4180, %v4236
            %v4315 = vadd.f32 %v4181, %v4235
            %v4316 = vadd.f32 %v4182, %v4236
            %v4317 = vadd.f32 %v4183, %v4235
            %v4318 = vadd.f32 %v4184, %v4236
            %v4319 = vadd.f32 %v4185, %v4235
            %v4320 = vadd.f32 %v4186, %v4236
            %v4321 = vadd.f32 %v4187, %v4235
            %v4322 = vadd.f32 %v4188, %v4236
            %v4323 = vadd.f32 %v4189, %v4235
            %v4324 = vadd.f32 %v4190, %v4236
            %v4325 = vadd.f32 %v4191, %v4235
            %v4326 = vadd.f32 %v4192, %v4236
            %v4327 = vadd.f32 %v4193, %v4235
            %v4328 = vadd.f32 %v4194, %v4236
            %v4329 = vadd.f32 %v4195, %v4235
            %v4330 = vadd.f32 %v4196, %v4236
            %v4331 = vadd.f32 %v4197, %v4235
            %v4332 = vadd.f32 %v4198, %v4236
            %v4333 = vadd.f32 %v4199, %v4235
            %v4334 = vadd.f32 %v4200, %v4236
            %v4335 = vadd.f32 %v4201, %v4235
            %v4336 = vadd.f32 %v4202, %v4236
            %v4337 = vadd.f32 %v4203, %v4235
            %v4338 = vadd.f32 %v4204, %v4236
            %v4339 = vadd.f32 %v4205, %v4235
            %v4340 = vadd.f32 %v4206, %v4236
            %v4341 = vadd.f32 %v4207, %v4235
            %v4342 = vadd.f32 %v4208, %v4236
            %v4343 = vadd.f32 %v4209, %v4235
            %v4344 = vadd.f32 %v4210, %v4236
            %v4345 = vadd.f32 %v4211, %v4235
            %v4346 = vadd.f32 %v4212, %v4236
            %v4347 = vadd.f32 %v4213, %v4235
            %v4348 = vadd.f32 %v4214, %v4236
            %v4349 = vadd.f32 %v4215, %v4235
            %v4350 = vadd.f32 %v4216, %v4236
            %v4351 = vadd.f32 %v4217, %v4235
            %v4352 = vadd.f32 %v4218, %v4236
            %v4353 = vadd.f32 %v4219, %v4235
            %v4354 = vadd.f32 %v4220, %v4236
            %v4355 = vadd.f32 %v4221, %v4235
            %v4356 = vadd.f32 %v4222, %v4236
            %v4357 = vadd.f32 %v4223, %v4235
            %v4358 = vadd.f32 %v4224, %v4236
            %v4359 = vadd.f32 %v4225, %v4235
            %v4360 = vadd.f32 %v4226, %v4236
            %v4361 = vadd.f32 %v4227, %v4235
            %v4362 = vadd.f32 %v4228, %v4236
            %v4363 = vadd.f32 %v4229, %v4235
            %v4364 = vadd.f32 %v4230, %v4236
            %v4365 = vadd.f32 %v4231, %v4235
            %v4366 = vadd.f32 %v4232, %v4236
            %4367 = vst [vmem:[%s429] sm:$0xff] %v4239
            %4368 = vst [vmem:[%s429 + $0x8] sm:$0xff] %v4240
            %4369 = vst [vmem:[%s429 + $0x10] sm:$0xff] %v4241
            %4370 = vst [vmem:[%s429 + $0x18] sm:$0xff] %v4242
            %4371 = vst [vmem:[%s429 + $0x20] sm:$0xff] %v4243
            %4372 = vst [vmem:[%s429 + $0x28] sm:$0xff] %v4244
            %4373 = vst [vmem:[%s429 + $0x30] sm:$0xff] %v4245
            %4374 = vst [vmem:[%s429 + $0x38] sm:$0xff] %v4246
            %4375 = vst [vmem:[%s429 + $0x40] sm:$0xff] %v4247
            %4376 = vst [vmem:[%s429 + $0x48] sm:$0xff] %v4248
            %4377 = vst [vmem:[%s429 + $0x50] sm:$0xff] %v4249
            %4378 = vst [vmem:[%s429 + $0x58] sm:$0xff] %v4250
            %4379 = vst [vmem:[%s429 + $0x60] sm:$0xff] %v4251
            %4380 = vst [vmem:[%s429 + $0x68] sm:$0xff] %v4252
            %4381 = vst [vmem:[%s429 + $0x70] sm:$0xff] %v4253
            %4382 = vst [vmem:[%s429 + $0x78] sm:$0xff] %v4254
            %4383 = vst [vmem:[%s429 + $0x80] sm:$0xff] %v4255
            %4384 = vst [vmem:[%s429 + $0x88] sm:$0xff] %v4256
            %4385 = vst [vmem:[%s429 + $0x90] sm:$0xff] %v4257
            %4386 = vst [vmem:[%s429 + $0x98] sm:$0xff] %v4258
            %4387 = vst [vmem:[%s429 + $0xa0] sm:$0xff] %v4259
            %4388 = vst [vmem:[%s429 + $0xa8] sm:$0xff] %v4260
            %4389 = vst [vmem:[%s429 + $0xb0] sm:$0xff] %v4261
            %4390 = vst [vmem:[%s429 + $0xb8] sm:$0xff] %v4262
            %4391 = vst [vmem:[%s429 + $0xc0] sm:$0xff] %v4263
            %4392 = vst [vmem:[%s429 + $0xc8] sm:$0xff] %v4264
            %4393 = vst [vmem:[%s429 + $0xd0] sm:$0xff] %v4265
            %4394 = vst [vmem:[%s429 + $0xd8] sm:$0xff] %v4266
            %4395 = vst [vmem:[%s429 + $0xe0] sm:$0xff] %v4267
            %4396 = vst [vmem:[%s429 + $0xe8] sm:$0xff] %v4268
            %4397 = vst [vmem:[%s429 + $0xf0] sm:$0xff] %v4269
            %4398 = vst [vmem:[%s429 + $0xf8] sm:$0xff] %v4270
            %4399 = vst [vmem:[%s429 + $0x100] sm:$0xff] %v4271
            %4400 = vst [vmem:[%s429 + $0x108] sm:$0xff] %v4272
            %4401 = vst [vmem:[%s429 + $0x110] sm:$0xff] %v4273
            %4402 = vst [vmem:[%s429 + $0x118] sm:$0xff] %v4274
            %4403 = vst [vmem:[%s429 + $0x120] sm:$0xff] %v4275
            %4404 = vst [vmem:[%s429 + $0x128] sm:$0xff] %v4276
            %4405 = vst [vmem:[%s429 + $0x130] sm:$0xff] %v4277
            %4406 = vst [vmem:[%s429 + $0x138] sm:$0xff] %v4278
            %4407 = vst [vmem:[%s429 + $0x140] sm:$0xff] %v4279
            %4408 = vst [vmem:[%s429 + $0x148] sm:$0xff] %v4280
            %4409 = vst [vmem:[%s429 + $0x150] sm:$0xff] %v4281
            %4410 = vst [vmem:[%s429 + $0x158] sm:$0xff] %v4282
            %4411 = vst [vmem:[%s429 + $0x160] sm:$0xff] %v4283
            %4412 = vst [vmem:[%s429 + $0x168] sm:$0xff] %v4284
            %4413 = vst [vmem:[%s429 + $0x170] sm:$0xff] %v4285
            %4414 = vst [vmem:[%s429 + $0x178] sm:$0xff] %v4286
            %4415 = vst [vmem:[%s429 + $0x180] sm:$0xff] %v4287
            %4416 = vst [vmem:[%s429 + $0x188] sm:$0xff] %v4288
            %4417 = vst [vmem:[%s429 + $0x190] sm:$0xff] %v4289
            %4418 = vst [vmem:[%s429 + $0x198] sm:$0xff] %v4290
            %4419 = vst [vmem:[%s429 + $0x1a0] sm:$0xff] %v4291
            %4420 = vst [vmem:[%s429 + $0x1a8] sm:$0xff] %v4292
            %4421 = vst [vmem:[%s429 + $0x1b0] sm:$0xff] %v4293
            %4422 = vst [vmem:[%s429 + $0x1b8] sm:$0xff] %v4294
            %4423 = vst [vmem:[%s429 + $0x1c0] sm:$0xff] %v4295
            %4424 = vst [vmem:[%s429 + $0x1c8] sm:$0xff] %v4296
            %4425 = vst [vmem:[%s429 + $0x1d0] sm:$0xff] %v4297
            %4426 = vst [vmem:[%s429 + $0x1d8] sm:$0xff] %v4298
            %4427 = vst [vmem:[%s429 + $0x1e0] sm:$0xff] %v4299
            %4428 = vst [vmem:[%s429 + $0x1e8] sm:$0xff] %v4300
            %4429 = vst [vmem:[%s429 + $0x1f0] sm:$0xff] %v4301
            %4430 = vst [vmem:[%s429 + $0x1f8] sm:$0xff] %v4302
            %4431 = vst [vmem:[%s429 + $0x200] sm:$0xff] %v4303
            %4432 = vst [vmem:[%s429 + $0x208] sm:$0xff] %v4304
            %4433 = vst [vmem:[%s429 + $0x210] sm:$0xff] %v4305
            %4434 = vst [vmem:[%s429 + $0x218] sm:$0xff] %v4306
            %4435 = vst [vmem:[%s429 + $0x220] sm:$0xff] %v4307
            %4436 = vst [vmem:[%s429 + $0x228] sm:$0xff] %v4308
            %4437 = vst [vmem:[%s429 + $0x230] sm:$0xff] %v4309
            %4438 = vst [vmem:[%s429 + $0x238] sm:$0xff] %v4310
            %4439 = vst [vmem:[%s429 + $0x240] sm:$0xff] %v4311
            %4440 = vst [vmem:[%s429 + $0x248] sm:$0xff] %v4312
            %4441 = vst [vmem:[%s429 + $0x250] sm:$0xff] %v4313
            %4442 = vst [vmem:[%s429 + $0x258] sm:$0xff] %v4314
            %4443 = vst [vmem:[%s429 + $0x260] sm:$0xff] %v4315
            %4444 = vst [vmem:[%s429 + $0x268] sm:$0xff] %v4316
            %4445 = vst [vmem:[%s429 + $0x270] sm:$0xff] %v4317
            %4446 = vst [vmem:[%s429 + $0x278] sm:$0xff] %v4318
            %4447 = vst [vmem:[%s429 + $0x280] sm:$0xff] %v4319
            %4448 = vst [vmem:[%s429 + $0x288] sm:$0xff] %v4320
            %4449 = vst [vmem:[%s429 + $0x290] sm:$0xff] %v4321
            %4450 = vst [vmem:[%s429 + $0x298] sm:$0xff] %v4322
            %4451 = vst [vmem:[%s429 + $0x2a0] sm:$0xff] %v4323
            %4452 = vst [vmem:[%s429 + $0x2a8] sm:$0xff] %v4324
            %4453 = vst [vmem:[%s429 + $0x2b0] sm:$0xff] %v4325
            %4454 = vst [vmem:[%s429 + $0x2b8] sm:$0xff] %v4326
            %4455 = vst [vmem:[%s429 + $0x2c0] sm:$0xff] %v4327
            %4456 = vst [vmem:[%s429 + $0x2c8] sm:$0xff] %v4328
            %4457 = vst [vmem:[%s429 + $0x2d0] sm:$0xff] %v4329
            %4458 = vst [vmem:[%s429 + $0x2d8] sm:$0xff] %v4330
            %4459 = vst [vmem:[%s429 + $0x2e0] sm:$0xff] %v4331
            %4460 = vst [vmem:[%s429 + $0x2e8] sm:$0xff] %v4332
            %4461 = vst [vmem:[%s429 + $0x2f0] sm:$0xff] %v4333
            %4462 = vst [vmem:[%s429 + $0x2f8] sm:$0xff] %v4334
            %4463 = vst [vmem:[%s429 + $0x300] sm:$0xff] %v4335
            %4464 = vst [vmem:[%s429 + $0x308] sm:$0xff] %v4336
            %4465 = vst [vmem:[%s429 + $0x310] sm:$0xff] %v4337
            %4466 = vst [vmem:[%s429 + $0x318] sm:$0xff] %v4338
            %4467 = vst [vmem:[%s429 + $0x320] sm:$0xff] %v4339
            %4468 = vst [vmem:[%s429 + $0x328] sm:$0xff] %v4340
            %4469 = vst [vmem:[%s429 + $0x330] sm:$0xff] %v4341
            %4470 = vst [vmem:[%s429 + $0x338] sm:$0xff] %v4342
            %4471 = vst [vmem:[%s429 + $0x340] sm:$0xff] %v4343
            %4472 = vst [vmem:[%s429 + $0x348] sm:$0xff] %v4344
            %4473 = vst [vmem:[%s429 + $0x350] sm:$0xff] %v4345
            %4474 = vst [vmem:[%s429 + $0x358] sm:$0xff] %v4346
            %4475 = vst [vmem:[%s429 + $0x360] sm:$0xff] %v4347
            %4476 = vst [vmem:[%s429 + $0x368] sm:$0xff] %v4348
            %4477 = vst [vmem:[%s429 + $0x370] sm:$0xff] %v4349
            %4478 = vst [vmem:[%s429 + $0x378] sm:$0xff] %v4350
            %4479 = vst [vmem:[%s429 + $0x380] sm:$0xff] %v4351
            %4480 = vst [vmem:[%s429 + $0x388] sm:$0xff] %v4352
            %4481 = vst [vmem:[%s429 + $0x390] sm:$0xff] %v4353
            %4482 = vst [vmem:[%s429 + $0x398] sm:$0xff] %v4354
            %4483 = vst [vmem:[%s429 + $0x3a0] sm:$0xff] %v4355
            %4484 = vst [vmem:[%s429 + $0x3a8] sm:$0xff] %v4356
            %4485 = vst [vmem:[%s429 + $0x3b0] sm:$0xff] %v4357
            %4486 = vst [vmem:[%s429 + $0x3b8] sm:$0xff] %v4358
            %4487 = vst [vmem:[%s429 + $0x3c0] sm:$0xff] %v4359
            %4488 = vst [vmem:[%s429 + $0x3c8] sm:$0xff] %v4360
            %4489 = vst [vmem:[%s429 + $0x3d0] sm:$0xff] %v4361
            %4490 = vst [vmem:[%s429 + $0x3d8] sm:$0xff] %v4362
            %4491 = vst [vmem:[%s429 + $0x3e0] sm:$0xff] %v4363
            %4492 = vst [vmem:[%s429 + $0x3e8] sm:$0xff] %v4364
            %4493 = vst [vmem:[%s429 + $0x3f0] sm:$0xff] %v4365
            %4494 = vst [vmem:[%s429 + $0x3f8] sm:$0xff] %v4366
          $region108: #{tpu_custom_call.1} parent=99 // pred_fallthru
            _
        $region100: #{tpu_custom_call.1} parent=55 // pred_fallthru
          _
        %s4495 = sand.u32 %s245, 1
        %s4496 = scalar_lea.sflag [#allocation12], %s4495
        %s4497 = sand.u32 %s245, 1
        %s4498 = smul.addr %s4497, 1024
        %s4499 = scalar_lea.vmem [#allocation21], %s4498
        // Predicated region
        $region109: #{tpu_custom_call.1} parent=55 // pred_check
          %p4500 = pneg %p255
        $region110: #{tpu_custom_call.1} parent=55 // pred_check_branch
          %4502 = sbr.rel (%p4500) target = $region112
        $region111: #{tpu_custom_call.1} parent=55 // pred_region
          %p4503 = scmp.eq.s32.totalorder %s31, 2
          %s4504 = scalar_select %p4503, %s32, 0
          %s4505 = smul.u32 64, %s4504
          %4507 = vsyncadd %s4496, 0
          %s4508 = smul.addr %s4505, 2
          %s4509 = smul.addr %s4508, 8
          %s4510 = scalar_lea.hbm %s9, %s4509
          %s4511 = sshll.u32 %s4499, 4
          %s4512 = int_to_ptr.vmem [resolvable:$true] %s4511
          %s4513 = sshll.u32 %s4510, 4
          %s4514 = int_to_ptr.hbm [resolvable:$true] %s4513
          %4519 = dma.vmem_to_hbm [thread:$0]  %s4512, 16384, %s4514, %s4496, 256, 256, 16
        $region112: #{tpu_custom_call.1} parent=55 // pred_fallthru
          _
      $region56: #{tpu_custom_call.1} parent=5 // pred_fallthru
        _
      %p4520 = scmp.le.s32.totalorder 2, %s22
      // Predicated region
      $region113: #{tpu_custom_call.1} parent=5 // pred_check
        %p4521 = pneg %p4520
      $region114: #{tpu_custom_call.1} parent=5 // pred_check_branch
        %4523 = sbr.rel (%p4521) target = $region116
      $region115: #{tpu_custom_call.1} parent=5 // pred_region
        %s4524 = ssub.s32 %s22, 2
        // Predicated region
        $region117: #{tpu_custom_call.1} parent=115 // pred_check
          %p4525 = pneg %p261
        $region118: #{tpu_custom_call.1} parent=115 // pred_check_branch
          %4527 = sbr.rel (%p4525) target = $region120
        $region119: #{tpu_custom_call.1} parent=115 // pred_region
          %s4528 = sand.u32 %s246, 1
          %s4529 = scalar_lea.sflag [#allocation12], %s4528
          %s4530 = sand.u32 %s246, 1
          %s4531 = smul.addr %s4530, 1024
          %s4532 = scalar_lea.vmem [#allocation21], %s4531
          %4534 = dma.done %s4529, 16384
        $region120: #{tpu_custom_call.1} parent=115 // pred_fallthru
          _
      $region116: #{tpu_custom_call.1} parent=5 // pred_fallthru
        _
    $region6: #{tpu_custom_call.1} parent=1 // loop_footer
      %s26 = sadd.s32 1, %s22
    $region7: #{tpu_custom_call.1} parent=1 // loop_footer_branch
      %21 = sbr.rel target = $region3
    $region8: #{tpu_custom_call.1} parent=1 // loop_exit
      _
    %4535 = vsyncpa [#allocation11], 1
    %s4536 = scalar_lea.sflag [#allocation11], 1
    %4537 = vsyncpa %s4536, 1
    %4538 = vsyncpa [#allocation14], 1
    %4539 = vsyncpa [#allocation17], 1
    %4540 = vsyncpa [#allocation20], 1
    %4541 = vsyncpa [#allocation12], 1
    %s4542 = scalar_lea.sflag [#allocation12], 1
    %4543 = vsyncpa %s4542, 1

// kernel: tpu_custom_call.1
$region0: #{tpu_custom_call.1}
  #allocation0 [shape = 'u32[]', space=smem, size = 0x4, offset = 0x4, fixed_abs, tag = 'smem constant byte address 0x4 - core index']
  #allocation1 [shape = 'u32[72,128]{1,0:T(1,128)}', space=vmem, size = 0x9000, scoped, tag = 'internal scratch']
  #allocation2 [shape = 'f32[1,256]{1,0:T(1,128)}', space=vmem, size = 0x400, scoped, tag = 'scratch operand']
  #allocation3 [shape = 'f32[1,256]{1,0:T(1,128)}', space=vmem, size = 0x400, scoped, tag = 'scratch operand']
  #allocation4 [shape = 'f32[1,256]{1,0:T(1,128)}', space=vmem, size = 0x400, scoped, tag = 'scratch operand']
  #allocation5 [shape = 'f32[1,256]{1,0:T(1,128)}', space=vmem, size = 0x400, scoped, tag = 'scratch operand']
  #allocation6 [shape = 'f32[1,256]{1,0:T(1,128)}', space=vmem, size = 0x400, scoped, tag = 'scratch operand']
  #allocation7 [shape = 'f32[1,256]{1,0:T(1,128)}', space=vmem, size = 0x400, scoped, tag = 'scratch operand']
  #allocation8 [shape = 'f32[1,256]{1,0:T(1,128)}', space=vmem, size = 0x400, scoped, tag = 'scratch operand']
  #allocation9 [shape = 'f32[1,256]{1,0:T(1,128)}', space=vmem, size = 0x400, scoped, tag = 'scratch operand']
  %s0 = inlined_call_operand.hbm [shape: bf16[512,256], index: 0, kind: input, shape index: {}]
  %s1 = inlined_call_operand.hbm [shape: bf16[256,256], index: 1, kind: input, shape index: {}]
  %s2 = inlined_call_operand.hbm [shape: f32[1,256], index: 2, kind: input, shape index: {}]
  %s3 = inlined_call_operand.vmem [shape: f32[1,256], index: 3, kind: input, shape index: {}]
  %s4 = inlined_call_operand.hbm [shape: f32[1,256], index: 4, kind: input, shape index: {}]
  %s5 = inlined_call_operand.hbm [shape: bf16[256,256], index: 5, kind: input, shape index: {}]
  %s6 = inlined_call_operand.vmem [shape: f32[1,256], index: 6, kind: input, shape index: {}]
  %s7 = inlined_call_operand.vmem [shape: f32[1,256], index: 7, kind: input, shape index: {}]
  %s8 = inlined_call_operand.hbm [shape: f32[1,256], index: 8, kind: input, shape index: {}]
  %s9 = inlined_call_operand.hbm [shape: f32[512,256], index: 9, kind: output, shape index: {}]
  %s10 = sld [smem:[#allocation0]]
  $region121: #{tpu_custom_call.1} parent=0
    _
  %s12 = ssub.s32 1, %s10
  %s13 = scalar_select 0, %s12, %s10
  $region1: #{tpu_custom_call.1} parent=0
    #allocation10 [shape = 'u8[262144]{0}', space=vmem, size = 0x40000, scoped, tag = 'input window, operand 0, single buffered']
    #allocation11 [shape = 's32[2]{0}', space=sflag, size = 0x8, scoped, tag = 'scoped memory for tpu_custom_call.1']
    #allocation12 [shape = 's32[2]{0}', space=sflag, size = 0x8, scoped, tag = 'scoped memory for tpu_custom_call.1']
    #allocation13 [shape = 'u8[131072]{0}', space=vmem, size = 0x20000, scoped, tag = 'input window, operand 1, single buffered']
    #allocation14 [shape = 's32[1]{0}', space=sflag, size = 0x4, scoped, tag = 'scoped memory for tpu_custom_call.1']
    #allocation15 [shape = 'u8[1024]{0}', space=vmem, size = 0x400, scoped, tag = 'input window, operand 2, single buffered']
    #allocation16 [shape = 'u8[1024]{0}', space=vmem, size = 0x400, scoped, tag = 'input window, operand 4, single buffered']
    #allocation17 [shape = 's32[1]{0}', space=sflag, size = 0x4, scoped, tag = 'scoped memory for tpu_custom_call.1']
    #allocation18 [shape = 'u8[131072]{0}', space=vmem, size = 0x20000, scoped, tag = 'input window, operand 5, single buffered']
    #allocation19 [shape = 'u8[1024]{0}', space=vmem, size = 0x400, scoped, tag = 'input window, operand 8, single buffered']
    #allocation20 [shape = 's32[1]{0}', space=sflag, size = 0x4, scoped, tag = 'scoped memory for tpu_custom_call.1']
    #allocation21 [shape = 'u8[1048576]{0}', space=vmem, size = 0x100000, scoped, tag = 'output window, operand 0']
    %14 = vsyncpa [#allocation11], 0
    %15 = vsyncpa [#allocation14], 0
    %16 = vsyncpa [#allocation17], 0
    %17 = vsyncpa [#allocation20], 0
    %18 = vsyncpa [#allocation12], 0
    %s19 = scalar_lea.sflag [#allocation12], 1
    %20 = vsyncpa %s19, 0
    loop: start=0, step=1, limit=5
    $region2: #{tpu_custom_call.1} parent=1 // loop_pre_header
      _
    $region3: #{tpu_custom_call.1} parent=1 // loop_header
      %s22 = sphi 0, %s26
      %p23 = scmp.ge.s32.totalorder %s22, 5
      %s29 = sphi 0, %s41
      %s30 = sphi 0, %s37
      %s31 = sphi 0, %s29
      %s32 = sphi 0, %s30
      %s33 = sphi 0, %s31
      %s34 = sphi 0, %s32
      %s44 = sphi 0, %s46
      %s47 = sphi 0, %s44
      %s48 = sphi 0, %s47
      %s64 = sphi 0, %s48
      %s68 = sphi 0, %s68
      %s70 = sphi 0, %s68
      %s71 = sphi 0, %s70
      %s85 = sphi 0, %s71
      %s89 = sphi 0, %s89
      %s91 = sphi 0, %s89
      %s92 = sphi 0, %s91
      %s106 = sphi 0, %s92
      %s110 = sphi 0, %s110
      %s112 = sphi 0, %s110
      %s113 = sphi 0, %s112
      %s127 = sphi 0, %s113
      %s131 = sphi 0, %s131
      %s133 = sphi 0, %s131
      %s134 = sphi 0, %s133
      %s148 = sphi 0, %s134
      %s152 = sphi 0, %s152
      %s154 = sphi 0, %s152
      %s155 = sphi 0, %s154
      %s169 = sphi 0, %s155
      %s173 = sphi 0, %s173
      %s175 = sphi 0, %s173
      %s176 = sphi 0, %s175
      %s190 = sphi 0, %s176
      %s194 = sphi 0, %s194
      %s196 = sphi 0, %s194
      %s197 = sphi 0, %s196
      %s211 = sphi 0, %s197
      %s215 = sphi 0, %s215
      %s217 = sphi 0, %s215
      %s218 = sphi 0, %s217
      %s232 = sphi 0, %s218
      %s242 = sphi 0, %s244
      %s245 = sphi 0, %s242
      %s246 = sphi 0, %s245
      %s262 = sphi 0, %s246
    $region4: #{tpu_custom_call.1} parent=1 // loop_header_branch
      %25 = sbr.rel (%p23) target = $region8
    $region5: #{tpu_custom_call.1} parent=1 // loop_body
      %s27 = ssub.s32 %s22, 1
      %s28 = ssub.s32 %s22, 2
      %s35 = sadd.s32 1, %s30
      %p36 = scmp.ge.s32.totalorder %s35, 1
      %s37 = scalar_select %p36, 0, %s35
      %s38 = sadd.s32 1, %s29
      %s39 = scalar_select %p36, %s38, %s29
      %p40 = scmp.ge.s32.totalorder %s39, 3
      %s41 = scalar_select %p40, 0, %s39
      %s42 = ssub.s32 %s30, %s37
      %p43 = scmp.eq.s32.totalorder %s42, 0
      %s45 = sadd.s32 %s44, 1
      %s46 = scalar_select %p43, %s44, %s45
      %p49 = pneg %p43
      %p50 = scmp.eq.s32.totalorder %s22, 2
      %p51 = por %p49, %p50
      %p52 = scmp.ne.s32.totalorder %s44, %s47
      %p53 = scmp.eq.s32.totalorder %s22, 0
      %p54 = por %p52, %p53
      %p55 = scmp.ne.s32.totalorder %s44, %s47
      %p56 = scmp.eq.s32.totalorder %s27, 2
      %p57 = por %p55, %p56
      %p58 = scmp.ne.s32.totalorder %s47, %s48
      %p59 = scmp.eq.s32.totalorder %s27, 0
      %p60 = por %p58, %p59
      %p61 = scmp.ne.s32.totalorder %s47, %s48
      %p62 = scmp.eq.s32.totalorder %s28, 2
      %p63 = por %p61, %p62
      %p65 = scmp.ne.s32.totalorder %s48, %s64
      %p66 = scmp.eq.s32.totalorder %s28, 0
      %p67 = por %p65, %p66
      %s69 = sadd.s32 %s68, 1
      %p72 = scmp.eq.s32.totalorder %s22, 2
      %p73 = scmp.ne.s32.totalorder %s68, %s70
      %p74 = scmp.eq.s32.totalorder %s22, 0
      %p75 = por %p73, %p74
      %p76 = scmp.ne.s32.totalorder %s68, %s70
      %p77 = scmp.eq.s32.totalorder %s27, 2
      %p78 = por %p76, %p77
      %p79 = scmp.ne.s32.totalorder %s70, %s71
      %p80 = scmp.eq.s32.totalorder %s27, 0
      %p81 = por %p79, %p80
      %p82 = scmp.ne.s32.totalorder %s70, %s71
      %p83 = scmp.eq.s32.totalorder %s28, 2
      %p84 = por %p82, %p83
      %p86 = scmp.ne.s32.totalorder %s71, %s85
      %p87 = scmp.eq.s32.totalorder %s28, 0
      %p88 = por %p86, %p87
      %s90 = sadd.s32 %s89, 1
      %p93 = scmp.eq.s32.totalorder %s22, 2
      %p94 = scmp.ne.s32.totalorder %s89, %s91
      %p95 = scmp.eq.s32.totalorder %s22, 0
      %p96 = por %p94, %p95
      %p97 = scmp.ne.s32.totalorder %s89, %s91
      %p98 = scmp.eq.s32.totalorder %s27, 2
      %p99 = por %p97, %p98
      %p100 = scmp.ne.s32.totalorder %s91, %s92
      %p101 = scmp.eq.s32.totalorder %s27, 0
      %p102 = por %p100, %p101
      %p103 = scmp.ne.s32.totalorder %s91, %s92
      %p104 = scmp.eq.s32.totalorder %s28, 2
      %p105 = por %p103, %p104
      %p107 = scmp.ne.s32.totalorder %s92, %s106
      %p108 = scmp.eq.s32.totalorder %s28, 0
      %p109 = por %p107, %p108
      %s111 = sadd.s32 %s110, 1
      %p114 = scmp.eq.s32.totalorder %s22, 2
      %p115 = scmp.ne.s32.totalorder %s110, %s112
      %p116 = scmp.eq.s32.totalorder %s22, 0
      %p117 = por %p115, %p116
      %p118 = scmp.ne.s32.totalorder %s110, %s112
      %p119 = scmp.eq.s32.totalorder %s27, 2
      %p120 = por %p118, %p119
      %p121 = scmp.ne.s32.totalorder %s112, %s113
      %p122 = scmp.eq.s32.totalorder %s27, 0
      %p123 = por %p121, %p122
      %p124 = scmp.ne.s32.totalorder %s112, %s113
      %p125 = scmp.eq.s32.totalorder %s28, 2
      %p126 = por %p124, %p125
      %p128 = scmp.ne.s32.totalorder %s113, %s127
      %p129 = scmp.eq.s32.totalorder %s28, 0
      %p130 = por %p128, %p129
      %s132 = sadd.s32 %s131, 1
      %p135 = scmp.eq.s32.totalorder %s22, 2
      %p136 = scmp.ne.s32.totalorder %s131, %s133
      %p137 = scmp.eq.s32.totalorder %s22, 0
      %p138 = por %p136, %p137
      %p139 = scmp.ne.s32.totalorder %s131, %s133
      %p140 = scmp.eq.s32.totalorder %s27, 2
      %p141 = por %p139, %p140
      %p142 = scmp.ne.s32.totalorder %s133, %s134
      %p143 = scmp.eq.s32.totalorder %s27, 0
      %p144 = por %p142, %p143
      %p145 = scmp.ne.s32.totalorder %s133, %s134
      %p146 = scmp.eq.s32.totalorder %s28, 2
      %p147 = por %p145, %p146
      %p149 = scmp.ne.s32.totalorder %s134, %s148
      %p150 = scmp.eq.s32.totalorder %s28, 0
      %p151 = por %p149, %p150
      %s153 = sadd.s32 %s152, 1
      %p156 = scmp.eq.s32.totalorder %s22, 2
      %p157 = scmp.ne.s32.totalorder %s152, %s154
      %p158 = scmp.eq.s32.totalorder %s22, 0
      %p159 = por %p157, %p158
      %p160 = scmp.ne.s32.totalorder %s152, %s154
      %p161 = scmp.eq.s32.totalorder %s27, 2
      %p162 = por %p160, %p161
      %p163 = scmp.ne.s32.totalorder %s154, %s155
      %p164 = scmp.eq.s32.totalorder %s27, 0
      %p165 = por %p163, %p164
      %p166 = scmp.ne.s32.totalorder %s154, %s155
      %p167 = scmp.eq.s32.totalorder %s28, 2
      %p168 = por %p166, %p167
      %p170 = scmp.ne.s32.totalorder %s155, %s169
      %p171 = scmp.eq.s32.totalorder %s28, 0
      %p172 = por %p170, %p171
      %s174 = sadd.s32 %s173, 1
      %p177 = scmp.eq.s32.totalorder %s22, 2
      %p178 = scmp.ne.s32.totalorder %s173, %s175
      %p179 = scmp.eq.s32.totalorder %s22, 0
      %p180 = por %p178, %p179
      %p181 = scmp.ne.s32.totalorder %s173, %s175
      %p182 = scmp.eq.s32.totalorder %s27, 2
      %p183 = por %p181, %p182
      %p184 = scmp.ne.s32.totalorder %s175, %s176
      %p185 = scmp.eq.s32.totalorder %s27, 0
      %p186 = por %p184, %p185
      %p187 = scmp.ne.s32.totalorder %s175, %s176
      %p188 = scmp.eq.s32.totalorder %s28, 2
      %p189 = por %p187, %p188
      %p191 = scmp.ne.s32.totalorder %s176, %s190
      %p192 = scmp.eq.s32.totalorder %s28, 0
      %p193 = por %p191, %p192
      %s195 = sadd.s32 %s194, 1
      %p198 = scmp.eq.s32.totalorder %s22, 2
      %p199 = scmp.ne.s32.totalorder %s194, %s196
      %p200 = scmp.eq.s32.totalorder %s22, 0
      %p201 = por %p199, %p200
      %p202 = scmp.ne.s32.totalorder %s194, %s196
      %p203 = scmp.eq.s32.totalorder %s27, 2
      %p204 = por %p202, %p203
      %p205 = scmp.ne.s32.totalorder %s196, %s197
      %p206 = scmp.eq.s32.totalorder %s27, 0
      %p207 = por %p205, %p206
      %p208 = scmp.ne.s32.totalorder %s196, %s197
      %p209 = scmp.eq.s32.totalorder %s28, 2
      %p210 = por %p208, %p209
      %p212 = scmp.ne.s32.totalorder %s197, %s211
      %p213 = scmp.eq.s32.totalorder %s28, 0
      %p214 = por %p212, %p213
      %s216 = sadd.s32 %s215, 1
      %p219 = scmp.eq.s32.totalorder %s22, 2
      %p220 = scmp.ne.s32.totalorder %s215, %s217
      %p221 = scmp.eq.s32.totalorder %s22, 0
      %p222 = por %p220, %p221
      %p223 = scmp.ne.s32.totalorder %s215, %s217
      %p224 = scmp.eq.s32.totalorder %s27, 2
      %p225 = por %p223, %p224
      %p226 = scmp.ne.s32.totalorder %s217, %s218
      %p227 = scmp.eq.s32.totalorder %s27, 0
      %p228 = por %p226, %p227
      %p229 = scmp.ne.s32.totalorder %s217, %s218
      %p230 = scmp.eq.s32.totalorder %s28, 2
      %p231 = por %p229, %p230
      %p233 = scmp.ne.s32.totalorder %s218, %s232
      %p234 = scmp.eq.s32.totalorder %s28, 0
      %p235 = por %p233, %p234
      %p236 = scmp.eq.s32.totalorder %s29, 2
      %s237 = scalar_select %p236, %s30, 0
      %p238 = scmp.eq.s32.totalorder %s41, 2
      %s239 = scalar_select %p238, %s37, 0
      %s240 = ssub.s32 %s237, %s239
      %p241 = scmp.eq.s32.totalorder %s240, 0
      %s243 = sadd.s32 %s242, 1
      %s244 = scalar_select %p241, %s242, %s243
      %p247 = pneg %p241
      %p248 = scmp.eq.s32.totalorder %s22, 2
      %p249 = por %p247, %p248
      %p250 = scmp.ne.s32.totalorder %s242, %s245
      %p251 = scmp.eq.s32.totalorder %s22, 0
      %p252 = por %p250, %p251
      %p253 = scmp.ne.s32.totalorder %s242, %s245
      %p254 = scmp.eq.s32.totalorder %s27, 2
      %p255 = por %p253, %p254
      %p256 = scmp.ne.s32.totalorder %s245, %s246
      %p257 = scmp.eq.s32.totalorder %s27, 0
      %p258 = por %p256, %p257
      %p259 = scmp.ne.s32.totalorder %s245, %s246
      %p260 = scmp.eq.s32.totalorder %s28, 2
      %p261 = por %p259, %p260
      %p263 = scmp.ne.s32.totalorder %s246, %s262
      %p264 = scmp.eq.s32.totalorder %s28, 0
      %p265 = por %p263, %p264
      %p266 = scmp.le.s32.totalorder 1, %s22
      %p267 = scmp.lt.s32.totalorder %s22, 4
      %p268 = pnand %p266, %p267
      %p269 = pneg %p268
      // Predicated region
      $region9: #{tpu_custom_call.1} parent=5 // pred_check
        _
      $region10: #{tpu_custom_call.1} parent=5 // pred_check_branch
        %271 = sbr.rel (%p268) target = $region12
      $region11: #{tpu_custom_call.1} parent=5 // pred_region
        %s272 = ssub.s32 %s22, 1
        // Predicated region
        $region13: #{tpu_custom_call.1} parent=11 // pred_check
          %p273 = pneg %p60
        $region14: #{tpu_custom_call.1} parent=11 // pred_check_branch
          %275 = sbr.rel (%p273) target = $region16
        $region15: #{tpu_custom_call.1} parent=11 // pred_region
          %s276 = smul.u32 64, %s32
          %278 = vsyncadd [#allocation11], 0
          %s279 = smul.addr %s276, 2
          %s280 = smul.addr %s279, 4
          %s281 = scalar_lea.hbm %s0, %s280
          %s282 = sshll.u32 %s281, 4
          %s283 = int_to_ptr.hbm [resolvable:$true] %s282
          %s284 = sshll.u32 [#allocation10], 4
          %s285 = int_to_ptr.vmem [resolvable:$true] %s284
          %290 = dma.hbm_to_vmem [thread:$0]  %s283, 8192, %s285, [#allocation11], 128, 128, 8
        $region16: #{tpu_custom_call.1} parent=11 // pred_fallthru
          _
        // Predicated region
        $region17: #{tpu_custom_call.1} parent=11 // pred_check
          %p291 = pneg %p81
        $region18: #{tpu_custom_call.1} parent=11 // pred_check_branch
          %293 = sbr.rel (%p291) target = $region20
        $region19: #{tpu_custom_call.1} parent=11 // pred_region
          %295 = vsyncadd [#allocation14], 0
          %s296 = sshll.u32 %s1, 4
          %s297 = int_to_ptr.hbm [resolvable:$true] %s296
          %s298 = sshll.u32 [#allocation13], 4
          %s299 = int_to_ptr.vmem [resolvable:$true] %s298
          %304 = dma.hbm_to_vmem [thread:$0]  %s297, 4096, %s299, [#allocation14], 128, 128, 8
        $region20: #{tpu_custom_call.1} parent=11 // pred_fallthru
          _
        // Predicated region
        $region21: #{tpu_custom_call.1} parent=11 // pred_check
          %p305 = pneg %p102
        $region22: #{tpu_custom_call.1} parent=11 // pred_check_branch
          %307 = sbr.rel (%p305) target = $region24
        $region23: #{tpu_custom_call.1} parent=11 // pred_region
          %309 = vsyncadd [#allocation14], 0
          %s311 = sshll.u32 %s2, 4
          %s312 = int_to_ptr.hbm [resolvable:$true] %s311
          %s313 = sshll.u32 [#allocation15], 4
          %s314 = int_to_ptr.vmem [resolvable:$true] %s313
          %316 = dma.hbm_to_vmem [thread:$0]  %s312, 32, %s314, [#allocation14]
        $region24: #{tpu_custom_call.1} parent=11 // pred_fallthru
          _
        // Predicated region
        $region25: #{tpu_custom_call.1} parent=11 // pred_check
          %p317 = pneg %p123
        $region26: #{tpu_custom_call.1} parent=11 // pred_check_branch
          %319 = sbr.rel (%p317) target = $region28
        $region27: #{tpu_custom_call.1} parent=11 // pred_region
          _
        $region28: #{tpu_custom_call.1} parent=11 // pred_fallthru
          _
        // Predicated region
        $region29: #{tpu_custom_call.1} parent=11 // pred_check
          %p320 = pneg %p144
        $region30: #{tpu_custom_call.1} parent=11 // pred_check_branch
          %322 = sbr.rel (%p320) target = $region32
        $region31: #{tpu_custom_call.1} parent=11 // pred_region
          %324 = vsyncadd [#allocation17], 0
          %s326 = sshll.u32 %s4, 4
          %s327 = int_to_ptr.hbm [resolvable:$true] %s326
          %s328 = sshll.u32 [#allocation16], 4
          %s329 = int_to_ptr.vmem [resolvable:$true] %s328
          %331 = dma.hbm_to_vmem [thread:$0]  %s327, 32, %s329, [#allocation17]
        $region32: #{tpu_custom_call.1} parent=11 // pred_fallthru
          _
        // Predicated region
        $region33: #{tpu_custom_call.1} parent=11 // pred_check
          %p332 = pneg %p165
        $region34: #{tpu_custom_call.1} parent=11 // pred_check_branch
          %334 = sbr.rel (%p332) target = $region36
        $region35: #{tpu_custom_call.1} parent=11 // pred_region
          %336 = vsyncadd [#allocation17], 0
          %s337 = sshll.u32 %s5, 4
          %s338 = int_to_ptr.hbm [resolvable:$true] %s337
          %s339 = sshll.u32 [#allocation18], 4
          %s340 = int_to_ptr.vmem [resolvable:$true] %s339
          %345 = dma.hbm_to_vmem [thread:$0]  %s338, 4096, %s340, [#allocation17], 128, 128, 8
        $region36: #{tpu_custom_call.1} parent=11 // pred_fallthru
          _
        // Predicated region
        $region37: #{tpu_custom_call.1} parent=11 // pred_check
          %p346 = pneg %p186
        $region38: #{tpu_custom_call.1} parent=11 // pred_check_branch
          %348 = sbr.rel (%p346) target = $region40
        $region39: #{tpu_custom_call.1} parent=11 // pred_region
          _
        $region40: #{tpu_custom_call.1} parent=11 // pred_fallthru
          _
        // Predicated region
        $region41: #{tpu_custom_call.1} parent=11 // pred_check
          %p349 = pneg %p207
        $region42: #{tpu_custom_call.1} parent=11 // pred_check_branch
          %351 = sbr.rel (%p349) target = $region44
        $region43: #{tpu_custom_call.1} parent=11 // pred_region
          _
        $region44: #{tpu_custom_call.1} parent=11 // pred_fallthru
          _
        // Predicated region
        $region45: #{tpu_custom_call.1} parent=11 // pred_check
          %p352 = pneg %p228
        $region46: #{tpu_custom_call.1} parent=11 // pred_check_branch
          %354 = sbr.rel (%p352) target = $region48
        $region47: #{tpu_custom_call.1} parent=11 // pred_region
          %356 = vsyncadd [#allocation20], 0
          %s358 = sshll.u32 %s8, 4
          %s359 = int_to_ptr.hbm [resolvable:$true] %s358
          %s360 = sshll.u32 [#allocation19], 4
          %s361 = int_to_ptr.vmem [resolvable:$true] %s360
          %363 = dma.hbm_to_vmem [thread:$0]  %s359, 32, %s361, [#allocation20]
        $region48: #{tpu_custom_call.1} parent=11 // pred_fallthru
          _
      $region12: #{tpu_custom_call.1} parent=5 // pred_fallthru
        _
      %p364 = scmp.lt.s32.totalorder %s22, 3
      // Predicated region
      $region49: #{tpu_custom_call.1} parent=5 // pred_check
        %p365 = pneg %p364
      $region50: #{tpu_custom_call.1} parent=5 // pred_check_branch
        %367 = sbr.rel (%p365) target = $region52
      $region51: #{tpu_custom_call.1} parent=5 // pred_region
        _
      $region52: #{tpu_custom_call.1} parent=5 // pred_fallthru
        _
      %p368 = scmp.le.s32.totalorder 1, %s22
      %p369 = scmp.lt.s32.totalorder %s22, 4
      %p370 = pnand %p368, %p369
      %p371 = pneg %p370
      // Predicated region
      $region53: #{tpu_custom_call.1} parent=5 // pred_check
        _
      $region54: #{tpu_custom_call.1} parent=5 // pred_check_branch
        %373 = sbr.rel (%p370) target = $region56
      $region55: #{tpu_custom_call.1} parent=5 // pred_region
        %s374 = ssub.s32 %s22, 1
        // Predicated region
        $region57: #{tpu_custom_call.1} parent=55 // pred_check
          %p375 = pneg %p60
        $region58: #{tpu_custom_call.1} parent=55 // pred_check_branch
          %377 = sbr.rel (%p375) target = $region60
        $region59: #{tpu_custom_call.1} parent=55 // pred_region
          %379 = dma.done [#allocation11], 8192
        $region60: #{tpu_custom_call.1} parent=55 // pred_fallthru
          _
        // Predicated region
        $region61: #{tpu_custom_call.1} parent=55 // pred_check
          %p380 = pneg %p81
        $region62: #{tpu_custom_call.1} parent=55 // pred_check_branch
          %382 = sbr.rel (%p380) target = $region64
        $region63: #{tpu_custom_call.1} parent=55 // pred_region
          %384 = dma.done [#allocation14], 4096
        $region64: #{tpu_custom_call.1} parent=55 // pred_fallthru
          _
        // Predicated region
        $region65: #{tpu_custom_call.1} parent=55 // pred_check
          %p385 = pneg %p102
        $region66: #{tpu_custom_call.1} parent=55 // pred_check_branch
          %387 = sbr.rel (%p385) target = $region68
        $region67: #{tpu_custom_call.1} parent=55 // pred_region
          %389 = dma.done [#allocation14], 32
        $region68: #{tpu_custom_call.1} parent=55 // pred_fallthru
          _
        // Predicated region
        $region69: #{tpu_custom_call.1} parent=55 // pred_check
          %p390 = pneg %p144
        $region70: #{tpu_custom_call.1} parent=55 // pred_check_branch
          %392 = sbr.rel (%p390) target = $region72
        $region71: #{tpu_custom_call.1} parent=55 // pred_region
          %394 = dma.done [#allocation17], 32
        $region72: #{tpu_custom_call.1} parent=55 // pred_fallthru
          _
        // Predicated region
        $region73: #{tpu_custom_call.1} parent=55 // pred_check
          %p395 = pneg %p165
        $region74: #{tpu_custom_call.1} parent=55 // pred_check_branch
          %397 = sbr.rel (%p395) target = $region76
        $region75: #{tpu_custom_call.1} parent=55 // pred_region
          %399 = dma.done [#allocation17], 4096
        $region76: #{tpu_custom_call.1} parent=55 // pred_fallthru
          _
        // Predicated region
        $region77: #{tpu_custom_call.1} parent=55 // pred_check
          %p400 = pneg %p228
        $region78: #{tpu_custom_call.1} parent=55 // pred_check_branch
          %402 = sbr.rel (%p400) target = $region80
        $region79: #{tpu_custom_call.1} parent=55 // pred_region
          %404 = dma.done [#allocation20], 32
        $region80: #{tpu_custom_call.1} parent=55 // pred_fallthru
          _
        %p405 = pneg %p60
        %p406 = pneg %p57
        %p407 = pneg %p81
        %p408 = pneg %p78
        %p409 = pneg %p102
        %p410 = pneg %p99
        %p411 = pneg %p123
        %p412 = pneg %p120
        %p413 = pneg %p144
        %p414 = pneg %p141
        %p415 = pneg %p165
        %p416 = pneg %p162
        %p417 = pneg %p186
        %p418 = pneg %p183
        %p419 = pneg %p207
        %p420 = pneg %p204
        %p421 = pneg %p228
        %p422 = pneg %p225
        %p423 = pneg %p258
        %p424 = pneg %p255
        %s425 = sand.u32 %s245, 1
        %s426 = scalar_lea.sflag [#allocation12], %s425
        %s427 = sand.u32 %s245, 1
        %s428 = smul.addr %s427, 1024
        %s429 = scalar_lea.vmem [#allocation21], %s428
        %s430 = smul.u32 64, %s32
        %p431 = scmp.eq.s32.totalorder %s31, 2
        %s432 = scalar_select %p431, %s32, 0
        %s433 = smul.u32 64, %s432
        %p434 = scmp.eq.s32.totalorder %s32, 0
        %p435 = scmp.eq.s32.totalorder %s31, 0
        %p436 = pnand %p435, %p434
        %p437 = pneg %p436
        // Predicated region
        $region81: #{tpu_custom_call.1} parent=55 // pred_check
          _
        $region82: #{tpu_custom_call.1} parent=55 // pred_check_branch
          %439 = sbr.rel (%p436) target = $region84
        $region83: #{tpu_custom_call.1} parent=55 // pred_region
          %v440 = vlaneseq
          %vm441 = vcmp.ge.s32.totalorder %v440, 0
          %vm442 = vcmp.lt.s32.totalorder %v440, 256
          %vm443 = vmand %vm441, %vm442
          %444 = vst.msk [vmem:[#allocation2] sm:$0x3] %vm443, 0.0
          %445 = vst.msk [vmem:[#allocation3] sm:$0x3] %vm443, 0.0
        $region84: #{tpu_custom_call.1} parent=55 // pred_fallthru
          _
        %p446 = scmp.eq.s32.totalorder %s31, 1
        %p447 = pnand %p446, %p434
        %p448 = pneg %p447
        // Predicated region
        $region85: #{tpu_custom_call.1} parent=55 // pred_check
          _
        $region86: #{tpu_custom_call.1} parent=55 // pred_check_branch
          %450 = sbr.rel (%p447) target = $region88
        $region87: #{tpu_custom_call.1} parent=55 // pred_region
          %v451 = vld [vmem:[#allocation2] sm:$0x3]
          %v452 = vmul.f32 %v451, 0.001953125
          %v453 = vld [vmem:[#allocation3] sm:$0x3]
          %v454 = vmul.f32 %v453, 0.001953125
          %v455 = vmul.f32 %v452, %v452
          %v456 = vsub.f32 %v454, %v455
          %v457 = vmax.f32 %v456, 0.0
          %v458 = vld [vmem:[%s3] sm:$0x3]
          %v459 = vadd.f32 %v457, 1e-05
          %v460 = vrsqrt.pop %v459
          %v461 = vmul.f32 %v460, %v459
          %v462 = vmul.f32 %v461, %v460
          %v463 = vmul.f32 0.5, %v462
          %v464 = vsub.f32 1.5, %v463
          %v465 = vmul.f32 %v460, %v464
          %vm466 = vweird.f32 %v459
          %vm467 = vweird.f32 %v460
          %vm468 = vmor %vm466, %vm467
          %v469 = vsel %vm468, %v460, %v465
          %v470 = vmul.f32 %v458, %v469
          %v471 = vlaneseq
          %vm472 = vcmp.ge.s32.totalorder %v471, 0
          %vm473 = vcmp.lt.s32.totalorder %v471, 256
          %vm474 = vmand %vm472, %vm473
          %475 = vst.msk [vmem:[#allocation6] sm:$0x3] %vm474, %v470
          %v476 = vld [vmem:[#allocation16] sm:$0x3]
          %v477 = vmul.f32 %v452, %v470
          %v478 = vsub.f32 %v476, %v477
          %479 = vst.msk [vmem:[#allocation7] sm:$0x3] %vm474, %v478
          %480 = vst.msk [vmem:[#allocation4] sm:$0x3] %vm474, 0.0
          %481 = vst.msk [vmem:[#allocation5] sm:$0x3] %vm474, 0.0
        $region88: #{tpu_custom_call.1} parent=55 // pred_fallthru
          _
        %p482 = scmp.eq.s32.totalorder %s31, 2
        %p483 = pnand %p482, %p434
        %p484 = pneg %p483
        // Predicated region
        $region89: #{tpu_custom_call.1} parent=55 // pred_check
          _
        $region90: #{tpu_custom_call.1} parent=55 // pred_check_branch
          %486 = sbr.rel (%p483) target = $region92
        $region91: #{tpu_custom_call.1} parent=55 // pred_region
          %v487 = vld [vmem:[#allocation4] sm:$0x3]
          %v488 = vmul.f32 %v487, 0.001953125
          %v489 = vld [vmem:[#allocation5] sm:$0x3]
          %v490 = vmul.f32 %v489, 0.001953125
          %v491 = vmul.f32 %v488, %v488
          %v492 = vsub.f32 %v490, %v491
          %v493 = vmax.f32 %v492, 0.0
          %v494 = vld [vmem:[%s7] sm:$0x3]
          %v495 = vadd.f32 %v493, 1e-05
          %v496 = vrsqrt.pop %v495
          %v497 = vmul.f32 %v496, %v495
          %v498 = vmul.f32 %v497, %v496
          %v499 = vmul.f32 0.5, %v498
          %v500 = vsub.f32 1.5, %v499
          %v501 = vmul.f32 %v496, %v500
          %vm502 = vweird.f32 %v495
          %vm503 = vweird.f32 %v496
          %vm504 = vmor %vm502, %vm503
          %v505 = vsel %vm504, %v496, %v501
          %v506 = vmul.f32 %v494, %v505
          %v507 = vlaneseq
          %vm508 = vcmp.ge.s32.totalorder %v507, 0
          %vm509 = vcmp.lt.s32.totalorder %v507, 256
          %vm510 = vmand %vm508, %vm509
          %511 = vst.msk [vmem:[#allocation8] sm:$0x3] %vm510, %v506
          %v512 = vld [vmem:[#allocation19] sm:$0x3]
          %v513 = vmul.f32 %v488, %v506
          %v514 = vsub.f32 %v512, %v513
          %515 = vst.msk [vmem:[#allocation9] sm:$0x3] %vm510, %v514
        $region92: #{tpu_custom_call.1} parent=55 // pred_fallthru
          _
        %v516 = vld [vmem:[#allocation10] sm:$0xff]
        %v517 = vld [vmem:[#allocation10 + $0x8] sm:$0xff]
        %v518 = vld [vmem:[#allocation10 + $0x10] sm:$0xff]
        %v519 = vld [vmem:[#allocation10 + $0x18] sm:$0xff]
        %v520 = vld [vmem:[#allocation10 + $0x20] sm:$0xff]
        %v521 = vld [vmem:[#allocation10 + $0x28] sm:$0xff]
        %v522 = vld [vmem:[#allocation10 + $0x30] sm:$0xff]
        %v523 = vld [vmem:[#allocation10 + $0x38] sm:$0xff]
        %v524 = vld [vmem:[#allocation10 + $0x40] sm:$0xff]
        %v525 = vld [vmem:[#allocation10 + $0x48] sm:$0xff]
        %v526 = vld [vmem:[#allocation10 + $0x50] sm:$0xff]
        %v527 = vld [vmem:[#allocation10 + $0x58] sm:$0xff]
        %v528 = vld [vmem:[#allocation10 + $0x60] sm:$0xff]
        %v529 = vld [vmem:[#allocation10 + $0x68] sm:$0xff]
        %v530 = vld [vmem:[#allocation10 + $0x70] sm:$0xff]
        %v531 = vld [vmem:[#allocation10 + $0x78] sm:$0xff]
        %v532 = vld [vmem:[#allocation10 + $0x80] sm:$0xff]
        %v533 = vld [vmem:[#allocation10 + $0x88] sm:$0xff]
        %v534 = vld [vmem:[#allocation10 + $0x90] sm:$0xff]
        %v535 = vld [vmem:[#allocation10 + $0x98] sm:$0xff]
        %v536 = vld [vmem:[#allocation10 + $0xa0] sm:$0xff]
        %v537 = vld [vmem:[#allocation10 + $0xa8] sm:$0xff]
        %v538 = vld [vmem:[#allocation10 + $0xb0] sm:$0xff]
        %v539 = vld [vmem:[#allocation10 + $0xb8] sm:$0xff]
        %v540 = vld [vmem:[#allocation10 + $0xc0] sm:$0xff]
        %v541 = vld [vmem:[#allocation10 + $0xc8] sm:$0xff]
        %v542 = vld [vmem:[#allocation10 + $0xd0] sm:$0xff]
        %v543 = vld [vmem:[#allocation10 + $0xd8] sm:$0xff]
        %v544 = vld [vmem:[#allocation10 + $0xe0] sm:$0xff]
        %v545 = vld [vmem:[#allocation10 + $0xe8] sm:$0xff]
        %v546 = vld [vmem:[#allocation10 + $0xf0] sm:$0xff]
        %v547 = vld [vmem:[#allocation10 + $0xf8] sm:$0xff]
        %v548 = vld [vmem:[#allocation10 + $0x100] sm:$0xff]
        %v549 = vld [vmem:[#allocation10 + $0x108] sm:$0xff]
        %v550 = vld [vmem:[#allocation10 + $0x110] sm:$0xff]
        %v551 = vld [vmem:[#allocation10 + $0x118] sm:$0xff]
        %v552 = vld [vmem:[#allocation10 + $0x120] sm:$0xff]
        %v553 = vld [vmem:[#allocation10 + $0x128] sm:$0xff]
        %v554 = vld [vmem:[#allocation10 + $0x130] sm:$0xff]
        %v555 = vld [vmem:[#allocation10 + $0x138] sm:$0xff]
        %v556 = vld [vmem:[#allocation10 + $0x140] sm:$0xff]
        %v557 = vld [vmem:[#allocation10 + $0x148] sm:$0xff]
        %v558 = vld [vmem:[#allocation10 + $0x150] sm:$0xff]
        %v559 = vld [vmem:[#allocation10 + $0x158] sm:$0xff]
        %v560 = vld [vmem:[#allocation10 + $0x160] sm:$0xff]
        %v561 = vld [vmem:[#allocation10 + $0x168] sm:$0xff]
        %v562 = vld [vmem:[#allocation10 + $0x170] sm:$0xff]
        %v563 = vld [vmem:[#allocation10 + $0x178] sm:$0xff]
        %v564 = vld [vmem:[#allocation10 + $0x180] sm:$0xff]
        %v565 = vld [vmem:[#allocation10 + $0x188] sm:$0xff]
        %v566 = vld [vmem:[#allocation10 + $0x190] sm:$0xff]
        %v567 = vld [vmem:[#allocation10 + $0x198] sm:$0xff]
        %v568 = vld [vmem:[#allocation10 + $0x1a0] sm:$0xff]
        %v569 = vld [vmem:[#allocation10 + $0x1a8] sm:$0xff]
        %v570 = vld [vmem:[#allocation10 + $0x1b0] sm:$0xff]
        %v571 = vld [vmem:[#allocation10 + $0x1b8] sm:$0xff]
        %v572 = vld [vmem:[#allocation10 + $0x1c0] sm:$0xff]
        %v573 = vld [vmem:[#allocation10 + $0x1c8] sm:$0xff]
        %v574 = vld [vmem:[#allocation10 + $0x1d0] sm:$0xff]
        %v575 = vld [vmem:[#allocation10 + $0x1d8] sm:$0xff]
        %v576 = vld [vmem:[#allocation10 + $0x1e0] sm:$0xff]
        %v577 = vld [vmem:[#allocation10 + $0x1e8] sm:$0xff]
        %v578 = vld [vmem:[#allocation10 + $0x1f0] sm:$0xff]
        %v579 = vld [vmem:[#allocation10 + $0x1f8] sm:$0xff]
        %v580 = vld [vmem:[#allocation13] sm:$0xff]
        %v581 = vld [vmem:[#allocation13 + $0x8] sm:$0xff]
        %v582 = vld [vmem:[#allocation13 + $0x10] sm:$0xff]
        %v583 = vld [vmem:[#allocation13 + $0x18] sm:$0xff]
        %v584 = vld [vmem:[#allocation13 + $0x20] sm:$0xff]
        %v585 = vld [vmem:[#allocation13 + $0x28] sm:$0xff]
        %v586 = vld [vmem:[#allocation13 + $0x30] sm:$0xff]
        %v587 = vld [vmem:[#allocation13 + $0x38] sm:$0xff]
        %v588 = vld [vmem:[#allocation13 + $0x40] sm:$0xff]
        %v589 = vld [vmem:[#allocation13 + $0x48] sm:$0xff]
        %v590 = vld [vmem:[#allocation13 + $0x50] sm:$0xff]
        %v591 = vld [vmem:[#allocation13 + $0x58] sm:$0xff]
        %v592 = vld [vmem:[#allocation13 + $0x60] sm:$0xff]
        %v593 = vld [vmem:[#allocation13 + $0x68] sm:$0xff]
        %v594 = vld [vmem:[#allocation13 + $0x70] sm:$0xff]
        %v595 = vld [vmem:[#allocation13 + $0x78] sm:$0xff]
        %v596 = vld [vmem:[#allocation13 + $0x80] sm:$0xff]
        %v597 = vld [vmem:[#allocation13 + $0x88] sm:$0xff]
        %v598 = vld [vmem:[#allocation13 + $0x90] sm:$0xff]
        %v599 = vld [vmem:[#allocation13 + $0x98] sm:$0xff]
        %v600 = vld [vmem:[#allocation13 + $0xa0] sm:$0xff]
        %v601 = vld [vmem:[#allocation13 + $0xa8] sm:$0xff]
        %v602 = vld [vmem:[#allocation13 + $0xb0] sm:$0xff]
        %v603 = vld [vmem:[#allocation13 + $0xb8] sm:$0xff]
        %v604 = vld [vmem:[#allocation13 + $0xc0] sm:$0xff]
        %v605 = vld [vmem:[#allocation13 + $0xc8] sm:$0xff]
        %v606 = vld [vmem:[#allocation13 + $0xd0] sm:$0xff]
        %v607 = vld [vmem:[#allocation13 + $0xd8] sm:$0xff]
        %v608 = vld [vmem:[#allocation13 + $0xe0] sm:$0xff]
        %v609 = vld [vmem:[#allocation13 + $0xe8] sm:$0xff]
        %v610 = vld [vmem:[#allocation13 + $0xf0] sm:$0xff]
        %v611 = vld [vmem:[#allocation13 + $0xf8] sm:$0xff]
        %v612 = vld [vmem:[#allocation15] sm:$0x3]
        %v614 = vperm.slane %v612, 0
        %v615 = vperm.slane %v612, 1
        %v682 = vunpack.c.l.b16 %v516
        %v683 = vunpack.c.h.b16 %v516
        %v684 = vunpack.c.l.b16 %v517
        %v685 = vunpack.c.h.b16 %v517
        %v686 = vunpack.c.l.b16 %v518
        %v687 = vunpack.c.h.b16 %v518
        %v688 = vunpack.c.l.b16 %v519
        %v689 = vunpack.c.h.b16 %v519
        %v690 = vunpack.c.l.b16 %v520
        %v691 = vunpack.c.h.b16 %v520
        %v692 = vunpack.c.l.b16 %v521
        %v693 = vunpack.c.h.b16 %v521
        %v694 = vunpack.c.l.b16 %v522
        %v695 = vunpack.c.h.b16 %v522
        %v696 = vunpack.c.l.b16 %v523
        %v697 = vunpack.c.h.b16 %v523
        %v698 = vunpack.c.l.b16 %v524
        %v699 = vunpack.c.h.b16 %v524
        %v700 = vunpack.c.l.b16 %v525
        %v701 = vunpack.c.h.b16 %v525
        %v702 = vunpack.c.l.b16 %v526
        %v703 = vunpack.c.h.b16 %v526
        %v704 = vunpack.c.l.b16 %v527
        %v705 = vunpack.c.h.b16 %v527
        %v706 = vunpack.c.l.b16 %v528
        %v707 = vunpack.c.h.b16 %v528
        %v708 = vunpack.c.l.b16 %v529
        %v709 = vunpack.c.h.b16 %v529
        %v710 = vunpack.c.l.b16 %v530
        %v711 = vunpack.c.h.b16 %v530
        %v712 = vunpack.c.l.b16 %v531
        %v713 = vunpack.c.h.b16 %v531
        %v714 = vunpack.c.l.b16 %v532
        %v715 = vunpack.c.h.b16 %v532
        %v716 = vunpack.c.l.b16 %v533
        %v717 = vunpack.c.h.b16 %v533
        %v718 = vunpack.c.l.b16 %v534
        %v719 = vunpack.c.h.b16 %v534
        %v720 = vunpack.c.l.b16 %v535
        %v721 = vunpack.c.h.b16 %v535
        %v722 = vunpack.c.l.b16 %v536
        %v723 = vunpack.c.h.b16 %v536
        %v724 = vunpack.c.l.b16 %v537
        %v725 = vunpack.c.h.b16 %v537
        %v726 = vunpack.c.l.b16 %v538
        %v727 = vunpack.c.h.b16 %v538
        %v728 = vunpack.c.l.b16 %v539
        %v729 = vunpack.c.h.b16 %v539
        %v730 = vunpack.c.l.b16 %v540
        %v731 = vunpack.c.h.b16 %v540
        %v732 = vunpack.c.l.b16 %v541
        %v733 = vunpack.c.h.b16 %v541
        %v734 = vunpack.c.l.b16 %v542
        %v735 = vunpack.c.h.b16 %v542
        %v736 = vunpack.c.l.b16 %v543
        %v737 = vunpack.c.h.b16 %v543
        %v738 = vunpack.c.l.b16 %v544
        %v739 = vunpack.c.h.b16 %v544
        %v740 = vunpack.c.l.b16 %v545
        %v741 = vunpack.c.h.b16 %v545
        %v742 = vunpack.c.l.b16 %v546
        %v743 = vunpack.c.h.b16 %v546
        %v744 = vunpack.c.l.b16 %v547
        %v745 = vunpack.c.h.b16 %v547
        %v746 = vunpack.c.l.b16 %v548
        %v747 = vunpack.c.h.b16 %v548
        %v748 = vunpack.c.l.b16 %v549
        %v749 = vunpack.c.h.b16 %v549
        %v750 = vunpack.c.l.b16 %v550
        %v751 = vunpack.c.h.b16 %v550
        %v752 = vunpack.c.l.b16 %v551
        %v753 = vunpack.c.h.b16 %v551
        %v754 = vunpack.c.l.b16 %v552
        %v755 = vunpack.c.h.b16 %v552
        %v756 = vunpack.c.l.b16 %v553
        %v757 = vunpack.c.h.b16 %v553
        %v758 = vunpack.c.l.b16 %v554
        %v759 = vunpack.c.h.b16 %v554
        %v760 = vunpack.c.l.b16 %v555
        %v761 = vunpack.c.h.b16 %v555
        %v762 = vunpack.c.l.b16 %v556
        %v763 = vunpack.c.h.b16 %v556
        %v764 = vunpack.c.l.b16 %v557
        %v765 = vunpack.c.h.b16 %v557
        %v766 = vunpack.c.l.b16 %v558
        %v767 = vunpack.c.h.b16 %v558
        %v768 = vunpack.c.l.b16 %v559
        %v769 = vunpack.c.h.b16 %v559
        %v770 = vunpack.c.l.b16 %v560
        %v771 = vunpack.c.h.b16 %v560
        %v772 = vunpack.c.l.b16 %v561
        %v773 = vunpack.c.h.b16 %v561
        %v774 = vunpack.c.l.b16 %v562
        %v775 = vunpack.c.h.b16 %v562
        %v776 = vunpack.c.l.b16 %v563
        %v777 = vunpack.c.h.b16 %v563
        %v778 = vunpack.c.l.b16 %v564
        %v779 = vunpack.c.h.b16 %v564
        %v780 = vunpack.c.l.b16 %v565
        %v781 = vunpack.c.h.b16 %v565
        %v782 = vunpack.c.l.b16 %v566
        %v783 = vunpack.c.h.b16 %v566
        %v784 = vunpack.c.l.b16 %v567
        %v785 = vunpack.c.h.b16 %v567
        %v786 = vunpack.c.l.b16 %v568
        %v787 = vunpack.c.h.b16 %v568
        %v788 = vunpack.c.l.b16 %v569
        %v789 = vunpack.c.h.b16 %v569
        %v790 = vunpack.c.l.b16 %v570
        %v791 = vunpack.c.h.b16 %v570
        %v792 = vunpack.c.l.b16 %v571
        %v793 = vunpack.c.h.b16 %v571
        %v794 = vunpack.c.l.b16 %v572
        %v795 = vunpack.c.h.b16 %v572
        %v796 = vunpack.c.l.b16 %v573
        %v797 = vunpack.c.h.b16 %v573
        %v798 = vunpack.c.l.b16 %v574
        %v799 = vunpack.c.h.b16 %v574
        %v800 = vunpack.c.l.b16 %v575
        %v801 = vunpack.c.h.b16 %v575
        %v802 = vunpack.c.l.b16 %v576
        %v803 = vunpack.c.h.b16 %v576
        %v804 = vunpack.c.l.b16 %v577
        %v805 = vunpack.c.h.b16 %v577
        %v806 = vunpack.c.l.b16 %v578
        %v807 = vunpack.c.h.b16 %v578
        %v808 = vunpack.c.l.b16 %v579
        %v809 = vunpack.c.h.b16 %v579
        %v810 = vpack.c.b16 %v684, %v682
        %v811 = vpack.c.b16 %v685, %v683
        %v812 = vpack.c.b16 %v688, %v686
        %v813 = vpack.c.b16 %v689, %v687
        %v814 = vpack.c.b16 %v692, %v690
        %v815 = vpack.c.b16 %v693, %v691
        %v816 = vpack.c.b16 %v696, %v694
        %v817 = vpack.c.b16 %v697, %v695
        %v818 = vpack.c.b16 %v700, %v698
        %v819 = vpack.c.b16 %v701, %v699
        %v820 = vpack.c.b16 %v704, %v702
        %v821 = vpack.c.b16 %v705, %v703
        %v822 = vpack.c.b16 %v708, %v706
        %v823 = vpack.c.b16 %v709, %v707
        %v824 = vpack.c.b16 %v712, %v710
        %v825 = vpack.c.b16 %v713, %v711
        %v826 = vpack.c.b16 %v716, %v714
        %v827 = vpack.c.b16 %v717, %v715
        %v828 = vpack.c.b16 %v720, %v718
        %v829 = vpack.c.b16 %v721, %v719
        %v830 = vpack.c.b16 %v724, %v722
        %v831 = vpack.c.b16 %v725, %v723
        %v832 = vpack.c.b16 %v728, %v726
        %v833 = vpack.c.b16 %v729, %v727
        %v834 = vpack.c.b16 %v732, %v730
        %v835 = vpack.c.b16 %v733, %v731
        %v836 = vpack.c.b16 %v736, %v734
        %v837 = vpack.c.b16 %v737, %v735
        %v838 = vpack.c.b16 %v740, %v738
        %v839 = vpack.c.b16 %v741, %v739
        %v840 = vpack.c.b16 %v744, %v742
        %v841 = vpack.c.b16 %v745, %v743
        %v842 = vpack.c.b16 %v748, %v746
        %v843 = vpack.c.b16 %v749, %v747
        %v844 = vpack.c.b16 %v752, %v750
        %v845 = vpack.c.b16 %v753, %v751
        %v846 = vpack.c.b16 %v756, %v754
        %v847 = vpack.c.b16 %v757, %v755
        %v848 = vpack.c.b16 %v760, %v758
        %v849 = vpack.c.b16 %v761, %v759
        %v850 = vpack.c.b16 %v764, %v762
        %v851 = vpack.c.b16 %v765, %v763
        %v852 = vpack.c.b16 %v768, %v766
        %v853 = vpack.c.b16 %v769, %v767
        %v854 = vpack.c.b16 %v772, %v770
        %v855 = vpack.c.b16 %v773, %v771
        %v856 = vpack.c.b16 %v776, %v774
        %v857 = vpack.c.b16 %v777, %v775
        %v858 = vpack.c.b16 %v780, %v778
        %v859 = vpack.c.b16 %v781, %v779
        %v860 = vpack.c.b16 %v784, %v782
        %v861 = vpack.c.b16 %v785, %v783
        %v862 = vpack.c.b16 %v788, %v786
        %v863 = vpack.c.b16 %v789, %v787
        %v864 = vpack.c.b16 %v792, %v790
        %v865 = vpack.c.b16 %v793, %v791
        %v866 = vpack.c.b16 %v796, %v794
        %v867 = vpack.c.b16 %v797, %v795
        %v868 = vpack.c.b16 %v800, %v798
        %v869 = vpack.c.b16 %v801, %v799
        %v870 = vpack.c.b16 %v804, %v802
        %v871 = vpack.c.b16 %v805, %v803
        %v872 = vpack.c.b16 %v808, %v806
        %v873 = vpack.c.b16 %v809, %v807
        %v970 = vunpack.c.l.b16 %v580
        %v971 = vunpack.c.h.b16 %v580
        %v972 = vunpack.c.l.b16 %v581
        %v973 = vunpack.c.h.b16 %v581
        %v974 = vunpack.c.l.b16 %v582
        %v975 = vunpack.c.h.b16 %v582
        %v976 = vunpack.c.l.b16 %v583
        %v977 = vunpack.c.h.b16 %v583
        %v978 = vunpack.c.l.b16 %v584
        %v979 = vunpack.c.h.b16 %v584
        %v980 = vunpack.c.l.b16 %v585
        %v981 = vunpack.c.h.b16 %v585
        %v982 = vunpack.c.l.b16 %v586
        %v983 = vunpack.c.h.b16 %v586
        %v984 = vunpack.c.l.b16 %v587
        %v985 = vunpack.c.h.b16 %v587
        %v986 = vunpack.c.l.b16 %v588
        %v987 = vunpack.c.h.b16 %v588
        %v988 = vunpack.c.l.b16 %v589
        %v989 = vunpack.c.h.b16 %v589
        %v990 = vunpack.c.l.b16 %v590
        %v991 = vunpack.c.h.b16 %v590
        %v992 = vunpack.c.l.b16 %v591
        %v993 = vunpack.c.h.b16 %v591
        %v994 = vunpack.c.l.b16 %v592
        %v995 = vunpack.c.h.b16 %v592
        %v996 = vunpack.c.l.b16 %v593
        %v997 = vunpack.c.h.b16 %v593
        %v998 = vunpack.c.l.b16 %v594
        %v999 = vunpack.c.h.b16 %v594
        %v1000 = vunpack.c.l.b16 %v595
        %v1001 = vunpack.c.h.b16 %v595
        %v1002 = vunpack.c.l.b16 %v596
        %v1003 = vunpack.c.h.b16 %v596
        %v1004 = vunpack.c.l.b16 %v597
        %v1005 = vunpack.c.h.b16 %v597
        %v1006 = vunpack.c.l.b16 %v598
        %v1007 = vunpack.c.h.b16 %v598
        %v1008 = vunpack.c.l.b16 %v599
        %v1009 = vunpack.c.h.b16 %v599
        %v1010 = vunpack.c.l.b16 %v600
        %v1011 = vunpack.c.h.b16 %v600
        %v1012 = vunpack.c.l.b16 %v601
        %v1013 = vunpack.c.h.b16 %v601
        %v1014 = vunpack.c.l.b16 %v602
        %v1015 = vunpack.c.h.b16 %v602
        %v1016 = vunpack.c.l.b16 %v603
        %v1017 = vunpack.c.h.b16 %v603
        %v1018 = vunpack.c.l.b16 %v604
        %v1019 = vunpack.c.h.b16 %v604
        %v1020 = vunpack.c.l.b16 %v605
        %v1021 = vunpack.c.h.b16 %v605
        %v1022 = vunpack.c.l.b16 %v606
        %v1023 = vunpack.c.h.b16 %v606
        %v1024 = vunpack.c.l.b16 %v607
        %v1025 = vunpack.c.h.b16 %v607
        %v1026 = vunpack.c.l.b16 %v608
        %v1027 = vunpack.c.h.b16 %v608
        %v1028 = vunpack.c.l.b16 %v609
        %v1029 = vunpack.c.h.b16 %v609
        %v1030 = vunpack.c.l.b16 %v610
        %v1031 = vunpack.c.h.b16 %v610
        %v1032 = vunpack.c.l.b16 %v611
        %v1033 = vunpack.c.h.b16 %v611
        %v1034 = vpack.c.b16 %v972, %v970
        %v1035 = vpack.c.b16 %v973, %v971
        %v1036 = vpack.c.b16 %v976, %v974
        %v1037 = vpack.c.b16 %v977, %v975
        %v1038 = vpack.c.b16 %v980, %v978
        %v1039 = vpack.c.b16 %v981, %v979
        %v1040 = vpack.c.b16 %v984, %v982
        %v1041 = vpack.c.b16 %v985, %v983
        %v1042 = vpack.c.b16 %v988, %v986
        %v1043 = vpack.c.b16 %v989, %v987
        %v1044 = vpack.c.b16 %v992, %v990
        %v1045 = vpack.c.b16 %v993, %v991
        %v1046 = vpack.c.b16 %v996, %v994
        %v1047 = vpack.c.b16 %v997, %v995
        %v1048 = vpack.c.b16 %v1000, %v998
        %v1049 = vpack.c.b16 %v1001, %v999
        %v1050 = vpack.c.b16 %v1004, %v1002
        %v1051 = vpack.c.b16 %v1005, %v1003
        %v1052 = vpack.c.b16 %v1008, %v1006
        %v1053 = vpack.c.b16 %v1009, %v1007
        %v1054 = vpack.c.b16 %v1012, %v1010
        %v1055 = vpack.c.b16 %v1013, %v1011
        %v1056 = vpack.c.b16 %v1016, %v1014
        %v1057 = vpack.c.b16 %v1017, %v1015
        %v1058 = vpack.c.b16 %v1020, %v1018
        %v1059 = vpack.c.b16 %v1021, %v1019
        %v1060 = vpack.c.b16 %v1024, %v1022
        %v1061 = vpack.c.b16 %v1025, %v1023
        %v1062 = vpack.c.b16 %v1028, %v1026
        %v1063 = vpack.c.b16 %v1029, %v1027
        %v1064 = vpack.c.b16 %v1032, %v1030
        %v1065 = vpack.c.b16 %v1033, %v1031
        %1098 = vmatpush.bf16.msra.mxu0 %v1048
        %1099 = vmatpush.bf16.msra.mxu0 %v1046
        %1100 = vmatpush.bf16.msra.mxu0 %v1044
        %1101 = vmatpush.bf16.msra.mxu0 %v1042
        %1102 = vmatpush.bf16.msra.mxu0 %v1040
        %1103 = vmatpush.bf16.msra.mxu0 %v1038
        %1104 = vmatpush.bf16.msra.mxu0 %v1036
        %1105 = vmatpush.bf16.msra.mxu0 %v1034
        %1106 = vmatmul.bf16.gmra.mxu0 %v810
        %v1107 = vpop.f32.mrf.mxu0
        %v1108 = vadd.f32 %v614, %v1107
        %v1109 = vpop.f32.mrf.mxu0
        %v1110 = vadd.f32 %v614, %v1109
        %1111 = vmatmul.bf16.gmra.mxu0 %v812
        %v1112 = vpop.f32.mrf.mxu0
        %v1113 = vadd.f32 %v614, %v1112
        %v1114 = vpop.f32.mrf.mxu0
        %v1115 = vadd.f32 %v614, %v1114
        %1116 = vmatmul.bf16.gmra.mxu0 %v814
        %v1117 = vpop.f32.mrf.mxu0
        %v1118 = vadd.f32 %v614, %v1117
        %v1119 = vpop.f32.mrf.mxu0
        %v1120 = vadd.f32 %v614, %v1119
        %1121 = vmatmul.bf16.gmra.mxu0 %v816
        %v1122 = vpop.f32.mrf.mxu0
        %v1123 = vadd.f32 %v614, %v1122
        %v1124 = vpop.f32.mrf.mxu0
        %v1125 = vadd.f32 %v614, %v1124
        %1126 = vmatmul.bf16.gmra.mxu0 %v818
        %v1127 = vpop.f32.mrf.mxu0
        %v1128 = vadd.f32 %v614, %v1127
        %v1129 = vpop.f32.mrf.mxu0
        %v1130 = vadd.f32 %v614, %v1129
        %1131 = vmatmul.bf16.gmra.mxu0 %v820
        %v1132 = vpop.f32.mrf.mxu0
        %v1133 = vadd.f32 %v614, %v1132
        %v1134 = vpop.f32.mrf.mxu0
        %v1135 = vadd.f32 %v614, %v1134
        %1136 = vmatmul.bf16.gmra.mxu0 %v822
        %v1137 = vpop.f32.mrf.mxu0
        %v1138 = vadd.f32 %v614, %v1137
        %v1139 = vpop.f32.mrf.mxu0
        %v1140 = vadd.f32 %v614, %v1139
        %1141 = vmatmul.bf16.gmra.mxu0 %v824
        %v1142 = vpop.f32.mrf.mxu0
        %v1143 = vadd.f32 %v614, %v1142
        %v1144 = vpop.f32.mrf.mxu0
        %v1145 = vadd.f32 %v614, %v1144
        %1146 = vmatmul.bf16.gmra.mxu0 %v826
        %v1147 = vpop.f32.mrf.mxu0
        %v1148 = vadd.f32 %v614, %v1147
        %v1149 = vpop.f32.mrf.mxu0
        %v1150 = vadd.f32 %v614, %v1149
        %1151 = vmatmul.bf16.gmra.mxu0 %v828
        %v1152 = vpop.f32.mrf.mxu0
        %v1153 = vadd.f32 %v614, %v1152
        %v1154 = vpop.f32.mrf.mxu0
        %v1155 = vadd.f32 %v614, %v1154
        %1156 = vmatmul.bf16.gmra.mxu0 %v830
        %v1157 = vpop.f32.mrf.mxu0
        %v1158 = vadd.f32 %v614, %v1157
        %v1159 = vpop.f32.mrf.mxu0
        %v1160 = vadd.f32 %v614, %v1159
        %1161 = vmatmul.bf16.gmra.mxu0 %v832
        %v1162 = vpop.f32.mrf.mxu0
        %v1163 = vadd.f32 %v614, %v1162
        %v1164 = vpop.f32.mrf.mxu0
        %v1165 = vadd.f32 %v614, %v1164
        %1166 = vmatmul.bf16.gmra.mxu0 %v834
        %v1167 = vpop.f32.mrf.mxu0
        %v1168 = vadd.f32 %v614, %v1167
        %v1169 = vpop.f32.mrf.mxu0
        %v1170 = vadd.f32 %v614, %v1169
        %1171 = vmatmul.bf16.gmra.mxu0 %v836
        %v1172 = vpop.f32.mrf.mxu0
        %v1173 = vadd.f32 %v614, %v1172
        %v1174 = vpop.f32.mrf.mxu0
        %v1175 = vadd.f32 %v614, %v1174
        %1176 = vmatmul.bf16.gmra.mxu0 %v838
        %v1177 = vpop.f32.mrf.mxu0
        %v1178 = vadd.f32 %v614, %v1177
        %v1179 = vpop.f32.mrf.mxu0
        %v1180 = vadd.f32 %v614, %v1179
        %1181 = vmatmul.bf16.gmra.mxu0 %v840
        %v1182 = vpop.f32.mrf.mxu0
        %v1183 = vadd.f32 %v614, %v1182
        %v1184 = vpop.f32.mrf.mxu0
        %v1185 = vadd.f32 %v614, %v1184
        %1186 = vmatmul.bf16.gmra.mxu0 %v842
        %v1187 = vpop.f32.mrf.mxu0
        %v1188 = vadd.f32 %v614, %v1187
        %v1189 = vpop.f32.mrf.mxu0
        %v1190 = vadd.f32 %v614, %v1189
        %1191 = vmatmul.bf16.gmra.mxu0 %v844
        %v1192 = vpop.f32.mrf.mxu0
        %v1193 = vadd.f32 %v614, %v1192
        %v1194 = vpop.f32.mrf.mxu0
        %v1195 = vadd.f32 %v614, %v1194
        %1196 = vmatmul.bf16.gmra.mxu0 %v846
        %v1197 = vpop.f32.mrf.mxu0
        %v1198 = vadd.f32 %v614, %v1197
        %v1199 = vpop.f32.mrf.mxu0
        %v1200 = vadd.f32 %v614, %v1199
        %1201 = vmatmul.bf16.gmra.mxu0 %v848
        %v1202 = vpop.f32.mrf.mxu0
        %v1203 = vadd.f32 %v614, %v1202
        %v1204 = vpop.f32.mrf.mxu0
        %v1205 = vadd.f32 %v614, %v1204
        %1206 = vmatmul.bf16.gmra.mxu0 %v850
        %v1207 = vpop.f32.mrf.mxu0
        %v1208 = vadd.f32 %v614, %v1207
        %v1209 = vpop.f32.mrf.mxu0
        %v1210 = vadd.f32 %v614, %v1209
        %1211 = vmatmul.bf16.gmra.mxu0 %v852
        %v1212 = vpop.f32.mrf.mxu0
        %v1213 = vadd.f32 %v614, %v1212
        %v1214 = vpop.f32.mrf.mxu0
        %v1215 = vadd.f32 %v614, %v1214
        %1216 = vmatmul.bf16.gmra.mxu0 %v854
        %v1217 = vpop.f32.mrf.mxu0
        %v1218 = vadd.f32 %v614, %v1217
        %v1219 = vpop.f32.mrf.mxu0
        %v1220 = vadd.f32 %v614, %v1219
        %1221 = vmatmul.bf16.gmra.mxu0 %v856
        %v1222 = vpop.f32.mrf.mxu0
        %v1223 = vadd.f32 %v614, %v1222
        %v1224 = vpop.f32.mrf.mxu0
        %v1225 = vadd.f32 %v614, %v1224
        %1226 = vmatmul.bf16.gmra.mxu0 %v858
        %v1227 = vpop.f32.mrf.mxu0
        %v1228 = vadd.f32 %v614, %v1227
        %v1229 = vpop.f32.mrf.mxu0
        %v1230 = vadd.f32 %v614, %v1229
        %1231 = vmatmul.bf16.gmra.mxu0 %v860
        %v1232 = vpop.f32.mrf.mxu0
        %v1233 = vadd.f32 %v614, %v1232
        %v1234 = vpop.f32.mrf.mxu0
        %v1235 = vadd.f32 %v614, %v1234
        %1236 = vmatmul.bf16.gmra.mxu0 %v862
        %v1237 = vpop.f32.mrf.mxu0
        %v1238 = vadd.f32 %v614, %v1237
        %v1239 = vpop.f32.mrf.mxu0
        %v1240 = vadd.f32 %v614, %v1239
        %1241 = vmatmul.bf16.gmra.mxu0 %v864
        %v1242 = vpop.f32.mrf.mxu0
        %v1243 = vadd.f32 %v614, %v1242
        %v1244 = vpop.f32.mrf.mxu0
        %v1245 = vadd.f32 %v614, %v1244
        %1246 = vmatmul.bf16.gmra.mxu0 %v866
        %v1247 = vpop.f32.mrf.mxu0
        %v1248 = vadd.f32 %v614, %v1247
        %v1249 = vpop.f32.mrf.mxu0
        %v1250 = vadd.f32 %v614, %v1249
        %1251 = vmatmul.bf16.gmra.mxu0 %v868
        %v1252 = vpop.f32.mrf.mxu0
        %v1253 = vadd.f32 %v614, %v1252
        %v1254 = vpop.f32.mrf.mxu0
        %v1255 = vadd.f32 %v614, %v1254
        %1256 = vmatmul.bf16.gmra.mxu0 %v870
        %v1257 = vpop.f32.mrf.mxu0
        %v1258 = vadd.f32 %v614, %v1257
        %v1259 = vpop.f32.mrf.mxu0
        %v1260 = vadd.f32 %v614, %v1259
        %1261 = vmatmul.bf16.gmra.mxu0 %v872
        %v1262 = vpop.f32.mrf.mxu0
        %v1263 = vadd.f32 %v614, %v1262
        %v1264 = vpop.f32.mrf.mxu0
        %v1265 = vadd.f32 %v614, %v1264
        %1266 = vdwg.mxu0
        %1267 = vmatpush.bf16.msra.mxu0 %v1064
        %1268 = vmatpush.bf16.msra.mxu0 %v1062
        %1269 = vmatpush.bf16.msra.mxu0 %v1060
        %1270 = vmatpush.bf16.msra.mxu0 %v1058
        %1271 = vmatpush.bf16.msra.mxu0 %v1056
        %1272 = vmatpush.bf16.msra.mxu0 %v1054
        %1273 = vmatpush.bf16.msra.mxu0 %v1052
        %1274 = vmatpush.bf16.msra.mxu0 %v1050
        %1275 = vmatmul.bf16.gmra.mxu0 %v811
        %v1276 = vpop.f32.mrf.mxu0
        %v1277 = vadd.f32 %v1108, %v1276
        %v1278 = vpop.f32.mrf.mxu0
        %v1279 = vadd.f32 %v1110, %v1278
        %1280 = vmatmul.bf16.gmra.mxu0 %v813
        %v1281 = vpop.f32.mrf.mxu0
        %v1282 = vadd.f32 %v1113, %v1281
        %v1283 = vpop.f32.mrf.mxu0
        %v1284 = vadd.f32 %v1115, %v1283
        %1285 = vmatmul.bf16.gmra.mxu0 %v815
        %v1286 = vpop.f32.mrf.mxu0
        %v1287 = vadd.f32 %v1118, %v1286
        %v1288 = vpop.f32.mrf.mxu0
        %v1289 = vadd.f32 %v1120, %v1288
        %1290 = vmatmul.bf16.gmra.mxu0 %v817
        %v1291 = vpop.f32.mrf.mxu0
        %v1292 = vadd.f32 %v1123, %v1291
        %v1293 = vpop.f32.mrf.mxu0
        %v1294 = vadd.f32 %v1125, %v1293
        %1295 = vmatmul.bf16.gmra.mxu0 %v819
        %v1296 = vpop.f32.mrf.mxu0
        %v1297 = vadd.f32 %v1128, %v1296
        %v1298 = vpop.f32.mrf.mxu0
        %v1299 = vadd.f32 %v1130, %v1298
        %1300 = vmatmul.bf16.gmra.mxu0 %v821
        %v1301 = vpop.f32.mrf.mxu0
        %v1302 = vadd.f32 %v1133, %v1301
        %v1303 = vpop.f32.mrf.mxu0
        %v1304 = vadd.f32 %v1135, %v1303
        %1305 = vmatmul.bf16.gmra.mxu0 %v823
        %v1306 = vpop.f32.mrf.mxu0
        %v1307 = vadd.f32 %v1138, %v1306
        %v1308 = vpop.f32.mrf.mxu0
        %v1309 = vadd.f32 %v1140, %v1308
        %1310 = vmatmul.bf16.gmra.mxu0 %v825
        %v1311 = vpop.f32.mrf.mxu0
        %v1312 = vadd.f32 %v1143, %v1311
        %v1313 = vpop.f32.mrf.mxu0
        %v1314 = vadd.f32 %v1145, %v1313
        %1315 = vmatmul.bf16.gmra.mxu0 %v827
        %v1316 = vpop.f32.mrf.mxu0
        %v1317 = vadd.f32 %v1148, %v1316
        %v1318 = vpop.f32.mrf.mxu0
        %v1319 = vadd.f32 %v1150, %v1318
        %1320 = vmatmul.bf16.gmra.mxu0 %v829
        %v1321 = vpop.f32.mrf.mxu0
        %v1322 = vadd.f32 %v1153, %v1321
        %v1323 = vpop.f32.mrf.mxu0
        %v1324 = vadd.f32 %v1155, %v1323
        %1325 = vmatmul.bf16.gmra.mxu0 %v831
        %v1326 = vpop.f32.mrf.mxu0
        %v1327 = vadd.f32 %v1158, %v1326
        %v1328 = vpop.f32.mrf.mxu0
        %v1329 = vadd.f32 %v1160, %v1328
        %1330 = vmatmul.bf16.gmra.mxu0 %v833
        %v1331 = vpop.f32.mrf.mxu0
        %v1332 = vadd.f32 %v1163, %v1331
        %v1333 = vpop.f32.mrf.mxu0
        %v1334 = vadd.f32 %v1165, %v1333
        %1335 = vmatmul.bf16.gmra.mxu0 %v835
        %v1336 = vpop.f32.mrf.mxu0
        %v1337 = vadd.f32 %v1168, %v1336
        %v1338 = vpop.f32.mrf.mxu0
        %v1339 = vadd.f32 %v1170, %v1338
        %1340 = vmatmul.bf16.gmra.mxu0 %v837
        %v1341 = vpop.f32.mrf.mxu0
        %v1342 = vadd.f32 %v1173, %v1341
        %v1343 = vpop.f32.mrf.mxu0
        %v1344 = vadd.f32 %v1175, %v1343
        %1345 = vmatmul.bf16.gmra.mxu0 %v839
        %v1346 = vpop.f32.mrf.mxu0
        %v1347 = vadd.f32 %v1178, %v1346
        %v1348 = vpop.f32.mrf.mxu0
        %v1349 = vadd.f32 %v1180, %v1348
        %1350 = vmatmul.bf16.gmra.mxu0 %v841
        %v1351 = vpop.f32.mrf.mxu0
        %v1352 = vadd.f32 %v1183, %v1351
        %v1353 = vpop.f32.mrf.mxu0
        %v1354 = vadd.f32 %v1185, %v1353
        %1355 = vmatmul.bf16.gmra.mxu0 %v843
        %v1356 = vpop.f32.mrf.mxu0
        %v1357 = vadd.f32 %v1188, %v1356
        %v1358 = vpop.f32.mrf.mxu0
        %v1359 = vadd.f32 %v1190, %v1358
        %1360 = vmatmul.bf16.gmra.mxu0 %v845
        %v1361 = vpop.f32.mrf.mxu0
        %v1362 = vadd.f32 %v1193, %v1361
        %v1363 = vpop.f32.mrf.mxu0
        %v1364 = vadd.f32 %v1195, %v1363
        %1365 = vmatmul.bf16.gmra.mxu0 %v847
        %v1366 = vpop.f32.mrf.mxu0
        %v1367 = vadd.f32 %v1198, %v1366
        %v1368 = vpop.f32.mrf.mxu0
        %v1369 = vadd.f32 %v1200, %v1368
        %1370 = vmatmul.bf16.gmra.mxu0 %v849
        %v1371 = vpop.f32.mrf.mxu0
        %v1372 = vadd.f32 %v1203, %v1371
        %v1373 = vpop.f32.mrf.mxu0
        %v1374 = vadd.f32 %v1205, %v1373
        %1375 = vmatmul.bf16.gmra.mxu0 %v851
        %v1376 = vpop.f32.mrf.mxu0
        %v1377 = vadd.f32 %v1208, %v1376
        %v1378 = vpop.f32.mrf.mxu0
        %v1379 = vadd.f32 %v1210, %v1378
        %1380 = vmatmul.bf16.gmra.mxu0 %v853
        %v1381 = vpop.f32.mrf.mxu0
        %v1382 = vadd.f32 %v1213, %v1381
        %v1383 = vpop.f32.mrf.mxu0
        %v1384 = vadd.f32 %v1215, %v1383
        %1385 = vmatmul.bf16.gmra.mxu0 %v855
        %v1386 = vpop.f32.mrf.mxu0
        %v1387 = vadd.f32 %v1218, %v1386
        %v1388 = vpop.f32.mrf.mxu0
        %v1389 = vadd.f32 %v1220, %v1388
        %1390 = vmatmul.bf16.gmra.mxu0 %v857
        %v1391 = vpop.f32.mrf.mxu0
        %v1392 = vadd.f32 %v1223, %v1391
        %v1393 = vpop.f32.mrf.mxu0
        %v1394 = vadd.f32 %v1225, %v1393
        %1395 = vmatmul.bf16.gmra.mxu0 %v859
        %v1396 = vpop.f32.mrf.mxu0
        %v1397 = vadd.f32 %v1228, %v1396
        %v1398 = vpop.f32.mrf.mxu0
        %v1399 = vadd.f32 %v1230, %v1398
        %1400 = vmatmul.bf16.gmra.mxu0 %v861
        %v1401 = vpop.f32.mrf.mxu0
        %v1402 = vadd.f32 %v1233, %v1401
        %v1403 = vpop.f32.mrf.mxu0
        %v1404 = vadd.f32 %v1235, %v1403
        %1405 = vmatmul.bf16.gmra.mxu0 %v863
        %v1406 = vpop.f32.mrf.mxu0
        %v1407 = vadd.f32 %v1238, %v1406
        %v1408 = vpop.f32.mrf.mxu0
        %v1409 = vadd.f32 %v1240, %v1408
        %1410 = vmatmul.bf16.gmra.mxu0 %v865
        %v1411 = vpop.f32.mrf.mxu0
        %v1412 = vadd.f32 %v1243, %v1411
        %v1413 = vpop.f32.mrf.mxu0
        %v1414 = vadd.f32 %v1245, %v1413
        %1415 = vmatmul.bf16.gmra.mxu0 %v867
        %v1416 = vpop.f32.mrf.mxu0
        %v1417 = vadd.f32 %v1248, %v1416
        %v1418 = vpop.f32.mrf.mxu0
        %v1419 = vadd.f32 %v1250, %v1418
        %1420 = vmatmul.bf16.gmra.mxu0 %v869
        %v1421 = vpop.f32.mrf.mxu0
        %v1422 = vadd.f32 %v1253, %v1421
        %v1423 = vpop.f32.mrf.mxu0
        %v1424 = vadd.f32 %v1255, %v1423
        %1425 = vmatmul.bf16.gmra.mxu0 %v871
        %v1426 = vpop.f32.mrf.mxu0
        %v1427 = vadd.f32 %v1258, %v1426
        %v1428 = vpop.f32.mrf.mxu0
        %v1429 = vadd.f32 %v1260, %v1428
        %1430 = vmatmul.bf16.gmra.mxu0 %v873
        %v1431 = vpop.f32.mrf.mxu0
        %v1432 = vadd.f32 %v1263, %v1431
        %v1433 = vpop.f32.mrf.mxu0
        %v1434 = vadd.f32 %v1265, %v1433
        %1435 = vdwg.mxu0
        %1436 = vmatpush.bf16.msra.mxu0 %v1049
        %1437 = vmatpush.bf16.msra.mxu0 %v1047
        %1438 = vmatpush.bf16.msra.mxu0 %v1045
        %1439 = vmatpush.bf16.msra.mxu0 %v1043
        %1440 = vmatpush.bf16.msra.mxu0 %v1041
        %1441 = vmatpush.bf16.msra.mxu0 %v1039
        %1442 = vmatpush.bf16.msra.mxu0 %v1037
        %1443 = vmatpush.bf16.msra.mxu0 %v1035
        %1444 = vmatmul.bf16.gmra.mxu0 %v810
        %v1445 = vpop.f32.mrf.mxu0
        %v1446 = vadd.f32 %v615, %v1445
        %v1447 = vpop.f32.mrf.mxu0
        %v1448 = vadd.f32 %v615, %v1447
        %1449 = vmatmul.bf16.gmra.mxu0 %v812
        %v1450 = vpop.f32.mrf.mxu0
        %v1451 = vadd.f32 %v615, %v1450
        %v1452 = vpop.f32.mrf.mxu0
        %v1453 = vadd.f32 %v615, %v1452
        %1454 = vmatmul.bf16.gmra.mxu0 %v814
        %v1455 = vpop.f32.mrf.mxu0
        %v1456 = vadd.f32 %v615, %v1455
        %v1457 = vpop.f32.mrf.mxu0
        %v1458 = vadd.f32 %v615, %v1457
        %1459 = vmatmul.bf16.gmra.mxu0 %v816
        %v1460 = vpop.f32.mrf.mxu0
        %v1461 = vadd.f32 %v615, %v1460
        %v1462 = vpop.f32.mrf.mxu0
        %v1463 = vadd.f32 %v615, %v1462
        %1464 = vmatmul.bf16.gmra.mxu0 %v818
        %v1465 = vpop.f32.mrf.mxu0
        %v1466 = vadd.f32 %v615, %v1465
        %v1467 = vpop.f32.mrf.mxu0
        %v1468 = vadd.f32 %v615, %v1467
        %1469 = vmatmul.bf16.gmra.mxu0 %v820
        %v1470 = vpop.f32.mrf.mxu0
        %v1471 = vadd.f32 %v615, %v1470
        %v1472 = vpop.f32.mrf.mxu0
        %v1473 = vadd.f32 %v615, %v1472
        %1474 = vmatmul.bf16.gmra.mxu0 %v822
        %v1475 = vpop.f32.mrf.mxu0
        %v1476 = vadd.f32 %v615, %v1475
        %v1477 = vpop.f32.mrf.mxu0
        %v1478 = vadd.f32 %v615, %v1477
        %1479 = vmatmul.bf16.gmra.mxu0 %v824
        %v1480 = vpop.f32.mrf.mxu0
        %v1481 = vadd.f32 %v615, %v1480
        %v1482 = vpop.f32.mrf.mxu0
        %v1483 = vadd.f32 %v615, %v1482
        %1484 = vmatmul.bf16.gmra.mxu0 %v826
        %v1485 = vpop.f32.mrf.mxu0
        %v1486 = vadd.f32 %v615, %v1485
        %v1487 = vpop.f32.mrf.mxu0
        %v1488 = vadd.f32 %v615, %v1487
        %1489 = vmatmul.bf16.gmra.mxu0 %v828
        %v1490 = vpop.f32.mrf.mxu0
        %v1491 = vadd.f32 %v615, %v1490
        %v1492 = vpop.f32.mrf.mxu0
        %v1493 = vadd.f32 %v615, %v1492
        %1494 = vmatmul.bf16.gmra.mxu0 %v830
        %v1495 = vpop.f32.mrf.mxu0
        %v1496 = vadd.f32 %v615, %v1495
        %v1497 = vpop.f32.mrf.mxu0
        %v1498 = vadd.f32 %v615, %v1497
        %1499 = vmatmul.bf16.gmra.mxu0 %v832
        %v1500 = vpop.f32.mrf.mxu0
        %v1501 = vadd.f32 %v615, %v1500
        %v1502 = vpop.f32.mrf.mxu0
        %v1503 = vadd.f32 %v615, %v1502
        %1504 = vmatmul.bf16.gmra.mxu0 %v834
        %v1505 = vpop.f32.mrf.mxu0
        %v1506 = vadd.f32 %v615, %v1505
        %v1507 = vpop.f32.mrf.mxu0
        %v1508 = vadd.f32 %v615, %v1507
        %1509 = vmatmul.bf16.gmra.mxu0 %v836
        %v1510 = vpop.f32.mrf.mxu0
        %v1511 = vadd.f32 %v615, %v1510
        %v1512 = vpop.f32.mrf.mxu0
        %v1513 = vadd.f32 %v615, %v1512
        %1514 = vmatmul.bf16.gmra.mxu0 %v838
        %v1515 = vpop.f32.mrf.mxu0
        %v1516 = vadd.f32 %v615, %v1515
        %v1517 = vpop.f32.mrf.mxu0
        %v1518 = vadd.f32 %v615, %v1517
        %1519 = vmatmul.bf16.gmra.mxu0 %v840
        %v1520 = vpop.f32.mrf.mxu0
        %v1521 = vadd.f32 %v615, %v1520
        %v1522 = vpop.f32.mrf.mxu0
        %v1523 = vadd.f32 %v615, %v1522
        %1524 = vmatmul.bf16.gmra.mxu0 %v842
        %v1525 = vpop.f32.mrf.mxu0
        %v1526 = vadd.f32 %v615, %v1525
        %v1527 = vpop.f32.mrf.mxu0
        %v1528 = vadd.f32 %v615, %v1527
        %1529 = vmatmul.bf16.gmra.mxu0 %v844
        %v1530 = vpop.f32.mrf.mxu0
        %v1531 = vadd.f32 %v615, %v1530
        %v1532 = vpop.f32.mrf.mxu0
        %v1533 = vadd.f32 %v615, %v1532
        %1534 = vmatmul.bf16.gmra.mxu0 %v846
        %v1535 = vpop.f32.mrf.mxu0
        %v1536 = vadd.f32 %v615, %v1535
        %v1537 = vpop.f32.mrf.mxu0
        %v1538 = vadd.f32 %v615, %v1537
        %1539 = vmatmul.bf16.gmra.mxu0 %v848
        %v1540 = vpop.f32.mrf.mxu0
        %v1541 = vadd.f32 %v615, %v1540
        %v1542 = vpop.f32.mrf.mxu0
        %v1543 = vadd.f32 %v615, %v1542
        %1544 = vmatmul.bf16.gmra.mxu0 %v850
        %v1545 = vpop.f32.mrf.mxu0
        %v1546 = vadd.f32 %v615, %v1545
        %v1547 = vpop.f32.mrf.mxu0
        %v1548 = vadd.f32 %v615, %v1547
        %1549 = vmatmul.bf16.gmra.mxu0 %v852
        %v1550 = vpop.f32.mrf.mxu0
        %v1551 = vadd.f32 %v615, %v1550
        %v1552 = vpop.f32.mrf.mxu0
        %v1553 = vadd.f32 %v615, %v1552
        %1554 = vmatmul.bf16.gmra.mxu0 %v854
        %v1555 = vpop.f32.mrf.mxu0
        %v1556 = vadd.f32 %v615, %v1555
        %v1557 = vpop.f32.mrf.mxu0
        %v1558 = vadd.f32 %v615, %v1557
        %1559 = vmatmul.bf16.gmra.mxu0 %v856
        %v1560 = vpop.f32.mrf.mxu0
        %v1561 = vadd.f32 %v615, %v1560
        %v1562 = vpop.f32.mrf.mxu0
        %v1563 = vadd.f32 %v615, %v1562
        %1564 = vmatmul.bf16.gmra.mxu0 %v858
        %v1565 = vpop.f32.mrf.mxu0
        %v1566 = vadd.f32 %v615, %v1565
        %v1567 = vpop.f32.mrf.mxu0
        %v1568 = vadd.f32 %v615, %v1567
        %1569 = vmatmul.bf16.gmra.mxu0 %v860
        %v1570 = vpop.f32.mrf.mxu0
        %v1571 = vadd.f32 %v615, %v1570
        %v1572 = vpop.f32.mrf.mxu0
        %v1573 = vadd.f32 %v615, %v1572
        %1574 = vmatmul.bf16.gmra.mxu0 %v862
        %v1575 = vpop.f32.mrf.mxu0
        %v1576 = vadd.f32 %v615, %v1575
        %v1577 = vpop.f32.mrf.mxu0
        %v1578 = vadd.f32 %v615, %v1577
        %1579 = vmatmul.bf16.gmra.mxu0 %v864
        %v1580 = vpop.f32.mrf.mxu0
        %v1581 = vadd.f32 %v615, %v1580
        %v1582 = vpop.f32.mrf.mxu0
        %v1583 = vadd.f32 %v615, %v1582
        %1584 = vmatmul.bf16.gmra.mxu0 %v866
        %v1585 = vpop.f32.mrf.mxu0
        %v1586 = vadd.f32 %v615, %v1585
        %v1587 = vpop.f32.mrf.mxu0
        %v1588 = vadd.f32 %v615, %v1587
        %1589 = vmatmul.bf16.gmra.mxu0 %v868
        %v1590 = vpop.f32.mrf.mxu0
        %v1591 = vadd.f32 %v615, %v1590
        %v1592 = vpop.f32.mrf.mxu0
        %v1593 = vadd.f32 %v615, %v1592
        %1594 = vmatmul.bf16.gmra.mxu0 %v870
        %v1595 = vpop.f32.mrf.mxu0
        %v1596 = vadd.f32 %v615, %v1595
        %v1597 = vpop.f32.mrf.mxu0
        %v1598 = vadd.f32 %v615, %v1597
        %1599 = vmatmul.bf16.gmra.mxu0 %v872
        %v1600 = vpop.f32.mrf.mxu0
        %v1601 = vadd.f32 %v615, %v1600
        %v1602 = vpop.f32.mrf.mxu0
        %v1603 = vadd.f32 %v615, %v1602
        %1604 = vdwg.mxu0
        %1605 = vmatpush.bf16.msra.mxu0 %v1065
        %1606 = vmatpush.bf16.msra.mxu0 %v1063
        %1607 = vmatpush.bf16.msra.mxu0 %v1061
        %1608 = vmatpush.bf16.msra.mxu0 %v1059
        %1609 = vmatpush.bf16.msra.mxu0 %v1057
        %1610 = vmatpush.bf16.msra.mxu0 %v1055
        %1611 = vmatpush.bf16.msra.mxu0 %v1053
        %1612 = vmatpush.bf16.msra.mxu0 %v1051
        %1613 = vmatmul.bf16.gmra.mxu0 %v811
        %v1614 = vpop.f32.mrf.mxu0
        %v1615 = vadd.f32 %v1446, %v1614
        %v1616 = vpop.f32.mrf.mxu0
        %v1617 = vadd.f32 %v1448, %v1616
        %1618 = vmatmul.bf16.gmra.mxu0 %v813
        %v1619 = vpop.f32.mrf.mxu0
        %v1620 = vadd.f32 %v1451, %v1619
        %v1621 = vpop.f32.mrf.mxu0
        %v1622 = vadd.f32 %v1453, %v1621
        %1623 = vmatmul.bf16.gmra.mxu0 %v815
        %v1624 = vpop.f32.mrf.mxu0
        %v1625 = vadd.f32 %v1456, %v1624
        %v1626 = vpop.f32.mrf.mxu0
        %v1627 = vadd.f32 %v1458, %v1626
        %1628 = vmatmul.bf16.gmra.mxu0 %v817
        %v1629 = vpop.f32.mrf.mxu0
        %v1630 = vadd.f32 %v1461, %v1629
        %v1631 = vpop.f32.mrf.mxu0
        %v1632 = vadd.f32 %v1463, %v1631
        %1633 = vmatmul.bf16.gmra.mxu0 %v819
        %v1634 = vpop.f32.mrf.mxu0
        %v1635 = vadd.f32 %v1466, %v1634
        %v1636 = vpop.f32.mrf.mxu0
        %v1637 = vadd.f32 %v1468, %v1636
        %1638 = vmatmul.bf16.gmra.mxu0 %v821
        %v1639 = vpop.f32.mrf.mxu0
        %v1640 = vadd.f32 %v1471, %v1639
        %v1641 = vpop.f32.mrf.mxu0
        %v1642 = vadd.f32 %v1473, %v1641
        %1643 = vmatmul.bf16.gmra.mxu0 %v823
        %v1644 = vpop.f32.mrf.mxu0
        %v1645 = vadd.f32 %v1476, %v1644
        %v1646 = vpop.f32.mrf.mxu0
        %v1647 = vadd.f32 %v1478, %v1646
        %1648 = vmatmul.bf16.gmra.mxu0 %v825
        %v1649 = vpop.f32.mrf.mxu0
        %v1650 = vadd.f32 %v1481, %v1649
        %v1651 = vpop.f32.mrf.mxu0
        %v1652 = vadd.f32 %v1483, %v1651
        %1653 = vmatmul.bf16.gmra.mxu0 %v827
        %v1654 = vpop.f32.mrf.mxu0
        %v1655 = vadd.f32 %v1486, %v1654
        %v1656 = vpop.f32.mrf.mxu0
        %v1657 = vadd.f32 %v1488, %v1656
        %1658 = vmatmul.bf16.gmra.mxu0 %v829
        %v1659 = vpop.f32.mrf.mxu0
        %v1660 = vadd.f32 %v1491, %v1659
        %v1661 = vpop.f32.mrf.mxu0
        %v1662 = vadd.f32 %v1493, %v1661
        %1663 = vmatmul.bf16.gmra.mxu0 %v831
        %v1664 = vpop.f32.mrf.mxu0
        %v1665 = vadd.f32 %v1496, %v1664
        %v1666 = vpop.f32.mrf.mxu0
        %v1667 = vadd.f32 %v1498, %v1666
        %1668 = vmatmul.bf16.gmra.mxu0 %v833
        %v1669 = vpop.f32.mrf.mxu0
        %v1670 = vadd.f32 %v1501, %v1669
        %v1671 = vpop.f32.mrf.mxu0
        %v1672 = vadd.f32 %v1503, %v1671
        %1673 = vmatmul.bf16.gmra.mxu0 %v835
        %v1674 = vpop.f32.mrf.mxu0
        %v1675 = vadd.f32 %v1506, %v1674
        %v1676 = vpop.f32.mrf.mxu0
        %v1677 = vadd.f32 %v1508, %v1676
        %1678 = vmatmul.bf16.gmra.mxu0 %v837
        %v1679 = vpop.f32.mrf.mxu0
        %v1680 = vadd.f32 %v1511, %v1679
        %v1681 = vpop.f32.mrf.mxu0
        %v1682 = vadd.f32 %v1513, %v1681
        %1683 = vmatmul.bf16.gmra.mxu0 %v839
        %v1684 = vpop.f32.mrf.mxu0
        %v1685 = vadd.f32 %v1516, %v1684
        %v1686 = vpop.f32.mrf.mxu0
        %v1687 = vadd.f32 %v1518, %v1686
        %1688 = vmatmul.bf16.gmra.mxu0 %v841
        %v1689 = vpop.f32.mrf.mxu0
        %v1690 = vadd.f32 %v1521, %v1689
        %v1691 = vpop.f32.mrf.mxu0
        %v1692 = vadd.f32 %v1523, %v1691
        %1693 = vmatmul.bf16.gmra.mxu0 %v843
        %v1694 = vpop.f32.mrf.mxu0
        %v1695 = vadd.f32 %v1526, %v1694
        %v1696 = vpop.f32.mrf.mxu0
        %v1697 = vadd.f32 %v1528, %v1696
        %1698 = vmatmul.bf16.gmra.mxu0 %v845
        %v1699 = vpop.f32.mrf.mxu0
        %v1700 = vadd.f32 %v1531, %v1699
        %v1701 = vpop.f32.mrf.mxu0
        %v1702 = vadd.f32 %v1533, %v1701
        %1703 = vmatmul.bf16.gmra.mxu0 %v847
        %v1704 = vpop.f32.mrf.mxu0
        %v1705 = vadd.f32 %v1536, %v1704
        %v1706 = vpop.f32.mrf.mxu0
        %v1707 = vadd.f32 %v1538, %v1706
        %1708 = vmatmul.bf16.gmra.mxu0 %v849
        %v1709 = vpop.f32.mrf.mxu0
        %v1710 = vadd.f32 %v1541, %v1709
        %v1711 = vpop.f32.mrf.mxu0
        %v1712 = vadd.f32 %v1543, %v1711
        %1713 = vmatmul.bf16.gmra.mxu0 %v851
        %v1714 = vpop.f32.mrf.mxu0
        %v1715 = vadd.f32 %v1546, %v1714
        %v1716 = vpop.f32.mrf.mxu0
        %v1717 = vadd.f32 %v1548, %v1716
        %1718 = vmatmul.bf16.gmra.mxu0 %v853
        %v1719 = vpop.f32.mrf.mxu0
        %v1720 = vadd.f32 %v1551, %v1719
        %v1721 = vpop.f32.mrf.mxu0
        %v1722 = vadd.f32 %v1553, %v1721
        %1723 = vmatmul.bf16.gmra.mxu0 %v855
        %v1724 = vpop.f32.mrf.mxu0
        %v1725 = vadd.f32 %v1556, %v1724
        %v1726 = vpop.f32.mrf.mxu0
        %v1727 = vadd.f32 %v1558, %v1726
        %1728 = vmatmul.bf16.gmra.mxu0 %v857
        %v1729 = vpop.f32.mrf.mxu0
        %v1730 = vadd.f32 %v1561, %v1729
        %v1731 = vpop.f32.mrf.mxu0
        %v1732 = vadd.f32 %v1563, %v1731
        %1733 = vmatmul.bf16.gmra.mxu0 %v859
        %v1734 = vpop.f32.mrf.mxu0
        %v1735 = vadd.f32 %v1566, %v1734
        %v1736 = vpop.f32.mrf.mxu0
        %v1737 = vadd.f32 %v1568, %v1736
        %1738 = vmatmul.bf16.gmra.mxu0 %v861
        %v1739 = vpop.f32.mrf.mxu0
        %v1740 = vadd.f32 %v1571, %v1739
        %v1741 = vpop.f32.mrf.mxu0
        %v1742 = vadd.f32 %v1573, %v1741
        %1743 = vmatmul.bf16.gmra.mxu0 %v863
        %v1744 = vpop.f32.mrf.mxu0
        %v1745 = vadd.f32 %v1576, %v1744
        %v1746 = vpop.f32.mrf.mxu0
        %v1747 = vadd.f32 %v1578, %v1746
        %1748 = vmatmul.bf16.gmra.mxu0 %v865
        %v1749 = vpop.f32.mrf.mxu0
        %v1750 = vadd.f32 %v1581, %v1749
        %v1751 = vpop.f32.mrf.mxu0
        %v1752 = vadd.f32 %v1583, %v1751
        %1753 = vmatmul.bf16.gmra.mxu0 %v867
        %v1754 = vpop.f32.mrf.mxu0
        %v1755 = vadd.f32 %v1586, %v1754
        %v1756 = vpop.f32.mrf.mxu0
        %v1757 = vadd.f32 %v1588, %v1756
        %1758 = vmatmul.bf16.gmra.mxu0 %v869
        %v1759 = vpop.f32.mrf.mxu0
        %v1760 = vadd.f32 %v1591, %v1759
        %v1761 = vpop.f32.mrf.mxu0
        %v1762 = vadd.f32 %v1593, %v1761
        %1763 = vmatmul.bf16.gmra.mxu0 %v871
        %v1764 = vpop.f32.mrf.mxu0
        %v1765 = vadd.f32 %v1596, %v1764
        %v1766 = vpop.f32.mrf.mxu0
        %v1767 = vadd.f32 %v1598, %v1766
        %1768 = vmatmul.bf16.gmra.mxu0 %v873
        %v1769 = vpop.f32.mrf.mxu0
        %v1770 = vadd.f32 %v1601, %v1769
        %v1771 = vpop.f32.mrf.mxu0
        %v1772 = vadd.f32 %v1603, %v1771
        %1773 = vdwg.mxu0
        %v1774 = vmax.f32 %v1277, 0.0
        %v1775 = vmax.f32 %v1615, 0.0
        %v1776 = vmax.f32 %v1279, 0.0
        %v1777 = vmax.f32 %v1617, 0.0
        %v1778 = vmax.f32 %v1282, 0.0
        %v1779 = vmax.f32 %v1620, 0.0
        %v1780 = vmax.f32 %v1284, 0.0
        %v1781 = vmax.f32 %v1622, 0.0
        %v1782 = vmax.f32 %v1287, 0.0
        %v1783 = vmax.f32 %v1625, 0.0
        %v1784 = vmax.f32 %v1289, 0.0
        %v1785 = vmax.f32 %v1627, 0.0
        %v1786 = vmax.f32 %v1292, 0.0
        %v1787 = vmax.f32 %v1630, 0.0
        %v1788 = vmax.f32 %v1294, 0.0
        %v1789 = vmax.f32 %v1632, 0.0
        %v1790 = vmax.f32 %v1297, 0.0
        %v1791 = vmax.f32 %v1635, 0.0
        %v1792 = vmax.f32 %v1299, 0.0
        %v1793 = vmax.f32 %v1637, 0.0
        %v1794 = vmax.f32 %v1302, 0.0
        %v1795 = vmax.f32 %v1640, 0.0
        %v1796 = vmax.f32 %v1304, 0.0
        %v1797 = vmax.f32 %v1642, 0.0
        %v1798 = vmax.f32 %v1307, 0.0
        %v1799 = vmax.f32 %v1645, 0.0
        %v1800 = vmax.f32 %v1309, 0.0
        %v1801 = vmax.f32 %v1647, 0.0
        %v1802 = vmax.f32 %v1312, 0.0
        %v1803 = vmax.f32 %v1650, 0.0
        %v1804 = vmax.f32 %v1314, 0.0
        %v1805 = vmax.f32 %v1652, 0.0
        %v1806 = vmax.f32 %v1317, 0.0
        %v1807 = vmax.f32 %v1655, 0.0
        %v1808 = vmax.f32 %v1319, 0.0
        %v1809 = vmax.f32 %v1657, 0.0
        %v1810 = vmax.f32 %v1322, 0.0
        %v1811 = vmax.f32 %v1660, 0.0
        %v1812 = vmax.f32 %v1324, 0.0
        %v1813 = vmax.f32 %v1662, 0.0
        %v1814 = vmax.f32 %v1327, 0.0
        %v1815 = vmax.f32 %v1665, 0.0
        %v1816 = vmax.f32 %v1329, 0.0
        %v1817 = vmax.f32 %v1667, 0.0
        %v1818 = vmax.f32 %v1332, 0.0
        %v1819 = vmax.f32 %v1670, 0.0
        %v1820 = vmax.f32 %v1334, 0.0
        %v1821 = vmax.f32 %v1672, 0.0
        %v1822 = vmax.f32 %v1337, 0.0
        %v1823 = vmax.f32 %v1675, 0.0
        %v1824 = vmax.f32 %v1339, 0.0
        %v1825 = vmax.f32 %v1677, 0.0
        %v1826 = vmax.f32 %v1342, 0.0
        %v1827 = vmax.f32 %v1680, 0.0
        %v1828 = vmax.f32 %v1344, 0.0
        %v1829 = vmax.f32 %v1682, 0.0
        %v1830 = vmax.f32 %v1347, 0.0
        %v1831 = vmax.f32 %v1685, 0.0
        %v1832 = vmax.f32 %v1349, 0.0
        %v1833 = vmax.f32 %v1687, 0.0
        %v1834 = vmax.f32 %v1352, 0.0
        %v1835 = vmax.f32 %v1690, 0.0
        %v1836 = vmax.f32 %v1354, 0.0
        %v1837 = vmax.f32 %v1692, 0.0
        %v1838 = vmax.f32 %v1357, 0.0
        %v1839 = vmax.f32 %v1695, 0.0
        %v1840 = vmax.f32 %v1359, 0.0
        %v1841 = vmax.f32 %v1697, 0.0
        %v1842 = vmax.f32 %v1362, 0.0
        %v1843 = vmax.f32 %v1700, 0.0
        %v1844 = vmax.f32 %v1364, 0.0
        %v1845 = vmax.f32 %v1702, 0.0
        %v1846 = vmax.f32 %v1367, 0.0
        %v1847 = vmax.f32 %v1705, 0.0
        %v1848 = vmax.f32 %v1369, 0.0
        %v1849 = vmax.f32 %v1707, 0.0
        %v1850 = vmax.f32 %v1372, 0.0
        %v1851 = vmax.f32 %v1710, 0.0
        %v1852 = vmax.f32 %v1374, 0.0
        %v1853 = vmax.f32 %v1712, 0.0
        %v1854 = vmax.f32 %v1377, 0.0
        %v1855 = vmax.f32 %v1715, 0.0
        %v1856 = vmax.f32 %v1379, 0.0
        %v1857 = vmax.f32 %v1717, 0.0
        %v1858 = vmax.f32 %v1382, 0.0
        %v1859 = vmax.f32 %v1720, 0.0
        %v1860 = vmax.f32 %v1384, 0.0
        %v1861 = vmax.f32 %v1722, 0.0
        %v1862 = vmax.f32 %v1387, 0.0
        %v1863 = vmax.f32 %v1725, 0.0
        %v1864 = vmax.f32 %v1389, 0.0
        %v1865 = vmax.f32 %v1727, 0.0
        %v1866 = vmax.f32 %v1392, 0.0
        %v1867 = vmax.f32 %v1730, 0.0
        %v1868 = vmax.f32 %v1394, 0.0
        %v1869 = vmax.f32 %v1732, 0.0
        %v1870 = vmax.f32 %v1397, 0.0
        %v1871 = vmax.f32 %v1735, 0.0
        %v1872 = vmax.f32 %v1399, 0.0
        %v1873 = vmax.f32 %v1737, 0.0
        %v1874 = vmax.f32 %v1402, 0.0
        %v1875 = vmax.f32 %v1740, 0.0
        %v1876 = vmax.f32 %v1404, 0.0
        %v1877 = vmax.f32 %v1742, 0.0
        %v1878 = vmax.f32 %v1407, 0.0
        %v1879 = vmax.f32 %v1745, 0.0
        %v1880 = vmax.f32 %v1409, 0.0
        %v1881 = vmax.f32 %v1747, 0.0
        %v1882 = vmax.f32 %v1412, 0.0
        %v1883 = vmax.f32 %v1750, 0.0
        %v1884 = vmax.f32 %v1414, 0.0
        %v1885 = vmax.f32 %v1752, 0.0
        %v1886 = vmax.f32 %v1417, 0.0
        %v1887 = vmax.f32 %v1755, 0.0
        %v1888 = vmax.f32 %v1419, 0.0
        %v1889 = vmax.f32 %v1757, 0.0
        %v1890 = vmax.f32 %v1422, 0.0
        %v1891 = vmax.f32 %v1760, 0.0
        %v1892 = vmax.f32 %v1424, 0.0
        %v1893 = vmax.f32 %v1762, 0.0
        %v1894 = vmax.f32 %v1427, 0.0
        %v1895 = vmax.f32 %v1765, 0.0
        %v1896 = vmax.f32 %v1429, 0.0
        %v1897 = vmax.f32 %v1767, 0.0
        %v1898 = vmax.f32 %v1432, 0.0
        %v1899 = vmax.f32 %v1770, 0.0
        %v1900 = vmax.f32 %v1434, 0.0
        %v1901 = vmax.f32 %v1772, 0.0
        // Predicated region
        $region93: #{tpu_custom_call.1} parent=55 // pred_check
          %p1902 = pneg %p435
        $region94: #{tpu_custom_call.1} parent=55 // pred_check_branch
          %1904 = sbr.rel (%p1902) target = $region96
        $region95: #{tpu_custom_call.1} parent=55 // pred_region
          %v1905 = vld [vmem:[#allocation2] sm:$0x3]
          %v1906 = vadd.f32 %v1774, %v1776
          %v1907 = vadd.f32 %v1906, %v1778
          %v1908 = vadd.f32 %v1907, %v1780
          %v1909 = vadd.f32 %v1908, %v1782
          %v1910 = vadd.f32 %v1909, %v1784
          %v1911 = vadd.f32 %v1910, %v1786
          %v1912 = vadd.f32 %v1911, %v1788
          %v1913 = vadd.f32 %v1912, %v1790
          %v1914 = vadd.f32 %v1913, %v1792
          %v1915 = vadd.f32 %v1914, %v1794
          %v1916 = vadd.f32 %v1915, %v1796
          %v1917 = vadd.f32 %v1916, %v1798
          %v1918 = vadd.f32 %v1917, %v1800
          %v1919 = vadd.f32 %v1918, %v1802
          %v1920 = vadd.f32 %v1919, %v1804
          %v1921 = vadd.f32 %v1920, %v1806
          %v1922 = vadd.f32 %v1921, %v1808
          %v1923 = vadd.f32 %v1922, %v1810
          %v1924 = vadd.f32 %v1923, %v1812
          %v1925 = vadd.f32 %v1924, %v1814
          %v1926 = vadd.f32 %v1925, %v1816
          %v1927 = vadd.f32 %v1926, %v1818
          %v1928 = vadd.f32 %v1927, %v1820
          %v1929 = vadd.f32 %v1928, %v1822
          %v1930 = vadd.f32 %v1929, %v1824
          %v1931 = vadd.f32 %v1930, %v1826
          %v1932 = vadd.f32 %v1931, %v1828
          %v1933 = vadd.f32 %v1932, %v1830
          %v1934 = vadd.f32 %v1933, %v1832
          %v1935 = vadd.f32 %v1934, %v1834
          %v1936 = vadd.f32 %v1935, %v1836
          %v1937 = vadd.f32 %v1936, %v1838
          %v1938 = vadd.f32 %v1937, %v1840
          %v1939 = vadd.f32 %v1938, %v1842
          %v1940 = vadd.f32 %v1939, %v1844
          %v1941 = vadd.f32 %v1940, %v1846
          %v1942 = vadd.f32 %v1941, %v1848
          %v1943 = vadd.f32 %v1942, %v1850
          %v1944 = vadd.f32 %v1943, %v1852
          %v1945 = vadd.f32 %v1944, %v1854
          %v1946 = vadd.f32 %v1945, %v1856
          %v1947 = vadd.f32 %v1946, %v1858
          %v1948 = vadd.f32 %v1947, %v1860
          %v1949 = vadd.f32 %v1948, %v1862
          %v1950 = vadd.f32 %v1949, %v1864
          %v1951 = vadd.f32 %v1950, %v1866
          %v1952 = vadd.f32 %v1951, %v1868
          %v1953 = vadd.f32 %v1952, %v1870
          %v1954 = vadd.f32 %v1953, %v1872
          %v1955 = vadd.f32 %v1954, %v1874
          %v1956 = vadd.f32 %v1955, %v1876
          %v1957 = vadd.f32 %v1956, %v1878
          %v1958 = vadd.f32 %v1957, %v1880
          %v1959 = vadd.f32 %v1958, %v1882
          %v1960 = vadd.f32 %v1959, %v1884
          %v1961 = vadd.f32 %v1960, %v1886
          %v1962 = vadd.f32 %v1961, %v1888
          %v1963 = vadd.f32 %v1962, %v1890
          %v1964 = vadd.f32 %v1963, %v1892
          %v1965 = vadd.f32 %v1964, %v1894
          %v1966 = vadd.f32 %v1965, %v1896
          %v1967 = vadd.f32 %v1966, %v1898
          %v1968 = vadd.f32 %v1967, %v1900
          %v1969 = vrot.slane %v1968, 4
          %v1970 = vadd.f32 %v1968, %v1969
          %v1971 = vrot.slane %v1970, 2
          %v1972 = vadd.f32 %v1970, %v1971
          %v1973 = vrot.slane %v1972, 1
          %v1974 = vadd.f32 %v1972, %v1973
          %v1975 = vadd.f32 %v1775, %v1777
          %v1976 = vadd.f32 %v1975, %v1779
          %v1977 = vadd.f32 %v1976, %v1781
          %v1978 = vadd.f32 %v1977, %v1783
          %v1979 = vadd.f32 %v1978, %v1785
          %v1980 = vadd.f32 %v1979, %v1787
          %v1981 = vadd.f32 %v1980, %v1789
          %v1982 = vadd.f32 %v1981, %v1791
          %v1983 = vadd.f32 %v1982, %v1793
          %v1984 = vadd.f32 %v1983, %v1795
          %v1985 = vadd.f32 %v1984, %v1797
          %v1986 = vadd.f32 %v1985, %v1799
          %v1987 = vadd.f32 %v1986, %v1801
          %v1988 = vadd.f32 %v1987, %v1803
          %v1989 = vadd.f32 %v1988, %v1805
          %v1990 = vadd.f32 %v1989, %v1807
          %v1991 = vadd.f32 %v1990, %v1809
          %v1992 = vadd.f32 %v1991, %v1811
          %v1993 = vadd.f32 %v1992, %v1813
          %v1994 = vadd.f32 %v1993, %v1815
          %v1995 = vadd.f32 %v1994, %v1817
          %v1996 = vadd.f32 %v1995, %v1819
          %v1997 = vadd.f32 %v1996, %v1821
          %v1998 = vadd.f32 %v1997, %v1823
          %v1999 = vadd.f32 %v1998, %v1825
          %v2000 = vadd.f32 %v1999, %v1827
          %v2001 = vadd.f32 %v2000, %v1829
          %v2002 = vadd.f32 %v2001, %v1831
          %v2003 = vadd.f32 %v2002, %v1833
          %v2004 = vadd.f32 %v2003, %v1835
          %v2005 = vadd.f32 %v2004, %v1837
          %v2006 = vadd.f32 %v2005, %v1839
          %v2007 = vadd.f32 %v2006, %v1841
          %v2008 = vadd.f32 %v2007, %v1843
          %v2009 = vadd.f32 %v2008, %v1845
          %v2010 = vadd.f32 %v2009, %v1847
          %v2011 = vadd.f32 %v2010, %v1849
          %v2012 = vadd.f32 %v2011, %v1851
          %v2013 = vadd.f32 %v2012, %v1853
          %v2014 = vadd.f32 %v2013, %v1855
          %v2015 = vadd.f32 %v2014, %v1857
          %v2016 = vadd.f32 %v2015, %v1859
          %v2017 = vadd.f32 %v2016, %v1861
          %v2018 = vadd.f32 %v2017, %v1863
          %v2019 = vadd.f32 %v2018, %v1865
          %v2020 = vadd.f32 %v2019, %v1867
          %v2021 = vadd.f32 %v2020, %v1869
          %v2022 = vadd.f32 %v2021, %v1871
          %v2023 = vadd.f32 %v2022, %v1873
          %v2024 = vadd.f32 %v2023, %v1875
          %v2025 = vadd.f32 %v2024, %v1877
          %v2026 = vadd.f32 %v2025, %v1879
          %v2027 = vadd.f32 %v2026, %v1881
          %v2028 = vadd.f32 %v2027, %v1883
          %v2029 = vadd.f32 %v2028, %v1885
          %v2030 = vadd.f32 %v2029, %v1887
          %v2031 = vadd.f32 %v2030, %v1889
          %v2032 = vadd.f32 %v2031, %v1891
          %v2033 = vadd.f32 %v2032, %v1893
          %v2034 = vadd.f32 %v2033, %v1895
          %v2035 = vadd.f32 %v2034, %v1897
          %v2036 = vadd.f32 %v2035, %v1899
          %v2037 = vadd.f32 %v2036, %v1901
          %v2038 = vrot.slane %v2037, 4
          %v2039 = vadd.f32 %v2037, %v2038
          %v2040 = vrot.slane %v2039, 2
          %v2041 = vadd.f32 %v2039, %v2040
          %v2042 = vrot.slane %v2041, 1
          %v2043 = vadd.f32 %v2041, %v2042
          %v2046 = vrot.slane %v2043, 7
          %vm2047 = vcmask 1040384
          %v2048 = vsel %vm2047, %v1974, %v2046
          %v2050 = vadd.f32 %v1905, %v2048
          %v2051 = vlaneseq
          %vm2052 = vcmp.ge.s32.totalorder %v2051, 0
          %vm2053 = vcmp.lt.s32.totalorder %v2051, 256
          %vm2054 = vmand %vm2052, %vm2053
          %2055 = vst.msk [vmem:[#allocation2] sm:$0x3] %vm2054, %v2050
          %v2056 = vld [vmem:[#allocation3] sm:$0x3]
          %v2057 = vmul.f32 %v1774, %v1774
          %v2058 = vmul.f32 %v1775, %v1775
          %v2059 = vmul.f32 %v1776, %v1776
          %v2060 = vmul.f32 %v1777, %v1777
          %v2061 = vmul.f32 %v1778, %v1778
          %v2062 = vmul.f32 %v1779, %v1779
          %v2063 = vmul.f32 %v1780, %v1780
          %v2064 = vmul.f32 %v1781, %v1781
          %v2065 = vmul.f32 %v1782, %v1782
          %v2066 = vmul.f32 %v1783, %v1783
          %v2067 = vmul.f32 %v1784, %v1784
          %v2068 = vmul.f32 %v1785, %v1785
          %v2069 = vmul.f32 %v1786, %v1786
          %v2070 = vmul.f32 %v1787, %v1787
          %v2071 = vmul.f32 %v1788, %v1788
          %v2072 = vmul.f32 %v1789, %v1789
          %v2073 = vmul.f32 %v1790, %v1790
          %v2074 = vmul.f32 %v1791, %v1791
          %v2075 = vmul.f32 %v1792, %v1792
          %v2076 = vmul.f32 %v1793, %v1793
          %v2077 = vmul.f32 %v1794, %v1794
          %v2078 = vmul.f32 %v1795, %v1795
          %v2079 = vmul.f32 %v1796, %v1796
          %v2080 = vmul.f32 %v1797, %v1797
          %v2081 = vmul.f32 %v1798, %v1798
          %v2082 = vmul.f32 %v1799, %v1799
          %v2083 = vmul.f32 %v1800, %v1800
          %v2084 = vmul.f32 %v1801, %v1801
          %v2085 = vmul.f32 %v1802, %v1802
          %v2086 = vmul.f32 %v1803, %v1803
          %v2087 = vmul.f32 %v1804, %v1804
          %v2088 = vmul.f32 %v1805, %v1805
          %v2089 = vmul.f32 %v1806, %v1806
          %v2090 = vmul.f32 %v1807, %v1807
          %v2091 = vmul.f32 %v1808, %v1808
          %v2092 = vmul.f32 %v1809, %v1809
          %v2093 = vmul.f32 %v1810, %v1810
          %v2094 = vmul.f32 %v1811, %v1811
          %v2095 = vmul.f32 %v1812, %v1812
          %v2096 = vmul.f32 %v1813, %v1813
          %v2097 = vmul.f32 %v1814, %v1814
          %v2098 = vmul.f32 %v1815, %v1815
          %v2099 = vmul.f32 %v1816, %v1816
          %v2100 = vmul.f32 %v1817, %v1817
          %v2101 = vmul.f32 %v1818, %v1818
          %v2102 = vmul.f32 %v1819, %v1819
          %v2103 = vmul.f32 %v1820, %v1820
          %v2104 = vmul.f32 %v1821, %v1821
          %v2105 = vmul.f32 %v1822, %v1822
          %v2106 = vmul.f32 %v1823, %v1823
          %v2107 = vmul.f32 %v1824, %v1824
          %v2108 = vmul.f32 %v1825, %v1825
          %v2109 = vmul.f32 %v1826, %v1826
          %v2110 = vmul.f32 %v1827, %v1827
          %v2111 = vmul.f32 %v1828, %v1828
          %v2112 = vmul.f32 %v1829, %v1829
          %v2113 = vmul.f32 %v1830, %v1830
          %v2114 = vmul.f32 %v1831, %v1831
          %v2115 = vmul.f32 %v1832, %v1832
          %v2116 = vmul.f32 %v1833, %v1833
          %v2117 = vmul.f32 %v1834, %v1834
          %v2118 = vmul.f32 %v1835, %v1835
          %v2119 = vmul.f32 %v1836, %v1836
          %v2120 = vmul.f32 %v1837, %v1837
          %v2121 = vmul.f32 %v1838, %v1838
          %v2122 = vmul.f32 %v1839, %v1839
          %v2123 = vmul.f32 %v1840, %v1840
          %v2124 = vmul.f32 %v1841, %v1841
          %v2125 = vmul.f32 %v1842, %v1842
          %v2126 = vmul.f32 %v1843, %v1843
          %v2127 = vmul.f32 %v1844, %v1844
          %v2128 = vmul.f32 %v1845, %v1845
          %v2129 = vmul.f32 %v1846, %v1846
          %v2130 = vmul.f32 %v1847, %v1847
          %v2131 = vmul.f32 %v1848, %v1848
          %v2132 = vmul.f32 %v1849, %v1849
          %v2133 = vmul.f32 %v1850, %v1850
          %v2134 = vmul.f32 %v1851, %v1851
          %v2135 = vmul.f32 %v1852, %v1852
          %v2136 = vmul.f32 %v1853, %v1853
          %v2137 = vmul.f32 %v1854, %v1854
          %v2138 = vmul.f32 %v1855, %v1855
          %v2139 = vmul.f32 %v1856, %v1856
          %v2140 = vmul.f32 %v1857, %v1857
          %v2141 = vmul.f32 %v1858, %v1858
          %v2142 = vmul.f32 %v1859, %v1859
          %v2143 = vmul.f32 %v1860, %v1860
          %v2144 = vmul.f32 %v1861, %v1861
          %v2145 = vmul.f32 %v1862, %v1862
          %v2146 = vmul.f32 %v1863, %v1863
          %v2147 = vmul.f32 %v1864, %v1864
          %v2148 = vmul.f32 %v1865, %v1865
          %v2149 = vmul.f32 %v1866, %v1866
          %v2150 = vmul.f32 %v1867, %v1867
          %v2151 = vmul.f32 %v1868, %v1868
          %v2152 = vmul.f32 %v1869, %v1869
          %v2153 = vmul.f32 %v1870, %v1870
          %v2154 = vmul.f32 %v1871, %v1871
          %v2155 = vmul.f32 %v1872, %v1872
          %v2156 = vmul.f32 %v1873, %v1873
          %v2157 = vmul.f32 %v1874, %v1874
          %v2158 = vmul.f32 %v1875, %v1875
          %v2159 = vmul.f32 %v1876, %v1876
          %v2160 = vmul.f32 %v1877, %v1877
          %v2161 = vmul.f32 %v1878, %v1878
          %v2162 = vmul.f32 %v1879, %v1879
          %v2163 = vmul.f32 %v1880, %v1880
          %v2164 = vmul.f32 %v1881, %v1881
          %v2165 = vmul.f32 %v1882, %v1882
          %v2166 = vmul.f32 %v1883, %v1883
          %v2167 = vmul.f32 %v1884, %v1884
          %v2168 = vmul.f32 %v1885, %v1885
          %v2169 = vmul.f32 %v1886, %v1886
          %v2170 = vmul.f32 %v1887, %v1887
          %v2171 = vmul.f32 %v1888, %v1888
          %v2172 = vmul.f32 %v1889, %v1889
          %v2173 = vmul.f32 %v1890, %v1890
          %v2174 = vmul.f32 %v1891, %v1891
          %v2175 = vmul.f32 %v1892, %v1892
          %v2176 = vmul.f32 %v1893, %v1893
          %v2177 = vmul.f32 %v1894, %v1894
          %v2178 = vmul.f32 %v1895, %v1895
          %v2179 = vmul.f32 %v1896, %v1896
          %v2180 = vmul.f32 %v1897, %v1897
          %v2181 = vmul.f32 %v1898, %v1898
          %v2182 = vmul.f32 %v1899, %v1899
          %v2183 = vmul.f32 %v1900, %v1900
          %v2184 = vmul.f32 %v1901, %v1901
          %v2185 = vadd.f32 %v2057, %v2059
          %v2186 = vadd.f32 %v2185, %v2061
          %v2187 = vadd.f32 %v2186, %v2063
          %v2188 = vadd.f32 %v2187, %v2065
          %v2189 = vadd.f32 %v2188, %v2067
          %v2190 = vadd.f32 %v2189, %v2069
          %v2191 = vadd.f32 %v2190, %v2071
          %v2192 = vadd.f32 %v2191, %v2073
          %v2193 = vadd.f32 %v2192, %v2075
          %v2194 = vadd.f32 %v2193, %v2077
          %v2195 = vadd.f32 %v2194, %v2079
          %v2196 = vadd.f32 %v2195, %v2081
          %v2197 = vadd.f32 %v2196, %v2083
          %v2198 = vadd.f32 %v2197, %v2085
          %v2199 = vadd.f32 %v2198, %v2087
          %v2200 = vadd.f32 %v2199, %v2089
          %v2201 = vadd.f32 %v2200, %v2091
          %v2202 = vadd.f32 %v2201, %v2093
          %v2203 = vadd.f32 %v2202, %v2095
          %v2204 = vadd.f32 %v2203, %v2097
          %v2205 = vadd.f32 %v2204, %v2099
          %v2206 = vadd.f32 %v2205, %v2101
          %v2207 = vadd.f32 %v2206, %v2103
          %v2208 = vadd.f32 %v2207, %v2105
          %v2209 = vadd.f32 %v2208, %v2107
          %v2210 = vadd.f32 %v2209, %v2109
          %v2211 = vadd.f32 %v2210, %v2111
          %v2212 = vadd.f32 %v2211, %v2113
          %v2213 = vadd.f32 %v2212, %v2115
          %v2214 = vadd.f32 %v2213, %v2117
          %v2215 = vadd.f32 %v2214, %v2119
          %v2216 = vadd.f32 %v2215, %v2121
          %v2217 = vadd.f32 %v2216, %v2123
          %v2218 = vadd.f32 %v2217, %v2125
          %v2219 = vadd.f32 %v2218, %v2127
          %v2220 = vadd.f32 %v2219, %v2129
          %v2221 = vadd.f32 %v2220, %v2131
          %v2222 = vadd.f32 %v2221, %v2133
          %v2223 = vadd.f32 %v2222, %v2135
          %v2224 = vadd.f32 %v2223, %v2137
          %v2225 = vadd.f32 %v2224, %v2139
          %v2226 = vadd.f32 %v2225, %v2141
          %v2227 = vadd.f32 %v2226, %v2143
          %v2228 = vadd.f32 %v2227, %v2145
          %v2229 = vadd.f32 %v2228, %v2147
          %v2230 = vadd.f32 %v2229, %v2149
          %v2231 = vadd.f32 %v2230, %v2151
          %v2232 = vadd.f32 %v2231, %v2153
          %v2233 = vadd.f32 %v2232, %v2155
          %v2234 = vadd.f32 %v2233, %v2157
          %v2235 = vadd.f32 %v2234, %v2159
          %v2236 = vadd.f32 %v2235, %v2161
          %v2237 = vadd.f32 %v2236, %v2163
          %v2238 = vadd.f32 %v2237, %v2165
          %v2239 = vadd.f32 %v2238, %v2167
          %v2240 = vadd.f32 %v2239, %v2169
          %v2241 = vadd.f32 %v2240, %v2171
          %v2242 = vadd.f32 %v2241, %v2173
          %v2243 = vadd.f32 %v2242, %v2175
          %v2244 = vadd.f32 %v2243, %v2177
          %v2245 = vadd.f32 %v2244, %v2179
          %v2246 = vadd.f32 %v2245, %v2181
          %v2247 = vadd.f32 %v2246, %v2183
          %v2248 = vrot.slane %v2247, 4
          %v2249 = vadd.f32 %v2247, %v2248
          %v2250 = vrot.slane %v2249, 2
          %v2251 = vadd.f32 %v2249, %v2250
          %v2252 = vrot.slane %v2251, 1
          %v2253 = vadd.f32 %v2251, %v2252
          %v2254 = vadd.f32 %v2058, %v2060
          %v2255 = vadd.f32 %v2254, %v2062
          %v2256 = vadd.f32 %v2255, %v2064
          %v2257 = vadd.f32 %v2256, %v2066
          %v2258 = vadd.f32 %v2257, %v2068
          %v2259 = vadd.f32 %v2258, %v2070
          %v2260 = vadd.f32 %v2259, %v2072
          %v2261 = vadd.f32 %v2260, %v2074
          %v2262 = vadd.f32 %v2261, %v2076
          %v2263 = vadd.f32 %v2262, %v2078
          %v2264 = vadd.f32 %v2263, %v2080
          %v2265 = vadd.f32 %v2264, %v2082
          %v2266 = vadd.f32 %v2265, %v2084
          %v2267 = vadd.f32 %v2266, %v2086
          %v2268 = vadd.f32 %v2267, %v2088
          %v2269 = vadd.f32 %v2268, %v2090
          %v2270 = vadd.f32 %v2269, %v2092
          %v2271 = vadd.f32 %v2270, %v2094
          %v2272 = vadd.f32 %v2271, %v2096
          %v2273 = vadd.f32 %v2272, %v2098
          %v2274 = vadd.f32 %v2273, %v2100
          %v2275 = vadd.f32 %v2274, %v2102
          %v2276 = vadd.f32 %v2275, %v2104
          %v2277 = vadd.f32 %v2276, %v2106
          %v2278 = vadd.f32 %v2277, %v2108
          %v2279 = vadd.f32 %v2278, %v2110
          %v2280 = vadd.f32 %v2279, %v2112
          %v2281 = vadd.f32 %v2280, %v2114
          %v2282 = vadd.f32 %v2281, %v2116
          %v2283 = vadd.f32 %v2282, %v2118
          %v2284 = vadd.f32 %v2283, %v2120
          %v2285 = vadd.f32 %v2284, %v2122
          %v2286 = vadd.f32 %v2285, %v2124
          %v2287 = vadd.f32 %v2286, %v2126
          %v2288 = vadd.f32 %v2287, %v2128
          %v2289 = vadd.f32 %v2288, %v2130
          %v2290 = vadd.f32 %v2289, %v2132
          %v2291 = vadd.f32 %v2290, %v2134
          %v2292 = vadd.f32 %v2291, %v2136
          %v2293 = vadd.f32 %v2292, %v2138
          %v2294 = vadd.f32 %v2293, %v2140
          %v2295 = vadd.f32 %v2294, %v2142
          %v2296 = vadd.f32 %v2295, %v2144
          %v2297 = vadd.f32 %v2296, %v2146
          %v2298 = vadd.f32 %v2297, %v2148
          %v2299 = vadd.f32 %v2298, %v2150
          %v2300 = vadd.f32 %v2299, %v2152
          %v2301 = vadd.f32 %v2300, %v2154
          %v2302 = vadd.f32 %v2301, %v2156
          %v2303 = vadd.f32 %v2302, %v2158
          %v2304 = vadd.f32 %v2303, %v2160
          %v2305 = vadd.f32 %v2304, %v2162
          %v2306 = vadd.f32 %v2305, %v2164
          %v2307 = vadd.f32 %v2306, %v2166
          %v2308 = vadd.f32 %v2307, %v2168
          %v2309 = vadd.f32 %v2308, %v2170
          %v2310 = vadd.f32 %v2309, %v2172
          %v2311 = vadd.f32 %v2310, %v2174
          %v2312 = vadd.f32 %v2311, %v2176
          %v2313 = vadd.f32 %v2312, %v2178
          %v2314 = vadd.f32 %v2313, %v2180
          %v2315 = vadd.f32 %v2314, %v2182
          %v2316 = vadd.f32 %v2315, %v2184
          %v2317 = vrot.slane %v2316, 4
          %v2318 = vadd.f32 %v2316, %v2317
          %v2319 = vrot.slane %v2318, 2
          %v2320 = vadd.f32 %v2318, %v2319
          %v2321 = vrot.slane %v2320, 1
          %v2322 = vadd.f32 %v2320, %v2321
          %v2325 = vrot.slane %v2322, 7
          %v2326 = vsel %vm2047, %v2253, %v2325
          %v2328 = vadd.f32 %v2056, %v2326
          %2329 = vst.msk [vmem:[#allocation3] sm:$0x3] %vm2054, %v2328
        $region96: #{tpu_custom_call.1} parent=55 // pred_fallthru
          _
        %p2330 = scmp.ge.s32.totalorder %s31, 1
        // Predicated region
        $region97: #{tpu_custom_call.1} parent=55 // pred_check
          %p2331 = pneg %p2330
        $region98: #{tpu_custom_call.1} parent=55 // pred_check_branch
          %2333 = sbr.rel (%p2331) target = $region100
        $region99: #{tpu_custom_call.1} parent=55 // pred_region
          %v2334 = vld [vmem:[#allocation6] sm:$0x3]
          %v2336 = vperm.slane %v2334, 0
          %v2337 = vperm.slane %v2334, 1
          %v2340 = vmul.f32 %v1774, %v2336
          %v2341 = vmul.f32 %v1775, %v2337
          %v2342 = vmul.f32 %v1776, %v2336
          %v2343 = vmul.f32 %v1777, %v2337
          %v2344 = vmul.f32 %v1778, %v2336
          %v2345 = vmul.f32 %v1779, %v2337
          %v2346 = vmul.f32 %v1780, %v2336
          %v2347 = vmul.f32 %v1781, %v2337
          %v2348 = vmul.f32 %v1782, %v2336
          %v2349 = vmul.f32 %v1783, %v2337
          %v2350 = vmul.f32 %v1784, %v2336
          %v2351 = vmul.f32 %v1785, %v2337
          %v2352 = vmul.f32 %v1786, %v2336
          %v2353 = vmul.f32 %v1787, %v2337
          %v2354 = vmul.f32 %v1788, %v2336
          %v2355 = vmul.f32 %v1789, %v2337
          %v2356 = vmul.f32 %v1790, %v2336
          %v2357 = vmul.f32 %v1791, %v2337
          %v2358 = vmul.f32 %v1792, %v2336
          %v2359 = vmul.f32 %v1793, %v2337
          %v2360 = vmul.f32 %v1794, %v2336
          %v2361 = vmul.f32 %v1795, %v2337
          %v2362 = vmul.f32 %v1796, %v2336
          %v2363 = vmul.f32 %v1797, %v2337
          %v2364 = vmul.f32 %v1798, %v2336
          %v2365 = vmul.f32 %v1799, %v2337
          %v2366 = vmul.f32 %v1800, %v2336
          %v2367 = vmul.f32 %v1801, %v2337
          %v2368 = vmul.f32 %v1802, %v2336
          %v2369 = vmul.f32 %v1803, %v2337
          %v2370 = vmul.f32 %v1804, %v2336
          %v2371 = vmul.f32 %v1805, %v2337
          %v2372 = vmul.f32 %v1806, %v2336
          %v2373 = vmul.f32 %v1807, %v2337
          %v2374 = vmul.f32 %v1808, %v2336
          %v2375 = vmul.f32 %v1809, %v2337
          %v2376 = vmul.f32 %v1810, %v2336
          %v2377 = vmul.f32 %v1811, %v2337
          %v2378 = vmul.f32 %v1812, %v2336
          %v2379 = vmul.f32 %v1813, %v2337
          %v2380 = vmul.f32 %v1814, %v2336
          %v2381 = vmul.f32 %v1815, %v2337
          %v2382 = vmul.f32 %v1816, %v2336
          %v2383 = vmul.f32 %v1817, %v2337
          %v2384 = vmul.f32 %v1818, %v2336
          %v2385 = vmul.f32 %v1819, %v2337
          %v2386 = vmul.f32 %v1820, %v2336
          %v2387 = vmul.f32 %v1821, %v2337
          %v2388 = vmul.f32 %v1822, %v2336
          %v2389 = vmul.f32 %v1823, %v2337
          %v2390 = vmul.f32 %v1824, %v2336
          %v2391 = vmul.f32 %v1825, %v2337
          %v2392 = vmul.f32 %v1826, %v2336
          %v2393 = vmul.f32 %v1827, %v2337
          %v2394 = vmul.f32 %v1828, %v2336
          %v2395 = vmul.f32 %v1829, %v2337
          %v2396 = vmul.f32 %v1830, %v2336
          %v2397 = vmul.f32 %v1831, %v2337
          %v2398 = vmul.f32 %v1832, %v2336
          %v2399 = vmul.f32 %v1833, %v2337
          %v2400 = vmul.f32 %v1834, %v2336
          %v2401 = vmul.f32 %v1835, %v2337
          %v2402 = vmul.f32 %v1836, %v2336
          %v2403 = vmul.f32 %v1837, %v2337
          %v2404 = vmul.f32 %v1838, %v2336
          %v2405 = vmul.f32 %v1839, %v2337
          %v2406 = vmul.f32 %v1840, %v2336
          %v2407 = vmul.f32 %v1841, %v2337
          %v2408 = vmul.f32 %v1842, %v2336
          %v2409 = vmul.f32 %v1843, %v2337
          %v2410 = vmul.f32 %v1844, %v2336
          %v2411 = vmul.f32 %v1845, %v2337
          %v2412 = vmul.f32 %v1846, %v2336
          %v2413 = vmul.f32 %v1847, %v2337
          %v2414 = vmul.f32 %v1848, %v2336
          %v2415 = vmul.f32 %v1849, %v2337
          %v2416 = vmul.f32 %v1850, %v2336
          %v2417 = vmul.f32 %v1851, %v2337
          %v2418 = vmul.f32 %v1852, %v2336
          %v2419 = vmul.f32 %v1853, %v2337
          %v2420 = vmul.f32 %v1854, %v2336
          %v2421 = vmul.f32 %v1855, %v2337
          %v2422 = vmul.f32 %v1856, %v2336
          %v2423 = vmul.f32 %v1857, %v2337
          %v2424 = vmul.f32 %v1858, %v2336
          %v2425 = vmul.f32 %v1859, %v2337
          %v2426 = vmul.f32 %v1860, %v2336
          %v2427 = vmul.f32 %v1861, %v2337
          %v2428 = vmul.f32 %v1862, %v2336
          %v2429 = vmul.f32 %v1863, %v2337
          %v2430 = vmul.f32 %v1864, %v2336
          %v2431 = vmul.f32 %v1865, %v2337
          %v2432 = vmul.f32 %v1866, %v2336
          %v2433 = vmul.f32 %v1867, %v2337
          %v2434 = vmul.f32 %v1868, %v2336
          %v2435 = vmul.f32 %v1869, %v2337
          %v2436 = vmul.f32 %v1870, %v2336
          %v2437 = vmul.f32 %v1871, %v2337
          %v2438 = vmul.f32 %v1872, %v2336
          %v2439 = vmul.f32 %v1873, %v2337
          %v2440 = vmul.f32 %v1874, %v2336
          %v2441 = vmul.f32 %v1875, %v2337
          %v2442 = vmul.f32 %v1876, %v2336
          %v2443 = vmul.f32 %v1877, %v2337
          %v2444 = vmul.f32 %v1878, %v2336
          %v2445 = vmul.f32 %v1879, %v2337
          %v2446 = vmul.f32 %v1880, %v2336
          %v2447 = vmul.f32 %v1881, %v2337
          %v2448 = vmul.f32 %v1882, %v2336
          %v2449 = vmul.f32 %v1883, %v2337
          %v2450 = vmul.f32 %v1884, %v2336
          %v2451 = vmul.f32 %v1885, %v2337
          %v2452 = vmul.f32 %v1886, %v2336
          %v2453 = vmul.f32 %v1887, %v2337
          %v2454 = vmul.f32 %v1888, %v2336
          %v2455 = vmul.f32 %v1889, %v2337
          %v2456 = vmul.f32 %v1890, %v2336
          %v2457 = vmul.f32 %v1891, %v2337
          %v2458 = vmul.f32 %v1892, %v2336
          %v2459 = vmul.f32 %v1893, %v2337
          %v2460 = vmul.f32 %v1894, %v2336
          %v2461 = vmul.f32 %v1895, %v2337
          %v2462 = vmul.f32 %v1896, %v2336
          %v2463 = vmul.f32 %v1897, %v2337
          %v2464 = vmul.f32 %v1898, %v2336
          %v2465 = vmul.f32 %v1899, %v2337
          %v2466 = vmul.f32 %v1900, %v2336
          %v2467 = vmul.f32 %v1901, %v2337
          %v2468 = vld [vmem:[#allocation7] sm:$0x3]
          %v2470 = vperm.slane %v2468, 0
          %v2471 = vperm.slane %v2468, 1
          %v2474 = vadd.f32 %v2340, %v2470
          %v2475 = vadd.f32 %v2341, %v2471
          %v2476 = vadd.f32 %v2342, %v2470
          %v2477 = vadd.f32 %v2343, %v2471
          %v2478 = vadd.f32 %v2344, %v2470
          %v2479 = vadd.f32 %v2345, %v2471
          %v2480 = vadd.f32 %v2346, %v2470
          %v2481 = vadd.f32 %v2347, %v2471
          %v2482 = vadd.f32 %v2348, %v2470
          %v2483 = vadd.f32 %v2349, %v2471
          %v2484 = vadd.f32 %v2350, %v2470
          %v2485 = vadd.f32 %v2351, %v2471
          %v2486 = vadd.f32 %v2352, %v2470
          %v2487 = vadd.f32 %v2353, %v2471
          %v2488 = vadd.f32 %v2354, %v2470
          %v2489 = vadd.f32 %v2355, %v2471
          %v2490 = vadd.f32 %v2356, %v2470
          %v2491 = vadd.f32 %v2357, %v2471
          %v2492 = vadd.f32 %v2358, %v2470
          %v2493 = vadd.f32 %v2359, %v2471
          %v2494 = vadd.f32 %v2360, %v2470
          %v2495 = vadd.f32 %v2361, %v2471
          %v2496 = vadd.f32 %v2362, %v2470
          %v2497 = vadd.f32 %v2363, %v2471
          %v2498 = vadd.f32 %v2364, %v2470
          %v2499 = vadd.f32 %v2365, %v2471
          %v2500 = vadd.f32 %v2366, %v2470
          %v2501 = vadd.f32 %v2367, %v2471
          %v2502 = vadd.f32 %v2368, %v2470
          %v2503 = vadd.f32 %v2369, %v2471
          %v2504 = vadd.f32 %v2370, %v2470
          %v2505 = vadd.f32 %v2371, %v2471
          %v2506 = vadd.f32 %v2372, %v2470
          %v2507 = vadd.f32 %v2373, %v2471
          %v2508 = vadd.f32 %v2374, %v2470
          %v2509 = vadd.f32 %v2375, %v2471
          %v2510 = vadd.f32 %v2376, %v2470
          %v2511 = vadd.f32 %v2377, %v2471
          %v2512 = vadd.f32 %v2378, %v2470
          %v2513 = vadd.f32 %v2379, %v2471
          %v2514 = vadd.f32 %v2380, %v2470
          %v2515 = vadd.f32 %v2381, %v2471
          %v2516 = vadd.f32 %v2382, %v2470
          %v2517 = vadd.f32 %v2383, %v2471
          %v2518 = vadd.f32 %v2384, %v2470
          %v2519 = vadd.f32 %v2385, %v2471
          %v2520 = vadd.f32 %v2386, %v2470
          %v2521 = vadd.f32 %v2387, %v2471
          %v2522 = vadd.f32 %v2388, %v2470
          %v2523 = vadd.f32 %v2389, %v2471
          %v2524 = vadd.f32 %v2390, %v2470
          %v2525 = vadd.f32 %v2391, %v2471
          %v2526 = vadd.f32 %v2392, %v2470
          %v2527 = vadd.f32 %v2393, %v2471
          %v2528 = vadd.f32 %v2394, %v2470
          %v2529 = vadd.f32 %v2395, %v2471
          %v2530 = vadd.f32 %v2396, %v2470
          %v2531 = vadd.f32 %v2397, %v2471
          %v2532 = vadd.f32 %v2398, %v2470
          %v2533 = vadd.f32 %v2399, %v2471
          %v2534 = vadd.f32 %v2400, %v2470
          %v2535 = vadd.f32 %v2401, %v2471
          %v2536 = vadd.f32 %v2402, %v2470
          %v2537 = vadd.f32 %v2403, %v2471
          %v2538 = vadd.f32 %v2404, %v2470
          %v2539 = vadd.f32 %v2405, %v2471
          %v2540 = vadd.f32 %v2406, %v2470
          %v2541 = vadd.f32 %v2407, %v2471
          %v2542 = vadd.f32 %v2408, %v2470
          %v2543 = vadd.f32 %v2409, %v2471
          %v2544 = vadd.f32 %v2410, %v2470
          %v2545 = vadd.f32 %v2411, %v2471
          %v2546 = vadd.f32 %v2412, %v2470
          %v2547 = vadd.f32 %v2413, %v2471
          %v2548 = vadd.f32 %v2414, %v2470
          %v2549 = vadd.f32 %v2415, %v2471
          %v2550 = vadd.f32 %v2416, %v2470
          %v2551 = vadd.f32 %v2417, %v2471
          %v2552 = vadd.f32 %v2418, %v2470
          %v2553 = vadd.f32 %v2419, %v2471
          %v2554 = vadd.f32 %v2420, %v2470
          %v2555 = vadd.f32 %v2421, %v2471
          %v2556 = vadd.f32 %v2422, %v2470
          %v2557 = vadd.f32 %v2423, %v2471
          %v2558 = vadd.f32 %v2424, %v2470
          %v2559 = vadd.f32 %v2425, %v2471
          %v2560 = vadd.f32 %v2426, %v2470
          %v2561 = vadd.f32 %v2427, %v2471
          %v2562 = vadd.f32 %v2428, %v2470
          %v2563 = vadd.f32 %v2429, %v2471
          %v2564 = vadd.f32 %v2430, %v2470
          %v2565 = vadd.f32 %v2431, %v2471
          %v2566 = vadd.f32 %v2432, %v2470
          %v2567 = vadd.f32 %v2433, %v2471
          %v2568 = vadd.f32 %v2434, %v2470
          %v2569 = vadd.f32 %v2435, %v2471
          %v2570 = vadd.f32 %v2436, %v2470
          %v2571 = vadd.f32 %v2437, %v2471
          %v2572 = vadd.f32 %v2438, %v2470
          %v2573 = vadd.f32 %v2439, %v2471
          %v2574 = vadd.f32 %v2440, %v2470
          %v2575 = vadd.f32 %v2441, %v2471
          %v2576 = vadd.f32 %v2442, %v2470
          %v2577 = vadd.f32 %v2443, %v2471
          %v2578 = vadd.f32 %v2444, %v2470
          %v2579 = vadd.f32 %v2445, %v2471
          %v2580 = vadd.f32 %v2446, %v2470
          %v2581 = vadd.f32 %v2447, %v2471
          %v2582 = vadd.f32 %v2448, %v2470
          %v2583 = vadd.f32 %v2449, %v2471
          %v2584 = vadd.f32 %v2450, %v2470
          %v2585 = vadd.f32 %v2451, %v2471
          %v2586 = vadd.f32 %v2452, %v2470
          %v2587 = vadd.f32 %v2453, %v2471
          %v2588 = vadd.f32 %v2454, %v2470
          %v2589 = vadd.f32 %v2455, %v2471
          %v2590 = vadd.f32 %v2456, %v2470
          %v2591 = vadd.f32 %v2457, %v2471
          %v2592 = vadd.f32 %v2458, %v2470
          %v2593 = vadd.f32 %v2459, %v2471
          %v2594 = vadd.f32 %v2460, %v2470
          %v2595 = vadd.f32 %v2461, %v2471
          %v2596 = vadd.f32 %v2462, %v2470
          %v2597 = vadd.f32 %v2463, %v2471
          %v2598 = vadd.f32 %v2464, %v2470
          %v2599 = vadd.f32 %v2465, %v2471
          %v2600 = vadd.f32 %v2466, %v2470
          %v2601 = vadd.f32 %v2467, %v2471
          %v2602 = vpack.c.bf16 %v2476, %v2474
          %v2603 = vpack.c.bf16 %v2477, %v2475
          %v2604 = vpack.c.bf16 %v2480, %v2478
          %v2605 = vpack.c.bf16 %v2481, %v2479
          %v2606 = vpack.c.bf16 %v2484, %v2482
          %v2607 = vpack.c.bf16 %v2485, %v2483
          %v2608 = vpack.c.bf16 %v2488, %v2486
          %v2609 = vpack.c.bf16 %v2489, %v2487
          %v2610 = vpack.c.bf16 %v2492, %v2490
          %v2611 = vpack.c.bf16 %v2493, %v2491
          %v2612 = vpack.c.bf16 %v2496, %v2494
          %v2613 = vpack.c.bf16 %v2497, %v2495
          %v2614 = vpack.c.bf16 %v2500, %v2498
          %v2615 = vpack.c.bf16 %v2501, %v2499
          %v2616 = vpack.c.bf16 %v2504, %v2502
          %v2617 = vpack.c.bf16 %v2505, %v2503
          %v2618 = vpack.c.bf16 %v2508, %v2506
          %v2619 = vpack.c.bf16 %v2509, %v2507
          %v2620 = vpack.c.bf16 %v2512, %v2510
          %v2621 = vpack.c.bf16 %v2513, %v2511
          %v2622 = vpack.c.bf16 %v2516, %v2514
          %v2623 = vpack.c.bf16 %v2517, %v2515
          %v2624 = vpack.c.bf16 %v2520, %v2518
          %v2625 = vpack.c.bf16 %v2521, %v2519
          %v2626 = vpack.c.bf16 %v2524, %v2522
          %v2627 = vpack.c.bf16 %v2525, %v2523
          %v2628 = vpack.c.bf16 %v2528, %v2526
          %v2629 = vpack.c.bf16 %v2529, %v2527
          %v2630 = vpack.c.bf16 %v2532, %v2530
          %v2631 = vpack.c.bf16 %v2533, %v2531
          %v2632 = vpack.c.bf16 %v2536, %v2534
          %v2633 = vpack.c.bf16 %v2537, %v2535
          %v2634 = vpack.c.bf16 %v2540, %v2538
          %v2635 = vpack.c.bf16 %v2541, %v2539
          %v2636 = vpack.c.bf16 %v2544, %v2542
          %v2637 = vpack.c.bf16 %v2545, %v2543
          %v2638 = vpack.c.bf16 %v2548, %v2546
          %v2639 = vpack.c.bf16 %v2549, %v2547
          %v2640 = vpack.c.bf16 %v2552, %v2550
          %v2641 = vpack.c.bf16 %v2553, %v2551
          %v2642 = vpack.c.bf16 %v2556, %v2554
          %v2643 = vpack.c.bf16 %v2557, %v2555
          %v2644 = vpack.c.bf16 %v2560, %v2558
          %v2645 = vpack.c.bf16 %v2561, %v2559
          %v2646 = vpack.c.bf16 %v2564, %v2562
          %v2647 = vpack.c.bf16 %v2565, %v2563
          %v2648 = vpack.c.bf16 %v2568, %v2566
          %v2649 = vpack.c.bf16 %v2569, %v2567
          %v2650 = vpack.c.bf16 %v2572, %v2570
          %v2651 = vpack.c.bf16 %v2573, %v2571
          %v2652 = vpack.c.bf16 %v2576, %v2574
          %v2653 = vpack.c.bf16 %v2577, %v2575
          %v2654 = vpack.c.bf16 %v2580, %v2578
          %v2655 = vpack.c.bf16 %v2581, %v2579
          %v2656 = vpack.c.bf16 %v2584, %v2582
          %v2657 = vpack.c.bf16 %v2585, %v2583
          %v2658 = vpack.c.bf16 %v2588, %v2586
          %v2659 = vpack.c.bf16 %v2589, %v2587
          %v2660 = vpack.c.bf16 %v2592, %v2590
          %v2661 = vpack.c.bf16 %v2593, %v2591
          %v2662 = vpack.c.bf16 %v2596, %v2594
          %v2663 = vpack.c.bf16 %v2597, %v2595
          %v2664 = vpack.c.bf16 %v2600, %v2598
          %v2665 = vpack.c.bf16 %v2601, %v2599
          %v2666 = vld [vmem:[#allocation18] sm:$0xff]
          %v2667 = vld [vmem:[#allocation18 + $0x8] sm:$0xff]
          %v2668 = vld [vmem:[#allocation18 + $0x10] sm:$0xff]
          %v2669 = vld [vmem:[#allocation18 + $0x18] sm:$0xff]
          %v2670 = vld [vmem:[#allocation18 + $0x20] sm:$0xff]
          %v2671 = vld [vmem:[#allocation18 + $0x28] sm:$0xff]
          %v2672 = vld [vmem:[#allocation18 + $0x30] sm:$0xff]
          %v2673 = vld [vmem:[#allocation18 + $0x38] sm:$0xff]
          %v2674 = vld [vmem:[#allocation18 + $0x40] sm:$0xff]
          %v2675 = vld [vmem:[#allocation18 + $0x48] sm:$0xff]
          %v2676 = vld [vmem:[#allocation18 + $0x50] sm:$0xff]
          %v2677 = vld [vmem:[#allocation18 + $0x58] sm:$0xff]
          %v2678 = vld [vmem:[#allocation18 + $0x60] sm:$0xff]
          %v2679 = vld [vmem:[#allocation18 + $0x68] sm:$0xff]
          %v2680 = vld [vmem:[#allocation18 + $0x70] sm:$0xff]
          %v2681 = vld [vmem:[#allocation18 + $0x78] sm:$0xff]
          %v2682 = vld [vmem:[#allocation18 + $0x80] sm:$0xff]
          %v2683 = vld [vmem:[#allocation18 + $0x88] sm:$0xff]
          %v2684 = vld [vmem:[#allocation18 + $0x90] sm:$0xff]
          %v2685 = vld [vmem:[#allocation18 + $0x98] sm:$0xff]
          %v2686 = vld [vmem:[#allocation18 + $0xa0] sm:$0xff]
          %v2687 = vld [vmem:[#allocation18 + $0xa8] sm:$0xff]
          %v2688 = vld [vmem:[#allocation18 + $0xb0] sm:$0xff]
          %v2689 = vld [vmem:[#allocation18 + $0xb8] sm:$0xff]
          %v2690 = vld [vmem:[#allocation18 + $0xc0] sm:$0xff]
          %v2691 = vld [vmem:[#allocation18 + $0xc8] sm:$0xff]
          %v2692 = vld [vmem:[#allocation18 + $0xd0] sm:$0xff]
          %v2693 = vld [vmem:[#allocation18 + $0xd8] sm:$0xff]
          %v2694 = vld [vmem:[#allocation18 + $0xe0] sm:$0xff]
          %v2695 = vld [vmem:[#allocation18 + $0xe8] sm:$0xff]
          %v2696 = vld [vmem:[#allocation18 + $0xf0] sm:$0xff]
          %v2697 = vld [vmem:[#allocation18 + $0xf8] sm:$0xff]
          %v2698 = vld [vmem:[%s6] sm:$0x3]
          %v2700 = vperm.slane %v2698, 0
          %v2701 = vperm.slane %v2698, 1
          %v2736 = vunpack.c.l.b16 %v2666
          %v2737 = vunpack.c.h.b16 %v2666
          %v2738 = vunpack.c.l.b16 %v2667
          %v2739 = vunpack.c.h.b16 %v2667
          %v2740 = vunpack.c.l.b16 %v2668
          %v2741 = vunpack.c.h.b16 %v2668
          %v2742 = vunpack.c.l.b16 %v2669
          %v2743 = vunpack.c.h.b16 %v2669
          %v2744 = vunpack.c.l.b16 %v2670
          %v2745 = vunpack.c.h.b16 %v2670
          %v2746 = vunpack.c.l.b16 %v2671
          %v2747 = vunpack.c.h.b16 %v2671
          %v2748 = vunpack.c.l.b16 %v2672
          %v2749 = vunpack.c.h.b16 %v2672
          %v2750 = vunpack.c.l.b16 %v2673
          %v2751 = vunpack.c.h.b16 %v2673
          %v2752 = vunpack.c.l.b16 %v2674
          %v2753 = vunpack.c.h.b16 %v2674
          %v2754 = vunpack.c.l.b16 %v2675
          %v2755 = vunpack.c.h.b16 %v2675
          %v2756 = vunpack.c.l.b16 %v2676
          %v2757 = vunpack.c.h.b16 %v2676
          %v2758 = vunpack.c.l.b16 %v2677
          %v2759 = vunpack.c.h.b16 %v2677
          %v2760 = vunpack.c.l.b16 %v2678
          %v2761 = vunpack.c.h.b16 %v2678
          %v2762 = vunpack.c.l.b16 %v2679
          %v2763 = vunpack.c.h.b16 %v2679
          %v2764 = vunpack.c.l.b16 %v2680
          %v2765 = vunpack.c.h.b16 %v2680
          %v2766 = vunpack.c.l.b16 %v2681
          %v2767 = vunpack.c.h.b16 %v2681
          %v2768 = vunpack.c.l.b16 %v2682
          %v2769 = vunpack.c.h.b16 %v2682
          %v2770 = vunpack.c.l.b16 %v2683
          %v2771 = vunpack.c.h.b16 %v2683
          %v2772 = vunpack.c.l.b16 %v2684
          %v2773 = vunpack.c.h.b16 %v2684
          %v2774 = vunpack.c.l.b16 %v2685
          %v2775 = vunpack.c.h.b16 %v2685
          %v2776 = vunpack.c.l.b16 %v2686
          %v2777 = vunpack.c.h.b16 %v2686
          %v2778 = vunpack.c.l.b16 %v2687
          %v2779 = vunpack.c.h.b16 %v2687
          %v2780 = vunpack.c.l.b16 %v2688
          %v2781 = vunpack.c.h.b16 %v2688
          %v2782 = vunpack.c.l.b16 %v2689
          %v2783 = vunpack.c.h.b16 %v2689
          %v2784 = vunpack.c.l.b16 %v2690
          %v2785 = vunpack.c.h.b16 %v2690
          %v2786 = vunpack.c.l.b16 %v2691
          %v2787 = vunpack.c.h.b16 %v2691
          %v2788 = vunpack.c.l.b16 %v2692
          %v2789 = vunpack.c.h.b16 %v2692
          %v2790 = vunpack.c.l.b16 %v2693
          %v2791 = vunpack.c.h.b16 %v2693
          %v2792 = vunpack.c.l.b16 %v2694
          %v2793 = vunpack.c.h.b16 %v2694
          %v2794 = vunpack.c.l.b16 %v2695
          %v2795 = vunpack.c.h.b16 %v2695
          %v2796 = vunpack.c.l.b16 %v2696
          %v2797 = vunpack.c.h.b16 %v2696
          %v2798 = vunpack.c.l.b16 %v2697
          %v2799 = vunpack.c.h.b16 %v2697
          %v2800 = vpack.c.b16 %v2738, %v2736
          %v2801 = vpack.c.b16 %v2739, %v2737
          %v2802 = vpack.c.b16 %v2742, %v2740
          %v2803 = vpack.c.b16 %v2743, %v2741
          %v2804 = vpack.c.b16 %v2746, %v2744
          %v2805 = vpack.c.b16 %v2747, %v2745
          %v2806 = vpack.c.b16 %v2750, %v2748
          %v2807 = vpack.c.b16 %v2751, %v2749
          %v2808 = vpack.c.b16 %v2754, %v2752
          %v2809 = vpack.c.b16 %v2755, %v2753
          %v2810 = vpack.c.b16 %v2758, %v2756
          %v2811 = vpack.c.b16 %v2759, %v2757
          %v2812 = vpack.c.b16 %v2762, %v2760
          %v2813 = vpack.c.b16 %v2763, %v2761
          %v2814 = vpack.c.b16 %v2766, %v2764
          %v2815 = vpack.c.b16 %v2767, %v2765
          %v2816 = vpack.c.b16 %v2770, %v2768
          %v2817 = vpack.c.b16 %v2771, %v2769
          %v2818 = vpack.c.b16 %v2774, %v2772
          %v2819 = vpack.c.b16 %v2775, %v2773
          %v2820 = vpack.c.b16 %v2778, %v2776
          %v2821 = vpack.c.b16 %v2779, %v2777
          %v2822 = vpack.c.b16 %v2782, %v2780
          %v2823 = vpack.c.b16 %v2783, %v2781
          %v2824 = vpack.c.b16 %v2786, %v2784
          %v2825 = vpack.c.b16 %v2787, %v2785
          %v2826 = vpack.c.b16 %v2790, %v2788
          %v2827 = vpack.c.b16 %v2791, %v2789
          %v2828 = vpack.c.b16 %v2794, %v2792
          %v2829 = vpack.c.b16 %v2795, %v2793
          %v2830 = vpack.c.b16 %v2798, %v2796
          %v2831 = vpack.c.b16 %v2799, %v2797
          %2864 = vmatpush.bf16.msra.mxu0 %v2814
          %2865 = vmatpush.bf16.msra.mxu0 %v2812
          %2866 = vmatpush.bf16.msra.mxu0 %v2810
          %2867 = vmatpush.bf16.msra.mxu0 %v2808
          %2868 = vmatpush.bf16.msra.mxu0 %v2806
          %2869 = vmatpush.bf16.msra.mxu0 %v2804
          %2870 = vmatpush.bf16.msra.mxu0 %v2802
          %2871 = vmatpush.bf16.msra.mxu0 %v2800
          %2872 = vmatmul.bf16.gmra.mxu0 %v2602
          %v2873 = vpop.f32.mrf.mxu0
          %v2874 = vadd.f32 %v2700, %v2873
          %v2875 = vpop.f32.mrf.mxu0
          %v2876 = vadd.f32 %v2700, %v2875
          %2877 = vmatmul.bf16.gmra.mxu0 %v2604
          %v2878 = vpop.f32.mrf.mxu0
          %v2879 = vadd.f32 %v2700, %v2878
          %v2880 = vpop.f32.mrf.mxu0
          %v2881 = vadd.f32 %v2700, %v2880
          %2882 = vmatmul.bf16.gmra.mxu0 %v2606
          %v2883 = vpop.f32.mrf.mxu0
          %v2884 = vadd.f32 %v2700, %v2883
          %v2885 = vpop.f32.mrf.mxu0
          %v2886 = vadd.f32 %v2700, %v2885
          %2887 = vmatmul.bf16.gmra.mxu0 %v2608
          %v2888 = vpop.f32.mrf.mxu0
          %v2889 = vadd.f32 %v2700, %v2888
          %v2890 = vpop.f32.mrf.mxu0
          %v2891 = vadd.f32 %v2700, %v2890
          %2892 = vmatmul.bf16.gmra.mxu0 %v2610
          %v2893 = vpop.f32.mrf.mxu0
          %v2894 = vadd.f32 %v2700, %v2893
          %v2895 = vpop.f32.mrf.mxu0
          %v2896 = vadd.f32 %v2700, %v2895
          %2897 = vmatmul.bf16.gmra.mxu0 %v2612
          %v2898 = vpop.f32.mrf.mxu0
          %v2899 = vadd.f32 %v2700, %v2898
          %v2900 = vpop.f32.mrf.mxu0
          %v2901 = vadd.f32 %v2700, %v2900
          %2902 = vmatmul.bf16.gmra.mxu0 %v2614
          %v2903 = vpop.f32.mrf.mxu0
          %v2904 = vadd.f32 %v2700, %v2903
          %v2905 = vpop.f32.mrf.mxu0
          %v2906 = vadd.f32 %v2700, %v2905
          %2907 = vmatmul.bf16.gmra.mxu0 %v2616
          %v2908 = vpop.f32.mrf.mxu0
          %v2909 = vadd.f32 %v2700, %v2908
          %v2910 = vpop.f32.mrf.mxu0
          %v2911 = vadd.f32 %v2700, %v2910
          %2912 = vmatmul.bf16.gmra.mxu0 %v2618
          %v2913 = vpop.f32.mrf.mxu0
          %v2914 = vadd.f32 %v2700, %v2913
          %v2915 = vpop.f32.mrf.mxu0
          %v2916 = vadd.f32 %v2700, %v2915
          %2917 = vmatmul.bf16.gmra.mxu0 %v2620
          %v2918 = vpop.f32.mrf.mxu0
          %v2919 = vadd.f32 %v2700, %v2918
          %v2920 = vpop.f32.mrf.mxu0
          %v2921 = vadd.f32 %v2700, %v2920
          %2922 = vmatmul.bf16.gmra.mxu0 %v2622
          %v2923 = vpop.f32.mrf.mxu0
          %v2924 = vadd.f32 %v2700, %v2923
          %v2925 = vpop.f32.mrf.mxu0
          %v2926 = vadd.f32 %v2700, %v2925
          %2927 = vmatmul.bf16.gmra.mxu0 %v2624
          %v2928 = vpop.f32.mrf.mxu0
          %v2929 = vadd.f32 %v2700, %v2928
          %v2930 = vpop.f32.mrf.mxu0
          %v2931 = vadd.f32 %v2700, %v2930
          %2932 = vmatmul.bf16.gmra.mxu0 %v2626
          %v2933 = vpop.f32.mrf.mxu0
          %v2934 = vadd.f32 %v2700, %v2933
          %v2935 = vpop.f32.mrf.mxu0
          %v2936 = vadd.f32 %v2700, %v2935
          %2937 = vmatmul.bf16.gmra.mxu0 %v2628
          %v2938 = vpop.f32.mrf.mxu0
          %v2939 = vadd.f32 %v2700, %v2938
          %v2940 = vpop.f32.mrf.mxu0
          %v2941 = vadd.f32 %v2700, %v2940
          %2942 = vmatmul.bf16.gmra.mxu0 %v2630
          %v2943 = vpop.f32.mrf.mxu0
          %v2944 = vadd.f32 %v2700, %v2943
          %v2945 = vpop.f32.mrf.mxu0
          %v2946 = vadd.f32 %v2700, %v2945
          %2947 = vmatmul.bf16.gmra.mxu0 %v2632
          %v2948 = vpop.f32.mrf.mxu0
          %v2949 = vadd.f32 %v2700, %v2948
          %v2950 = vpop.f32.mrf.mxu0
          %v2951 = vadd.f32 %v2700, %v2950
          %2952 = vmatmul.bf16.gmra.mxu0 %v2634
          %v2953 = vpop.f32.mrf.mxu0
          %v2954 = vadd.f32 %v2700, %v2953
          %v2955 = vpop.f32.mrf.mxu0
          %v2956 = vadd.f32 %v2700, %v2955
          %2957 = vmatmul.bf16.gmra.mxu0 %v2636
          %v2958 = vpop.f32.mrf.mxu0
          %v2959 = vadd.f32 %v2700, %v2958
          %v2960 = vpop.f32.mrf.mxu0
          %v2961 = vadd.f32 %v2700, %v2960
          %2962 = vmatmul.bf16.gmra.mxu0 %v2638
          %v2963 = vpop.f32.mrf.mxu0
          %v2964 = vadd.f32 %v2700, %v2963
          %v2965 = vpop.f32.mrf.mxu0
          %v2966 = vadd.f32 %v2700, %v2965
          %2967 = vmatmul.bf16.gmra.mxu0 %v2640
          %v2968 = vpop.f32.mrf.mxu0
          %v2969 = vadd.f32 %v2700, %v2968
          %v2970 = vpop.f32.mrf.mxu0
          %v2971 = vadd.f32 %v2700, %v2970
          %2972 = vmatmul.bf16.gmra.mxu0 %v2642
          %v2973 = vpop.f32.mrf.mxu0
          %v2974 = vadd.f32 %v2700, %v2973
          %v2975 = vpop.f32.mrf.mxu0
          %v2976 = vadd.f32 %v2700, %v2975
          %2977 = vmatmul.bf16.gmra.mxu0 %v2644
          %v2978 = vpop.f32.mrf.mxu0
          %v2979 = vadd.f32 %v2700, %v2978
          %v2980 = vpop.f32.mrf.mxu0
          %v2981 = vadd.f32 %v2700, %v2980
          %2982 = vmatmul.bf16.gmra.mxu0 %v2646
          %v2983 = vpop.f32.mrf.mxu0
          %v2984 = vadd.f32 %v2700, %v2983
          %v2985 = vpop.f32.mrf.mxu0
          %v2986 = vadd.f32 %v2700, %v2985
          %2987 = vmatmul.bf16.gmra.mxu0 %v2648
          %v2988 = vpop.f32.mrf.mxu0
          %v2989 = vadd.f32 %v2700, %v2988
          %v2990 = vpop.f32.mrf.mxu0
          %v2991 = vadd.f32 %v2700, %v2990
          %2992 = vmatmul.bf16.gmra.mxu0 %v2650
          %v2993 = vpop.f32.mrf.mxu0
          %v2994 = vadd.f32 %v2700, %v2993
          %v2995 = vpop.f32.mrf.mxu0
          %v2996 = vadd.f32 %v2700, %v2995
          %2997 = vmatmul.bf16.gmra.mxu0 %v2652
          %v2998 = vpop.f32.mrf.mxu0
          %v2999 = vadd.f32 %v2700, %v2998
          %v3000 = vpop.f32.mrf.mxu0
          %v3001 = vadd.f32 %v2700, %v3000
          %3002 = vmatmul.bf16.gmra.mxu0 %v2654
          %v3003 = vpop.f32.mrf.mxu0
          %v3004 = vadd.f32 %v2700, %v3003
          %v3005 = vpop.f32.mrf.mxu0
          %v3006 = vadd.f32 %v2700, %v3005
          %3007 = vmatmul.bf16.gmra.mxu0 %v2656
          %v3008 = vpop.f32.mrf.mxu0
          %v3009 = vadd.f32 %v2700, %v3008
          %v3010 = vpop.f32.mrf.mxu0
          %v3011 = vadd.f32 %v2700, %v3010
          %3012 = vmatmul.bf16.gmra.mxu0 %v2658
          %v3013 = vpop.f32.mrf.mxu0
          %v3014 = vadd.f32 %v2700, %v3013
          %v3015 = vpop.f32.mrf.mxu0
          %v3016 = vadd.f32 %v2700, %v3015
          %3017 = vmatmul.bf16.gmra.mxu0 %v2660
          %v3018 = vpop.f32.mrf.mxu0
          %v3019 = vadd.f32 %v2700, %v3018
          %v3020 = vpop.f32.mrf.mxu0
          %v3021 = vadd.f32 %v2700, %v3020
          %3022 = vmatmul.bf16.gmra.mxu0 %v2662
          %v3023 = vpop.f32.mrf.mxu0
          %v3024 = vadd.f32 %v2700, %v3023
          %v3025 = vpop.f32.mrf.mxu0
          %v3026 = vadd.f32 %v2700, %v3025
          %3027 = vmatmul.bf16.gmra.mxu0 %v2664
          %v3028 = vpop.f32.mrf.mxu0
          %v3029 = vadd.f32 %v2700, %v3028
          %v3030 = vpop.f32.mrf.mxu0
          %v3031 = vadd.f32 %v2700, %v3030
          %3032 = vdwg.mxu0
          %3033 = vmatpush.bf16.msra.mxu0 %v2830
          %3034 = vmatpush.bf16.msra.mxu0 %v2828
          %3035 = vmatpush.bf16.msra.mxu0 %v2826
          %3036 = vmatpush.bf16.msra.mxu0 %v2824
          %3037 = vmatpush.bf16.msra.mxu0 %v2822
          %3038 = vmatpush.bf16.msra.mxu0 %v2820
          %3039 = vmatpush.bf16.msra.mxu0 %v2818
          %3040 = vmatpush.bf16.msra.mxu0 %v2816
          %3041 = vmatmul.bf16.gmra.mxu0 %v2603
          %v3042 = vpop.f32.mrf.mxu0
          %v3043 = vadd.f32 %v2874, %v3042
          %v3044 = vpop.f32.mrf.mxu0
          %v3045 = vadd.f32 %v2876, %v3044
          %3046 = vmatmul.bf16.gmra.mxu0 %v2605
          %v3047 = vpop.f32.mrf.mxu0
          %v3048 = vadd.f32 %v2879, %v3047
          %v3049 = vpop.f32.mrf.mxu0
          %v3050 = vadd.f32 %v2881, %v3049
          %3051 = vmatmul.bf16.gmra.mxu0 %v2607
          %v3052 = vpop.f32.mrf.mxu0
          %v3053 = vadd.f32 %v2884, %v3052
          %v3054 = vpop.f32.mrf.mxu0
          %v3055 = vadd.f32 %v2886, %v3054
          %3056 = vmatmul.bf16.gmra.mxu0 %v2609
          %v3057 = vpop.f32.mrf.mxu0
          %v3058 = vadd.f32 %v2889, %v3057
          %v3059 = vpop.f32.mrf.mxu0
          %v3060 = vadd.f32 %v2891, %v3059
          %3061 = vmatmul.bf16.gmra.mxu0 %v2611
          %v3062 = vpop.f32.mrf.mxu0
          %v3063 = vadd.f32 %v2894, %v3062
          %v3064 = vpop.f32.mrf.mxu0
          %v3065 = vadd.f32 %v2896, %v3064
          %3066 = vmatmul.bf16.gmra.mxu0 %v2613
          %v3067 = vpop.f32.mrf.mxu0
          %v3068 = vadd.f32 %v2899, %v3067
          %v3069 = vpop.f32.mrf.mxu0
          %v3070 = vadd.f32 %v2901, %v3069
          %3071 = vmatmul.bf16.gmra.mxu0 %v2615
          %v3072 = vpop.f32.mrf.mxu0
          %v3073 = vadd.f32 %v2904, %v3072
          %v3074 = vpop.f32.mrf.mxu0
          %v3075 = vadd.f32 %v2906, %v3074
          %3076 = vmatmul.bf16.gmra.mxu0 %v2617
          %v3077 = vpop.f32.mrf.mxu0
          %v3078 = vadd.f32 %v2909, %v3077
          %v3079 = vpop.f32.mrf.mxu0
          %v3080 = vadd.f32 %v2911, %v3079
          %3081 = vmatmul.bf16.gmra.mxu0 %v2619
          %v3082 = vpop.f32.mrf.mxu0
          %v3083 = vadd.f32 %v2914, %v3082
          %v3084 = vpop.f32.mrf.mxu0
          %v3085 = vadd.f32 %v2916, %v3084
          %3086 = vmatmul.bf16.gmra.mxu0 %v2621
          %v3087 = vpop.f32.mrf.mxu0
          %v3088 = vadd.f32 %v2919, %v3087
          %v3089 = vpop.f32.mrf.mxu0
          %v3090 = vadd.f32 %v2921, %v3089
          %3091 = vmatmul.bf16.gmra.mxu0 %v2623
          %v3092 = vpop.f32.mrf.mxu0
          %v3093 = vadd.f32 %v2924, %v3092
          %v3094 = vpop.f32.mrf.mxu0
          %v3095 = vadd.f32 %v2926, %v3094
          %3096 = vmatmul.bf16.gmra.mxu0 %v2625
          %v3097 = vpop.f32.mrf.mxu0
          %v3098 = vadd.f32 %v2929, %v3097
          %v3099 = vpop.f32.mrf.mxu0
          %v3100 = vadd.f32 %v2931, %v3099
          %3101 = vmatmul.bf16.gmra.mxu0 %v2627
          %v3102 = vpop.f32.mrf.mxu0
          %v3103 = vadd.f32 %v2934, %v3102
          %v3104 = vpop.f32.mrf.mxu0
          %v3105 = vadd.f32 %v2936, %v3104
          %3106 = vmatmul.bf16.gmra.mxu0 %v2629
          %v3107 = vpop.f32.mrf.mxu0
          %v3108 = vadd.f32 %v2939, %v3107
          %v3109 = vpop.f32.mrf.mxu0
          %v3110 = vadd.f32 %v2941, %v3109
          %3111 = vmatmul.bf16.gmra.mxu0 %v2631
          %v3112 = vpop.f32.mrf.mxu0
          %v3113 = vadd.f32 %v2944, %v3112
          %v3114 = vpop.f32.mrf.mxu0
          %v3115 = vadd.f32 %v2946, %v3114
          %3116 = vmatmul.bf16.gmra.mxu0 %v2633
          %v3117 = vpop.f32.mrf.mxu0
          %v3118 = vadd.f32 %v2949, %v3117
          %v3119 = vpop.f32.mrf.mxu0
          %v3120 = vadd.f32 %v2951, %v3119
          %3121 = vmatmul.bf16.gmra.mxu0 %v2635
          %v3122 = vpop.f32.mrf.mxu0
          %v3123 = vadd.f32 %v2954, %v3122
          %v3124 = vpop.f32.mrf.mxu0
          %v3125 = vadd.f32 %v2956, %v3124
          %3126 = vmatmul.bf16.gmra.mxu0 %v2637
          %v3127 = vpop.f32.mrf.mxu0
          %v3128 = vadd.f32 %v2959, %v3127
          %v3129 = vpop.f32.mrf.mxu0
          %v3130 = vadd.f32 %v2961, %v3129
          %3131 = vmatmul.bf16.gmra.mxu0 %v2639
          %v3132 = vpop.f32.mrf.mxu0
          %v3133 = vadd.f32 %v2964, %v3132
          %v3134 = vpop.f32.mrf.mxu0
          %v3135 = vadd.f32 %v2966, %v3134
          %3136 = vmatmul.bf16.gmra.mxu0 %v2641
          %v3137 = vpop.f32.mrf.mxu0
          %v3138 = vadd.f32 %v2969, %v3137
          %v3139 = vpop.f32.mrf.mxu0
          %v3140 = vadd.f32 %v2971, %v3139
          %3141 = vmatmul.bf16.gmra.mxu0 %v2643
          %v3142 = vpop.f32.mrf.mxu0
          %v3143 = vadd.f32 %v2974, %v3142
          %v3144 = vpop.f32.mrf.mxu0
          %v3145 = vadd.f32 %v2976, %v3144
          %3146 = vmatmul.bf16.gmra.mxu0 %v2645
          %v3147 = vpop.f32.mrf.mxu0
          %v3148 = vadd.f32 %v2979, %v3147
          %v3149 = vpop.f32.mrf.mxu0
          %v3150 = vadd.f32 %v2981, %v3149
          %3151 = vmatmul.bf16.gmra.mxu0 %v2647
          %v3152 = vpop.f32.mrf.mxu0
          %v3153 = vadd.f32 %v2984, %v3152
          %v3154 = vpop.f32.mrf.mxu0
          %v3155 = vadd.f32 %v2986, %v3154
          %3156 = vmatmul.bf16.gmra.mxu0 %v2649
          %v3157 = vpop.f32.mrf.mxu0
          %v3158 = vadd.f32 %v2989, %v3157
          %v3159 = vpop.f32.mrf.mxu0
          %v3160 = vadd.f32 %v2991, %v3159
          %3161 = vmatmul.bf16.gmra.mxu0 %v2651
          %v3162 = vpop.f32.mrf.mxu0
          %v3163 = vadd.f32 %v2994, %v3162
          %v3164 = vpop.f32.mrf.mxu0
          %v3165 = vadd.f32 %v2996, %v3164
          %3166 = vmatmul.bf16.gmra.mxu0 %v2653
          %v3167 = vpop.f32.mrf.mxu0
          %v3168 = vadd.f32 %v2999, %v3167
          %v3169 = vpop.f32.mrf.mxu0
          %v3170 = vadd.f32 %v3001, %v3169
          %3171 = vmatmul.bf16.gmra.mxu0 %v2655
          %v3172 = vpop.f32.mrf.mxu0
          %v3173 = vadd.f32 %v3004, %v3172
          %v3174 = vpop.f32.mrf.mxu0
          %v3175 = vadd.f32 %v3006, %v3174
          %3176 = vmatmul.bf16.gmra.mxu0 %v2657
          %v3177 = vpop.f32.mrf.mxu0
          %v3178 = vadd.f32 %v3009, %v3177
          %v3179 = vpop.f32.mrf.mxu0
          %v3180 = vadd.f32 %v3011, %v3179
          %3181 = vmatmul.bf16.gmra.mxu0 %v2659
          %v3182 = vpop.f32.mrf.mxu0
          %v3183 = vadd.f32 %v3014, %v3182
          %v3184 = vpop.f32.mrf.mxu0
          %v3185 = vadd.f32 %v3016, %v3184
          %3186 = vmatmul.bf16.gmra.mxu0 %v2661
          %v3187 = vpop.f32.mrf.mxu0
          %v3188 = vadd.f32 %v3019, %v3187
          %v3189 = vpop.f32.mrf.mxu0
          %v3190 = vadd.f32 %v3021, %v3189
          %3191 = vmatmul.bf16.gmra.mxu0 %v2663
          %v3192 = vpop.f32.mrf.mxu0
          %v3193 = vadd.f32 %v3024, %v3192
          %v3194 = vpop.f32.mrf.mxu0
          %v3195 = vadd.f32 %v3026, %v3194
          %3196 = vmatmul.bf16.gmra.mxu0 %v2665
          %v3197 = vpop.f32.mrf.mxu0
          %v3198 = vadd.f32 %v3029, %v3197
          %v3199 = vpop.f32.mrf.mxu0
          %v3200 = vadd.f32 %v3031, %v3199
          %3201 = vdwg.mxu0
          %3202 = vmatpush.bf16.msra.mxu0 %v2815
          %3203 = vmatpush.bf16.msra.mxu0 %v2813
          %3204 = vmatpush.bf16.msra.mxu0 %v2811
          %3205 = vmatpush.bf16.msra.mxu0 %v2809
          %3206 = vmatpush.bf16.msra.mxu0 %v2807
          %3207 = vmatpush.bf16.msra.mxu0 %v2805
          %3208 = vmatpush.bf16.msra.mxu0 %v2803
          %3209 = vmatpush.bf16.msra.mxu0 %v2801
          %3210 = vmatmul.bf16.gmra.mxu0 %v2602
          %v3211 = vpop.f32.mrf.mxu0
          %v3212 = vadd.f32 %v2701, %v3211
          %v3213 = vpop.f32.mrf.mxu0
          %v3214 = vadd.f32 %v2701, %v3213
          %3215 = vmatmul.bf16.gmra.mxu0 %v2604
          %v3216 = vpop.f32.mrf.mxu0
          %v3217 = vadd.f32 %v2701, %v3216
          %v3218 = vpop.f32.mrf.mxu0
          %v3219 = vadd.f32 %v2701, %v3218
          %3220 = vmatmul.bf16.gmra.mxu0 %v2606
          %v3221 = vpop.f32.mrf.mxu0
          %v3222 = vadd.f32 %v2701, %v3221
          %v3223 = vpop.f32.mrf.mxu0
          %v3224 = vadd.f32 %v2701, %v3223
          %3225 = vmatmul.bf16.gmra.mxu0 %v2608
          %v3226 = vpop.f32.mrf.mxu0
          %v3227 = vadd.f32 %v2701, %v3226
          %v3228 = vpop.f32.mrf.mxu0
          %v3229 = vadd.f32 %v2701, %v3228
          %3230 = vmatmul.bf16.gmra.mxu0 %v2610
          %v3231 = vpop.f32.mrf.mxu0
          %v3232 = vadd.f32 %v2701, %v3231
          %v3233 = vpop.f32.mrf.mxu0
          %v3234 = vadd.f32 %v2701, %v3233
          %3235 = vmatmul.bf16.gmra.mxu0 %v2612
          %v3236 = vpop.f32.mrf.mxu0
          %v3237 = vadd.f32 %v2701, %v3236
          %v3238 = vpop.f32.mrf.mxu0
          %v3239 = vadd.f32 %v2701, %v3238
          %3240 = vmatmul.bf16.gmra.mxu0 %v2614
          %v3241 = vpop.f32.mrf.mxu0
          %v3242 = vadd.f32 %v2701, %v3241
          %v3243 = vpop.f32.mrf.mxu0
          %v3244 = vadd.f32 %v2701, %v3243
          %3245 = vmatmul.bf16.gmra.mxu0 %v2616
          %v3246 = vpop.f32.mrf.mxu0
          %v3247 = vadd.f32 %v2701, %v3246
          %v3248 = vpop.f32.mrf.mxu0
          %v3249 = vadd.f32 %v2701, %v3248
          %3250 = vmatmul.bf16.gmra.mxu0 %v2618
          %v3251 = vpop.f32.mrf.mxu0
          %v3252 = vadd.f32 %v2701, %v3251
          %v3253 = vpop.f32.mrf.mxu0
          %v3254 = vadd.f32 %v2701, %v3253
          %3255 = vmatmul.bf16.gmra.mxu0 %v2620
          %v3256 = vpop.f32.mrf.mxu0
          %v3257 = vadd.f32 %v2701, %v3256
          %v3258 = vpop.f32.mrf.mxu0
          %v3259 = vadd.f32 %v2701, %v3258
          %3260 = vmatmul.bf16.gmra.mxu0 %v2622
          %v3261 = vpop.f32.mrf.mxu0
          %v3262 = vadd.f32 %v2701, %v3261
          %v3263 = vpop.f32.mrf.mxu0
          %v3264 = vadd.f32 %v2701, %v3263
          %3265 = vmatmul.bf16.gmra.mxu0 %v2624
          %v3266 = vpop.f32.mrf.mxu0
          %v3267 = vadd.f32 %v2701, %v3266
          %v3268 = vpop.f32.mrf.mxu0
          %v3269 = vadd.f32 %v2701, %v3268
          %3270 = vmatmul.bf16.gmra.mxu0 %v2626
          %v3271 = vpop.f32.mrf.mxu0
          %v3272 = vadd.f32 %v2701, %v3271
          %v3273 = vpop.f32.mrf.mxu0
          %v3274 = vadd.f32 %v2701, %v3273
          %3275 = vmatmul.bf16.gmra.mxu0 %v2628
          %v3276 = vpop.f32.mrf.mxu0
          %v3277 = vadd.f32 %v2701, %v3276
          %v3278 = vpop.f32.mrf.mxu0
          %v3279 = vadd.f32 %v2701, %v3278
          %3280 = vmatmul.bf16.gmra.mxu0 %v2630
          %v3281 = vpop.f32.mrf.mxu0
          %v3282 = vadd.f32 %v2701, %v3281
          %v3283 = vpop.f32.mrf.mxu0
          %v3284 = vadd.f32 %v2701, %v3283
          %3285 = vmatmul.bf16.gmra.mxu0 %v2632
          %v3286 = vpop.f32.mrf.mxu0
          %v3287 = vadd.f32 %v2701, %v3286
          %v3288 = vpop.f32.mrf.mxu0
          %v3289 = vadd.f32 %v2701, %v3288
          %3290 = vmatmul.bf16.gmra.mxu0 %v2634
          %v3291 = vpop.f32.mrf.mxu0
          %v3292 = vadd.f32 %v2701, %v3291
          %v3293 = vpop.f32.mrf.mxu0
          %v3294 = vadd.f32 %v2701, %v3293
          %3295 = vmatmul.bf16.gmra.mxu0 %v2636
          %v3296 = vpop.f32.mrf.mxu0
          %v3297 = vadd.f32 %v2701, %v3296
          %v3298 = vpop.f32.mrf.mxu0
          %v3299 = vadd.f32 %v2701, %v3298
          %3300 = vmatmul.bf16.gmra.mxu0 %v2638
          %v3301 = vpop.f32.mrf.mxu0
          %v3302 = vadd.f32 %v2701, %v3301
          %v3303 = vpop.f32.mrf.mxu0
          %v3304 = vadd.f32 %v2701, %v3303
          %3305 = vmatmul.bf16.gmra.mxu0 %v2640
          %v3306 = vpop.f32.mrf.mxu0
          %v3307 = vadd.f32 %v2701, %v3306
          %v3308 = vpop.f32.mrf.mxu0
          %v3309 = vadd.f32 %v2701, %v3308
          %3310 = vmatmul.bf16.gmra.mxu0 %v2642
          %v3311 = vpop.f32.mrf.mxu0
          %v3312 = vadd.f32 %v2701, %v3311
          %v3313 = vpop.f32.mrf.mxu0
          %v3314 = vadd.f32 %v2701, %v3313
          %3315 = vmatmul.bf16.gmra.mxu0 %v2644
          %v3316 = vpop.f32.mrf.mxu0
          %v3317 = vadd.f32 %v2701, %v3316
          %v3318 = vpop.f32.mrf.mxu0
          %v3319 = vadd.f32 %v2701, %v3318
          %3320 = vmatmul.bf16.gmra.mxu0 %v2646
          %v3321 = vpop.f32.mrf.mxu0
          %v3322 = vadd.f32 %v2701, %v3321
          %v3323 = vpop.f32.mrf.mxu0
          %v3324 = vadd.f32 %v2701, %v3323
          %3325 = vmatmul.bf16.gmra.mxu0 %v2648
          %v3326 = vpop.f32.mrf.mxu0
          %v3327 = vadd.f32 %v2701, %v3326
          %v3328 = vpop.f32.mrf.mxu0
          %v3329 = vadd.f32 %v2701, %v3328
          %3330 = vmatmul.bf16.gmra.mxu0 %v2650
          %v3331 = vpop.f32.mrf.mxu0
          %v3332 = vadd.f32 %v2701, %v3331
          %v3333 = vpop.f32.mrf.mxu0
          %v3334 = vadd.f32 %v2701, %v3333
          %3335 = vmatmul.bf16.gmra.mxu0 %v2652
          %v3336 = vpop.f32.mrf.mxu0
          %v3337 = vadd.f32 %v2701, %v3336
          %v3338 = vpop.f32.mrf.mxu0
          %v3339 = vadd.f32 %v2701, %v3338
          %3340 = vmatmul.bf16.gmra.mxu0 %v2654
          %v3341 = vpop.f32.mrf.mxu0
          %v3342 = vadd.f32 %v2701, %v3341
          %v3343 = vpop.f32.mrf.mxu0
          %v3344 = vadd.f32 %v2701, %v3343
          %3345 = vmatmul.bf16.gmra.mxu0 %v2656
          %v3346 = vpop.f32.mrf.mxu0
          %v3347 = vadd.f32 %v2701, %v3346
          %v3348 = vpop.f32.mrf.mxu0
          %v3349 = vadd.f32 %v2701, %v3348
          %3350 = vmatmul.bf16.gmra.mxu0 %v2658
          %v3351 = vpop.f32.mrf.mxu0
          %v3352 = vadd.f32 %v2701, %v3351
          %v3353 = vpop.f32.mrf.mxu0
          %v3354 = vadd.f32 %v2701, %v3353
          %3355 = vmatmul.bf16.gmra.mxu0 %v2660
          %v3356 = vpop.f32.mrf.mxu0
          %v3357 = vadd.f32 %v2701, %v3356
          %v3358 = vpop.f32.mrf.mxu0
          %v3359 = vadd.f32 %v2701, %v3358
          %3360 = vmatmul.bf16.gmra.mxu0 %v2662
          %v3361 = vpop.f32.mrf.mxu0
          %v3362 = vadd.f32 %v2701, %v3361
          %v3363 = vpop.f32.mrf.mxu0
          %v3364 = vadd.f32 %v2701, %v3363
          %3365 = vmatmul.bf16.gmra.mxu0 %v2664
          %v3366 = vpop.f32.mrf.mxu0
          %v3367 = vadd.f32 %v2701, %v3366
          %v3368 = vpop.f32.mrf.mxu0
          %v3369 = vadd.f32 %v2701, %v3368
          %3370 = vdwg.mxu0
          %3371 = vmatpush.bf16.msra.mxu0 %v2831
          %3372 = vmatpush.bf16.msra.mxu0 %v2829
          %3373 = vmatpush.bf16.msra.mxu0 %v2827
          %3374 = vmatpush.bf16.msra.mxu0 %v2825
          %3375 = vmatpush.bf16.msra.mxu0 %v2823
          %3376 = vmatpush.bf16.msra.mxu0 %v2821
          %3377 = vmatpush.bf16.msra.mxu0 %v2819
          %3378 = vmatpush.bf16.msra.mxu0 %v2817
          %3379 = vmatmul.bf16.gmra.mxu0 %v2603
          %v3380 = vpop.f32.mrf.mxu0
          %v3381 = vadd.f32 %v3212, %v3380
          %v3382 = vpop.f32.mrf.mxu0
          %v3383 = vadd.f32 %v3214, %v3382
          %3384 = vmatmul.bf16.gmra.mxu0 %v2605
          %v3385 = vpop.f32.mrf.mxu0
          %v3386 = vadd.f32 %v3217, %v3385
          %v3387 = vpop.f32.mrf.mxu0
          %v3388 = vadd.f32 %v3219, %v3387
          %3389 = vmatmul.bf16.gmra.mxu0 %v2607
          %v3390 = vpop.f32.mrf.mxu0
          %v3391 = vadd.f32 %v3222, %v3390
          %v3392 = vpop.f32.mrf.mxu0
          %v3393 = vadd.f32 %v3224, %v3392
          %3394 = vmatmul.bf16.gmra.mxu0 %v2609
          %v3395 = vpop.f32.mrf.mxu0
          %v3396 = vadd.f32 %v3227, %v3395
          %v3397 = vpop.f32.mrf.mxu0
          %v3398 = vadd.f32 %v3229, %v3397
          %3399 = vmatmul.bf16.gmra.mxu0 %v2611
          %v3400 = vpop.f32.mrf.mxu0
          %v3401 = vadd.f32 %v3232, %v3400
          %v3402 = vpop.f32.mrf.mxu0
          %v3403 = vadd.f32 %v3234, %v3402
          %3404 = vmatmul.bf16.gmra.mxu0 %v2613
          %v3405 = vpop.f32.mrf.mxu0
          %v3406 = vadd.f32 %v3237, %v3405
          %v3407 = vpop.f32.mrf.mxu0
          %v3408 = vadd.f32 %v3239, %v3407
          %3409 = vmatmul.bf16.gmra.mxu0 %v2615
          %v3410 = vpop.f32.mrf.mxu0
          %v3411 = vadd.f32 %v3242, %v3410
          %v3412 = vpop.f32.mrf.mxu0
          %v3413 = vadd.f32 %v3244, %v3412
          %3414 = vmatmul.bf16.gmra.mxu0 %v2617
          %v3415 = vpop.f32.mrf.mxu0
          %v3416 = vadd.f32 %v3247, %v3415
          %v3417 = vpop.f32.mrf.mxu0
          %v3418 = vadd.f32 %v3249, %v3417
          %3419 = vmatmul.bf16.gmra.mxu0 %v2619
          %v3420 = vpop.f32.mrf.mxu0
          %v3421 = vadd.f32 %v3252, %v3420
          %v3422 = vpop.f32.mrf.mxu0
          %v3423 = vadd.f32 %v3254, %v3422
          %3424 = vmatmul.bf16.gmra.mxu0 %v2621
          %v3425 = vpop.f32.mrf.mxu0
          %v3426 = vadd.f32 %v3257, %v3425
          %v3427 = vpop.f32.mrf.mxu0
          %v3428 = vadd.f32 %v3259, %v3427
          %3429 = vmatmul.bf16.gmra.mxu0 %v2623
          %v3430 = vpop.f32.mrf.mxu0
          %v3431 = vadd.f32 %v3262, %v3430
          %v3432 = vpop.f32.mrf.mxu0
          %v3433 = vadd.f32 %v3264, %v3432
          %3434 = vmatmul.bf16.gmra.mxu0 %v2625
          %v3435 = vpop.f32.mrf.mxu0
          %v3436 = vadd.f32 %v3267, %v3435
          %v3437 = vpop.f32.mrf.mxu0
          %v3438 = vadd.f32 %v3269, %v3437
          %3439 = vmatmul.bf16.gmra.mxu0 %v2627
          %v3440 = vpop.f32.mrf.mxu0
          %v3441 = vadd.f32 %v3272, %v3440
          %v3442 = vpop.f32.mrf.mxu0
          %v3443 = vadd.f32 %v3274, %v3442
          %3444 = vmatmul.bf16.gmra.mxu0 %v2629
          %v3445 = vpop.f32.mrf.mxu0
          %v3446 = vadd.f32 %v3277, %v3445
          %v3447 = vpop.f32.mrf.mxu0
          %v3448 = vadd.f32 %v3279, %v3447
          %3449 = vmatmul.bf16.gmra.mxu0 %v2631
          %v3450 = vpop.f32.mrf.mxu0
          %v3451 = vadd.f32 %v3282, %v3450
          %v3452 = vpop.f32.mrf.mxu0
          %v3453 = vadd.f32 %v3284, %v3452
          %3454 = vmatmul.bf16.gmra.mxu0 %v2633
          %v3455 = vpop.f32.mrf.mxu0
          %v3456 = vadd.f32 %v3287, %v3455
          %v3457 = vpop.f32.mrf.mxu0
          %v3458 = vadd.f32 %v3289, %v3457
          %3459 = vmatmul.bf16.gmra.mxu0 %v2635
          %v3460 = vpop.f32.mrf.mxu0
          %v3461 = vadd.f32 %v3292, %v3460
          %v3462 = vpop.f32.mrf.mxu0
          %v3463 = vadd.f32 %v3294, %v3462
          %3464 = vmatmul.bf16.gmra.mxu0 %v2637
          %v3465 = vpop.f32.mrf.mxu0
          %v3466 = vadd.f32 %v3297, %v3465
          %v3467 = vpop.f32.mrf.mxu0
          %v3468 = vadd.f32 %v3299, %v3467
          %3469 = vmatmul.bf16.gmra.mxu0 %v2639
          %v3470 = vpop.f32.mrf.mxu0
          %v3471 = vadd.f32 %v3302, %v3470
          %v3472 = vpop.f32.mrf.mxu0
          %v3473 = vadd.f32 %v3304, %v3472
          %3474 = vmatmul.bf16.gmra.mxu0 %v2641
          %v3475 = vpop.f32.mrf.mxu0
          %v3476 = vadd.f32 %v3307, %v3475
          %v3477 = vpop.f32.mrf.mxu0
          %v3478 = vadd.f32 %v3309, %v3477
          %3479 = vmatmul.bf16.gmra.mxu0 %v2643
          %v3480 = vpop.f32.mrf.mxu0
          %v3481 = vadd.f32 %v3312, %v3480
          %v3482 = vpop.f32.mrf.mxu0
          %v3483 = vadd.f32 %v3314, %v3482
          %3484 = vmatmul.bf16.gmra.mxu0 %v2645
          %v3485 = vpop.f32.mrf.mxu0
          %v3486 = vadd.f32 %v3317, %v3485
          %v3487 = vpop.f32.mrf.mxu0
          %v3488 = vadd.f32 %v3319, %v3487
          %3489 = vmatmul.bf16.gmra.mxu0 %v2647
          %v3490 = vpop.f32.mrf.mxu0
          %v3491 = vadd.f32 %v3322, %v3490
          %v3492 = vpop.f32.mrf.mxu0
          %v3493 = vadd.f32 %v3324, %v3492
          %3494 = vmatmul.bf16.gmra.mxu0 %v2649
          %v3495 = vpop.f32.mrf.mxu0
          %v3496 = vadd.f32 %v3327, %v3495
          %v3497 = vpop.f32.mrf.mxu0
          %v3498 = vadd.f32 %v3329, %v3497
          %3499 = vmatmul.bf16.gmra.mxu0 %v2651
          %v3500 = vpop.f32.mrf.mxu0
          %v3501 = vadd.f32 %v3332, %v3500
          %v3502 = vpop.f32.mrf.mxu0
          %v3503 = vadd.f32 %v3334, %v3502
          %3504 = vmatmul.bf16.gmra.mxu0 %v2653
          %v3505 = vpop.f32.mrf.mxu0
          %v3506 = vadd.f32 %v3337, %v3505
          %v3507 = vpop.f32.mrf.mxu0
          %v3508 = vadd.f32 %v3339, %v3507
          %3509 = vmatmul.bf16.gmra.mxu0 %v2655
          %v3510 = vpop.f32.mrf.mxu0
          %v3511 = vadd.f32 %v3342, %v3510
          %v3512 = vpop.f32.mrf.mxu0
          %v3513 = vadd.f32 %v3344, %v3512
          %3514 = vmatmul.bf16.gmra.mxu0 %v2657
          %v3515 = vpop.f32.mrf.mxu0
          %v3516 = vadd.f32 %v3347, %v3515
          %v3517 = vpop.f32.mrf.mxu0
          %v3518 = vadd.f32 %v3349, %v3517
          %3519 = vmatmul.bf16.gmra.mxu0 %v2659
          %v3520 = vpop.f32.mrf.mxu0
          %v3521 = vadd.f32 %v3352, %v3520
          %v3522 = vpop.f32.mrf.mxu0
          %v3523 = vadd.f32 %v3354, %v3522
          %3524 = vmatmul.bf16.gmra.mxu0 %v2661
          %v3525 = vpop.f32.mrf.mxu0
          %v3526 = vadd.f32 %v3357, %v3525
          %v3527 = vpop.f32.mrf.mxu0
          %v3528 = vadd.f32 %v3359, %v3527
          %3529 = vmatmul.bf16.gmra.mxu0 %v2663
          %v3530 = vpop.f32.mrf.mxu0
          %v3531 = vadd.f32 %v3362, %v3530
          %v3532 = vpop.f32.mrf.mxu0
          %v3533 = vadd.f32 %v3364, %v3532
          %3534 = vmatmul.bf16.gmra.mxu0 %v2665
          %v3535 = vpop.f32.mrf.mxu0
          %v3536 = vadd.f32 %v3367, %v3535
          %v3537 = vpop.f32.mrf.mxu0
          %v3538 = vadd.f32 %v3369, %v3537
          %3539 = vdwg.mxu0
          %v3540 = vmax.f32 %v3043, 0.0
          %v3541 = vmax.f32 %v3381, 0.0
          %v3542 = vmax.f32 %v3045, 0.0
          %v3543 = vmax.f32 %v3383, 0.0
          %v3544 = vmax.f32 %v3048, 0.0
          %v3545 = vmax.f32 %v3386, 0.0
          %v3546 = vmax.f32 %v3050, 0.0
          %v3547 = vmax.f32 %v3388, 0.0
          %v3548 = vmax.f32 %v3053, 0.0
          %v3549 = vmax.f32 %v3391, 0.0
          %v3550 = vmax.f32 %v3055, 0.0
          %v3551 = vmax.f32 %v3393, 0.0
          %v3552 = vmax.f32 %v3058, 0.0
          %v3553 = vmax.f32 %v3396, 0.0
          %v3554 = vmax.f32 %v3060, 0.0
          %v3555 = vmax.f32 %v3398, 0.0
          %v3556 = vmax.f32 %v3063, 0.0
          %v3557 = vmax.f32 %v3401, 0.0
          %v3558 = vmax.f32 %v3065, 0.0
          %v3559 = vmax.f32 %v3403, 0.0
          %v3560 = vmax.f32 %v3068, 0.0
          %v3561 = vmax.f32 %v3406, 0.0
          %v3562 = vmax.f32 %v3070, 0.0
          %v3563 = vmax.f32 %v3408, 0.0
          %v3564 = vmax.f32 %v3073, 0.0
          %v3565 = vmax.f32 %v3411, 0.0
          %v3566 = vmax.f32 %v3075, 0.0
          %v3567 = vmax.f32 %v3413, 0.0
          %v3568 = vmax.f32 %v3078, 0.0
          %v3569 = vmax.f32 %v3416, 0.0
          %v3570 = vmax.f32 %v3080, 0.0
          %v3571 = vmax.f32 %v3418, 0.0
          %v3572 = vmax.f32 %v3083, 0.0
          %v3573 = vmax.f32 %v3421, 0.0
          %v3574 = vmax.f32 %v3085, 0.0
          %v3575 = vmax.f32 %v3423, 0.0
          %v3576 = vmax.f32 %v3088, 0.0
          %v3577 = vmax.f32 %v3426, 0.0
          %v3578 = vmax.f32 %v3090, 0.0
          %v3579 = vmax.f32 %v3428, 0.0
          %v3580 = vmax.f32 %v3093, 0.0
          %v3581 = vmax.f32 %v3431, 0.0
          %v3582 = vmax.f32 %v3095, 0.0
          %v3583 = vmax.f32 %v3433, 0.0
          %v3584 = vmax.f32 %v3098, 0.0
          %v3585 = vmax.f32 %v3436, 0.0
          %v3586 = vmax.f32 %v3100, 0.0
          %v3587 = vmax.f32 %v3438, 0.0
          %v3588 = vmax.f32 %v3103, 0.0
          %v3589 = vmax.f32 %v3441, 0.0
          %v3590 = vmax.f32 %v3105, 0.0
          %v3591 = vmax.f32 %v3443, 0.0
          %v3592 = vmax.f32 %v3108, 0.0
          %v3593 = vmax.f32 %v3446, 0.0
          %v3594 = vmax.f32 %v3110, 0.0
          %v3595 = vmax.f32 %v3448, 0.0
          %v3596 = vmax.f32 %v3113, 0.0
          %v3597 = vmax.f32 %v3451, 0.0
          %v3598 = vmax.f32 %v3115, 0.0
          %v3599 = vmax.f32 %v3453, 0.0
          %v3600 = vmax.f32 %v3118, 0.0
          %v3601 = vmax.f32 %v3456, 0.0
          %v3602 = vmax.f32 %v3120, 0.0
          %v3603 = vmax.f32 %v3458, 0.0
          %v3604 = vmax.f32 %v3123, 0.0
          %v3605 = vmax.f32 %v3461, 0.0
          %v3606 = vmax.f32 %v3125, 0.0
          %v3607 = vmax.f32 %v3463, 0.0
          %v3608 = vmax.f32 %v3128, 0.0
          %v3609 = vmax.f32 %v3466, 0.0
          %v3610 = vmax.f32 %v3130, 0.0
          %v3611 = vmax.f32 %v3468, 0.0
          %v3612 = vmax.f32 %v3133, 0.0
          %v3613 = vmax.f32 %v3471, 0.0
          %v3614 = vmax.f32 %v3135, 0.0
          %v3615 = vmax.f32 %v3473, 0.0
          %v3616 = vmax.f32 %v3138, 0.0
          %v3617 = vmax.f32 %v3476, 0.0
          %v3618 = vmax.f32 %v3140, 0.0
          %v3619 = vmax.f32 %v3478, 0.0
          %v3620 = vmax.f32 %v3143, 0.0
          %v3621 = vmax.f32 %v3481, 0.0
          %v3622 = vmax.f32 %v3145, 0.0
          %v3623 = vmax.f32 %v3483, 0.0
          %v3624 = vmax.f32 %v3148, 0.0
          %v3625 = vmax.f32 %v3486, 0.0
          %v3626 = vmax.f32 %v3150, 0.0
          %v3627 = vmax.f32 %v3488, 0.0
          %v3628 = vmax.f32 %v3153, 0.0
          %v3629 = vmax.f32 %v3491, 0.0
          %v3630 = vmax.f32 %v3155, 0.0
          %v3631 = vmax.f32 %v3493, 0.0
          %v3632 = vmax.f32 %v3158, 0.0
          %v3633 = vmax.f32 %v3496, 0.0
          %v3634 = vmax.f32 %v3160, 0.0
          %v3635 = vmax.f32 %v3498, 0.0
          %v3636 = vmax.f32 %v3163, 0.0
          %v3637 = vmax.f32 %v3501, 0.0
          %v3638 = vmax.f32 %v3165, 0.0
          %v3639 = vmax.f32 %v3503, 0.0
          %v3640 = vmax.f32 %v3168, 0.0
          %v3641 = vmax.f32 %v3506, 0.0
          %v3642 = vmax.f32 %v3170, 0.0
          %v3643 = vmax.f32 %v3508, 0.0
          %v3644 = vmax.f32 %v3173, 0.0
          %v3645 = vmax.f32 %v3511, 0.0
          %v3646 = vmax.f32 %v3175, 0.0
          %v3647 = vmax.f32 %v3513, 0.0
          %v3648 = vmax.f32 %v3178, 0.0
          %v3649 = vmax.f32 %v3516, 0.0
          %v3650 = vmax.f32 %v3180, 0.0
          %v3651 = vmax.f32 %v3518, 0.0
          %v3652 = vmax.f32 %v3183, 0.0
          %v3653 = vmax.f32 %v3521, 0.0
          %v3654 = vmax.f32 %v3185, 0.0
          %v3655 = vmax.f32 %v3523, 0.0
          %v3656 = vmax.f32 %v3188, 0.0
          %v3657 = vmax.f32 %v3526, 0.0
          %v3658 = vmax.f32 %v3190, 0.0
          %v3659 = vmax.f32 %v3528, 0.0
          %v3660 = vmax.f32 %v3193, 0.0
          %v3661 = vmax.f32 %v3531, 0.0
          %v3662 = vmax.f32 %v3195, 0.0
          %v3663 = vmax.f32 %v3533, 0.0
          %v3664 = vmax.f32 %v3198, 0.0
          %v3665 = vmax.f32 %v3536, 0.0
          %v3666 = vmax.f32 %v3200, 0.0
          %v3667 = vmax.f32 %v3538, 0.0
          // Predicated region
          $region101: #{tpu_custom_call.1} parent=99 // pred_check
            %p3668 = pneg %p446
          $region102: #{tpu_custom_call.1} parent=99 // pred_check_branch
            %3670 = sbr.rel (%p3668) target = $region104
          $region103: #{tpu_custom_call.1} parent=99 // pred_region
            %v3671 = vld [vmem:[#allocation4] sm:$0x3]
            %v3672 = vadd.f32 %v3540, %v3542
            %v3673 = vadd.f32 %v3672, %v3544
            %v3674 = vadd.f32 %v3673, %v3546
            %v3675 = vadd.f32 %v3674, %v3548
            %v3676 = vadd.f32 %v3675, %v3550
            %v3677 = vadd.f32 %v3676, %v3552
            %v3678 = vadd.f32 %v3677, %v3554
            %v3679 = vadd.f32 %v3678, %v3556
            %v3680 = vadd.f32 %v3679, %v3558
            %v3681 = vadd.f32 %v3680, %v3560
            %v3682 = vadd.f32 %v3681, %v3562
            %v3683 = vadd.f32 %v3682, %v3564
            %v3684 = vadd.f32 %v3683, %v3566
            %v3685 = vadd.f32 %v3684, %v3568
            %v3686 = vadd.f32 %v3685, %v3570
            %v3687 = vadd.f32 %v3686, %v3572
            %v3688 = vadd.f32 %v3687, %v3574
            %v3689 = vadd.f32 %v3688, %v3576
            %v3690 = vadd.f32 %v3689, %v3578
            %v3691 = vadd.f32 %v3690, %v3580
            %v3692 = vadd.f32 %v3691, %v3582
            %v3693 = vadd.f32 %v3692, %v3584
            %v3694 = vadd.f32 %v3693, %v3586
            %v3695 = vadd.f32 %v3694, %v3588
            %v3696 = vadd.f32 %v3695, %v3590
            %v3697 = vadd.f32 %v3696, %v3592
            %v3698 = vadd.f32 %v3697, %v3594
            %v3699 = vadd.f32 %v3698, %v3596
            %v3700 = vadd.f32 %v3699, %v3598
            %v3701 = vadd.f32 %v3700, %v3600
            %v3702 = vadd.f32 %v3701, %v3602
            %v3703 = vadd.f32 %v3702, %v3604
            %v3704 = vadd.f32 %v3703, %v3606
            %v3705 = vadd.f32 %v3704, %v3608
            %v3706 = vadd.f32 %v3705, %v3610
            %v3707 = vadd.f32 %v3706, %v3612
            %v3708 = vadd.f32 %v3707, %v3614
            %v3709 = vadd.f32 %v3708, %v3616
            %v3710 = vadd.f32 %v3709, %v3618
            %v3711 = vadd.f32 %v3710, %v3620
            %v3712 = vadd.f32 %v3711, %v3622
            %v3713 = vadd.f32 %v3712, %v3624
            %v3714 = vadd.f32 %v3713, %v3626
            %v3715 = vadd.f32 %v3714, %v3628
            %v3716 = vadd.f32 %v3715, %v3630
            %v3717 = vadd.f32 %v3716, %v3632
            %v3718 = vadd.f32 %v3717, %v3634
            %v3719 = vadd.f32 %v3718, %v3636
            %v3720 = vadd.f32 %v3719, %v3638
            %v3721 = vadd.f32 %v3720, %v3640
            %v3722 = vadd.f32 %v3721, %v3642
            %v3723 = vadd.f32 %v3722, %v3644
            %v3724 = vadd.f32 %v3723, %v3646
            %v3725 = vadd.f32 %v3724, %v3648
            %v3726 = vadd.f32 %v3725, %v3650
            %v3727 = vadd.f32 %v3726, %v3652
            %v3728 = vadd.f32 %v3727, %v3654
            %v3729 = vadd.f32 %v3728, %v3656
            %v3730 = vadd.f32 %v3729, %v3658
            %v3731 = vadd.f32 %v3730, %v3660
            %v3732 = vadd.f32 %v3731, %v3662
            %v3733 = vadd.f32 %v3732, %v3664
            %v3734 = vadd.f32 %v3733, %v3666
            %v3735 = vrot.slane %v3734, 4
            %v3736 = vadd.f32 %v3734, %v3735
            %v3737 = vrot.slane %v3736, 2
            %v3738 = vadd.f32 %v3736, %v3737
            %v3739 = vrot.slane %v3738, 1
            %v3740 = vadd.f32 %v3738, %v3739
            %v3741 = vadd.f32 %v3541, %v3543
            %v3742 = vadd.f32 %v3741, %v3545
            %v3743 = vadd.f32 %v3742, %v3547
            %v3744 = vadd.f32 %v3743, %v3549
            %v3745 = vadd.f32 %v3744, %v3551
            %v3746 = vadd.f32 %v3745, %v3553
            %v3747 = vadd.f32 %v3746, %v3555
            %v3748 = vadd.f32 %v3747, %v3557
            %v3749 = vadd.f32 %v3748, %v3559
            %v3750 = vadd.f32 %v3749, %v3561
            %v3751 = vadd.f32 %v3750, %v3563
            %v3752 = vadd.f32 %v3751, %v3565
            %v3753 = vadd.f32 %v3752, %v3567
            %v3754 = vadd.f32 %v3753, %v3569
            %v3755 = vadd.f32 %v3754, %v3571
            %v3756 = vadd.f32 %v3755, %v3573
            %v3757 = vadd.f32 %v3756, %v3575
            %v3758 = vadd.f32 %v3757, %v3577
            %v3759 = vadd.f32 %v3758, %v3579
            %v3760 = vadd.f32 %v3759, %v3581
            %v3761 = vadd.f32 %v3760, %v3583
            %v3762 = vadd.f32 %v3761, %v3585
            %v3763 = vadd.f32 %v3762, %v3587
            %v3764 = vadd.f32 %v3763, %v3589
            %v3765 = vadd.f32 %v3764, %v3591
            %v3766 = vadd.f32 %v3765, %v3593
            %v3767 = vadd.f32 %v3766, %v3595
            %v3768 = vadd.f32 %v3767, %v3597
            %v3769 = vadd.f32 %v3768, %v3599
            %v3770 = vadd.f32 %v3769, %v3601
            %v3771 = vadd.f32 %v3770, %v3603
            %v3772 = vadd.f32 %v3771, %v3605
            %v3773 = vadd.f32 %v3772, %v3607
            %v3774 = vadd.f32 %v3773, %v3609
            %v3775 = vadd.f32 %v3774, %v3611
            %v3776 = vadd.f32 %v3775, %v3613
            %v3777 = vadd.f32 %v3776, %v3615
            %v3778 = vadd.f32 %v3777, %v3617
            %v3779 = vadd.f32 %v3778, %v3619
            %v3780 = vadd.f32 %v3779, %v3621
            %v3781 = vadd.f32 %v3780, %v3623
            %v3782 = vadd.f32 %v3781, %v3625
            %v3783 = vadd.f32 %v3782, %v3627
            %v3784 = vadd.f32 %v3783, %v3629
            %v3785 = vadd.f32 %v3784, %v3631
            %v3786 = vadd.f32 %v3785, %v3633
            %v3787 = vadd.f32 %v3786, %v3635
            %v3788 = vadd.f32 %v3787, %v3637
            %v3789 = vadd.f32 %v3788, %v3639
            %v3790 = vadd.f32 %v3789, %v3641
            %v3791 = vadd.f32 %v3790, %v3643
            %v3792 = vadd.f32 %v3791, %v3645
            %v3793 = vadd.f32 %v3792, %v3647
            %v3794 = vadd.f32 %v3793, %v3649
            %v3795 = vadd.f32 %v3794, %v3651
            %v3796 = vadd.f32 %v3795, %v3653
            %v3797 = vadd.f32 %v3796, %v3655
            %v3798 = vadd.f32 %v3797, %v3657
            %v3799 = vadd.f32 %v3798, %v3659
            %v3800 = vadd.f32 %v3799, %v3661
            %v3801 = vadd.f32 %v3800, %v3663
            %v3802 = vadd.f32 %v3801, %v3665
            %v3803 = vadd.f32 %v3802, %v3667
            %v3804 = vrot.slane %v3803, 4
            %v3805 = vadd.f32 %v3803, %v3804
            %v3806 = vrot.slane %v3805, 2
            %v3807 = vadd.f32 %v3805, %v3806
            %v3808 = vrot.slane %v3807, 1
            %v3809 = vadd.f32 %v3807, %v3808
            %v3812 = vrot.slane %v3809, 7
            %vm3813 = vcmask 1040384
            %v3814 = vsel %vm3813, %v3740, %v3812
            %v3816 = vadd.f32 %v3671, %v3814
            %v3817 = vlaneseq
            %vm3818 = vcmp.ge.s32.totalorder %v3817, 0
            %vm3819 = vcmp.lt.s32.totalorder %v3817, 256
            %vm3820 = vmand %vm3818, %vm3819
            %3821 = vst.msk [vmem:[#allocation4] sm:$0x3] %vm3820, %v3816
            %v3822 = vld [vmem:[#allocation5] sm:$0x3]
            %v3823 = vmul.f32 %v3540, %v3540
            %v3824 = vmul.f32 %v3541, %v3541
            %v3825 = vmul.f32 %v3542, %v3542
            %v3826 = vmul.f32 %v3543, %v3543
            %v3827 = vmul.f32 %v3544, %v3544
            %v3828 = vmul.f32 %v3545, %v3545
            %v3829 = vmul.f32 %v3546, %v3546
            %v3830 = vmul.f32 %v3547, %v3547
            %v3831 = vmul.f32 %v3548, %v3548
            %v3832 = vmul.f32 %v3549, %v3549
            %v3833 = vmul.f32 %v3550, %v3550
            %v3834 = vmul.f32 %v3551, %v3551
            %v3835 = vmul.f32 %v3552, %v3552
            %v3836 = vmul.f32 %v3553, %v3553
            %v3837 = vmul.f32 %v3554, %v3554
            %v3838 = vmul.f32 %v3555, %v3555
            %v3839 = vmul.f32 %v3556, %v3556
            %v3840 = vmul.f32 %v3557, %v3557
            %v3841 = vmul.f32 %v3558, %v3558
            %v3842 = vmul.f32 %v3559, %v3559
            %v3843 = vmul.f32 %v3560, %v3560
            %v3844 = vmul.f32 %v3561, %v3561
            %v3845 = vmul.f32 %v3562, %v3562
            %v3846 = vmul.f32 %v3563, %v3563
            %v3847 = vmul.f32 %v3564, %v3564
            %v3848 = vmul.f32 %v3565, %v3565
            %v3849 = vmul.f32 %v3566, %v3566
            %v3850 = vmul.f32 %v3567, %v3567
            %v3851 = vmul.f32 %v3568, %v3568
            %v3852 = vmul.f32 %v3569, %v3569
            %v3853 = vmul.f32 %v3570, %v3570
            %v3854 = vmul.f32 %v3571, %v3571
            %v3855 = vmul.f32 %v3572, %v3572
            %v3856 = vmul.f32 %v3573, %v3573
            %v3857 = vmul.f32 %v3574, %v3574
            %v3858 = vmul.f32 %v3575, %v3575
            %v3859 = vmul.f32 %v3576, %v3576
            %v3860 = vmul.f32 %v3577, %v3577
            %v3861 = vmul.f32 %v3578, %v3578
            %v3862 = vmul.f32 %v3579, %v3579
            %v3863 = vmul.f32 %v3580, %v3580
            %v3864 = vmul.f32 %v3581, %v3581
            %v3865 = vmul.f32 %v3582, %v3582
            %v3866 = vmul.f32 %v3583, %v3583
            %v3867 = vmul.f32 %v3584, %v3584
            %v3868 = vmul.f32 %v3585, %v3585
            %v3869 = vmul.f32 %v3586, %v3586
            %v3870 = vmul.f32 %v3587, %v3587
            %v3871 = vmul.f32 %v3588, %v3588
            %v3872 = vmul.f32 %v3589, %v3589
            %v3873 = vmul.f32 %v3590, %v3590
            %v3874 = vmul.f32 %v3591, %v3591
            %v3875 = vmul.f32 %v3592, %v3592
            %v3876 = vmul.f32 %v3593, %v3593
            %v3877 = vmul.f32 %v3594, %v3594
            %v3878 = vmul.f32 %v3595, %v3595
            %v3879 = vmul.f32 %v3596, %v3596
            %v3880 = vmul.f32 %v3597, %v3597
            %v3881 = vmul.f32 %v3598, %v3598
            %v3882 = vmul.f32 %v3599, %v3599
            %v3883 = vmul.f32 %v3600, %v3600
            %v3884 = vmul.f32 %v3601, %v3601
            %v3885 = vmul.f32 %v3602, %v3602
            %v3886 = vmul.f32 %v3603, %v3603
            %v3887 = vmul.f32 %v3604, %v3604
            %v3888 = vmul.f32 %v3605, %v3605
            %v3889 = vmul.f32 %v3606, %v3606
            %v3890 = vmul.f32 %v3607, %v3607
            %v3891 = vmul.f32 %v3608, %v3608
            %v3892 = vmul.f32 %v3609, %v3609
            %v3893 = vmul.f32 %v3610, %v3610
            %v3894 = vmul.f32 %v3611, %v3611
            %v3895 = vmul.f32 %v3612, %v3612
            %v3896 = vmul.f32 %v3613, %v3613
            %v3897 = vmul.f32 %v3614, %v3614
            %v3898 = vmul.f32 %v3615, %v3615
            %v3899 = vmul.f32 %v3616, %v3616
            %v3900 = vmul.f32 %v3617, %v3617
            %v3901 = vmul.f32 %v3618, %v3618
            %v3902 = vmul.f32 %v3619, %v3619
            %v3903 = vmul.f32 %v3620, %v3620
            %v3904 = vmul.f32 %v3621, %v3621
            %v3905 = vmul.f32 %v3622, %v3622
            %v3906 = vmul.f32 %v3623, %v3623
            %v3907 = vmul.f32 %v3624, %v3624
            %v3908 = vmul.f32 %v3625, %v3625
            %v3909 = vmul.f32 %v3626, %v3626
            %v3910 = vmul.f32 %v3627, %v3627
            %v3911 = vmul.f32 %v3628, %v3628
            %v3912 = vmul.f32 %v3629, %v3629
            %v3913 = vmul.f32 %v3630, %v3630
            %v3914 = vmul.f32 %v3631, %v3631
            %v3915 = vmul.f32 %v3632, %v3632
            %v3916 = vmul.f32 %v3633, %v3633
            %v3917 = vmul.f32 %v3634, %v3634
            %v3918 = vmul.f32 %v3635, %v3635
            %v3919 = vmul.f32 %v3636, %v3636
            %v3920 = vmul.f32 %v3637, %v3637
            %v3921 = vmul.f32 %v3638, %v3638
            %v3922 = vmul.f32 %v3639, %v3639
            %v3923 = vmul.f32 %v3640, %v3640
            %v3924 = vmul.f32 %v3641, %v3641
            %v3925 = vmul.f32 %v3642, %v3642
            %v3926 = vmul.f32 %v3643, %v3643
            %v3927 = vmul.f32 %v3644, %v3644
            %v3928 = vmul.f32 %v3645, %v3645
            %v3929 = vmul.f32 %v3646, %v3646
            %v3930 = vmul.f32 %v3647, %v3647
            %v3931 = vmul.f32 %v3648, %v3648
            %v3932 = vmul.f32 %v3649, %v3649
            %v3933 = vmul.f32 %v3650, %v3650
            %v3934 = vmul.f32 %v3651, %v3651
            %v3935 = vmul.f32 %v3652, %v3652
            %v3936 = vmul.f32 %v3653, %v3653
            %v3937 = vmul.f32 %v3654, %v3654
            %v3938 = vmul.f32 %v3655, %v3655
            %v3939 = vmul.f32 %v3656, %v3656
            %v3940 = vmul.f32 %v3657, %v3657
            %v3941 = vmul.f32 %v3658, %v3658
            %v3942 = vmul.f32 %v3659, %v3659
            %v3943 = vmul.f32 %v3660, %v3660
            %v3944 = vmul.f32 %v3661, %v3661
            %v3945 = vmul.f32 %v3662, %v3662
            %v3946 = vmul.f32 %v3663, %v3663
            %v3947 = vmul.f32 %v3664, %v3664
            %v3948 = vmul.f32 %v3665, %v3665
            %v3949 = vmul.f32 %v3666, %v3666
            %v3950 = vmul.f32 %v3667, %v3667
            %v3951 = vadd.f32 %v3823, %v3825
            %v3952 = vadd.f32 %v3951, %v3827
            %v3953 = vadd.f32 %v3952, %v3829
            %v3954 = vadd.f32 %v3953, %v3831
            %v3955 = vadd.f32 %v3954, %v3833
            %v3956 = vadd.f32 %v3955, %v3835
            %v3957 = vadd.f32 %v3956, %v3837
            %v3958 = vadd.f32 %v3957, %v3839
            %v3959 = vadd.f32 %v3958, %v3841
            %v3960 = vadd.f32 %v3959, %v3843
            %v3961 = vadd.f32 %v3960, %v3845
            %v3962 = vadd.f32 %v3961, %v3847
            %v3963 = vadd.f32 %v3962, %v3849
            %v3964 = vadd.f32 %v3963, %v3851
            %v3965 = vadd.f32 %v3964, %v3853
            %v3966 = vadd.f32 %v3965, %v3855
            %v3967 = vadd.f32 %v3966, %v3857
            %v3968 = vadd.f32 %v3967, %v3859
            %v3969 = vadd.f32 %v3968, %v3861
            %v3970 = vadd.f32 %v3969, %v3863
            %v3971 = vadd.f32 %v3970, %v3865
            %v3972 = vadd.f32 %v3971, %v3867
            %v3973 = vadd.f32 %v3972, %v3869
            %v3974 = vadd.f32 %v3973, %v3871
            %v3975 = vadd.f32 %v3974, %v3873
            %v3976 = vadd.f32 %v3975, %v3875
            %v3977 = vadd.f32 %v3976, %v3877
            %v3978 = vadd.f32 %v3977, %v3879
            %v3979 = vadd.f32 %v3978, %v3881
            %v3980 = vadd.f32 %v3979, %v3883
            %v3981 = vadd.f32 %v3980, %v3885
            %v3982 = vadd.f32 %v3981, %v3887
            %v3983 = vadd.f32 %v3982, %v3889
            %v3984 = vadd.f32 %v3983, %v3891
            %v3985 = vadd.f32 %v3984, %v3893
            %v3986 = vadd.f32 %v3985, %v3895
            %v3987 = vadd.f32 %v3986, %v3897
            %v3988 = vadd.f32 %v3987, %v3899
            %v3989 = vadd.f32 %v3988, %v3901
            %v3990 = vadd.f32 %v3989, %v3903
            %v3991 = vadd.f32 %v3990, %v3905
            %v3992 = vadd.f32 %v3991, %v3907
            %v3993 = vadd.f32 %v3992, %v3909
            %v3994 = vadd.f32 %v3993, %v3911
            %v3995 = vadd.f32 %v3994, %v3913
            %v3996 = vadd.f32 %v3995, %v3915
            %v3997 = vadd.f32 %v3996, %v3917
            %v3998 = vadd.f32 %v3997, %v3919
            %v3999 = vadd.f32 %v3998, %v3921
            %v4000 = vadd.f32 %v3999, %v3923
            %v4001 = vadd.f32 %v4000, %v3925
            %v4002 = vadd.f32 %v4001, %v3927
            %v4003 = vadd.f32 %v4002, %v3929
            %v4004 = vadd.f32 %v4003, %v3931
            %v4005 = vadd.f32 %v4004, %v3933
            %v4006 = vadd.f32 %v4005, %v3935
            %v4007 = vadd.f32 %v4006, %v3937
            %v4008 = vadd.f32 %v4007, %v3939
            %v4009 = vadd.f32 %v4008, %v3941
            %v4010 = vadd.f32 %v4009, %v3943
            %v4011 = vadd.f32 %v4010, %v3945
            %v4012 = vadd.f32 %v4011, %v3947
            %v4013 = vadd.f32 %v4012, %v3949
            %v4014 = vrot.slane %v4013, 4
            %v4015 = vadd.f32 %v4013, %v4014
            %v4016 = vrot.slane %v4015, 2
            %v4017 = vadd.f32 %v4015, %v4016
            %v4018 = vrot.slane %v4017, 1
            %v4019 = vadd.f32 %v4017, %v4018
            %v4020 = vadd.f32 %v3824, %v3826
            %v4021 = vadd.f32 %v4020, %v3828
            %v4022 = vadd.f32 %v4021, %v3830
            %v4023 = vadd.f32 %v4022, %v3832
            %v4024 = vadd.f32 %v4023, %v3834
            %v4025 = vadd.f32 %v4024, %v3836
            %v4026 = vadd.f32 %v4025, %v3838
            %v4027 = vadd.f32 %v4026, %v3840
            %v4028 = vadd.f32 %v4027, %v3842
            %v4029 = vadd.f32 %v4028, %v3844
            %v4030 = vadd.f32 %v4029, %v3846
            %v4031 = vadd.f32 %v4030, %v3848
            %v4032 = vadd.f32 %v4031, %v3850
            %v4033 = vadd.f32 %v4032, %v3852
            %v4034 = vadd.f32 %v4033, %v3854
            %v4035 = vadd.f32 %v4034, %v3856
            %v4036 = vadd.f32 %v4035, %v3858
            %v4037 = vadd.f32 %v4036, %v3860
            %v4038 = vadd.f32 %v4037, %v3862
            %v4039 = vadd.f32 %v4038, %v3864
            %v4040 = vadd.f32 %v4039, %v3866
            %v4041 = vadd.f32 %v4040, %v3868
            %v4042 = vadd.f32 %v4041, %v3870
            %v4043 = vadd.f32 %v4042, %v3872
            %v4044 = vadd.f32 %v4043, %v3874
            %v4045 = vadd.f32 %v4044, %v3876
            %v4046 = vadd.f32 %v4045, %v3878
            %v4047 = vadd.f32 %v4046, %v3880
            %v4048 = vadd.f32 %v4047, %v3882
            %v4049 = vadd.f32 %v4048, %v3884
            %v4050 = vadd.f32 %v4049, %v3886
            %v4051 = vadd.f32 %v4050, %v3888
            %v4052 = vadd.f32 %v4051, %v3890
            %v4053 = vadd.f32 %v4052, %v3892
            %v4054 = vadd.f32 %v4053, %v3894
            %v4055 = vadd.f32 %v4054, %v3896
            %v4056 = vadd.f32 %v4055, %v3898
            %v4057 = vadd.f32 %v4056, %v3900
            %v4058 = vadd.f32 %v4057, %v3902
            %v4059 = vadd.f32 %v4058, %v3904
            %v4060 = vadd.f32 %v4059, %v3906
            %v4061 = vadd.f32 %v4060, %v3908
            %v4062 = vadd.f32 %v4061, %v3910
            %v4063 = vadd.f32 %v4062, %v3912
            %v4064 = vadd.f32 %v4063, %v3914
            %v4065 = vadd.f32 %v4064, %v3916
            %v4066 = vadd.f32 %v4065, %v3918
            %v4067 = vadd.f32 %v4066, %v3920
            %v4068 = vadd.f32 %v4067, %v3922
            %v4069 = vadd.f32 %v4068, %v3924
            %v4070 = vadd.f32 %v4069, %v3926
            %v4071 = vadd.f32 %v4070, %v3928
            %v4072 = vadd.f32 %v4071, %v3930
            %v4073 = vadd.f32 %v4072, %v3932
            %v4074 = vadd.f32 %v4073, %v3934
            %v4075 = vadd.f32 %v4074, %v3936
            %v4076 = vadd.f32 %v4075, %v3938
            %v4077 = vadd.f32 %v4076, %v3940
            %v4078 = vadd.f32 %v4077, %v3942
            %v4079 = vadd.f32 %v4078, %v3944
            %v4080 = vadd.f32 %v4079, %v3946
            %v4081 = vadd.f32 %v4080, %v3948
            %v4082 = vadd.f32 %v4081, %v3950
            %v4083 = vrot.slane %v4082, 4
            %v4084 = vadd.f32 %v4082, %v4083
            %v4085 = vrot.slane %v4084, 2
            %v4086 = vadd.f32 %v4084, %v4085
            %v4087 = vrot.slane %v4086, 1
            %v4088 = vadd.f32 %v4086, %v4087
            %v4091 = vrot.slane %v4088, 7
            %v4092 = vsel %vm3813, %v4019, %v4091
            %v4094 = vadd.f32 %v3822, %v4092
            %4095 = vst.msk [vmem:[#allocation5] sm:$0x3] %vm3820, %v4094
          $region104: #{tpu_custom_call.1} parent=99 // pred_fallthru
            _
          // Predicated region
          $region105: #{tpu_custom_call.1} parent=99 // pred_check
            %p4096 = pneg %p482
          $region106: #{tpu_custom_call.1} parent=99 // pred_check_branch
            %4098 = sbr.rel (%p4096) target = $region108
          $region107: #{tpu_custom_call.1} parent=99 // pred_region
            %v4099 = vld [vmem:[#allocation8] sm:$0x3]
            %v4101 = vperm.slane %v4099, 0
            %v4102 = vperm.slane %v4099, 1
            %v4105 = vmul.f32 %v3540, %v4101
            %v4106 = vmul.f32 %v3541, %v4102
            %v4107 = vmul.f32 %v3542, %v4101
            %v4108 = vmul.f32 %v3543, %v4102
            %v4109 = vmul.f32 %v3544, %v4101
            %v4110 = vmul.f32 %v3545, %v4102
            %v4111 = vmul.f32 %v3546, %v4101
            %v4112 = vmul.f32 %v3547, %v4102
            %v4113 = vmul.f32 %v3548, %v4101
            %v4114 = vmul.f32 %v3549, %v4102
            %v4115 = vmul.f32 %v3550, %v4101
            %v4116 = vmul.f32 %v3551, %v4102
            %v4117 = vmul.f32 %v3552, %v4101
            %v4118 = vmul.f32 %v3553, %v4102
            %v4119 = vmul.f32 %v3554, %v4101
            %v4120 = vmul.f32 %v3555, %v4102
            %v4121 = vmul.f32 %v3556, %v4101
            %v4122 = vmul.f32 %v3557, %v4102
            %v4123 = vmul.f32 %v3558, %v4101
            %v4124 = vmul.f32 %v3559, %v4102
            %v4125 = vmul.f32 %v3560, %v4101
            %v4126 = vmul.f32 %v3561, %v4102
            %v4127 = vmul.f32 %v3562, %v4101
            %v4128 = vmul.f32 %v3563, %v4102
            %v4129 = vmul.f32 %v3564, %v4101
            %v4130 = vmul.f32 %v3565, %v4102
            %v4131 = vmul.f32 %v3566, %v4101
            %v4132 = vmul.f32 %v3567, %v4102
            %v4133 = vmul.f32 %v3568, %v4101
            %v4134 = vmul.f32 %v3569, %v4102
            %v4135 = vmul.f32 %v3570, %v4101
            %v4136 = vmul.f32 %v3571, %v4102
            %v4137 = vmul.f32 %v3572, %v4101
            %v4138 = vmul.f32 %v3573, %v4102
            %v4139 = vmul.f32 %v3574, %v4101
            %v4140 = vmul.f32 %v3575, %v4102
            %v4141 = vmul.f32 %v3576, %v4101
            %v4142 = vmul.f32 %v3577, %v4102
            %v4143 = vmul.f32 %v3578, %v4101
            %v4144 = vmul.f32 %v3579, %v4102
            %v4145 = vmul.f32 %v3580, %v4101
            %v4146 = vmul.f32 %v3581, %v4102
            %v4147 = vmul.f32 %v3582, %v4101
            %v4148 = vmul.f32 %v3583, %v4102
            %v4149 = vmul.f32 %v3584, %v4101
            %v4150 = vmul.f32 %v3585, %v4102
            %v4151 = vmul.f32 %v3586, %v4101
            %v4152 = vmul.f32 %v3587, %v4102
            %v4153 = vmul.f32 %v3588, %v4101
            %v4154 = vmul.f32 %v3589, %v4102
            %v4155 = vmul.f32 %v3590, %v4101
            %v4156 = vmul.f32 %v3591, %v4102
            %v4157 = vmul.f32 %v3592, %v4101
            %v4158 = vmul.f32 %v3593, %v4102
            %v4159 = vmul.f32 %v3594, %v4101
            %v4160 = vmul.f32 %v3595, %v4102
            %v4161 = vmul.f32 %v3596, %v4101
            %v4162 = vmul.f32 %v3597, %v4102
            %v4163 = vmul.f32 %v3598, %v4101
            %v4164 = vmul.f32 %v3599, %v4102
            %v4165 = vmul.f32 %v3600, %v4101
            %v4166 = vmul.f32 %v3601, %v4102
            %v4167 = vmul.f32 %v3602, %v4101
            %v4168 = vmul.f32 %v3603, %v4102
            %v4169 = vmul.f32 %v3604, %v4101
            %v4170 = vmul.f32 %v3605, %v4102
            %v4171 = vmul.f32 %v3606, %v4101
            %v4172 = vmul.f32 %v3607, %v4102
            %v4173 = vmul.f32 %v3608, %v4101
            %v4174 = vmul.f32 %v3609, %v4102
            %v4175 = vmul.f32 %v3610, %v4101
            %v4176 = vmul.f32 %v3611, %v4102
            %v4177 = vmul.f32 %v3612, %v4101
            %v4178 = vmul.f32 %v3613, %v4102
            %v4179 = vmul.f32 %v3614, %v4101
            %v4180 = vmul.f32 %v3615, %v4102
            %v4181 = vmul.f32 %v3616, %v4101
            %v4182 = vmul.f32 %v3617, %v4102
            %v4183 = vmul.f32 %v3618, %v4101
            %v4184 = vmul.f32 %v3619, %v4102
            %v4185 = vmul.f32 %v3620, %v4101
            %v4186 = vmul.f32 %v3621, %v4102
            %v4187 = vmul.f32 %v3622, %v4101
            %v4188 = vmul.f32 %v3623, %v4102
            %v4189 = vmul.f32 %v3624, %v4101
            %v4190 = vmul.f32 %v3625, %v4102
            %v4191 = vmul.f32 %v3626, %v4101
            %v4192 = vmul.f32 %v3627, %v4102
            %v4193 = vmul.f32 %v3628, %v4101
            %v4194 = vmul.f32 %v3629, %v4102
            %v4195 = vmul.f32 %v3630, %v4101
            %v4196 = vmul.f32 %v3631, %v4102
            %v4197 = vmul.f32 %v3632, %v4101
            %v4198 = vmul.f32 %v3633, %v4102
            %v4199 = vmul.f32 %v3634, %v4101
            %v4200 = vmul.f32 %v3635, %v4102
            %v4201 = vmul.f32 %v3636, %v4101
            %v4202 = vmul.f32 %v3637, %v4102
            %v4203 = vmul.f32 %v3638, %v4101
            %v4204 = vmul.f32 %v3639, %v4102
            %v4205 = vmul.f32 %v3640, %v4101
            %v4206 = vmul.f32 %v3641, %v4102
            %v4207 = vmul.f32 %v3642, %v4101
            %v4208 = vmul.f32 %v3643, %v4102
            %v4209 = vmul.f32 %v3644, %v4101
            %v4210 = vmul.f32 %v3645, %v4102
            %v4211 = vmul.f32 %v3646, %v4101
            %v4212 = vmul.f32 %v3647, %v4102
            %v4213 = vmul.f32 %v3648, %v4101
            %v4214 = vmul.f32 %v3649, %v4102
            %v4215 = vmul.f32 %v3650, %v4101
            %v4216 = vmul.f32 %v3651, %v4102
            %v4217 = vmul.f32 %v3652, %v4101
            %v4218 = vmul.f32 %v3653, %v4102
            %v4219 = vmul.f32 %v3654, %v4101
            %v4220 = vmul.f32 %v3655, %v4102
            %v4221 = vmul.f32 %v3656, %v4101
            %v4222 = vmul.f32 %v3657, %v4102
            %v4223 = vmul.f32 %v3658, %v4101
            %v4224 = vmul.f32 %v3659, %v4102
            %v4225 = vmul.f32 %v3660, %v4101
            %v4226 = vmul.f32 %v3661, %v4102
            %v4227 = vmul.f32 %v3662, %v4101
            %v4228 = vmul.f32 %v3663, %v4102
            %v4229 = vmul.f32 %v3664, %v4101
            %v4230 = vmul.f32 %v3665, %v4102
            %v4231 = vmul.f32 %v3666, %v4101
            %v4232 = vmul.f32 %v3667, %v4102
            %v4233 = vld [vmem:[#allocation9] sm:$0x3]
            %v4235 = vperm.slane %v4233, 0
            %v4236 = vperm.slane %v4233, 1
            %v4239 = vadd.f32 %v4105, %v4235
            %v4240 = vadd.f32 %v4106, %v4236
            %v4241 = vadd.f32 %v4107, %v4235
            %v4242 = vadd.f32 %v4108, %v4236
            %v4243 = vadd.f32 %v4109, %v4235
            %v4244 = vadd.f32 %v4110, %v4236
            %v4245 = vadd.f32 %v4111, %v4235
            %v4246 = vadd.f32 %v4112, %v4236
            %v4247 = vadd.f32 %v4113, %v4235
            %v4248 = vadd.f32 %v4114, %v4236
            %v4249 = vadd.f32 %v4115, %v4235
            %v4250 = vadd.f32 %v4116, %v4236
            %v4251 = vadd.f32 %v4117, %v4235
            %v4252 = vadd.f32 %v4118, %v4236
            %v4253 = vadd.f32 %v4119, %v4235
            %v4254 = vadd.f32 %v4120, %v4236
            %v4255 = vadd.f32 %v4121, %v4235
            %v4256 = vadd.f32 %v4122, %v4236
            %v4257 = vadd.f32 %v4123, %v4235
            %v4258 = vadd.f32 %v4124, %v4236
            %v4259 = vadd.f32 %v4125, %v4235
            %v4260 = vadd.f32 %v4126, %v4236
            %v4261 = vadd.f32 %v4127, %v4235
            %v4262 = vadd.f32 %v4128, %v4236
            %v4263 = vadd.f32 %v4129, %v4235
            %v4264 = vadd.f32 %v4130, %v4236
            %v4265 = vadd.f32 %v4131, %v4235
            %v4266 = vadd.f32 %v4132, %v4236
            %v4267 = vadd.f32 %v4133, %v4235
            %v4268 = vadd.f32 %v4134, %v4236
            %v4269 = vadd.f32 %v4135, %v4235
            %v4270 = vadd.f32 %v4136, %v4236
            %v4271 = vadd.f32 %v4137, %v4235
            %v4272 = vadd.f32 %v4138, %v4236
            %v4273 = vadd.f32 %v4139, %v4235
            %v4274 = vadd.f32 %v4140, %v4236
            %v4275 = vadd.f32 %v4141, %v4235
            %v4276 = vadd.f32 %v4142, %v4236
            %v4277 = vadd.f32 %v4143, %v4235
            %v4278 = vadd.f32 %v4144, %v4236
            %v4279 = vadd.f32 %v4145, %v4235
            %v4280 = vadd.f32 %v4146, %v4236
            %v4281 = vadd.f32 %v4147, %v4235
            %v4282 = vadd.f32 %v4148, %v4236
            %v4283 = vadd.f32 %v4149, %v4235
            %v4284 = vadd.f32 %v4150, %v4236
            %v4285 = vadd.f32 %v4151, %v4235
            %v4286 = vadd.f32 %v4152, %v4236
            %v4287 = vadd.f32 %v4153, %v4235
            %v4288 = vadd.f32 %v4154, %v4236
            %v4289 = vadd.f32 %v4155, %v4235
            %v4290 = vadd.f32 %v4156, %v4236
            %v4291 = vadd.f32 %v4157, %v4235
            %v4292 = vadd.f32 %v4158, %v4236
            %v4293 = vadd.f32 %v4159, %v4235
            %v4294 = vadd.f32 %v4160, %v4236
            %v4295 = vadd.f32 %v4161, %v4235
            %v4296 = vadd.f32 %v4162, %v4236
            %v4297 = vadd.f32 %v4163, %v4235
            %v4298 = vadd.f32 %v4164, %v4236
            %v4299 = vadd.f32 %v4165, %v4235
            %v4300 = vadd.f32 %v4166, %v4236
            %v4301 = vadd.f32 %v4167, %v4235
            %v4302 = vadd.f32 %v4168, %v4236
            %v4303 = vadd.f32 %v4169, %v4235
            %v4304 = vadd.f32 %v4170, %v4236
            %v4305 = vadd.f32 %v4171, %v4235
            %v4306 = vadd.f32 %v4172, %v4236
            %v4307 = vadd.f32 %v4173, %v4235
            %v4308 = vadd.f32 %v4174, %v4236
            %v4309 = vadd.f32 %v4175, %v4235
            %v4310 = vadd.f32 %v4176, %v4236
            %v4311 = vadd.f32 %v4177, %v4235
            %v4312 = vadd.f32 %v4178, %v4236
            %v4313 = vadd.f32 %v4179, %v4235
            %v4314 = vadd.f32 %v4180, %v4236
            %v4315 = vadd.f32 %v4181, %v4235
            %v4316 = vadd.f32 %v4182, %v4236
            %v4317 = vadd.f32 %v4183, %v4235
            %v4318 = vadd.f32 %v4184, %v4236
            %v4319 = vadd.f32 %v4185, %v4235
            %v4320 = vadd.f32 %v4186, %v4236
            %v4321 = vadd.f32 %v4187, %v4235
            %v4322 = vadd.f32 %v4188, %v4236
            %v4323 = vadd.f32 %v4189, %v4235
            %v4324 = vadd.f32 %v4190, %v4236
            %v4325 = vadd.f32 %v4191, %v4235
            %v4326 = vadd.f32 %v4192, %v4236
            %v4327 = vadd.f32 %v4193, %v4235
            %v4328 = vadd.f32 %v4194, %v4236
            %v4329 = vadd.f32 %v4195, %v4235
            %v4330 = vadd.f32 %v4196, %v4236
            %v4331 = vadd.f32 %v4197, %v4235
            %v4332 = vadd.f32 %v4198, %v4236
            %v4333 = vadd.f32 %v4199, %v4235
            %v4334 = vadd.f32 %v4200, %v4236
            %v4335 = vadd.f32 %v4201, %v4235
            %v4336 = vadd.f32 %v4202, %v4236
            %v4337 = vadd.f32 %v4203, %v4235
            %v4338 = vadd.f32 %v4204, %v4236
            %v4339 = vadd.f32 %v4205, %v4235
            %v4340 = vadd.f32 %v4206, %v4236
            %v4341 = vadd.f32 %v4207, %v4235
            %v4342 = vadd.f32 %v4208, %v4236
            %v4343 = vadd.f32 %v4209, %v4235
            %v4344 = vadd.f32 %v4210, %v4236
            %v4345 = vadd.f32 %v4211, %v4235
            %v4346 = vadd.f32 %v4212, %v4236
            %v4347 = vadd.f32 %v4213, %v4235
            %v4348 = vadd.f32 %v4214, %v4236
            %v4349 = vadd.f32 %v4215, %v4235
            %v4350 = vadd.f32 %v4216, %v4236
            %v4351 = vadd.f32 %v4217, %v4235
            %v4352 = vadd.f32 %v4218, %v4236
            %v4353 = vadd.f32 %v4219, %v4235
            %v4354 = vadd.f32 %v4220, %v4236
            %v4355 = vadd.f32 %v4221, %v4235
            %v4356 = vadd.f32 %v4222, %v4236
            %v4357 = vadd.f32 %v4223, %v4235
            %v4358 = vadd.f32 %v4224, %v4236
            %v4359 = vadd.f32 %v4225, %v4235
            %v4360 = vadd.f32 %v4226, %v4236
            %v4361 = vadd.f32 %v4227, %v4235
            %v4362 = vadd.f32 %v4228, %v4236
            %v4363 = vadd.f32 %v4229, %v4235
            %v4364 = vadd.f32 %v4230, %v4236
            %v4365 = vadd.f32 %v4231, %v4235
            %v4366 = vadd.f32 %v4232, %v4236
            %4367 = vst [vmem:[%s429] sm:$0xff] %v4239
            %4368 = vst [vmem:[%s429 + $0x8] sm:$0xff] %v4240
            %4369 = vst [vmem:[%s429 + $0x10] sm:$0xff] %v4241
            %4370 = vst [vmem:[%s429 + $0x18] sm:$0xff] %v4242
            %4371 = vst [vmem:[%s429 + $0x20] sm:$0xff] %v4243
            %4372 = vst [vmem:[%s429 + $0x28] sm:$0xff] %v4244
            %4373 = vst [vmem:[%s429 + $0x30] sm:$0xff] %v4245
            %4374 = vst [vmem:[%s429 + $0x38] sm:$0xff] %v4246
            %4375 = vst [vmem:[%s429 + $0x40] sm:$0xff] %v4247
            %4376 = vst [vmem:[%s429 + $0x48] sm:$0xff] %v4248
            %4377 = vst [vmem:[%s429 + $0x50] sm:$0xff] %v4249
            %4378 = vst [vmem:[%s429 + $0x58] sm:$0xff] %v4250
            %4379 = vst [vmem:[%s429 + $0x60] sm:$0xff] %v4251
            %4380 = vst [vmem:[%s429 + $0x68] sm:$0xff] %v4252
            %4381 = vst [vmem:[%s429 + $0x70] sm:$0xff] %v4253
            %4382 = vst [vmem:[%s429 + $0x78] sm:$0xff] %v4254
            %4383 = vst [vmem:[%s429 + $0x80] sm:$0xff] %v4255
            %4384 = vst [vmem:[%s429 + $0x88] sm:$0xff] %v4256
            %4385 = vst [vmem:[%s429 + $0x90] sm:$0xff] %v4257
            %4386 = vst [vmem:[%s429 + $0x98] sm:$0xff] %v4258
            %4387 = vst [vmem:[%s429 + $0xa0] sm:$0xff] %v4259
            %4388 = vst [vmem:[%s429 + $0xa8] sm:$0xff] %v4260
            %4389 = vst [vmem:[%s429 + $0xb0] sm:$0xff] %v4261
            %4390 = vst [vmem:[%s429 + $0xb8] sm:$0xff] %v4262
            %4391 = vst [vmem:[%s429 + $0xc0] sm:$0xff] %v4263
            %4392 = vst [vmem:[%s429 + $0xc8] sm:$0xff] %v4264
            %4393 = vst [vmem:[%s429 + $0xd0] sm:$0xff] %v4265
            %4394 = vst [vmem:[%s429 + $0xd8] sm:$0xff] %v4266
            %4395 = vst [vmem:[%s429 + $0xe0] sm:$0xff] %v4267
            %4396 = vst [vmem:[%s429 + $0xe8] sm:$0xff] %v4268
            %4397 = vst [vmem:[%s429 + $0xf0] sm:$0xff] %v4269
            %4398 = vst [vmem:[%s429 + $0xf8] sm:$0xff] %v4270
            %4399 = vst [vmem:[%s429 + $0x100] sm:$0xff] %v4271
            %4400 = vst [vmem:[%s429 + $0x108] sm:$0xff] %v4272
            %4401 = vst [vmem:[%s429 + $0x110] sm:$0xff] %v4273
            %4402 = vst [vmem:[%s429 + $0x118] sm:$0xff] %v4274
            %4403 = vst [vmem:[%s429 + $0x120] sm:$0xff] %v4275
            %4404 = vst [vmem:[%s429 + $0x128] sm:$0xff] %v4276
            %4405 = vst [vmem:[%s429 + $0x130] sm:$0xff] %v4277
            %4406 = vst [vmem:[%s429 + $0x138] sm:$0xff] %v4278
            %4407 = vst [vmem:[%s429 + $0x140] sm:$0xff] %v4279
            %4408 = vst [vmem:[%s429 + $0x148] sm:$0xff] %v4280
            %4409 = vst [vmem:[%s429 + $0x150] sm:$0xff] %v4281
            %4410 = vst [vmem:[%s429 + $0x158] sm:$0xff] %v4282
            %4411 = vst [vmem:[%s429 + $0x160] sm:$0xff] %v4283
            %4412 = vst [vmem:[%s429 + $0x168] sm:$0xff] %v4284
            %4413 = vst [vmem:[%s429 + $0x170] sm:$0xff] %v4285
            %4414 = vst [vmem:[%s429 + $0x178] sm:$0xff] %v4286
            %4415 = vst [vmem:[%s429 + $0x180] sm:$0xff] %v4287
            %4416 = vst [vmem:[%s429 + $0x188] sm:$0xff] %v4288
            %4417 = vst [vmem:[%s429 + $0x190] sm:$0xff] %v4289
            %4418 = vst [vmem:[%s429 + $0x198] sm:$0xff] %v4290
            %4419 = vst [vmem:[%s429 + $0x1a0] sm:$0xff] %v4291
            %4420 = vst [vmem:[%s429 + $0x1a8] sm:$0xff] %v4292
            %4421 = vst [vmem:[%s429 + $0x1b0] sm:$0xff] %v4293
            %4422 = vst [vmem:[%s429 + $0x1b8] sm:$0xff] %v4294
            %4423 = vst [vmem:[%s429 + $0x1c0] sm:$0xff] %v4295
            %4424 = vst [vmem:[%s429 + $0x1c8] sm:$0xff] %v4296
            %4425 = vst [vmem:[%s429 + $0x1d0] sm:$0xff] %v4297
            %4426 = vst [vmem:[%s429 + $0x1d8] sm:$0xff] %v4298
            %4427 = vst [vmem:[%s429 + $0x1e0] sm:$0xff] %v4299
            %4428 = vst [vmem:[%s429 + $0x1e8] sm:$0xff] %v4300
            %4429 = vst [vmem:[%s429 + $0x1f0] sm:$0xff] %v4301
            %4430 = vst [vmem:[%s429 + $0x1f8] sm:$0xff] %v4302
            %4431 = vst [vmem:[%s429 + $0x200] sm:$0xff] %v4303
            %4432 = vst [vmem:[%s429 + $0x208] sm:$0xff] %v4304
            %4433 = vst [vmem:[%s429 + $0x210] sm:$0xff] %v4305
            %4434 = vst [vmem:[%s429 + $0x218] sm:$0xff] %v4306
            %4435 = vst [vmem:[%s429 + $0x220] sm:$0xff] %v4307
            %4436 = vst [vmem:[%s429 + $0x228] sm:$0xff] %v4308
            %4437 = vst [vmem:[%s429 + $0x230] sm:$0xff] %v4309
            %4438 = vst [vmem:[%s429 + $0x238] sm:$0xff] %v4310
            %4439 = vst [vmem:[%s429 + $0x240] sm:$0xff] %v4311
            %4440 = vst [vmem:[%s429 + $0x248] sm:$0xff] %v4312
            %4441 = vst [vmem:[%s429 + $0x250] sm:$0xff] %v4313
            %4442 = vst [vmem:[%s429 + $0x258] sm:$0xff] %v4314
            %4443 = vst [vmem:[%s429 + $0x260] sm:$0xff] %v4315
            %4444 = vst [vmem:[%s429 + $0x268] sm:$0xff] %v4316
            %4445 = vst [vmem:[%s429 + $0x270] sm:$0xff] %v4317
            %4446 = vst [vmem:[%s429 + $0x278] sm:$0xff] %v4318
            %4447 = vst [vmem:[%s429 + $0x280] sm:$0xff] %v4319
            %4448 = vst [vmem:[%s429 + $0x288] sm:$0xff] %v4320
            %4449 = vst [vmem:[%s429 + $0x290] sm:$0xff] %v4321
            %4450 = vst [vmem:[%s429 + $0x298] sm:$0xff] %v4322
            %4451 = vst [vmem:[%s429 + $0x2a0] sm:$0xff] %v4323
            %4452 = vst [vmem:[%s429 + $0x2a8] sm:$0xff] %v4324
            %4453 = vst [vmem:[%s429 + $0x2b0] sm:$0xff] %v4325
            %4454 = vst [vmem:[%s429 + $0x2b8] sm:$0xff] %v4326
            %4455 = vst [vmem:[%s429 + $0x2c0] sm:$0xff] %v4327
            %4456 = vst [vmem:[%s429 + $0x2c8] sm:$0xff] %v4328
            %4457 = vst [vmem:[%s429 + $0x2d0] sm:$0xff] %v4329
            %4458 = vst [vmem:[%s429 + $0x2d8] sm:$0xff] %v4330
            %4459 = vst [vmem:[%s429 + $0x2e0] sm:$0xff] %v4331
            %4460 = vst [vmem:[%s429 + $0x2e8] sm:$0xff] %v4332
            %4461 = vst [vmem:[%s429 + $0x2f0] sm:$0xff] %v4333
            %4462 = vst [vmem:[%s429 + $0x2f8] sm:$0xff] %v4334
            %4463 = vst [vmem:[%s429 + $0x300] sm:$0xff] %v4335
            %4464 = vst [vmem:[%s429 + $0x308] sm:$0xff] %v4336
            %4465 = vst [vmem:[%s429 + $0x310] sm:$0xff] %v4337
            %4466 = vst [vmem:[%s429 + $0x318] sm:$0xff] %v4338
            %4467 = vst [vmem:[%s429 + $0x320] sm:$0xff] %v4339
            %4468 = vst [vmem:[%s429 + $0x328] sm:$0xff] %v4340
            %4469 = vst [vmem:[%s429 + $0x330] sm:$0xff] %v4341
            %4470 = vst [vmem:[%s429 + $0x338] sm:$0xff] %v4342
            %4471 = vst [vmem:[%s429 + $0x340] sm:$0xff] %v4343
            %4472 = vst [vmem:[%s429 + $0x348] sm:$0xff] %v4344
            %4473 = vst [vmem:[%s429 + $0x350] sm:$0xff] %v4345
            %4474 = vst [vmem:[%s429 + $0x358] sm:$0xff] %v4346
            %4475 = vst [vmem:[%s429 + $0x360] sm:$0xff] %v4347
            %4476 = vst [vmem:[%s429 + $0x368] sm:$0xff] %v4348
            %4477 = vst [vmem:[%s429 + $0x370] sm:$0xff] %v4349
            %4478 = vst [vmem:[%s429 + $0x378] sm:$0xff] %v4350
            %4479 = vst [vmem:[%s429 + $0x380] sm:$0xff] %v4351
            %4480 = vst [vmem:[%s429 + $0x388] sm:$0xff] %v4352
            %4481 = vst [vmem:[%s429 + $0x390] sm:$0xff] %v4353
            %4482 = vst [vmem:[%s429 + $0x398] sm:$0xff] %v4354
            %4483 = vst [vmem:[%s429 + $0x3a0] sm:$0xff] %v4355
            %4484 = vst [vmem:[%s429 + $0x3a8] sm:$0xff] %v4356
            %4485 = vst [vmem:[%s429 + $0x3b0] sm:$0xff] %v4357
            %4486 = vst [vmem:[%s429 + $0x3b8] sm:$0xff] %v4358
            %4487 = vst [vmem:[%s429 + $0x3c0] sm:$0xff] %v4359
            %4488 = vst [vmem:[%s429 + $0x3c8] sm:$0xff] %v4360
            %4489 = vst [vmem:[%s429 + $0x3d0] sm:$0xff] %v4361
            %4490 = vst [vmem:[%s429 + $0x3d8] sm:$0xff] %v4362
            %4491 = vst [vmem:[%s429 + $0x3e0] sm:$0xff] %v4363
            %4492 = vst [vmem:[%s429 + $0x3e8] sm:$0xff] %v4364
            %4493 = vst [vmem:[%s429 + $0x3f0] sm:$0xff] %v4365
            %4494 = vst [vmem:[%s429 + $0x3f8] sm:$0xff] %v4366
          $region108: #{tpu_custom_call.1} parent=99 // pred_fallthru
            _
        $region100: #{tpu_custom_call.1} parent=55 // pred_fallthru
          _
        %s4495 = sand.u32 %s245, 1
        %s4496 = scalar_lea.sflag [#allocation12], %s4495
        %s4497 = sand.u32 %s245, 1
        %s4498 = smul.addr %s4497, 1024
        %s4499 = scalar_lea.vmem [#allocation21], %s4498
        // Predicated region
        $region109: #{tpu_custom_call.1} parent=55 // pred_check
          %p4500 = pneg %p255
        $region110: #{tpu_custom_call.1} parent=55 // pred_check_branch
          %4502 = sbr.rel (%p4500) target = $region112
        $region111: #{tpu_custom_call.1} parent=55 // pred_region
          %p4503 = scmp.eq.s32.totalorder %s31, 2
          %s4504 = scalar_select %p4503, %s32, 0
          %s4505 = smul.u32 64, %s4504
          %4507 = vsyncadd %s4496, 0
          %s4508 = smul.addr %s4505, 2
          %s4509 = smul.addr %s4508, 8
          %s4510 = scalar_lea.hbm %s9, %s4509
          %s4511 = sshll.u32 %s4499, 4
          %s4512 = int_to_ptr.vmem [resolvable:$true] %s4511
          %s4513 = sshll.u32 %s4510, 4
          %s4514 = int_to_ptr.hbm [resolvable:$true] %s4513
          %4519 = dma.vmem_to_hbm [thread:$0]  %s4512, 16384, %s4514, %s4496, 256, 256, 16
        $region112: #{tpu_custom_call.1} parent=55 // pred_fallthru
          _
      $region56: #{tpu_custom_call.1} parent=5 // pred_fallthru
        _
      %p4520 = scmp.le.s32.totalorder 2, %s22
      // Predicated region
      $region113: #{tpu_custom_call.1} parent=5 // pred_check
        %p4521 = pneg %p4520
      $region114: #{tpu_custom_call.1} parent=5 // pred_check_branch
        %4523 = sbr.rel (%p4521) target = $region116
      $region115: #{tpu_custom_call.1} parent=5 // pred_region
        %s4524 = ssub.s32 %s22, 2
        // Predicated region
        $region117: #{tpu_custom_call.1} parent=115 // pred_check
          %p4525 = pneg %p261
        $region118: #{tpu_custom_call.1} parent=115 // pred_check_branch
          %4527 = sbr.rel (%p4525) target = $region120
        $region119: #{tpu_custom_call.1} parent=115 // pred_region
          %s4528 = sand.u32 %s246, 1
          %s4529 = scalar_lea.sflag [#allocation12], %s4528
          %s4530 = sand.u32 %s246, 1
          %s4531 = smul.addr %s4530, 1024
          %s4532 = scalar_lea.vmem [#allocation21], %s4531
          %4534 = dma.done %s4529, 16384
        $region120: #{tpu_custom_call.1} parent=115 // pred_fallthru
          _
      $region116: #{tpu_custom_call.1} parent=5 // pred_fallthru
        _
    $region6: #{tpu_custom_call.1} parent=1 // loop_footer
      %s26 = sadd.s32 1, %s22
    $region7: #{tpu_custom_call.1} parent=1 // loop_footer_branch
      %21 = sbr.rel target = $region3
    $region8: #{tpu_custom_call.1} parent=1 // loop_exit
      _
    %4535 = vsyncpa [#allocation11], 1
    %s4536 = scalar_lea.sflag [#allocation11], 1
    %4537 = vsyncpa %s4536, 1
    %4538 = vsyncpa [#allocation14], 1
    %4539 = vsyncpa [#allocation17], 1
    %4540 = vsyncpa [#allocation20], 1
    %4541 = vsyncpa [#allocation12], 1
    %s4542 = scalar_lea.sflag [#allocation12], 1
    %4543 = vsyncpa %s4542, 1

</llo_original>
